<compile_context>
chip_gen: v7x
topology: tpu7x:2x2x1
jax: 0.10.0
libtpu: 0.0.40
codegen_flags: <defaults>
</compile_context>

<pallas_src>
import functools

import jax
import jax.numpy as jnp
import numpy as np
from jax.experimental import pallas as pl
from jax.experimental.pallas import tpu as pltpu

POOL_KS = (5, 9, 13)            # effective SPP pool sizes (== stacked 3x3 chains)
N_BRANCH = len(POOL_KS) + 1     # identity + 3 pools
HALO = 6                        # halo rows per band: 3 chained 5x5 stages * 2
HALO_BLK = 8                    # 8-row neighbour blocks that source the halo
PAD = 2                         # -inf border for one 5x5 "same" stage
LANE = 128                      # channel dims padded to this (lane-dense)
BN_EPS = 1e-3
VMEM_LIMIT = 48 * 1024 * 1024   # explicit scoped-VMEM budget (fits v5e/v6e/v7x)


def _round_up(x, m):
    return (x + m - 1) // m * m


# ------------------------- cv1: tiled 1x1 conv + BN + SiLU -------------------

def _conv1x1_bn_silu_kernel(x_ref, w_ref, b_ref, o_ref, *, approx):
    # x_ref: (TM, Cin) pixels, w_ref: (Cin, TN), b_ref: (1, TN) f32, o: (TM, TN)
    y = jnp.dot(x_ref[...], w_ref[...], preferred_element_type=jnp.float32)
    y = y + b_ref[...]                                        # f32 bias
    y = y * pl.reciprocal(1.0 + jnp.exp(-y), approx=approx)   # SiLU, EUP recip
    o_ref[...] = y.astype(o_ref.dtype)


def conv1x1_bn_silu(x2d, w, b, *, tile_m=512):
    """Fused 1x1 conv (BN folded) + SiLU over flattened pixels.

    Grid = (row tiles, cout tiles); the big x row tile is resident across the
    inner cout sweep (dominant HBM stream read once), the small weight tile is
    re-streamed.  Ragged M is zero-padded and sliced back (no giant blocks)."""
    m, cin = x2d.shape
    cout = w.shape[1]                              # multiple of LANE by prep
    tn = 256 if cout % 256 == 0 else (128 if cout % 128 == 0 else cout)
    tm = max(16, min(_round_up(tile_m, 16), _round_up(m, 16)))
    m_pad = _round_up(m, tm)
    x_p = x2d if m_pad == m else jnp.pad(x2d, ((0, m_pad - m), (0, 0)))
    approx = x2d.dtype != jnp.float32
    grid = (m_pad // tm, cout // tn)               # rows outer (large, parallel)
    out = pl.pallas_call(
        functools.partial(_conv1x1_bn_silu_kernel, approx=approx),
        out_shape=jax.ShapeDtypeStruct((m_pad, cout), x2d.dtype),
        grid=grid,
        in_specs=[
            pl.BlockSpec((tm, cin), lambda i, j: (i, 0)),   # resident over j
            pl.BlockSpec((cin, tn), lambda i, j: (0, j)),
            pl.BlockSpec((1, tn), lambda i, j: (0, j)),
        ],
        out_specs=pl.BlockSpec((tm, tn), lambda i, j: (i, j)),
        compiler_params=pltpu.CompilerParams(
            dimension_semantics=("parallel", "parallel"),
            vmem_limit_bytes=VMEM_LIMIT),
    )(x_p, w, b)
    return out if m_pad == m else out[:m]


# --------------- fused SPP pooling + cv2 1x1 conv + BN + SiLU ----------------

def _spp_cv2_silu_kernel(above_ref, band_ref, below_ref, w2_ref, b2_ref, o_ref,
                         pad_ref, cat_ref, *, n_bands, approx):
    # above/below: (8, W, Cp) neighbour blocks (halo source), band: (BH, W, Cp)
    # w2_ref: (4*Cp, C2p) folded cv2 weight, b2_ref: (1, C2p) f32
    # o_ref:  (BH, W, C2p) compute dtype
    # pad_ref: (BH+16, W+4, Cp) -inf padded scratch, cat_ref: (BH, W, 4*Cp)
    bh, w, cp = band_ref.shape
    ehi = bh + 2 * HALO                       # extended interior height
    dt = pad_ref.dtype
    bi = pl.program_id(1)

    # Re-establish -inf borders + halo rows for THIS band.  Only thin strips
    # are written (no full-scratch refill); a program_id==0 guard would be
    # unsafe because the scratch is per-core under megacore sharding and each
    # band must re-establish its own halo rows anyway.
    ninf_r = jnp.full((PAD, w + 2 * PAD, cp), -jnp.inf, dt)
    pad_ref[0:PAD, :, :] = ninf_r
    pad_ref[ehi + PAD:ehi + 2 * PAD, :, :] = ninf_r
    ninf_c = jnp.full((ehi + 2 * PAD, PAD, cp), -jnp.inf, dt)
    pad_ref[:, 0:PAD, :] = ninf_c
    pad_ref[:, w + PAD:w + 2 * PAD, :] = ninf_c

    ninf_h = jnp.full((HALO, w, cp), -jnp.inf, dt)
    if n_bands > 1:
        pad_ref[PAD:PAD + HALO, PAD:PAD + w, :] = jnp.where(
            bi > 0, above_ref[HALO_BLK - HALO:HALO_BLK, :, :], ninf_h)
        pad_ref[PAD + HALO + bh:PAD + 2 * HALO + bh, PAD:PAD + w, :] = jnp.where(
            bi < n_bands - 1, below_ref[0:HALO, :, :], ninf_h)
    else:
        pad_ref[PAD:PAD + HALO, PAD:PAD + w, :] = ninf_h
        pad_ref[PAD + HALO + bh:PAD + 2 * HALO + bh, PAD:PAD + w, :] = ninf_h

    x = band_ref[...]
    pad_ref[PAD + HALO:PAD + HALO + bh, PAD:PAD + w, :] = x
    cat_ref[:, :, 0:cp] = x                    # branch 0: identity

    def pool5():
        # Separable -inf-padded 5x5 "same" max over the padded scratch.
        # H pass first: shifted windows are plain loads at different row
        # offsets of the ref (vld slot, no in-register rotates); the sublane
        # (W) pass then runs on the already H-reduced tensor.
        t = pad_ref[0:ehi, :, :]
        for dh in range(1, 5):
            t = jnp.maximum(t, pad_ref[dh:dh + ehi, :, :])
        r = t[:, 0:w, :]
        for dw in range(1, 5):
            r = jnp.maximum(r, t[:, dw:dw + w, :])
        return r                                # (ehi, w, cp)

    # SPPF chaining: 5x5(y)==5, 5x5(5)==9, 5x5(9)==13 (exact with -inf pads).
    cur = pool5()
    cat_ref[:, :, cp:2 * cp] = cur[HALO:HALO + bh]
    pad_ref[PAD:PAD + ehi, PAD:PAD + w, :] = cur
    cur = pool5()
    cat_ref[:, :, 2 * cp:3 * cp] = cur[HALO:HALO + bh]
    pad_ref[PAD:PAD + ehi, PAD:PAD + w, :] = cur
    cur = pool5()
    cat_ref[:, :, 3 * cp:4 * cp] = cur[HALO:HALO + bh]

    # cv2: one matmul over the concat scratch (K = 4*Cp keeps the MXU pipeline
    # full and the accumulation in the MXU, not in spilled vregs).
    z = jnp.dot(cat_ref[...].reshape(bh * w, N_BRANCH * cp), w2_ref[...],
                preferred_element_type=jnp.float32)
    z = z + b2_ref[...]                                        # f32 bias
    z = z * pl.reciprocal(1.0 + jnp.exp(-z), approx=approx)    # SiLU
    o_ref[...] = z.reshape(bh, w, -1).astype(o_ref.dtype)


def _pick_band_h(h, requested=None):
    """Band height: a multiple of 8 that divides h (<= target), else full h."""
    target = requested if requested is not None else 16
    if h % 8 == 0 and h >= 8:
        bh = min(max((target // 8) * 8, 8), h)
        while bh >= 8:
            if h % bh == 0:
                return bh
            bh -= 8
    return h


def spp_cv2_silu(y_nhwc, w2, b2, *, band_h=None):
    """[y, max5(y), max9(y), max13(y)] -> 1x1 conv (BN folded) -> SiLU, fused so
    the 4x-channel concat never reaches HBM.  H-band tiled with +/-6-row halos
    sourced from the 8-row neighbour blocks (clamped Blocked index maps)."""
    n, h, w, cp = y_nhwc.shape
    c2p = w2.shape[1]
    bh = _pick_band_h(h, band_h)
    nb = h // bh
    approx = y_nhwc.dtype != jnp.float32

    if nb > 1:
        blk_per_band = bh // HALO_BLK          # bh is a multiple of 8 here
        n_hblk = h // HALO_BLK
        above_spec = pl.BlockSpec(
            (None, HALO_BLK, w, cp),
            lambda ni, bi: (ni, jnp.maximum(bi * blk_per_band - 1, 0), 0, 0))
        below_spec = pl.BlockSpec(
            (None, HALO_BLK, w, cp),
            lambda ni, bi: (ni, jnp.minimum((bi + 1) * blk_per_band,
                                            n_hblk - 1), 0, 0))
    else:  # single band: halos are never read (treated as -inf / image edge)
        above_spec = pl.BlockSpec((None, bh, w, cp), lambda ni, bi: (ni, 0, 0, 0))
        below_spec = pl.BlockSpec((None, bh, w, cp), lambda ni, bi: (ni, 0, 0, 0))

    # TODO(synk): optionally fuse cv1 into this kernel per band (recompute the
    # halo rows) to skip the y HBM round trip entirely.
    # TODO(synk): on v5e (no bf16 VPU datapath) consider an f32 pad scratch.
    return pl.pallas_call(
        functools.partial(_spp_cv2_silu_kernel, n_bands=nb, approx=approx),
        out_shape=jax.ShapeDtypeStruct((n, h, w, c2p), y_nhwc.dtype),
        grid=(n, nb),
        in_specs=[
            above_spec,
            pl.BlockSpec((None, bh, w, cp), lambda ni, bi: (ni, bi, 0, 0)),
            below_spec,
            pl.BlockSpec((N_BRANCH * cp, c2p), lambda ni, bi: (0, 0)),  # resident
            pl.BlockSpec((1, c2p), lambda ni, bi: (0, 0)),
        ],
        out_specs=pl.BlockSpec((None, bh, w, c2p), lambda ni, bi: (ni, bi, 0, 0)),
        scratch_shapes=[
            pltpu.VMEM((bh + 2 * HALO + 2 * PAD, w + 2 * PAD, cp), y_nhwc.dtype),
            pltpu.VMEM((bh, w, N_BRANCH * cp), y_nhwc.dtype),
        ],
        compiler_params=pltpu.CompilerParams(
            dimension_semantics=("parallel", "parallel"),
            vmem_limit_bytes=VMEM_LIMIT),
    )(y_nhwc, y_nhwc, y_nhwc, w2, b2)


# ------------------------------ parameter glue -------------------------------

def fold_bn(w_oi, gamma, beta, mean, var, eps=BN_EPS):
    """Fold inference-mode BatchNorm into the bias-free 1x1 conv.
    w_oi: (Cout, Cin).  Returns w: (Cin, Cout) and b: (Cout,), both f32."""
    scale = gamma / jnp.sqrt(var + eps)
    w_folded = (w_oi * scale[:, None]).T
    b_folded = beta - mean * scale
    return w_folded.astype(jnp.float32), b_folded.astype(jnp.float32)


def init_params(key, c1, c2):
    """Random Conv+BN parameters for cv1/cv2, BN-folded (f32, unpadded)."""
    c_ = c1 // 2
    cc = c_ * N_BRANCH
    ks = jax.random.split(key, 10)

    def conv_bn(kw, kg, kb, km, kv, cin, cout):
        w = jax.random.normal(kw, (cout, cin), jnp.float32) / np.sqrt(cin)
        gamma = 1.0 + 0.1 * jax.random.normal(kg, (cout,), jnp.float32)
        beta = 0.1 * jax.random.normal(kb, (cout,), jnp.float32)
        mean = 0.1 * jax.random.normal(km, (cout,), jnp.float32)
        var = jnp.abs(1.0 + 0.1 * jax.random.normal(kv, (cout,), jnp.float32))
        return fold_bn(w, gamma, beta, mean, var)

    return conv_bn(*ks[0:5], c1, c_), conv_bn(*ks[5:10], cc, c2)


def prepare_kernel_params(folded, compute_dtype=jnp.bfloat16):
    """Pad channel dims to multiples of 128 (lane-dense stores / MXU tiles),
    cast matmul inputs to the compute dtype (bias stays f32), and lay cv2's
    weight out as a single (4*Cp, C2p) matrix matching the in-kernel concat."""
    (w1, b1), (w2, b2) = folded
    c1, c_ = w1.shape
    c2 = w2.shape[1]
    cp = _round_up(c_, LANE)
    c2p = _round_up(c2, LANE)
    w1p = jnp.zeros((c1, cp), compute_dtype).at[:, :c_].set(w1.astype(compute_dtype))
    b1p = jnp.zeros((1, cp), jnp.float32).at[:, :c_].set(b1[None, :])
    w2p = jnp.zeros((N_BRANCH * cp, c2p), compute_dtype)
    for br in range(N_BRANCH):
        w2p = w2p.at[br * cp:br * cp + c_, :c2].set(
            w2[br * c_:(br + 1) * c_, :].astype(compute_dtype))
    b2p = jnp.zeros((1, c2p), jnp.float32).at[:, :c2].set(b2[None, :])
    return w1p, b1p, w2p, b2p


# ------------------------------- TISPP forward -------------------------------

def tispp_forward(x_nchw, kparams, *, c2, tile_m=512, band_h=None):
    w1p, b1p, w2p, b2p = kparams
    dt = w1p.dtype
    n, c1, h, w = x_nchw.shape
    cp = w1p.shape[1]
    # TODO(synk): a production graph would keep activations NHWC end-to-end;
    # the two transposes exist only because the module contract is NCHW.
    x = jnp.transpose(x_nchw, (0, 2, 3, 1)).astype(dt)           # NCHW -> NHWC
    y = conv1x1_bn_silu(x.reshape(n * h * w, c1), w1p, b1p, tile_m=tile_m)
    z = spp_cv2_silu(y.reshape(n, h, w, cp), w2p, b2p, band_h=band_h)
    return jnp.transpose(z[..., :c2], (0, 3, 1, 2)).astype(jnp.float32)


# ----------------------------- pure-JAX reference ----------------------------

def tispp_reference(x_nchw, folded, quant=None):
    """Pure-JAX reference (f32, HIGHEST-precision matmuls).  With quant=bf16 it
    mirrors the kernel's quantization points (matmul inputs / stored
    activations) so the comparison isolates kernel bugs from bf16 rounding."""
    (w1, b1), (w2, b2) = folded
    q = ((lambda a: a.astype(quant).astype(jnp.float32))
         if quant is not None else (lambda a: a))
    hp = jax.lax.Precision.HIGHEST

    def cbs(x, w, b):     # folded 1x1 conv + SiLU, NCHW
        y = jnp.einsum('nchw,co->nohw', q(x), q(w), precision=hp)
        y = y + b[None, :, None, None]
        return y * (1.0 / (1.0 + jnp.exp(-y)))

    y = q(cbs(x_nchw, w1, b1))
    pools = [y]
    for k in POOL_KS:
        p = k // 2
        pools.append(jax.lax.reduce_window(
            y, -jnp.inf, jax.lax.max, (1, 1, k, k), (1, 1, 1, 1),
            ((0, 0), (0, 0), (p, p), (p, p))))
    return cbs(jnp.concatenate(pools, axis=1), w2, b2)


# ------------------------------------ main -----------------------------------

if __name__ == "__main__":
    key = jax.random.PRNGKey(0)
    kx, kp = jax.random.split(key)

    N, C1, H, W = 2, 16, 16, 16     # NCHW input, like the PyTorch module
    C2 = 32

    x = jax.random.normal(kx, (N, C1, H, W), jnp.float32)
    folded = init_params(kp, C1, C2)
    kparams = prepare_kernel_params(folded, compute_dtype=jnp.bfloat16)

    # tile_m=128 / band_h=8 keep both grids multi-block (and exercise the band
    # halo paths) at these toy sizes; use tile_m=512+ and band_h=16..32 for
    # production feature maps.
    fwd = jax.jit(functools.partial(tispp_forward, c2=C2, tile_m=128, band_h=8))
    out = jax.block_until_ready(fwd(x, kparams))

    # Tight check vs. a reference that mirrors the kernel's bf16 quantization
    # points (slack only covers accumulation order, approx-reciprocal and the
    # final bf16 store rounding).
    ref_q = tispp_reference(x, folded, quant=jnp.bfloat16)
    np.testing.assert_allclose(np.asarray(out), np.asarray(ref_q),
                               rtol=2e-2, atol=2e-2)
    # End-to-end accuracy check vs. pure-f32 module semantics
    # (slack dominated by bf16 weight/activation rounding).
    ref = tispp_reference(x, folded)
    np.testing.assert_allclose(np.asarray(out), np.asarray(ref),
                               rtol=5e-2, atol=5e-2)

    assert out.shape == (N, C2, H, W)
    print("KERNEL_OK")
</pallas_src>

<mosaic_0001>
module attributes {stable_mosaic.version = 11 : i64} {
  func.func @_spp_cv2_silu_kernel(%arg0: i32, %arg1: i32, %arg2: memref<1x8x16x128xbf16, #tpu.memory_space<vmem>>, %arg3: memref<1x8x16x128xbf16, #tpu.memory_space<vmem>>, %arg4: memref<1x8x16x128xbf16, #tpu.memory_space<vmem>>, %arg5: memref<512x128xbf16, #tpu.memory_space<vmem>>, %arg6: memref<1x128xf32, #tpu.memory_space<vmem>>, %arg7: memref<1x8x16x128xbf16, #tpu.memory_space<vmem>>, %arg8: memref<24x20x128xbf16, #tpu.memory_space<vmem>>, %arg9: memref<8x16x512xbf16, #tpu.memory_space<vmem>>) attributes {dimension_semantics = [#tpu.dimension_semantics<parallel>, #tpu.dimension_semantics<parallel>], iteration_bounds = array<i64: 2, 2>, scalar_prefetch = 0 : i64, scratch_operands = 2 : i64, tpu.core_type = #tpu.core_type<tc>, window_params = [{transform_indices = @transform_0, window_bounds = array<i64: 1, 8, 16, 128>}, {transform_indices = @transform_1, window_bounds = array<i64: 1, 8, 16, 128>}, {transform_indices = @transform_2, window_bounds = array<i64: 1, 8, 16, 128>}, {pipeline_mode = #tpu.pipeline_mode<synchronous>, transform_indices = @transform_3, window_bounds = array<i64: 512, 128>}, {pipeline_mode = #tpu.pipeline_mode<synchronous>, transform_indices = @transform_4, window_bounds = array<i64: 1, 128>}, {transform_indices = @transform_5, window_bounds = array<i64: 1, 8, 16, 128>}]} {
    %cst = arith.constant 0xFF80 : bf16
    %0 = vector.broadcast %cst : bf16 to vector<2x20x128xbf16>
    %c0 = arith.constant 0 : index
    %c0_0 = arith.constant 0 : index
    %c0_1 = arith.constant 0 : index
    %1 = vector.load %arg8[%c0, %c0_0, %c0_1] : memref<24x20x128xbf16, #tpu.memory_space<vmem>>, vector<2x20x128xbf16>
    tpu.vector_store %arg8[%c0, %c0_0, %c0_1], %0 {strides = array<i32>} : memref<24x20x128xbf16, #tpu.memory_space<vmem>>, vector<2x20x128xbf16>,
    %c22 = arith.constant 22 : index
    %c0_2 = arith.constant 0 : index
    %c0_3 = arith.constant 0 : index
    %2 = vector.load %arg8[%c22, %c0_2, %c0_3] : memref<24x20x128xbf16, #tpu.memory_space<vmem>>, vector<2x20x128xbf16>
    tpu.vector_store %arg8[%c22, %c0_2, %c0_3], %0 {strides = array<i32>} : memref<24x20x128xbf16, #tpu.memory_space<vmem>>, vector<2x20x128xbf16>,
    %cst_4 = arith.constant 0xFF80 : bf16
    %3 = vector.broadcast %cst_4 : bf16 to vector<24x2x128xbf16>
    %c0_5 = arith.constant 0 : index
    %c0_6 = arith.constant 0 : index
    %c0_7 = arith.constant 0 : index
    %4 = vector.load %arg8[%c0_5, %c0_6, %c0_7] : memref<24x20x128xbf16, #tpu.memory_space<vmem>>, vector<24x2x128xbf16>
    tpu.vector_store %arg8[%c0_5, %c0_6, %c0_7], %3 {strides = array<i32>} : memref<24x20x128xbf16, #tpu.memory_space<vmem>>, vector<24x2x128xbf16>,
    %c0_8 = arith.constant 0 : index
    %c18 = arith.constant 18 : index
    %c0_9 = arith.constant 0 : index
    %5 = vector.load %arg8[%c0_8, %c18, %c0_9] : memref<24x20x128xbf16, #tpu.memory_space<vmem>>, vector<24x2x128xbf16>
    tpu.vector_store %arg8[%c0_8, %c18, %c0_9], %3 {strides = array<i32>} : memref<24x20x128xbf16, #tpu.memory_space<vmem>>, vector<24x2x128xbf16>,
    %cst_10 = arith.constant 0xFF80 : bf16
    %6 = vector.broadcast %cst_10 : bf16 to vector<6x16x128xbf16>
    %c0_i32 = arith.constant 0 : i32
    %7 = arith.cmpi sgt, %arg1, %c0_i32 : i32
    %c0_11 = arith.constant 0 : index
    %c2 = arith.constant 2 : index
    %c0_12 = arith.constant 0 : index
    %c0_13 = arith.constant 0 : index
    %8 = vector.load %arg2[%c0_11, %c2, %c0_12, %c0_13] : memref<1x8x16x128xbf16, #tpu.memory_space<vmem>>, vector<1x6x16x128xbf16>
    %9 = vector.shape_cast %8 : vector<1x6x16x128xbf16> to vector<6x16x128xbf16>
    %10 = arith.select %7, %9, %6 : vector<6x16x128xbf16>
    %c2_14 = arith.constant 2 : index
    %c2_15 = arith.constant 2 : index
    %c0_16 = arith.constant 0 : index
    %11 = vector.load %arg8[%c2_14, %c2_15, %c0_16] : memref<24x20x128xbf16, #tpu.memory_space<vmem>>, vector<6x16x128xbf16>
    tpu.vector_store %arg8[%c2_14, %c2_15, %c0_16], %10 {strides = array<i32>} : memref<24x20x128xbf16, #tpu.memory_space<vmem>>, vector<6x16x128xbf16>,
    %c1_i32 = arith.constant 1 : i32
    %12 = arith.cmpi slt, %arg1, %c1_i32 : i32
    %c0_17 = arith.constant 0 : index
    %c0_18 = arith.constant 0 : index
    %c0_19 = arith.constant 0 : index
    %c0_20 = arith.constant 0 : index
    %13 = vector.load %arg4[%c0_17, %c0_18, %c0_19, %c0_20] : memref<1x8x16x128xbf16, #tpu.memory_space<vmem>>, vector<1x6x16x128xbf16>
    %14 = vector.shape_cast %13 : vector<1x6x16x128xbf16> to vector<6x16x128xbf16>
    %15 = arith.select %12, %14, %6 : vector<6x16x128xbf16>
    %c16 = arith.constant 16 : index
    %c2_21 = arith.constant 2 : index
    %c0_22 = arith.constant 0 : index
    %16 = vector.load %arg8[%c16, %c2_21, %c0_22] : memref<24x20x128xbf16, #tpu.memory_space<vmem>>, vector<6x16x128xbf16>
    tpu.vector_store %arg8[%c16, %c2_21, %c0_22], %15 {strides = array<i32>} : memref<24x20x128xbf16, #tpu.memory_space<vmem>>, vector<6x16x128xbf16>,
    %c0_23 = arith.constant 0 : index
    %c0_24 = arith.constant 0 : index
    %c0_25 = arith.constant 0 : index
    %c0_26 = arith.constant 0 : index
    %17 = vector.load %arg3[%c0_23, %c0_24, %c0_25, %c0_26] : memref<1x8x16x128xbf16, #tpu.memory_space<vmem>>, vector<1x8x16x128xbf16>
    %18 = vector.shape_cast %17 : vector<1x8x16x128xbf16> to vector<8x16x128xbf16>
    %c8 = arith.constant 8 : index
    %c2_27 = arith.constant 2 : index
    %c0_28 = arith.constant 0 : index
    %19 = vector.load %arg8[%c8, %c2_27, %c0_28] : memref<24x20x128xbf16, #tpu.memory_space<vmem>>, vector<8x16x128xbf16>
    tpu.vector_store %arg8[%c8, %c2_27, %c0_28], %18 {strides = array<i32>} : memref<24x20x128xbf16, #tpu.memory_space<vmem>>, vector<8x16x128xbf16>,
    %c0_29 = arith.constant 0 : index
    %c0_30 = arith.constant 0 : index
    %c0_31 = arith.constant 0 : index
    %20 = vector.load %arg9[%c0_29, %c0_30, %c0_31] : memref<8x16x512xbf16, #tpu.memory_space<vmem>>, vector<8x16x128xbf16>
    tpu.vector_store %arg9[%c0_29, %c0_30, %c0_31], %18 {strides = array<i32>} : memref<8x16x512xbf16, #tpu.memory_space<vmem>>, vector<8x16x128xbf16>,
    %c0_32 = arith.constant 0 : index
    %c0_33 = arith.constant 0 : index
    %c0_34 = arith.constant 0 : index
    %21 = vector.load %arg8[%c0_32, %c0_33, %c0_34] : memref<24x20x128xbf16, #tpu.memory_space<vmem>>, vector<20x20x128xbf16>
    %c1 = arith.constant 1 : index
    %c0_35 = arith.constant 0 : index
    %c0_36 = arith.constant 0 : index
    %22 = vector.load %arg8[%c1, %c0_35, %c0_36] : memref<24x20x128xbf16, #tpu.memory_space<vmem>>, vector<20x20x128xbf16>
    %23 = arith.maximumf %21, %22 : vector<20x20x128xbf16>
    %c2_37 = arith.constant 2 : index
    %c0_38 = arith.constant 0 : index
    %c0_39 = arith.constant 0 : index
    %24 = vector.load %arg8[%c2_37, %c0_38, %c0_39] : memref<24x20x128xbf16, #tpu.memory_space<vmem>>, vector<20x20x128xbf16>
    %25 = arith.maximumf %23, %24 : vector<20x20x128xbf16>
    %c3 = arith.constant 3 : index
    %c0_40 = arith.constant 0 : index
    %c0_41 = arith.constant 0 : index
    %26 = vector.load %arg8[%c3, %c0_40, %c0_41] : memref<24x20x128xbf16, #tpu.memory_space<vmem>>, vector<20x20x128xbf16>
    %27 = arith.maximumf %25, %26 : vector<20x20x128xbf16>
    %c4 = arith.constant 4 : index
    %c0_42 = arith.constant 0 : index
    %c0_43 = arith.constant 0 : index
    %28 = vector.load %arg8[%c4, %c0_42, %c0_43] : memref<24x20x128xbf16, #tpu.memory_space<vmem>>, vector<20x20x128xbf16>
    %29 = arith.maximumf %27, %28 : vector<20x20x128xbf16>
    %30 = vector.extract_strided_slice %29 {offsets = [0, 0, 0], sizes = [20, 16, 128], strides = [1, 1, 1]} : vector<20x20x128xbf16> to vector<20x16x128xbf16>
    %31 = vector.extract_strided_slice %29 {offsets = [0, 1, 0], sizes = [20, 16, 128], strides = [1, 1, 1]} : vector<20x20x128xbf16> to vector<20x16x128xbf16>
    %32 = arith.maximumf %30, %31 : vector<20x16x128xbf16>
    %33 = vector.extract_strided_slice %29 {offsets = [0, 2, 0], sizes = [20, 16, 128], strides = [1, 1, 1]} : vector<20x20x128xbf16> to vector<20x16x128xbf16>
    %34 = arith.maximumf %32, %33 : vector<20x16x128xbf16>
    %35 = vector.extract_strided_slice %29 {offsets = [0, 3, 0], sizes = [20, 16, 128], strides = [1, 1, 1]} : vector<20x20x128xbf16> to vector<20x16x128xbf16>
    %36 = arith.maximumf %34, %35 : vector<20x16x128xbf16>
    %37 = vector.extract_strided_slice %29 {offsets = [0, 4, 0], sizes = [20, 16, 128], strides = [1, 1, 1]} : vector<20x20x128xbf16> to vector<20x16x128xbf16>
    %38 = arith.maximumf %36, %37 : vector<20x16x128xbf16>
    %39 = vector.extract_strided_slice %38 {offsets = [6, 0, 0], sizes = [8, 16, 128], strides = [1, 1, 1]} : vector<20x16x128xbf16> to vector<8x16x128xbf16>
    %c0_44 = arith.constant 0 : index
    %c0_45 = arith.constant 0 : index
    %c128 = arith.constant 128 : index
    %40 = vector.load %arg9[%c0_44, %c0_45, %c128] : memref<8x16x512xbf16, #tpu.memory_space<vmem>>, vector<8x16x128xbf16>
    tpu.vector_store %arg9[%c0_44, %c0_45, %c128], %39 {strides = array<i32>} : memref<8x16x512xbf16, #tpu.memory_space<vmem>>, vector<8x16x128xbf16>,
    %c2_46 = arith.constant 2 : index
    %c2_47 = arith.constant 2 : index
    %c0_48 = arith.constant 0 : index
    %41 = vector.load %arg8[%c2_46, %c2_47, %c0_48] : memref<24x20x128xbf16, #tpu.memory_space<vmem>>, vector<20x16x128xbf16>
    tpu.vector_store %arg8[%c2_46, %c2_47, %c0_48], %38 {strides = array<i32>} : memref<24x20x128xbf16, #tpu.memory_space<vmem>>, vector<20x16x128xbf16>,
    %c0_49 = arith.constant 0 : index
    %c0_50 = arith.constant 0 : index
    %c0_51 = arith.constant 0 : index
    %42 = vector.load %arg8[%c0_49, %c0_50, %c0_51] : memref<24x20x128xbf16, #tpu.memory_space<vmem>>, vector<20x20x128xbf16>
    %c1_52 = arith.constant 1 : index
    %c0_53 = arith.constant 0 : index
    %c0_54 = arith.constant 0 : index
    %43 = vector.load %arg8[%c1_52, %c0_53, %c0_54] : memref<24x20x128xbf16, #tpu.memory_space<vmem>>, vector<20x20x128xbf16>
    %44 = arith.maximumf %42, %43 : vector<20x20x128xbf16>
    %c2_55 = arith.constant 2 : index
    %c0_56 = arith.constant 0 : index
    %c0_57 = arith.constant 0 : index
    %45 = vector.load %arg8[%c2_55, %c0_56, %c0_57] : memref<24x20x128xbf16, #tpu.memory_space<vmem>>, vector<20x20x128xbf16>
    %46 = arith.maximumf %44, %45 : vector<20x20x128xbf16>
    %c3_58 = arith.constant 3 : index
    %c0_59 = arith.constant 0 : index
    %c0_60 = arith.constant 0 : index
    %47 = vector.load %arg8[%c3_58, %c0_59, %c0_60] : memref<24x20x128xbf16, #tpu.memory_space<vmem>>, vector<20x20x128xbf16>
    %48 = arith.maximumf %46, %47 : vector<20x20x128xbf16>
    %c4_61 = arith.constant 4 : index
    %c0_62 = arith.constant 0 : index
    %c0_63 = arith.constant 0 : index
    %49 = vector.load %arg8[%c4_61, %c0_62, %c0_63] : memref<24x20x128xbf16, #tpu.memory_space<vmem>>, vector<20x20x128xbf16>
    %50 = arith.maximumf %48, %49 : vector<20x20x128xbf16>
    %51 = vector.extract_strided_slice %50 {offsets = [0, 0, 0], sizes = [20, 16, 128], strides = [1, 1, 1]} : vector<20x20x128xbf16> to vector<20x16x128xbf16>
    %52 = vector.extract_strided_slice %50 {offsets = [0, 1, 0], sizes = [20, 16, 128], strides = [1, 1, 1]} : vector<20x20x128xbf16> to vector<20x16x128xbf16>
    %53 = arith.maximumf %51, %52 : vector<20x16x128xbf16>
    %54 = vector.extract_strided_slice %50 {offsets = [0, 2, 0], sizes = [20, 16, 128], strides = [1, 1, 1]} : vector<20x20x128xbf16> to vector<20x16x128xbf16>
    %55 = arith.maximumf %53, %54 : vector<20x16x128xbf16>
    %56 = vector.extract_strided_slice %50 {offsets = [0, 3, 0], sizes = [20, 16, 128], strides = [1, 1, 1]} : vector<20x20x128xbf16> to vector<20x16x128xbf16>
    %57 = arith.maximumf %55, %56 : vector<20x16x128xbf16>
    %58 = vector.extract_strided_slice %50 {offsets = [0, 4, 0], sizes = [20, 16, 128], strides = [1, 1, 1]} : vector<20x20x128xbf16> to vector<20x16x128xbf16>
    %59 = arith.maximumf %57, %58 : vector<20x16x128xbf16>
    %60 = vector.extract_strided_slice %59 {offsets = [6, 0, 0], sizes = [8, 16, 128], strides = [1, 1, 1]} : vector<20x16x128xbf16> to vector<8x16x128xbf16>
    %c0_64 = arith.constant 0 : index
    %c0_65 = arith.constant 0 : index
    %c256 = arith.constant 256 : index
    %61 = vector.load %arg9[%c0_64, %c0_65, %c256] : memref<8x16x512xbf16, #tpu.memory_space<vmem>>, vector<8x16x128xbf16>
    tpu.vector_store %arg9[%c0_64, %c0_65, %c256], %60 {strides = array<i32>} : memref<8x16x512xbf16, #tpu.memory_space<vmem>>, vector<8x16x128xbf16>,
    %c2_66 = arith.constant 2 : index
    %c2_67 = arith.constant 2 : index
    %c0_68 = arith.constant 0 : index
    %62 = vector.load %arg8[%c2_66, %c2_67, %c0_68] : memref<24x20x128xbf16, #tpu.memory_space<vmem>>, vector<20x16x128xbf16>
    tpu.vector_store %arg8[%c2_66, %c2_67, %c0_68], %59 {strides = array<i32>} : memref<24x20x128xbf16, #tpu.memory_space<vmem>>, vector<20x16x128xbf16>,
    %c0_69 = arith.constant 0 : index
    %c0_70 = arith.constant 0 : index
    %c0_71 = arith.constant 0 : index
    %63 = vector.load %arg8[%c0_69, %c0_70, %c0_71] : memref<24x20x128xbf16, #tpu.memory_space<vmem>>, vector<20x20x128xbf16>
    %c1_72 = arith.constant 1 : index
    %c0_73 = arith.constant 0 : index
    %c0_74 = arith.constant 0 : index
    %64 = vector.load %arg8[%c1_72, %c0_73, %c0_74] : memref<24x20x128xbf16, #tpu.memory_space<vmem>>, vector<20x20x128xbf16>
    %65 = arith.maximumf %63, %64 : vector<20x20x128xbf16>
    %c2_75 = arith.constant 2 : index
    %c0_76 = arith.constant 0 : index
    %c0_77 = arith.constant 0 : index
    %66 = vector.load %arg8[%c2_75, %c0_76, %c0_77] : memref<24x20x128xbf16, #tpu.memory_space<vmem>>, vector<20x20x128xbf16>
    %67 = arith.maximumf %65, %66 : vector<20x20x128xbf16>
    %c3_78 = arith.constant 3 : index
    %c0_79 = arith.constant 0 : index
    %c0_80 = arith.constant 0 : index
    %68 = vector.load %arg8[%c3_78, %c0_79, %c0_80] : memref<24x20x128xbf16, #tpu.memory_space<vmem>>, vector<20x20x128xbf16>
    %69 = arith.maximumf %67, %68 : vector<20x20x128xbf16>
    %c4_81 = arith.constant 4 : index
    %c0_82 = arith.constant 0 : index
    %c0_83 = arith.constant 0 : index
    %70 = vector.load %arg8[%c4_81, %c0_82, %c0_83] : memref<24x20x128xbf16, #tpu.memory_space<vmem>>, vector<20x20x128xbf16>
    %71 = arith.maximumf %69, %70 : vector<20x20x128xbf16>
    %72 = vector.extract_strided_slice %71 {offsets = [0, 0, 0], sizes = [20, 16, 128], strides = [1, 1, 1]} : vector<20x20x128xbf16> to vector<20x16x128xbf16>
    %73 = vector.extract_strided_slice %71 {offsets = [0, 1, 0], sizes = [20, 16, 128], strides = [1, 1, 1]} : vector<20x20x128xbf16> to vector<20x16x128xbf16>
    %74 = arith.maximumf %72, %73 : vector<20x16x128xbf16>
    %75 = vector.extract_strided_slice %71 {offsets = [0, 2, 0], sizes = [20, 16, 128], strides = [1, 1, 1]} : vector<20x20x128xbf16> to vector<20x16x128xbf16>
    %76 = arith.maximumf %74, %75 : vector<20x16x128xbf16>
    %77 = vector.extract_strided_slice %71 {offsets = [0, 3, 0], sizes = [20, 16, 128], strides = [1, 1, 1]} : vector<20x20x128xbf16> to vector<20x16x128xbf16>
    %78 = arith.maximumf %76, %77 : vector<20x16x128xbf16>
    %79 = vector.extract_strided_slice %71 {offsets = [0, 4, 0], sizes = [20, 16, 128], strides = [1, 1, 1]} : vector<20x20x128xbf16> to vector<20x16x128xbf16>
    %80 = arith.maximumf %78, %79 : vector<20x16x128xbf16>
    %81 = vector.extract_strided_slice %80 {offsets = [6, 0, 0], sizes = [8, 16, 128], strides = [1, 1, 1]} : vector<20x16x128xbf16> to vector<8x16x128xbf16>
    %c0_84 = arith.constant 0 : index
    %c0_85 = arith.constant 0 : index
    %c384 = arith.constant 384 : index
    %82 = vector.load %arg9[%c0_84, %c0_85, %c384] : memref<8x16x512xbf16, #tpu.memory_space<vmem>>, vector<8x16x128xbf16>
    tpu.vector_store %arg9[%c0_84, %c0_85, %c384], %81 {strides = array<i32>} : memref<8x16x512xbf16, #tpu.memory_space<vmem>>, vector<8x16x128xbf16>,
    %c0_86 = arith.constant 0 : index
    %c0_87 = arith.constant 0 : index
    %c0_88 = arith.constant 0 : index
    %83 = vector.load %arg9[%c0_86, %c0_87, %c0_88] : memref<8x16x512xbf16, #tpu.memory_space<vmem>>, vector<8x16x512xbf16>
    %84 = vector.shape_cast %83 : vector<8x16x512xbf16> to vector<128x512xbf16>
    %c0_89 = arith.constant 0 : index
    %c0_90 = arith.constant 0 : index
    %85 = vector.load %arg5[%c0_89, %c0_90] : memref<512x128xbf16, #tpu.memory_space<vmem>>, vector<512x128xbf16>
    %cst_91 = arith.constant dense<0.000000e+00> : vector<128x128xf32>
    %86 = tpu.matmul %84, %85, %cst_91 {dimension_numbers = #tpu.dot_dimension_numbers<[1], [0], [0], [1], [0, 0, 1, 1], [], []>} : vector<128x512xbf16>, vector<512x128xbf16>, vector<128x128xf32> -> vector<128x128xf32>
    %c0_92 = arith.constant 0 : index
    %c0_93 = arith.constant 0 : index
    %87 = vector.load %arg6[%c0_92, %c0_93] : memref<1x128xf32, #tpu.memory_space<vmem>>, vector<1x128xf32>
    %88 = vector.broadcast %87 : vector<1x128xf32> to vector<128x128xf32>
    %89 = arith.addf %86, %88 : vector<128x128xf32>
    %cst_94 = arith.constant 0.000000e+00 : f32
    %90 = vector.broadcast %cst_94 : f32 to vector<128x128xf32>
    %91 = arith.subf %90, %89 : vector<128x128xf32>
    %92 = math.exp %91 : vector<128x128xf32>
    %cst_95 = arith.constant 1.000000e+00 : f32
    %93 = vector.broadcast %cst_95 : f32 to vector<128x128xf32>
    %94 = arith.addf %93, %92 : vector<128x128xf32>
    %95 = tpu.reciprocal %94 {approx = true} : vector<128x128xf32> -> vector<128x128xf32>
    %96 = arith.mulf %89, %95 : vector<128x128xf32>
    %97 = vector.shape_cast %96 : vector<128x128xf32> to vector<8x16x128xf32>
    %98 = arith.truncf %97 : vector<8x16x128xf32> to vector<8x16x128xbf16>
    %c0_96 = arith.constant 0 : index
    %c0_97 = arith.constant 0 : index
    %c0_98 = arith.constant 0 : index
    %c0_99 = arith.constant 0 : index
    %99 = vector.load %arg7[%c0_96, %c0_97, %c0_98, %c0_99] : memref<1x8x16x128xbf16, #tpu.memory_space<vmem>>, vector<1x8x16x128xbf16>
    %100 = vector.shape_cast %99 : vector<1x8x16x128xbf16> to vector<8x16x128xbf16>
    %101 = vector.shape_cast %98 : vector<8x16x128xbf16> to vector<1x8x16x128xbf16>
    tpu.vector_store %arg7[%c0_96, %c0_97, %c0_98, %c0_99], %101 {strides = array<i32>} : memref<1x8x16x128xbf16, #tpu.memory_space<vmem>>, vector<1x8x16x128xbf16>,
    return
  }
  func.func @transform_0(%arg0: i32, %arg1: i32) -> (i32, i32, i32, i32) {
    %c1_i32 = arith.constant 1 : i32
    %0 = arith.muli %arg1, %c1_i32 : i32
    %c1_i32_0 = arith.constant 1 : i32
    %1 = arith.subi %0, %c1_i32_0 : i32
    %c0_i32 = arith.constant 0 : i32
    %2 = arith.maxsi %1, %c0_i32 : i32
    %c0_i32_1 = arith.constant 0 : i32
    %c0_i32_2 = arith.constant 0 : i32
    %c0_i32_3 = arith.constant 0 : i32
    return %arg0, %2, %c0_i32_1, %c0_i32_2 : i32, i32, i32, i32
  }
  func.func @transform_1(%arg0: i32, %arg1: i32) -> (i32, i32, i32, i32) {
    %c0_i32 = arith.constant 0 : i32
    %c0_i32_0 = arith.constant 0 : i32
    %c0_i32_1 = arith.constant 0 : i32
    return %arg0, %arg1, %c0_i32, %c0_i32_0 : i32, i32, i32, i32
  }
  func.func @transform_2(%arg0: i32, %arg1: i32) -> (i32, i32, i32, i32) {
    %c1_i32 = arith.constant 1 : i32
    %0 = arith.addi %arg1, %c1_i32 : i32
    %c1_i32_0 = arith.constant 1 : i32
    %1 = arith.muli %0, %c1_i32_0 : i32
    %c1_i32_1 = arith.constant 1 : i32
    %2 = arith.minsi %1, %c1_i32_1 : i32
    %c0_i32 = arith.constant 0 : i32
    %c0_i32_2 = arith.constant 0 : i32
    %c0_i32_3 = arith.constant 0 : i32
    return %arg0, %2, %c0_i32, %c0_i32_2 : i32, i32, i32, i32
  }
  func.func @transform_3(%arg0: i32, %arg1: i32) -> (i32, i32) {
    %c0_i32 = arith.constant 0 : i32
    %c0_i32_0 = arith.constant 0 : i32
    %c0_i32_1 = arith.constant 0 : i32
    return %c0_i32, %c0_i32_0 : i32, i32
  }
  func.func @transform_4(%arg0: i32, %arg1: i32) -> (i32, i32) {
    %c0_i32 = arith.constant 0 : i32
    %c0_i32_0 = arith.constant 0 : i32
    %c0_i32_1 = arith.constant 0 : i32
    return %c0_i32, %c0_i32_0 : i32, i32
  }
  func.func @transform_5(%arg0: i32, %arg1: i32) -> (i32, i32, i32, i32) {
    %c0_i32 = arith.constant 0 : i32
    %c0_i32_0 = arith.constant 0 : i32
    %c0_i32_1 = arith.constant 0 : i32
    return %arg0, %arg1, %c0_i32, %c0_i32_0 : i32, i32, i32, i32
  }
}

module attributes {stable_mosaic.version = 11 : i64} {
  func.func @_conv1x1_bn_silu_kernel(%arg0: i32, %arg1: i32, %arg2: memref<128x16xbf16, #tpu.memory_space<vmem>>, %arg3: memref<16x128xbf16, #tpu.memory_space<vmem>>, %arg4: memref<1x128xf32, #tpu.memory_space<vmem>>, %arg5: memref<128x128xbf16, #tpu.memory_space<vmem>>) attributes {dimension_semantics = [#tpu.dimension_semantics<parallel>, #tpu.dimension_semantics<parallel>], iteration_bounds = array<i64: 4, 1>, scalar_prefetch = 0 : i64, scratch_operands = 0 : i64, tpu.core_type = #tpu.core_type<tc>, window_params = [{transform_indices = @transform_0, window_bounds = array<i64: 128, 16>}, {transform_indices = @transform_1, window_bounds = array<i64: 16, 128>}, {transform_indices = @transform_2, window_bounds = array<i64: 1, 128>}, {transform_indices = @transform_3, window_bounds = array<i64: 128, 128>}]} {
    %c0 = arith.constant 0 : index
    %c0_0 = arith.constant 0 : index
    %0 = vector.load %arg2[%c0, %c0_0] : memref<128x16xbf16, #tpu.memory_space<vmem>>, vector<128x16xbf16>
    %c0_1 = arith.constant 0 : index
    %c0_2 = arith.constant 0 : index
    %1 = vector.load %arg3[%c0_1, %c0_2] : memref<16x128xbf16, #tpu.memory_space<vmem>>, vector<16x128xbf16>
    %cst = arith.constant dense<0.000000e+00> : vector<128x128xf32>
    %2 = tpu.matmul %0, %1, %cst {dimension_numbers = #tpu.dot_dimension_numbers<[1], [0], [0], [1], [0, 0, 1, 1], [], []>} : vector<128x16xbf16>, vector<16x128xbf16>, vector<128x128xf32> -> vector<128x128xf32>
    %c0_3 = arith.constant 0 : index
    %c0_4 = arith.constant 0 : index
    %3 = vector.load %arg4[%c0_3, %c0_4] : memref<1x128xf32, #tpu.memory_space<vmem>>, vector<1x128xf32>
    %4 = vector.broadcast %3 : vector<1x128xf32> to vector<128x128xf32>
    %5 = arith.addf %2, %4 : vector<128x128xf32>
    %cst_5 = arith.constant 0.000000e+00 : f32
    %6 = vector.broadcast %cst_5 : f32 to vector<128x128xf32>
    %7 = arith.subf %6, %5 : vector<128x128xf32>
    %8 = math.exp %7 : vector<128x128xf32>
    %cst_6 = arith.constant 1.000000e+00 : f32
    %9 = vector.broadcast %cst_6 : f32 to vector<128x128xf32>
    %10 = arith.addf %9, %8 : vector<128x128xf32>
    %11 = tpu.reciprocal %10 {approx = true} : vector<128x128xf32> -> vector<128x128xf32>
    %12 = arith.mulf %5, %11 : vector<128x128xf32>
    %13 = arith.truncf %12 : vector<128x128xf32> to vector<128x128xbf16>
    %c0_7 = arith.constant 0 : index
    %c0_8 = arith.constant 0 : index
    %14 = vector.load %arg5[%c0_7, %c0_8] : memref<128x128xbf16, #tpu.memory_space<vmem>>, vector<128x128xbf16>
    tpu.vector_store %arg5[%c0_7, %c0_8], %13 {strides = array<i32>} : memref<128x128xbf16, #tpu.memory_space<vmem>>, vector<128x128xbf16>,
    return
  }
  func.func @transform_0(%arg0: i32, %arg1: i32) -> (i32, i32) {
    %c0_i32 = arith.constant 0 : i32
    %c0_i32_0 = arith.constant 0 : i32
    return %arg0, %c0_i32 : i32, i32
  }
  func.func @transform_1(%arg0: i32, %arg1: i32) -> (i32, i32) {
    %c0_i32 = arith.constant 0 : i32
    %c0_i32_0 = arith.constant 0 : i32
    return %c0_i32, %arg1 : i32, i32
  }
  func.func @transform_2(%arg0: i32, %arg1: i32) -> (i32, i32) {
    %c0_i32 = arith.constant 0 : i32
    %c0_i32_0 = arith.constant 0 : i32
    return %c0_i32, %arg1 : i32, i32
  }
  func.func @transform_3(%arg0: i32, %arg1: i32) -> (i32, i32) {
    %c0_i32 = arith.constant 0 : i32
    return %arg0, %arg1 : i32, i32
  }
}

</mosaic_0001>

<llo_original>
// kernel: tispp_forward.2
$region0: #{tispp_forward.2}
  #allocation0 [shape = 'u32[]', space=smem, size = 0x4, offset = 0x4, fixed_abs, tag = 'smem constant byte address 0x4 - core index']
  #allocation1 [shape = 'u32[144,128]{1,0:T(1,128)}', space=vmem, size = 0x12000, scoped, tag = 'internal scratch']
  %s0 = inlined_call_operand.vmem [shape: bf16[512,16], index: 0, kind: input, shape index: {}]
  %s1 = inlined_call_operand.vmem [shape: bf16[16,128], index: 1, kind: input, shape index: {}]
  %s2 = inlined_call_operand.vmem [shape: f32[1,128], index: 2, kind: input, shape index: {}]
  %s3 = inlined_call_operand.vmem [shape: bf16[512,128], index: 3, kind: output, shape index: {}]
  %s4 = sld [smem:[#allocation0]]
  $region45: #{tispp_forward.2} parent=0
    _
  %s6 = ssub.s32 1, %s4
  %s7 = scalar_select 0, %s6, %s4
  loop: start=0, step=1, limit=6
  $region2: #{tispp_forward.2} parent=0 // loop_pre_header
    _
  $region3: #{tispp_forward.2} parent=0 // loop_header
    %s9 = sphi 0, %s13
    %p10 = scmp.ge.s32.totalorder %s9, 6
    %s16 = sphi 0, %s28
    %s17 = sphi 0, %s24
    %s18 = sphi 0, %s16
    %s19 = sphi 0, %s17
    %s20 = sphi 0, %s18
    %s21 = sphi 0, %s19
    %s31 = sphi 0, %s33
    %s34 = sphi 0, %s31
    %s35 = sphi 0, %s34
    %s51 = sphi 0, %s35
    %s57 = sphi 0, %s59
    %s60 = sphi 0, %s57
    %s61 = sphi 0, %s60
    %s77 = sphi 0, %s61
    %s83 = sphi 0, %s85
    %s86 = sphi 0, %s83
    %s87 = sphi 0, %s86
    %s103 = sphi 0, %s87
    %s111 = sphi 0, %s113
    %s114 = sphi 0, %s111
    %s115 = sphi 0, %s114
    %s131 = sphi 0, %s115
  $region4: #{tispp_forward.2} parent=0 // loop_header_branch
    %12 = sbr.rel (%p10) target = $region8
  $region5: #{tispp_forward.2} parent=0 // loop_body
    %s14 = ssub.s32 %s9, 1
    %s15 = ssub.s32 %s9, 2
    %s22 = sadd.s32 1, %s17
    %p23 = scmp.ge.s32.totalorder %s22, 1
    %s24 = scalar_select %p23, 0, %s22
    %s25 = sadd.s32 1, %s16
    %s26 = scalar_select %p23, %s25, %s16
    %p27 = scmp.ge.s32.totalorder %s26, 4
    %s28 = scalar_select %p27, 0, %s26
    %s29 = ssub.s32 %s16, %s28
    %p30 = scmp.eq.s32.totalorder %s29, 0
    %s32 = sadd.s32 %s31, 1
    %s33 = scalar_select %p30, %s31, %s32
    %p36 = pneg %p30
    %p37 = scmp.eq.s32.totalorder %s9, 3
    %p38 = por %p36, %p37
    %p39 = scmp.ne.s32.totalorder %s31, %s34
    %p40 = scmp.eq.s32.totalorder %s9, 0
    %p41 = por %p39, %p40
    %p42 = scmp.ne.s32.totalorder %s31, %s34
    %p43 = scmp.eq.s32.totalorder %s14, 3
    %p44 = por %p42, %p43
    %p45 = scmp.ne.s32.totalorder %s34, %s35
    %p46 = scmp.eq.s32.totalorder %s14, 0
    %p47 = por %p45, %p46
    %p48 = scmp.ne.s32.totalorder %s34, %s35
    %p49 = scmp.eq.s32.totalorder %s15, 3
    %p50 = por %p48, %p49
    %p52 = scmp.ne.s32.totalorder %s35, %s51
    %p53 = scmp.eq.s32.totalorder %s15, 0
    %p54 = por %p52, %p53
    %s55 = ssub.s32 %s17, %s24
    %p56 = scmp.eq.s32.totalorder %s55, 0
    %s58 = sadd.s32 %s57, 1
    %s59 = scalar_select %p56, %s57, %s58
    %p62 = pneg %p56
    %p63 = scmp.eq.s32.totalorder %s9, 3
    %p64 = por %p62, %p63
    %p65 = scmp.ne.s32.totalorder %s57, %s60
    %p66 = scmp.eq.s32.totalorder %s9, 0
    %p67 = por %p65, %p66
    %p68 = scmp.ne.s32.totalorder %s57, %s60
    %p69 = scmp.eq.s32.totalorder %s14, 3
    %p70 = por %p68, %p69
    %p71 = scmp.ne.s32.totalorder %s60, %s61
    %p72 = scmp.eq.s32.totalorder %s14, 0
    %p73 = por %p71, %p72
    %p74 = scmp.ne.s32.totalorder %s60, %s61
    %p75 = scmp.eq.s32.totalorder %s15, 3
    %p76 = por %p74, %p75
    %p78 = scmp.ne.s32.totalorder %s61, %s77
    %p79 = scmp.eq.s32.totalorder %s15, 0
    %p80 = por %p78, %p79
    %s81 = ssub.s32 %s17, %s24
    %p82 = scmp.eq.s32.totalorder %s81, 0
    %s84 = sadd.s32 %s83, 1
    %s85 = scalar_select %p82, %s83, %s84
    %p88 = pneg %p82
    %p89 = scmp.eq.s32.totalorder %s9, 3
    %p90 = por %p88, %p89
    %p91 = scmp.ne.s32.totalorder %s83, %s86
    %p92 = scmp.eq.s32.totalorder %s9, 0
    %p93 = por %p91, %p92
    %p94 = scmp.ne.s32.totalorder %s83, %s86
    %p95 = scmp.eq.s32.totalorder %s14, 3
    %p96 = por %p94, %p95
    %p97 = scmp.ne.s32.totalorder %s86, %s87
    %p98 = scmp.eq.s32.totalorder %s14, 0
    %p99 = por %p97, %p98
    %p100 = scmp.ne.s32.totalorder %s86, %s87
    %p101 = scmp.eq.s32.totalorder %s15, 3
    %p102 = por %p100, %p101
    %p104 = scmp.ne.s32.totalorder %s87, %s103
    %p105 = scmp.eq.s32.totalorder %s15, 0
    %p106 = por %p104, %p105
    %s107 = ssub.s32 %s16, %s28
    %s108 = ssub.s32 %s17, %s24
    %s109 = sor.u32 %s107, %s108
    %p110 = scmp.eq.s32.totalorder %s109, 0
    %s112 = sadd.s32 %s111, 1
    %s113 = scalar_select %p110, %s111, %s112
    %p116 = pneg %p110
    %p117 = scmp.eq.s32.totalorder %s9, 3
    %p118 = por %p116, %p117
    %p119 = scmp.ne.s32.totalorder %s111, %s114
    %p120 = scmp.eq.s32.totalorder %s9, 0
    %p121 = por %p119, %p120
    %p122 = scmp.ne.s32.totalorder %s111, %s114
    %p123 = scmp.eq.s32.totalorder %s14, 3
    %p124 = por %p122, %p123
    %p125 = scmp.ne.s32.totalorder %s114, %s115
    %p126 = scmp.eq.s32.totalorder %s14, 0
    %p127 = por %p125, %p126
    %p128 = scmp.ne.s32.totalorder %s114, %s115
    %p129 = scmp.eq.s32.totalorder %s15, 3
    %p130 = por %p128, %p129
    %p132 = scmp.ne.s32.totalorder %s115, %s131
    %p133 = scmp.eq.s32.totalorder %s15, 0
    %p134 = por %p132, %p133
    %p135 = scmp.le.s32.totalorder 1, %s9
    %p136 = scmp.lt.s32.totalorder %s9, 5
    %p137 = pnand %p135, %p136
    %p138 = pneg %p137
    // Predicated region
    $region9: #{tispp_forward.2} parent=5 // pred_check
      _
    $region10: #{tispp_forward.2} parent=5 // pred_check_branch
      %140 = sbr.rel (%p137) target = $region12
    $region11: #{tispp_forward.2} parent=5 // pred_region
      %s141 = ssub.s32 %s9, 1
      // Predicated region
      $region13: #{tispp_forward.2} parent=11 // pred_check
        %p142 = pneg %p73
      $region14: #{tispp_forward.2} parent=11 // pred_check_branch
        %144 = sbr.rel (%p142) target = $region16
      $region15: #{tispp_forward.2} parent=11 // pred_region
        %p145 = scmp.lt.s32.totalorder %s19, 0
        %s146 = scalar_select %p145, %s19, 0
        %s147 = smul.addr %s146, 4
        %s148 = scalar_lea.vmem %s1, %s147
      $region16: #{tispp_forward.2} parent=11 // pred_fallthru
        _
      // Predicated region
      $region17: #{tispp_forward.2} parent=11 // pred_check
        %p149 = pneg %p99
      $region18: #{tispp_forward.2} parent=11 // pred_check_branch
        %151 = sbr.rel (%p149) target = $region20
      $region19: #{tispp_forward.2} parent=11 // pred_region
        %p152 = scmp.lt.s32.totalorder %s19, 0
        %s153 = scalar_select %p152, %s19, 0
        %s154 = scalar_lea.vmem %s2, %s153
      $region20: #{tispp_forward.2} parent=11 // pred_fallthru
        _
    $region12: #{tispp_forward.2} parent=5 // pred_fallthru
      _
    %p155 = scmp.lt.s32.totalorder %s9, 4
    // Predicated region
    $region21: #{tispp_forward.2} parent=5 // pred_check
      %p156 = pneg %p155
    $region22: #{tispp_forward.2} parent=5 // pred_check_branch
      %158 = sbr.rel (%p156) target = $region24
    $region23: #{tispp_forward.2} parent=5 // pred_region
      // Predicated region
      $region25: #{tispp_forward.2} parent=23 // pred_check
        %p159 = pneg %p41
      $region26: #{tispp_forward.2} parent=23 // pred_check_branch
        %161 = sbr.rel (%p159) target = $region28
      $region27: #{tispp_forward.2} parent=23 // pred_region
        %s162 = smul.u32 16, %s16
        %p163 = scmp.lt.s32.totalorder %s162, 63
        %s164 = scalar_select %p163, %s162, 63
        %s165 = smul.addr %s164, 4
        %s166 = scalar_lea.vmem %s0, %s165
        %s167 = smul.u32 16, %s16
      $region28: #{tispp_forward.2} parent=23 // pred_fallthru
        _
    $region24: #{tispp_forward.2} parent=5 // pred_fallthru
      _
    %p168 = scmp.le.s32.totalorder 1, %s9
    %p169 = scmp.lt.s32.totalorder %s9, 5
    %p170 = pnand %p168, %p169
    %p171 = pneg %p170
    // Predicated region
    $region29: #{tispp_forward.2} parent=5 // pred_check
      _
    $region30: #{tispp_forward.2} parent=5 // pred_check_branch
      %173 = sbr.rel (%p170) target = $region32
    $region31: #{tispp_forward.2} parent=5 // pred_region
      %s174 = ssub.s32 %s9, 1
      %s175 = smul.u32 16, %s18
      %p176 = scmp.lt.s32.totalorder %s175, 63
      %s177 = scalar_select %p176, %s175, 63
      %s178 = smul.addr %s177, 4
      %s179 = scalar_lea.vmem %s0, %s178
      %p180 = pneg %p47
      %p181 = pneg %p44
      %p182 = scmp.lt.s32.totalorder %s19, 0
      %s183 = scalar_select %p182, %s19, 0
      %s184 = smul.addr %s183, 4
      %s185 = scalar_lea.vmem %s1, %s184
      %p186 = pneg %p73
      %p187 = pneg %p70
      %p188 = scmp.lt.s32.totalorder %s19, 0
      %s189 = scalar_select %p188, %s19, 0
      %s190 = scalar_lea.vmem %s2, %s189
      %p191 = pneg %p99
      %p192 = pneg %p96
      %p193 = pneg %p127
      %p194 = pneg %p124
      %s195 = smul.u32 16, %s18
      %p196 = scmp.lt.s32.totalorder %s195, 63
      %s197 = scalar_select %p196, %s195, 63
      %p198 = scmp.lt.s32.totalorder %s19, 0
      %s199 = scalar_select %p198, %s19, 0
      %s200 = sadd.s32 %s199, %s197
      %s201 = smul.addr %s200, 4
      %s202 = scalar_lea.vmem %s3, %s201
      %s203 = smul.u32 16, %s18
      %p204 = scmp.lt.s32.totalorder %s203, 63
      %s205 = scalar_select %p204, %s203, 63
      %s206 = smul.addr %s205, 4
      %s207 = scalar_lea.vmem %s0, %s206
      %s208 = smul.u32 16, %s18
      %p209 = scmp.lt.s32.totalorder %s19, 0
      %s210 = scalar_select %p209, %s19, 0
      %s211 = smul.addr %s210, 4
      %s212 = scalar_lea.vmem %s1, %s211
      %p213 = scmp.lt.s32.totalorder %s19, 0
      %s214 = scalar_select %p213, %s19, 0
      %s215 = scalar_lea.vmem %s2, %s214
      %s216 = smul.u32 16, %s18
      %p217 = scmp.lt.s32.totalorder %s216, 63
      %s218 = scalar_select %p217, %s216, 63
      %p219 = scmp.lt.s32.totalorder %s19, 0
      %s220 = scalar_select %p219, %s19, 0
      %s221 = sadd.s32 %s220, %s218
      %s222 = smul.addr %s221, 4
      %s223 = scalar_lea.vmem %s3, %s222
      %s224 = smul.u32 16, %s18
      %v226 = vld [vmem:[%s207] sm:$0xf]
      %v227 = vld [vmem:[%s207 + $0x4] sm:$0xf]
      %v228 = vld [vmem:[%s207 + $0x8] sm:$0xf]
      %v229 = vld [vmem:[%s207 + $0xc] sm:$0xf]
      %v230 = vld [vmem:[%s207 + $0x10] sm:$0xf]
      %v231 = vld [vmem:[%s207 + $0x14] sm:$0xf]
      %v232 = vld [vmem:[%s207 + $0x18] sm:$0xf]
      %v233 = vld [vmem:[%s207 + $0x1c] sm:$0xf]
      %v234 = vld [vmem:[%s207 + $0x20] sm:$0xf]
      %v235 = vld [vmem:[%s207 + $0x24] sm:$0xf]
      %v236 = vld [vmem:[%s207 + $0x28] sm:$0xf]
      %v237 = vld [vmem:[%s207 + $0x2c] sm:$0xf]
      %v238 = vld [vmem:[%s207 + $0x30] sm:$0xf]
      %v239 = vld [vmem:[%s207 + $0x34] sm:$0xf]
      %v240 = vld [vmem:[%s207 + $0x38] sm:$0xf]
      %v241 = vld [vmem:[%s207 + $0x3c] sm:$0xf]
      %v242 = vld [vmem:[%s212] sm:$0xf]
      %v243 = vld [vmem:[%s212 + $0x4] sm:$0xf]
      %v244 = vld [vmem:[%s215] sm:$0x1]
      %v246 = vlaneseq
      %v247 = vshrl.u32 %v246, 7
      %v248 = vsub.s32 0, %v247
      %v249 = vrot.slane %v244, %v248
      %v267 = vunpack.c.l.b16 %v226
      %v268 = vunpack.c.l.b16 %v227
      %v269 = vunpack.c.l.b16 %v228
      %v270 = vunpack.c.l.b16 %v229
      %v271 = vunpack.c.l.b16 %v230
      %v272 = vunpack.c.l.b16 %v231
      %v273 = vunpack.c.l.b16 %v232
      %v274 = vunpack.c.l.b16 %v233
      %v275 = vunpack.c.l.b16 %v234
      %v276 = vunpack.c.l.b16 %v235
      %v277 = vunpack.c.l.b16 %v236
      %v278 = vunpack.c.l.b16 %v237
      %v279 = vunpack.c.l.b16 %v238
      %v280 = vunpack.c.l.b16 %v239
      %v281 = vunpack.c.l.b16 %v240
      %v282 = vunpack.c.l.b16 %v241
      %v283 = vpack.c.b16 %v268, %v267
      %v284 = vpack.c.b16 %v270, %v269
      %v285 = vpack.c.b16 %v272, %v271
      %v286 = vpack.c.b16 %v274, %v273
      %v287 = vpack.c.b16 %v276, %v275
      %v288 = vpack.c.b16 %v278, %v277
      %v289 = vpack.c.b16 %v280, %v279
      %v290 = vpack.c.b16 %v282, %v281
      %v293 = vunpack.c.l.b16 %v242
      %v294 = vunpack.c.l.b16 %v243
      %v295 = vpack.c.b16 %v294, %v293
      %vm297 = vcmask 130048
      %v299 = vsel %vm297, %v283, 0
      %v302 = vsel %vm297, %v284, 0
      %v305 = vsel %vm297, %v285, 0
      %v308 = vsel %vm297, %v286, 0
      %v311 = vsel %vm297, %v287, 0
      %v314 = vsel %vm297, %v288, 0
      %v317 = vsel %vm297, %v289, 0
      %v320 = vsel %vm297, %v290, 0
      %322 = vmatprep.subr.bf16.mxu0 0
      %323 = vmatpush1.bf16.msra.mxu0 %v295
      %324 = vmatprep.subr.bf16.mxu0 0
      %325 = vmatpush1.bf16.msra.mxu0 0
      %326 = vmatprep.subr.bf16.mxu0 0
      %327 = vmatpush1.bf16.msra.mxu0 0
      %328 = vmatprep.subr.bf16.mxu0 0
      %329 = vmatpush1.bf16.msra.mxu0 0
      %330 = vmatprep.subr.bf16.mxu0 0
      %331 = vmatpush1.bf16.msra.mxu0 0
      %332 = vmatprep.subr.bf16.mxu0 0
      %333 = vmatpush1.bf16.msra.mxu0 0
      %334 = vmatprep.subr.bf16.mxu0 0
      %335 = vmatpush1.bf16.msra.mxu0 0
      %336 = vmatprep.subr.bf16.mxu0 0
      %337 = vmatpush1.bf16.msra.mxu0 0
      %338 = vmatprep.subr.bf16.mxu0 0
      %339 = vmatpush1.bf16.msra.mxu0 0
      %340 = vmatprep.subr.bf16.mxu0 0
      %341 = vmatpush1.bf16.msra.mxu0 0
      %342 = vmatprep.subr.bf16.mxu0 0
      %343 = vmatpush1.bf16.msra.mxu0 0
      %344 = vmatprep.subr.bf16.mxu0 0
      %345 = vmatpush1.bf16.msra.mxu0 0
      %346 = vmatprep.subr.bf16.mxu0 0
      %347 = vmatpush1.bf16.msra.mxu0 0
      %348 = vmatprep.subr.bf16.mxu0 0
      %349 = vmatpush1.bf16.msra.mxu0 0
      %350 = vmatprep.subr.bf16.mxu0 0
      %351 = vmatpush1.bf16.msra.mxu0 0
      %352 = vmatprep.subr.bf16.mxu0 0
      %353 = vmatpush1.bf16.msra.mxu0 0
      %354 = vmatprep.mubr.bf16.mxu0 0
      %355 = vmatmul.mubr.bf16.gmra.mrb[0].mxu0 %v299
      %v356 = vpop.f32.mrb[0].mxu0
      %v357 = vadd.f32 %v249, %v356
      %v358 = vpop.f32.mrb[0].mxu0
      %v359 = vpop.f32.mrb[0].mxu0
      %v360 = vadd.f32 %v249, %v359
      %v361 = vpop.f32.mrb[0].mxu0
      %362 = vmatprep.mubr.bf16.mxu0 0
      %363 = vmatmul.mubr.bf16.gmra.mrb[0].mxu0 %v302
      %v364 = vpop.f32.mrb[0].mxu0
      %v365 = vadd.f32 %v249, %v364
      %v366 = vpop.f32.mrb[0].mxu0
      %v367 = vpop.f32.mrb[0].mxu0
      %v368 = vadd.f32 %v249, %v367
      %v369 = vpop.f32.mrb[0].mxu0
      %370 = vmatprep.mubr.bf16.mxu0 0
      %371 = vmatmul.mubr.bf16.gmra.mrb[0].mxu0 %v305
      %v372 = vpop.f32.mrb[0].mxu0
      %v373 = vadd.f32 %v249, %v372
      %v374 = vpop.f32.mrb[0].mxu0
      %v375 = vpop.f32.mrb[0].mxu0
      %v376 = vadd.f32 %v249, %v375
      %v377 = vpop.f32.mrb[0].mxu0
      %378 = vmatprep.mubr.bf16.mxu0 0
      %379 = vmatmul.mubr.bf16.gmra.mrb[0].mxu0 %v308
      %v380 = vpop.f32.mrb[0].mxu0
      %v381 = vadd.f32 %v249, %v380
      %v382 = vpop.f32.mrb[0].mxu0
      %v383 = vpop.f32.mrb[0].mxu0
      %v384 = vadd.f32 %v249, %v383
      %v385 = vpop.f32.mrb[0].mxu0
      %386 = vmatprep.mubr.bf16.mxu0 0
      %387 = vmatmul.mubr.bf16.gmra.mrb[0].mxu0 %v311
      %v388 = vpop.f32.mrb[0].mxu0
      %v389 = vadd.f32 %v249, %v388
      %v390 = vpop.f32.mrb[0].mxu0
      %v391 = vpop.f32.mrb[0].mxu0
      %v392 = vadd.f32 %v249, %v391
      %v393 = vpop.f32.mrb[0].mxu0
      %394 = vmatprep.mubr.bf16.mxu0 0
      %395 = vmatmul.mubr.bf16.gmra.mrb[0].mxu0 %v314
      %v396 = vpop.f32.mrb[0].mxu0
      %v397 = vadd.f32 %v249, %v396
      %v398 = vpop.f32.mrb[0].mxu0
      %v399 = vpop.f32.mrb[0].mxu0
      %v400 = vadd.f32 %v249, %v399
      %v401 = vpop.f32.mrb[0].mxu0
      %402 = vmatprep.mubr.bf16.mxu0 0
      %403 = vmatmul.mubr.bf16.gmra.mrb[0].mxu0 %v317
      %v404 = vpop.f32.mrb[0].mxu0
      %v405 = vadd.f32 %v249, %v404
      %v406 = vpop.f32.mrb[0].mxu0
      %v407 = vpop.f32.mrb[0].mxu0
      %v408 = vadd.f32 %v249, %v407
      %v409 = vpop.f32.mrb[0].mxu0
      %410 = vmatprep.mubr.bf16.mxu0 0
      %411 = vmatmul.mubr.bf16.gmra.mrb[0].mxu0 %v320
      %v412 = vpop.f32.mrb[0].mxu0
      %v413 = vadd.f32 %v249, %v412
      %v414 = vpop.f32.mrb[0].mxu0
      %v415 = vpop.f32.mrb[0].mxu0
      %v416 = vadd.f32 %v249, %v415
      %v417 = vpop.f32.mrb[0].mxu0
      %418 = vdwg.mxu0
      %v419 = vsub.f32 0.0, %v357
      %v420 = vsub.f32 0.0, %v360
      %v421 = vsub.f32 0.0, %v365
      %v422 = vsub.f32 0.0, %v368
      %v423 = vsub.f32 0.0, %v373
      %v424 = vsub.f32 0.0, %v376
      %v425 = vsub.f32 0.0, %v381
      %v426 = vsub.f32 0.0, %v384
      %v427 = vsub.f32 0.0, %v389
      %v428 = vsub.f32 0.0, %v392
      %v429 = vsub.f32 0.0, %v397
      %v430 = vsub.f32 0.0, %v400
      %v431 = vsub.f32 0.0, %v405
      %v432 = vsub.f32 0.0, %v408
      %v433 = vsub.f32 0.0, %v413
      %v434 = vsub.f32 0.0, %v416
      %v435 = vmul.f32 %v419, 1.442695
      %v436 = vpow.pop %v435
      %v437 = vmul.f32 %v420, 1.442695
      %v438 = vpow.pop %v437
      %v439 = vmul.f32 %v421, 1.442695
      %v440 = vpow.pop %v439
      %v441 = vmul.f32 %v422, 1.442695
      %v442 = vpow.pop %v441
      %v443 = vmul.f32 %v423, 1.442695
      %v444 = vpow.pop %v443
      %v445 = vmul.f32 %v424, 1.442695
      %v446 = vpow.pop %v445
      %v447 = vmul.f32 %v425, 1.442695
      %v448 = vpow.pop %v447
      %v449 = vmul.f32 %v426, 1.442695
      %v450 = vpow.pop %v449
      %v451 = vmul.f32 %v427, 1.442695
      %v452 = vpow.pop %v451
      %v453 = vmul.f32 %v428, 1.442695
      %v454 = vpow.pop %v453
      %v455 = vmul.f32 %v429, 1.442695
      %v456 = vpow.pop %v455
      %v457 = vmul.f32 %v430, 1.442695
      %v458 = vpow.pop %v457
      %v459 = vmul.f32 %v431, 1.442695
      %v460 = vpow.pop %v459
      %v461 = vmul.f32 %v432, 1.442695
      %v462 = vpow.pop %v461
      %v463 = vmul.f32 %v433, 1.442695
      %v464 = vpow.pop %v463
      %v465 = vmul.f32 %v434, 1.442695
      %v466 = vpow.pop %v465
      %v467 = vadd.f32 %v436, 1.0
      %v468 = vadd.f32 %v438, 1.0
      %v469 = vadd.f32 %v440, 1.0
      %v470 = vadd.f32 %v442, 1.0
      %v471 = vadd.f32 %v444, 1.0
      %v472 = vadd.f32 %v446, 1.0
      %v473 = vadd.f32 %v448, 1.0
      %v474 = vadd.f32 %v450, 1.0
      %v475 = vadd.f32 %v452, 1.0
      %v476 = vadd.f32 %v454, 1.0
      %v477 = vadd.f32 %v456, 1.0
      %v478 = vadd.f32 %v458, 1.0
      %v479 = vadd.f32 %v460, 1.0
      %v480 = vadd.f32 %v462, 1.0
      %v481 = vadd.f32 %v464, 1.0
      %v482 = vadd.f32 %v466, 1.0
      %v483 = vrcp.pop %v467
      %v484 = vrcp.pop %v468
      %v485 = vrcp.pop %v469
      %v486 = vrcp.pop %v470
      %v487 = vrcp.pop %v471
      %v488 = vrcp.pop %v472
      %v489 = vrcp.pop %v473
      %v490 = vrcp.pop %v474
      %v491 = vrcp.pop %v475
      %v492 = vrcp.pop %v476
      %v493 = vrcp.pop %v477
      %v494 = vrcp.pop %v478
      %v495 = vrcp.pop %v479
      %v496 = vrcp.pop %v480
      %v497 = vrcp.pop %v481
      %v498 = vrcp.pop %v482
      %v499 = vmul.f32 %v357, %v483
      %v500 = vmul.f32 %v360, %v484
      %v501 = vmul.f32 %v365, %v485
      %v502 = vmul.f32 %v368, %v486
      %v503 = vmul.f32 %v373, %v487
      %v504 = vmul.f32 %v376, %v488
      %v505 = vmul.f32 %v381, %v489
      %v506 = vmul.f32 %v384, %v490
      %v507 = vmul.f32 %v389, %v491
      %v508 = vmul.f32 %v392, %v492
      %v509 = vmul.f32 %v397, %v493
      %v510 = vmul.f32 %v400, %v494
      %v511 = vmul.f32 %v405, %v495
      %v512 = vmul.f32 %v408, %v496
      %v513 = vmul.f32 %v413, %v497
      %v514 = vmul.f32 %v416, %v498
      %v515 = vpack.c.bf16 %v500, %v499
      %v516 = vpack.c.bf16 %v502, %v501
      %v517 = vpack.c.bf16 %v504, %v503
      %v518 = vpack.c.bf16 %v506, %v505
      %v519 = vpack.c.bf16 %v508, %v507
      %v520 = vpack.c.bf16 %v510, %v509
      %v521 = vpack.c.bf16 %v512, %v511
      %v522 = vpack.c.bf16 %v514, %v513
      %v531 = vunpack.c.l.b16 %v515
      %v532 = vunpack.c.h.b16 %v515
      %v533 = vunpack.c.l.b16 %v516
      %v534 = vunpack.c.h.b16 %v516
      %v535 = vunpack.c.l.b16 %v517
      %v536 = vunpack.c.h.b16 %v517
      %v537 = vunpack.c.l.b16 %v518
      %v538 = vunpack.c.h.b16 %v518
      %v539 = vunpack.c.l.b16 %v519
      %v540 = vunpack.c.h.b16 %v519
      %v541 = vunpack.c.l.b16 %v520
      %v542 = vunpack.c.h.b16 %v520
      %v543 = vunpack.c.l.b16 %v521
      %v544 = vunpack.c.h.b16 %v521
      %v545 = vunpack.c.l.b16 %v522
      %v546 = vunpack.c.h.b16 %v522
      %v547 = vpack.c.b16 %v531, %v531
      %v548 = vpack.c.b16 %v532, %v532
      %v549 = vpack.c.b16 %v533, %v533
      %v550 = vpack.c.b16 %v534, %v534
      %v551 = vpack.c.b16 %v535, %v535
      %v552 = vpack.c.b16 %v536, %v536
      %v553 = vpack.c.b16 %v537, %v537
      %v554 = vpack.c.b16 %v538, %v538
      %v555 = vpack.c.b16 %v539, %v539
      %v556 = vpack.c.b16 %v540, %v540
      %v557 = vpack.c.b16 %v541, %v541
      %v558 = vpack.c.b16 %v542, %v542
      %v559 = vpack.c.b16 %v543, %v543
      %v560 = vpack.c.b16 %v544, %v544
      %v561 = vpack.c.b16 %v545, %v545
      %v562 = vpack.c.b16 %v546, %v546
      %579 = vst [vmem:[%s223] sm:$0xf] %v547
      %580 = vst [vmem:[%s223 + $0x4] sm:$0xf] %v548
      %581 = vst [vmem:[%s223 + $0x8] sm:$0xf] %v549
      %582 = vst [vmem:[%s223 + $0xc] sm:$0xf] %v550
      %583 = vst [vmem:[%s223 + $0x10] sm:$0xf] %v551
      %584 = vst [vmem:[%s223 + $0x14] sm:$0xf] %v552
      %585 = vst [vmem:[%s223 + $0x18] sm:$0xf] %v553
      %586 = vst [vmem:[%s223 + $0x1c] sm:$0xf] %v554
      %587 = vst [vmem:[%s223 + $0x20] sm:$0xf] %v555
      %588 = vst [vmem:[%s223 + $0x24] sm:$0xf] %v556
      %589 = vst [vmem:[%s223 + $0x28] sm:$0xf] %v557
      %590 = vst [vmem:[%s223 + $0x2c] sm:$0xf] %v558
      %591 = vst [vmem:[%s223 + $0x30] sm:$0xf] %v559
      %592 = vst [vmem:[%s223 + $0x34] sm:$0xf] %v560
      %593 = vst [vmem:[%s223 + $0x38] sm:$0xf] %v561
      %594 = vst [vmem:[%s223 + $0x3c] sm:$0xf] %v562
      %s595 = smul.u32 16, %s18
      %p596 = scmp.lt.s32.totalorder %s595, 63
      %s597 = scalar_select %p596, %s595, 63
      %p598 = scmp.lt.s32.totalorder %s19, 0
      %s599 = scalar_select %p598, %s19, 0
      %s600 = sadd.s32 %s599, %s597
      %s601 = smul.addr %s600, 4
      %s602 = scalar_lea.vmem %s3, %s601
      // Predicated region
      $region33: #{tispp_forward.2} parent=31 // pred_check
        %p603 = pneg %p124
      $region34: #{tispp_forward.2} parent=31 // pred_check_branch
        %605 = sbr.rel (%p603) target = $region36
      $region35: #{tispp_forward.2} parent=31 // pred_region
        %s606 = smul.u32 16, %s18
      $region36: #{tispp_forward.2} parent=31 // pred_fallthru
        _
    $region32: #{tispp_forward.2} parent=5 // pred_fallthru
      _
    %p607 = scmp.le.s32.totalorder 2, %s9
    // Predicated region
    $region37: #{tispp_forward.2} parent=5 // pred_check
      %p608 = pneg %p607
    $region38: #{tispp_forward.2} parent=5 // pred_check_branch
      %610 = sbr.rel (%p608) target = $region40
    $region39: #{tispp_forward.2} parent=5 // pred_region
      %s611 = ssub.s32 %s9, 2
      // Predicated region
      $region41: #{tispp_forward.2} parent=39 // pred_check
        %p612 = pneg %p130
      $region42: #{tispp_forward.2} parent=39 // pred_check_branch
        %614 = sbr.rel (%p612) target = $region44
      $region43: #{tispp_forward.2} parent=39 // pred_region
        %s615 = smul.u32 16, %s20
        %p616 = scmp.lt.s32.totalorder %s615, 63
        %s617 = scalar_select %p616, %s615, 63
        %p618 = scmp.lt.s32.totalorder %s21, 0
        %s619 = scalar_select %p618, %s21, 0
        %s620 = sadd.s32 %s619, %s617
        %s621 = smul.addr %s620, 4
        %s622 = scalar_lea.vmem %s3, %s621
      $region44: #{tispp_forward.2} parent=39 // pred_fallthru
        _
    $region40: #{tispp_forward.2} parent=5 // pred_fallthru
      _
  $region6: #{tispp_forward.2} parent=0 // loop_footer
    %s13 = sadd.s32 1, %s9
  $region7: #{tispp_forward.2} parent=0 // loop_footer_branch
    %8 = sbr.rel target = $region3
  $region8: #{tispp_forward.2} parent=0 // loop_exit
    _

// kernel: tispp_forward.3
$region0: #{tispp_forward.3}
  #allocation0 [shape = 'u32[]', space=smem, size = 0x4, offset = 0x4, fixed_abs, tag = 'smem constant byte address 0x4 - core index']
  #allocation1 [shape = 'u32[144,128]{1,0:T(1,128)}', space=vmem, size = 0x12000, scoped, tag = 'internal scratch']
  #allocation2 [shape = 'bf16[24,20,128]{2,1,0:T(8,128)(2,1)}', space=vmem, size = 0x24000, scoped, tag = 'scratch operand']
  #allocation3 [shape = 'bf16[8,16,512]{2,1,0:T(16,128)(2,1)}', space=vmem, size = 0x20000, scoped, tag = 'scratch operand']
  %s0 = inlined_call_operand.vmem [shape: bf16[2,16,16,128], index: 0, kind: input, shape index: {}, may-alias: {0,1,2}]
  %s1 = inlined_call_operand.vmem [shape: bf16[2,16,16,128], index: 1, kind: input, shape index: {}, may-alias: {0,1,2}]
  %s2 = inlined_call_operand.vmem [shape: bf16[2,16,16,128], index: 2, kind: input, shape index: {}, may-alias: {0,1,2}]
  %s3 = inlined_call_operand.vmem [shape: bf16[512,128], index: 3, kind: input, shape index: {}]
  %s4 = inlined_call_operand.vmem [shape: f32[1,128], index: 4, kind: input, shape index: {}]
  %s5 = inlined_call_operand.vmem [shape: bf16[2,16,16,128], index: 5, kind: output, shape index: {}]
  %s6 = sld [smem:[#allocation0]]
  $region53: #{tispp_forward.3} parent=0
    _
  %s8 = ssub.s32 1, %s6
  %s9 = scalar_select 0, %s8, %s6
  loop: start=0, step=1, limit=6
  $region2: #{tispp_forward.3} parent=0 // loop_pre_header
    _
  $region3: #{tispp_forward.3} parent=0 // loop_header
    %s11 = sphi 0, %s15
    %p12 = scmp.ge.s32.totalorder %s11, 6
    %s18 = sphi 0, %s30
    %s19 = sphi 0, %s26
    %s20 = sphi 0, %s18
    %s21 = sphi 0, %s19
    %s22 = sphi 0, %s20
    %s23 = sphi 0, %s21
    %s41 = sphi 0, %s43
    %s44 = sphi 0, %s41
    %s45 = sphi 0, %s44
    %s61 = sphi 0, %s45
    %s69 = sphi 0, %s71
    %s72 = sphi 0, %s69
    %s73 = sphi 0, %s72
    %s89 = sphi 0, %s73
    %s103 = sphi 0, %s105
    %s106 = sphi 0, %s103
    %s107 = sphi 0, %s106
    %s123 = sphi 0, %s107
    %s127 = sphi 0, %s127
    %s129 = sphi 0, %s127
    %s130 = sphi 0, %s129
    %s144 = sphi 0, %s130
    %s148 = sphi 0, %s148
    %s150 = sphi 0, %s148
    %s151 = sphi 0, %s150
    %s165 = sphi 0, %s151
    %s173 = sphi 0, %s175
    %s176 = sphi 0, %s173
    %s177 = sphi 0, %s176
    %s193 = sphi 0, %s177
  $region4: #{tispp_forward.3} parent=0 // loop_header_branch
    %14 = sbr.rel (%p12) target = $region8
  $region5: #{tispp_forward.3} parent=0 // loop_body
    %s16 = ssub.s32 %s11, 1
    %s17 = ssub.s32 %s11, 2
    %s24 = sadd.s32 1, %s19
    %p25 = scmp.ge.s32.totalorder %s24, 2
    %s26 = scalar_select %p25, 0, %s24
    %s27 = sadd.s32 1, %s18
    %s28 = scalar_select %p25, %s27, %s18
    %p29 = scmp.ge.s32.totalorder %s28, 2
    %s30 = scalar_select %p29, 0, %s28
    %s31 = ssub.s32 %s19, 1
    %p32 = scmp.gt.s32.totalorder %s31, 0
    %s33 = scalar_select %p32, %s31, 0
    %s34 = ssub.s32 %s26, 1
    %p35 = scmp.gt.s32.totalorder %s34, 0
    %s36 = scalar_select %p35, %s34, 0
    %s37 = ssub.s32 %s18, %s30
    %s38 = ssub.s32 %s33, %s36
    %s39 = sor.u32 %s37, %s38
    %p40 = scmp.eq.s32.totalorder %s39, 0
    %s42 = sadd.s32 %s41, 1
    %s43 = scalar_select %p40, %s41, %s42
    %p46 = pneg %p40
    %p47 = scmp.eq.s32.totalorder %s11, 3
    %p48 = por %p46, %p47
    %p49 = scmp.ne.s32.totalorder %s41, %s44
    %p50 = scmp.eq.s32.totalorder %s11, 0
    %p51 = por %p49, %p50
    %p52 = scmp.ne.s32.totalorder %s41, %s44
    %p53 = scmp.eq.s32.totalorder %s16, 3
    %p54 = por %p52, %p53
    %p55 = scmp.ne.s32.totalorder %s44, %s45
    %p56 = scmp.eq.s32.totalorder %s16, 0
    %p57 = por %p55, %p56
    %p58 = scmp.ne.s32.totalorder %s44, %s45
    %p59 = scmp.eq.s32.totalorder %s17, 3
    %p60 = por %p58, %p59
    %p62 = scmp.ne.s32.totalorder %s45, %s61
    %p63 = scmp.eq.s32.totalorder %s17, 0
    %p64 = por %p62, %p63
    %s65 = ssub.s32 %s18, %s30
    %s66 = ssub.s32 %s19, %s26
    %s67 = sor.u32 %s65, %s66
    %p68 = scmp.eq.s32.totalorder %s67, 0
    %s70 = sadd.s32 %s69, 1
    %s71 = scalar_select %p68, %s69, %s70
    %p74 = pneg %p68
    %p75 = scmp.eq.s32.totalorder %s11, 3
    %p76 = por %p74, %p75
    %p77 = scmp.ne.s32.totalorder %s69, %s72
    %p78 = scmp.eq.s32.totalorder %s11, 0
    %p79 = por %p77, %p78
    %p80 = scmp.ne.s32.totalorder %s69, %s72
    %p81 = scmp.eq.s32.totalorder %s16, 3
    %p82 = por %p80, %p81
    %p83 = scmp.ne.s32.totalorder %s72, %s73
    %p84 = scmp.eq.s32.totalorder %s16, 0
    %p85 = por %p83, %p84
    %p86 = scmp.ne.s32.totalorder %s72, %s73
    %p87 = scmp.eq.s32.totalorder %s17, 3
    %p88 = por %p86, %p87
    %p90 = scmp.ne.s32.totalorder %s73, %s89
    %p91 = scmp.eq.s32.totalorder %s17, 0
    %p92 = por %p90, %p91
    %s93 = sadd.s32 %s19, 1
    %p94 = scmp.lt.s32.totalorder %s93, 1
    %s95 = scalar_select %p94, %s93, 1
    %s96 = sadd.s32 %s26, 1
    %p97 = scmp.lt.s32.totalorder %s96, 1
    %s98 = scalar_select %p97, %s96, 1
    %s99 = ssub.s32 %s18, %s30
    %s100 = ssub.s32 %s95, %s98
    %s101 = sor.u32 %s99, %s100
    %p102 = scmp.eq.s32.totalorder %s101, 0
    %s104 = sadd.s32 %s103, 1
    %s105 = scalar_select %p102, %s103, %s104
    %p108 = pneg %p102
    %p109 = scmp.eq.s32.totalorder %s11, 3
    %p110 = por %p108, %p109
    %p111 = scmp.ne.s32.totalorder %s103, %s106
    %p112 = scmp.eq.s32.totalorder %s11, 0
    %p113 = por %p111, %p112
    %p114 = scmp.ne.s32.totalorder %s103, %s106
    %p115 = scmp.eq.s32.totalorder %s16, 3
    %p116 = por %p114, %p115
    %p117 = scmp.ne.s32.totalorder %s106, %s107
    %p118 = scmp.eq.s32.totalorder %s16, 0
    %p119 = por %p117, %p118
    %p120 = scmp.ne.s32.totalorder %s106, %s107
    %p121 = scmp.eq.s32.totalorder %s17, 3
    %p122 = por %p120, %p121
    %p124 = scmp.ne.s32.totalorder %s107, %s123
    %p125 = scmp.eq.s32.totalorder %s17, 0
    %p126 = por %p124, %p125
    %s128 = sadd.s32 %s127, 1
    %p131 = scmp.eq.s32.totalorder %s11, 3
    %p132 = scmp.ne.s32.totalorder %s127, %s129
    %p133 = scmp.eq.s32.totalorder %s11, 0
    %p134 = por %p132, %p133
    %p135 = scmp.ne.s32.totalorder %s127, %s129
    %p136 = scmp.eq.s32.totalorder %s16, 3
    %p137 = por %p135, %p136
    %p138 = scmp.ne.s32.totalorder %s129, %s130
    %p139 = scmp.eq.s32.totalorder %s16, 0
    %p140 = por %p138, %p139
    %p141 = scmp.ne.s32.totalorder %s129, %s130
    %p142 = scmp.eq.s32.totalorder %s17, 3
    %p143 = por %p141, %p142
    %p145 = scmp.ne.s32.totalorder %s130, %s144
    %p146 = scmp.eq.s32.totalorder %s17, 0
    %p147 = por %p145, %p146
    %s149 = sadd.s32 %s148, 1
    %p152 = scmp.eq.s32.totalorder %s11, 3
    %p153 = scmp.ne.s32.totalorder %s148, %s150
    %p154 = scmp.eq.s32.totalorder %s11, 0
    %p155 = por %p153, %p154
    %p156 = scmp.ne.s32.totalorder %s148, %s150
    %p157 = scmp.eq.s32.totalorder %s16, 3
    %p158 = por %p156, %p157
    %p159 = scmp.ne.s32.totalorder %s150, %s151
    %p160 = scmp.eq.s32.totalorder %s16, 0
    %p161 = por %p159, %p160
    %p162 = scmp.ne.s32.totalorder %s150, %s151
    %p163 = scmp.eq.s32.totalorder %s17, 3
    %p164 = por %p162, %p163
    %p166 = scmp.ne.s32.totalorder %s151, %s165
    %p167 = scmp.eq.s32.totalorder %s17, 0
    %p168 = por %p166, %p167
    %s169 = ssub.s32 %s18, %s30
    %s170 = ssub.s32 %s19, %s26
    %s171 = sor.u32 %s169, %s170
    %p172 = scmp.eq.s32.totalorder %s171, 0
    %s174 = sadd.s32 %s173, 1
    %s175 = scalar_select %p172, %s173, %s174
    %p178 = pneg %p172
    %p179 = scmp.eq.s32.totalorder %s11, 3
    %p180 = por %p178, %p179
    %p181 = scmp.ne.s32.totalorder %s173, %s176
    %p182 = scmp.eq.s32.totalorder %s11, 0
    %p183 = por %p181, %p182
    %p184 = scmp.ne.s32.totalorder %s173, %s176
    %p185 = scmp.eq.s32.totalorder %s16, 3
    %p186 = por %p184, %p185
    %p187 = scmp.ne.s32.totalorder %s176, %s177
    %p188 = scmp.eq.s32.totalorder %s16, 0
    %p189 = por %p187, %p188
    %p190 = scmp.ne.s32.totalorder %s176, %s177
    %p191 = scmp.eq.s32.totalorder %s17, 3
    %p192 = por %p190, %p191
    %p194 = scmp.ne.s32.totalorder %s177, %s193
    %p195 = scmp.eq.s32.totalorder %s17, 0
    %p196 = por %p194, %p195
    %p197 = scmp.le.s32.totalorder 1, %s11
    %p198 = scmp.lt.s32.totalorder %s11, 5
    %p199 = pnand %p197, %p198
    %p200 = pneg %p199
    // Predicated region
    $region9: #{tispp_forward.3} parent=5 // pred_check
      _
    $region10: #{tispp_forward.3} parent=5 // pred_check_branch
      %202 = sbr.rel (%p199) target = $region12
    $region11: #{tispp_forward.3} parent=5 // pred_region
      %s203 = ssub.s32 %s11, 1
      // Predicated region
      $region13: #{tispp_forward.3} parent=11 // pred_check
        %p204 = pneg %p140
      $region14: #{tispp_forward.3} parent=11 // pred_check_branch
        %206 = sbr.rel (%p204) target = $region16
      $region15: #{tispp_forward.3} parent=11 // pred_region
        _
      $region16: #{tispp_forward.3} parent=11 // pred_fallthru
        _
      // Predicated region
      $region17: #{tispp_forward.3} parent=11 // pred_check
        %p207 = pneg %p161
      $region18: #{tispp_forward.3} parent=11 // pred_check_branch
        %209 = sbr.rel (%p207) target = $region20
      $region19: #{tispp_forward.3} parent=11 // pred_region
        _
      $region20: #{tispp_forward.3} parent=11 // pred_fallthru
        _
    $region12: #{tispp_forward.3} parent=5 // pred_fallthru
      _
    %p210 = scmp.lt.s32.totalorder %s11, 4
    // Predicated region
    $region21: #{tispp_forward.3} parent=5 // pred_check
      %p211 = pneg %p210
    $region22: #{tispp_forward.3} parent=5 // pred_check_branch
      %213 = sbr.rel (%p211) target = $region24
    $region23: #{tispp_forward.3} parent=5 // pred_region
      // Predicated region
      $region25: #{tispp_forward.3} parent=23 // pred_check
        %p214 = pneg %p51
      $region26: #{tispp_forward.3} parent=23 // pred_check_branch
        %216 = sbr.rel (%p214) target = $region28
      $region27: #{tispp_forward.3} parent=23 // pred_region
        %s217 = ssub.s32 %s19, 1
        %p218 = scmp.gt.s32.totalorder %s217, 0
        %s219 = scalar_select %p218, %s217, 0
        %s220 = smul.u32 8, %s219
        %p221 = scmp.lt.s32.totalorder %s18, 1
        %s222 = scalar_select %p221, %s18, 1
        %p223 = scmp.lt.s32.totalorder %s220, 15
        %s224 = scalar_select %p223, %s220, 15
        %s225 = smul.addr %s224, 2
        %s226 = smul.addr %s222, 32
        %s227 = sadd.s32 %s225, %s226
        %s228 = smul.addr %s227, 4
        %s229 = scalar_lea.vmem %s0, %s228
        %s230 = ssub.s32 %s19, 1
        %p231 = scmp.gt.s32.totalorder %s230, 0
        %s232 = scalar_select %p231, %s230, 0
        %s233 = smul.u32 8, %s232
      $region28: #{tispp_forward.3} parent=23 // pred_fallthru
        _
      // Predicated region
      $region29: #{tispp_forward.3} parent=23 // pred_check
        %p234 = pneg %p79
      $region30: #{tispp_forward.3} parent=23 // pred_check_branch
        %236 = sbr.rel (%p234) target = $region32
      $region31: #{tispp_forward.3} parent=23 // pred_region
        %s237 = smul.u32 8, %s19
        %p238 = scmp.lt.s32.totalorder %s18, 1
        %s239 = scalar_select %p238, %s18, 1
        %p240 = scmp.lt.s32.totalorder %s237, 15
        %s241 = scalar_select %p240, %s237, 15
        %s242 = smul.addr %s241, 2
        %s243 = smul.addr %s239, 32
        %s244 = sadd.s32 %s242, %s243
        %s245 = smul.addr %s244, 4
        %s246 = scalar_lea.vmem %s1, %s245
        %s247 = smul.u32 8, %s19
      $region32: #{tispp_forward.3} parent=23 // pred_fallthru
        _
      // Predicated region
      $region33: #{tispp_forward.3} parent=23 // pred_check
        %p248 = pneg %p113
      $region34: #{tispp_forward.3} parent=23 // pred_check_branch
        %250 = sbr.rel (%p248) target = $region36
      $region35: #{tispp_forward.3} parent=23 // pred_region
        %s251 = sadd.s32 %s19, 1
        %p252 = scmp.lt.s32.totalorder %s251, 1
        %s253 = scalar_select %p252, %s251, 1
        %s254 = smul.u32 8, %s253
        %p255 = scmp.lt.s32.totalorder %s18, 1
        %s256 = scalar_select %p255, %s18, 1
        %p257 = scmp.lt.s32.totalorder %s254, 15
        %s258 = scalar_select %p257, %s254, 15
        %s259 = smul.addr %s258, 2
        %s260 = smul.addr %s256, 32
        %s261 = sadd.s32 %s259, %s260
        %s262 = smul.addr %s261, 4
        %s263 = scalar_lea.vmem %s2, %s262
        %s264 = sadd.s32 %s19, 1
        %p265 = scmp.lt.s32.totalorder %s264, 1
        %s266 = scalar_select %p265, %s264, 1
        %s267 = smul.u32 8, %s266
      $region36: #{tispp_forward.3} parent=23 // pred_fallthru
        _
    $region24: #{tispp_forward.3} parent=5 // pred_fallthru
      _
    %p268 = scmp.le.s32.totalorder 1, %s11
    %p269 = scmp.lt.s32.totalorder %s11, 5
    %p270 = pnand %p268, %p269
    %p271 = pneg %p270
    // Predicated region
    $region37: #{tispp_forward.3} parent=5 // pred_check
      _
    $region38: #{tispp_forward.3} parent=5 // pred_check_branch
      %273 = sbr.rel (%p270) target = $region40
    $region39: #{tispp_forward.3} parent=5 // pred_region
      %s274 = ssub.s32 %s11, 1
      %s275 = ssub.s32 %s21, 1
      %p276 = scmp.gt.s32.totalorder %s275, 0
      %s277 = scalar_select %p276, %s275, 0
      %s278 = smul.u32 8, %s277
      %p279 = scmp.lt.s32.totalorder %s20, 1
      %s280 = scalar_select %p279, %s20, 1
      %p281 = scmp.lt.s32.totalorder %s278, 15
      %s282 = scalar_select %p281, %s278, 15
      %s283 = smul.addr %s282, 2
      %s284 = smul.addr %s280, 32
      %s285 = sadd.s32 %s283, %s284
      %s286 = smul.addr %s285, 4
      %s287 = scalar_lea.vmem %s0, %s286
      %p288 = pneg %p57
      %p289 = pneg %p54
      %s290 = smul.u32 8, %s21
      %p291 = scmp.lt.s32.totalorder %s20, 1
      %s292 = scalar_select %p291, %s20, 1
      %p293 = scmp.lt.s32.totalorder %s290, 15
      %s294 = scalar_select %p293, %s290, 15
      %s295 = smul.addr %s294, 2
      %s296 = smul.addr %s292, 32
      %s297 = sadd.s32 %s295, %s296
      %s298 = smul.addr %s297, 4
      %s299 = scalar_lea.vmem %s1, %s298
      %p300 = pneg %p85
      %p301 = pneg %p82
      %s302 = sadd.s32 %s21, 1
      %p303 = scmp.lt.s32.totalorder %s302, 1
      %s304 = scalar_select %p303, %s302, 1
      %s305 = smul.u32 8, %s304
      %p306 = scmp.lt.s32.totalorder %s20, 1
      %s307 = scalar_select %p306, %s20, 1
      %p308 = scmp.lt.s32.totalorder %s305, 15
      %s309 = scalar_select %p308, %s305, 15
      %s310 = smul.addr %s309, 2
      %s311 = smul.addr %s307, 32
      %s312 = sadd.s32 %s310, %s311
      %s313 = smul.addr %s312, 4
      %s314 = scalar_lea.vmem %s2, %s313
      %p315 = pneg %p119
      %p316 = pneg %p116
      %p317 = pneg %p140
      %p318 = pneg %p137
      %p319 = pneg %p161
      %p320 = pneg %p158
      %p321 = pneg %p189
      %p322 = pneg %p186
      %s323 = smul.u32 8, %s21
      %p324 = scmp.lt.s32.totalorder %s20, 1
      %s325 = scalar_select %p324, %s20, 1
      %p326 = scmp.lt.s32.totalorder %s323, 15
      %s327 = scalar_select %p326, %s323, 15
      %s328 = smul.addr %s327, 2
      %s329 = smul.addr %s325, 32
      %s330 = sadd.s32 %s328, %s329
      %s331 = smul.addr %s330, 4
      %s332 = scalar_lea.vmem %s5, %s331
      %s333 = ssub.s32 %s21, 1
      %p334 = scmp.gt.s32.totalorder %s333, 0
      %s335 = scalar_select %p334, %s333, 0
      %s336 = smul.u32 8, %s335
      %p337 = scmp.lt.s32.totalorder %s20, 1
      %s338 = scalar_select %p337, %s20, 1
      %p339 = scmp.lt.s32.totalorder %s336, 15
      %s340 = scalar_select %p339, %s336, 15
      %s341 = smul.addr %s340, 2
      %s342 = smul.addr %s338, 32
      %s343 = sadd.s32 %s341, %s342
      %s344 = smul.addr %s343, 4
      %s345 = scalar_lea.vmem %s0, %s344
      %s346 = ssub.s32 %s21, 1
      %p347 = scmp.gt.s32.totalorder %s346, 0
      %s348 = scalar_select %p347, %s346, 0
      %s349 = smul.u32 8, %s348
      %s350 = smul.u32 8, %s21
      %p351 = scmp.lt.s32.totalorder %s20, 1
      %s352 = scalar_select %p351, %s20, 1
      %p353 = scmp.lt.s32.totalorder %s350, 15
      %s354 = scalar_select %p353, %s350, 15
      %s355 = smul.addr %s354, 2
      %s356 = smul.addr %s352, 32
      %s357 = sadd.s32 %s355, %s356
      %s358 = smul.addr %s357, 4
      %s359 = scalar_lea.vmem %s1, %s358
      %s360 = smul.u32 8, %s21
      %s361 = sadd.s32 %s21, 1
      %p362 = scmp.lt.s32.totalorder %s361, 1
      %s363 = scalar_select %p362, %s361, 1
      %s364 = smul.u32 8, %s363
      %p365 = scmp.lt.s32.totalorder %s20, 1
      %s366 = scalar_select %p365, %s20, 1
      %p367 = scmp.lt.s32.totalorder %s364, 15
      %s368 = scalar_select %p367, %s364, 15
      %s369 = smul.addr %s368, 2
      %s370 = smul.addr %s366, 32
      %s371 = sadd.s32 %s369, %s370
      %s372 = smul.addr %s371, 4
      %s373 = scalar_lea.vmem %s2, %s372
      %s374 = sadd.s32 %s21, 1
      %p375 = scmp.lt.s32.totalorder %s374, 1
      %s376 = scalar_select %p375, %s374, 1
      %s377 = smul.u32 8, %s376
      %s378 = smul.u32 8, %s21
      %p379 = scmp.lt.s32.totalorder %s20, 1
      %s380 = scalar_select %p379, %s20, 1
      %p381 = scmp.lt.s32.totalorder %s378, 15
      %s382 = scalar_select %p381, %s378, 15
      %s383 = smul.addr %s382, 2
      %s384 = smul.addr %s380, 32
      %s385 = sadd.s32 %s383, %s384
      %s386 = smul.addr %s385, 4
      %s387 = scalar_lea.vmem %s5, %s386
      %s388 = smul.u32 8, %s21
      %391 = vst [vmem:[#allocation2] sm:$0xf] 4286644096
      %392 = vst [vmem:[#allocation2 + $0x4] sm:$0xf] 4286644096
      %393 = vst [vmem:[#allocation2 + $0x8] sm:$0x3] 4286644096
      %394 = vst [vmem:[#allocation2 + $0xc] sm:$0xf] 4286644096
      %395 = vst [vmem:[#allocation2 + $0x10] sm:$0xf] 4286644096
      %396 = vst [vmem:[#allocation2 + $0x14] sm:$0x3] 4286644096
      %s397 = scalar_lea.vmem [#allocation2], 264
      %398 = vst [vmem:[%s397] sm:$0xf] 4286644096
      %399 = vst [vmem:[%s397 + $0x4] sm:$0xf] 4286644096
      %400 = vst [vmem:[%s397 + $0x8] sm:$0x3] 4286644096
      %401 = vst [vmem:[%s397 + $0xc] sm:$0xf] 4286644096
      %402 = vst [vmem:[%s397 + $0x10] sm:$0xf] 4286644096
      %403 = vst [vmem:[%s397 + $0x14] sm:$0x3] 4286644096
      %404 = vst [vmem:[#allocation2] sm:$0x1] 4286644096
      %405 = vst [vmem:[#allocation2 + $0xc] sm:$0x1] 4286644096
      %406 = vst [vmem:[#allocation2 + $0x18] sm:$0x1] 4286644096
      %407 = vst [vmem:[#allocation2 + $0x24] sm:$0x1] 4286644096
      %408 = vst [vmem:[#allocation2 + $0x30] sm:$0x1] 4286644096
      %409 = vst [vmem:[#allocation2 + $0x3c] sm:$0x1] 4286644096
      %410 = vst [vmem:[#allocation2 + $0x48] sm:$0x1] 4286644096
      %411 = vst [vmem:[#allocation2 + $0x54] sm:$0x1] 4286644096
      %412 = vst [vmem:[#allocation2 + $0x60] sm:$0x1] 4286644096
      %413 = vst [vmem:[#allocation2 + $0x6c] sm:$0x1] 4286644096
      %414 = vst [vmem:[#allocation2 + $0x78] sm:$0x1] 4286644096
      %415 = vst [vmem:[#allocation2 + $0x84] sm:$0x1] 4286644096
      %416 = vst [vmem:[#allocation2 + $0x90] sm:$0x1] 4286644096
      %417 = vst [vmem:[#allocation2 + $0x9c] sm:$0x1] 4286644096
      %418 = vst [vmem:[#allocation2 + $0xa8] sm:$0x1] 4286644096
      %419 = vst [vmem:[#allocation2 + $0xb4] sm:$0x1] 4286644096
      %420 = vst [vmem:[#allocation2 + $0xc0] sm:$0x1] 4286644096
      %421 = vst [vmem:[#allocation2 + $0xcc] sm:$0x1] 4286644096
      %422 = vst [vmem:[#allocation2 + $0xd8] sm:$0x1] 4286644096
      %423 = vst [vmem:[#allocation2 + $0xe4] sm:$0x1] 4286644096
      %424 = vst [vmem:[#allocation2 + $0xf0] sm:$0x1] 4286644096
      %425 = vst [vmem:[#allocation2 + $0xfc] sm:$0x1] 4286644096
      %426 = vst [vmem:[#allocation2 + $0x108] sm:$0x1] 4286644096
      %427 = vst [vmem:[#allocation2 + $0x114] sm:$0x1] 4286644096
      %428 = vst [vmem:[#allocation2 + $0x8] sm:$0x2] 4286644096
      %429 = vst [vmem:[#allocation2 + $0x14] sm:$0x2] 4286644096
      %430 = vst [vmem:[#allocation2 + $0x20] sm:$0x2] 4286644096
      %431 = vst [vmem:[#allocation2 + $0x2c] sm:$0x2] 4286644096
      %432 = vst [vmem:[#allocation2 + $0x38] sm:$0x2] 4286644096
      %433 = vst [vmem:[#allocation2 + $0x44] sm:$0x2] 4286644096
      %434 = vst [vmem:[#allocation2 + $0x50] sm:$0x2] 4286644096
      %435 = vst [vmem:[#allocation2 + $0x5c] sm:$0x2] 4286644096
      %436 = vst [vmem:[#allocation2 + $0x68] sm:$0x2] 4286644096
      %437 = vst [vmem:[#allocation2 + $0x74] sm:$0x2] 4286644096
      %438 = vst [vmem:[#allocation2 + $0x80] sm:$0x2] 4286644096
      %439 = vst [vmem:[#allocation2 + $0x8c] sm:$0x2] 4286644096
      %440 = vst [vmem:[#allocation2 + $0x98] sm:$0x2] 4286644096
      %441 = vst [vmem:[#allocation2 + $0xa4] sm:$0x2] 4286644096
      %442 = vst [vmem:[#allocation2 + $0xb0] sm:$0x2] 4286644096
      %443 = vst [vmem:[#allocation2 + $0xbc] sm:$0x2] 4286644096
      %444 = vst [vmem:[#allocation2 + $0xc8] sm:$0x2] 4286644096
      %445 = vst [vmem:[#allocation2 + $0xd4] sm:$0x2] 4286644096
      %446 = vst [vmem:[#allocation2 + $0xe0] sm:$0x2] 4286644096
      %447 = vst [vmem:[#allocation2 + $0xec] sm:$0x2] 4286644096
      %448 = vst [vmem:[#allocation2 + $0xf8] sm:$0x2] 4286644096
      %449 = vst [vmem:[#allocation2 + $0x104] sm:$0x2] 4286644096
      %450 = vst [vmem:[#allocation2 + $0x110] sm:$0x2] 4286644096
      %451 = vst [vmem:[#allocation2 + $0x11c] sm:$0x2] 4286644096
      %p452 = scmp.gt.s32.totalorder %s21, 0
      %s453 = scalar_lea.vmem %s345, 16
      %v454 = vld [vmem:[%s453] sm:$0xf]
      %v455 = vld [vmem:[%s453 + $0x4] sm:$0xf]
      %v456 = vld [vmem:[%s453 + $0x8] sm:$0xf]
      %v457 = vld [vmem:[%s453 + $0xc] sm:$0xf]
      %v458 = vld [vmem:[%s453 + $0x10] sm:$0xf]
      %v459 = vld [vmem:[%s453 + $0x14] sm:$0xf]
      %v460 = vld [vmem:[%s453 + $0x18] sm:$0xf]
      %v461 = vld [vmem:[%s453 + $0x1c] sm:$0xf]
      %v462 = vld [vmem:[%s453 + $0x20] sm:$0xf]
      %v463 = vld [vmem:[%s453 + $0x24] sm:$0xf]
      %v464 = vld [vmem:[%s453 + $0x28] sm:$0xf]
      %v465 = vld [vmem:[%s453 + $0x2c] sm:$0xf]
      %s466 = scalar_select %p452, 1, 0
      %v467 = vstv %s466
      %vm468 = vcmp.eq.s32.totalorder %v467, 1
      %v469 = vsel %vm468, %v454, 4286644096
      %v470 = vsel %vm468, %v455, 4286644096
      %v471 = vsel %vm468, %v456, 4286644096
      %v472 = vsel %vm468, %v457, 4286644096
      %v473 = vsel %vm468, %v458, 4286644096
      %v474 = vsel %vm468, %v459, 4286644096
      %v475 = vsel %vm468, %v460, 4286644096
      %v476 = vsel %vm468, %v461, 4286644096
      %v477 = vsel %vm468, %v462, 4286644096
      %v478 = vsel %vm468, %v463, 4286644096
      %v479 = vsel %vm468, %v464, 4286644096
      %v480 = vsel %vm468, %v465, 4286644096
      %vm493 = vcmask 1040384
      %vm494 = vcmask 1044484
      %vm495 = vmor %vm493, %vm494
      %v496 = vrot.slane %v469, 7
      %v497 = vrot.slane %v496, 4
      %v498 = vrot.slane %v470, 7
      %v499 = vsel %vm495, %v497, %v498
      %v500 = vrot.slane %v498, 4
      %v501 = vrot.slane %v471, 7
      %v502 = vrot.slane %v501, 4
      %v503 = vrot.slane %v472, 7
      %v504 = vsel %vm495, %v502, %v503
      %v505 = vrot.slane %v503, 4
      %v506 = vrot.slane %v473, 7
      %v507 = vrot.slane %v506, 4
      %v508 = vrot.slane %v474, 7
      %v509 = vsel %vm495, %v507, %v508
      %v510 = vrot.slane %v508, 4
      %v511 = vrot.slane %v475, 7
      %v512 = vrot.slane %v511, 4
      %v513 = vrot.slane %v476, 7
      %v514 = vsel %vm495, %v512, %v513
      %v515 = vrot.slane %v513, 4
      %v516 = vrot.slane %v477, 7
      %v517 = vrot.slane %v516, 4
      %v518 = vrot.slane %v478, 7
      %v519 = vsel %vm495, %v517, %v518
      %v520 = vrot.slane %v518, 4
      %v521 = vrot.slane %v479, 7
      %v522 = vrot.slane %v521, 4
      %v523 = vrot.slane %v480, 7
      %v524 = vsel %vm495, %v522, %v523
      %v525 = vrot.slane %v523, 4
      %s544 = scalar_lea.vmem [#allocation2], 24
      %545 = vst [vmem:[%s544] sm:$0xe] %v496
      %546 = vst [vmem:[%s544 + $0x4] sm:$0xf] %v499
      %547 = vst [vmem:[%s544 + $0x8] sm:$0x1] %v500
      %548 = vst [vmem:[%s544 + $0xc] sm:$0xe] %v501
      %549 = vst [vmem:[%s544 + $0x10] sm:$0xf] %v504
      %550 = vst [vmem:[%s544 + $0x14] sm:$0x1] %v505
      %551 = vst [vmem:[%s544 + $0x18] sm:$0xe] %v506
      %552 = vst [vmem:[%s544 + $0x1c] sm:$0xf] %v509
      %553 = vst [vmem:[%s544 + $0x20] sm:$0x1] %v510
      %554 = vst [vmem:[%s544 + $0x24] sm:$0xe] %v511
      %555 = vst [vmem:[%s544 + $0x28] sm:$0xf] %v514
      %556 = vst [vmem:[%s544 + $0x2c] sm:$0x1] %v515
      %557 = vst [vmem:[%s544 + $0x30] sm:$0xe] %v516
      %558 = vst [vmem:[%s544 + $0x34] sm:$0xf] %v519
      %559 = vst [vmem:[%s544 + $0x38] sm:$0x1] %v520
      %560 = vst [vmem:[%s544 + $0x3c] sm:$0xe] %v521
      %561 = vst [vmem:[%s544 + $0x40] sm:$0xf] %v524
      %562 = vst [vmem:[%s544 + $0x44] sm:$0x1] %v525
      %p563 = scmp.lt.s32.totalorder %s21, 1
      %v564 = vld [vmem:[%s373] sm:$0xf]
      %v565 = vld [vmem:[%s373 + $0x4] sm:$0xf]
      %v566 = vld [vmem:[%s373 + $0x8] sm:$0xf]
      %v567 = vld [vmem:[%s373 + $0xc] sm:$0xf]
      %v568 = vld [vmem:[%s373 + $0x10] sm:$0xf]
      %v569 = vld [vmem:[%s373 + $0x14] sm:$0xf]
      %v570 = vld [vmem:[%s373 + $0x18] sm:$0xf]
      %v571 = vld [vmem:[%s373 + $0x1c] sm:$0xf]
      %v572 = vld [vmem:[%s373 + $0x20] sm:$0xf]
      %v573 = vld [vmem:[%s373 + $0x24] sm:$0xf]
      %v574 = vld [vmem:[%s373 + $0x28] sm:$0xf]
      %v575 = vld [vmem:[%s373 + $0x2c] sm:$0xf]
      %s576 = scalar_select %p563, 1, 0
      %v577 = vstv %s576
      %vm578 = vcmp.eq.s32.totalorder %v577, 1
      %v579 = vsel %vm578, %v564, 4286644096
      %v580 = vsel %vm578, %v565, 4286644096
      %v581 = vsel %vm578, %v566, 4286644096
      %v582 = vsel %vm578, %v567, 4286644096
      %v583 = vsel %vm578, %v568, 4286644096
      %v584 = vsel %vm578, %v569, 4286644096
      %v585 = vsel %vm578, %v570, 4286644096
      %v586 = vsel %vm578, %v571, 4286644096
      %v587 = vsel %vm578, %v572, 4286644096
      %v588 = vsel %vm578, %v573, 4286644096
      %v589 = vsel %vm578, %v574, 4286644096
      %v590 = vsel %vm578, %v575, 4286644096
      %v603 = vrot.slane %v579, 7
      %v604 = vrot.slane %v603, 4
      %v605 = vrot.slane %v580, 7
      %v606 = vsel %vm495, %v604, %v605
      %v607 = vrot.slane %v605, 4
      %v608 = vrot.slane %v581, 7
      %v609 = vrot.slane %v608, 4
      %v610 = vrot.slane %v582, 7
      %v611 = vsel %vm495, %v609, %v610
      %v612 = vrot.slane %v610, 4
      %v613 = vrot.slane %v583, 7
      %v614 = vrot.slane %v613, 4
      %v615 = vrot.slane %v584, 7
      %v616 = vsel %vm495, %v614, %v615
      %v617 = vrot.slane %v615, 4
      %v618 = vrot.slane %v585, 7
      %v619 = vrot.slane %v618, 4
      %v620 = vrot.slane %v586, 7
      %v621 = vsel %vm495, %v619, %v620
      %v622 = vrot.slane %v620, 4
      %v623 = vrot.slane %v587, 7
      %v624 = vrot.slane %v623, 4
      %v625 = vrot.slane %v588, 7
      %v626 = vsel %vm495, %v624, %v625
      %v627 = vrot.slane %v625, 4
      %v628 = vrot.slane %v589, 7
      %v629 = vrot.slane %v628, 4
      %v630 = vrot.slane %v590, 7
      %v631 = vsel %vm495, %v629, %v630
      %v632 = vrot.slane %v630, 4
      %s651 = scalar_lea.vmem [#allocation2], 192
      %652 = vst [vmem:[%s651] sm:$0xe] %v603
      %653 = vst [vmem:[%s651 + $0x4] sm:$0xf] %v606
      %654 = vst [vmem:[%s651 + $0x8] sm:$0x1] %v607
      %655 = vst [vmem:[%s651 + $0xc] sm:$0xe] %v608
      %656 = vst [vmem:[%s651 + $0x10] sm:$0xf] %v611
      %657 = vst [vmem:[%s651 + $0x14] sm:$0x1] %v612
      %658 = vst [vmem:[%s651 + $0x18] sm:$0xe] %v613
      %659 = vst [vmem:[%s651 + $0x1c] sm:$0xf] %v616
      %660 = vst [vmem:[%s651 + $0x20] sm:$0x1] %v617
      %661 = vst [vmem:[%s651 + $0x24] sm:$0xe] %v618
      %662 = vst [vmem:[%s651 + $0x28] sm:$0xf] %v621
      %663 = vst [vmem:[%s651 + $0x2c] sm:$0x1] %v622
      %664 = vst [vmem:[%s651 + $0x30] sm:$0xe] %v623
      %665 = vst [vmem:[%s651 + $0x34] sm:$0xf] %v626
      %666 = vst [vmem:[%s651 + $0x38] sm:$0x1] %v627
      %667 = vst [vmem:[%s651 + $0x3c] sm:$0xe] %v628
      %668 = vst [vmem:[%s651 + $0x40] sm:$0xf] %v631
      %669 = vst [vmem:[%s651 + $0x44] sm:$0x1] %v632
      %v670 = vld [vmem:[%s359] sm:$0xf]
      %v671 = vld [vmem:[%s359 + $0x4] sm:$0xf]
      %v672 = vld [vmem:[%s359 + $0x8] sm:$0xf]
      %v673 = vld [vmem:[%s359 + $0xc] sm:$0xf]
      %v674 = vld [vmem:[%s359 + $0x10] sm:$0xf]
      %v675 = vld [vmem:[%s359 + $0x14] sm:$0xf]
      %v676 = vld [vmem:[%s359 + $0x18] sm:$0xf]
      %v677 = vld [vmem:[%s359 + $0x1c] sm:$0xf]
      %v678 = vld [vmem:[%s359 + $0x20] sm:$0xf]
      %v679 = vld [vmem:[%s359 + $0x24] sm:$0xf]
      %v680 = vld [vmem:[%s359 + $0x28] sm:$0xf]
      %v681 = vld [vmem:[%s359 + $0x2c] sm:$0xf]
      %v682 = vld [vmem:[%s359 + $0x30] sm:$0xf]
      %v683 = vld [vmem:[%s359 + $0x34] sm:$0xf]
      %v684 = vld [vmem:[%s359 + $0x38] sm:$0xf]
      %v685 = vld [vmem:[%s359 + $0x3c] sm:$0xf]
      %v702 = vrot.slane %v670, 7
      %v703 = vrot.slane %v702, 4
      %v704 = vrot.slane %v671, 7
      %v705 = vsel %vm495, %v703, %v704
      %v706 = vrot.slane %v704, 4
      %v707 = vrot.slane %v672, 7
      %v708 = vrot.slane %v707, 4
      %v709 = vrot.slane %v673, 7
      %v710 = vsel %vm495, %v708, %v709
      %v711 = vrot.slane %v709, 4
      %v712 = vrot.slane %v674, 7
      %v713 = vrot.slane %v712, 4
      %v714 = vrot.slane %v675, 7
      %v715 = vsel %vm495, %v713, %v714
      %v716 = vrot.slane %v714, 4
      %v717 = vrot.slane %v676, 7
      %v718 = vrot.slane %v717, 4
      %v719 = vrot.slane %v677, 7
      %v720 = vsel %vm495, %v718, %v719
      %v721 = vrot.slane %v719, 4
      %v722 = vrot.slane %v678, 7
      %v723 = vrot.slane %v722, 4
      %v724 = vrot.slane %v679, 7
      %v725 = vsel %vm495, %v723, %v724
      %v726 = vrot.slane %v724, 4
      %v727 = vrot.slane %v680, 7
      %v728 = vrot.slane %v727, 4
      %v729 = vrot.slane %v681, 7
      %v730 = vsel %vm495, %v728, %v729
      %v731 = vrot.slane %v729, 4
      %v732 = vrot.slane %v682, 7
      %v733 = vrot.slane %v732, 4
      %v734 = vrot.slane %v683, 7
      %v735 = vsel %vm495, %v733, %v734
      %v736 = vrot.slane %v734, 4
      %v737 = vrot.slane %v684, 7
      %v738 = vrot.slane %v737, 4
      %v739 = vrot.slane %v685, 7
      %v740 = vsel %vm495, %v738, %v739
      %v741 = vrot.slane %v739, 4
      %s766 = scalar_lea.vmem [#allocation2], 96
      %767 = vst [vmem:[%s766] sm:$0xe] %v702
      %768 = vst [vmem:[%s766 + $0x4] sm:$0xf] %v705
      %769 = vst [vmem:[%s766 + $0x8] sm:$0x1] %v706
      %770 = vst [vmem:[%s766 + $0xc] sm:$0xe] %v707
      %771 = vst [vmem:[%s766 + $0x10] sm:$0xf] %v710
      %772 = vst [vmem:[%s766 + $0x14] sm:$0x1] %v711
      %773 = vst [vmem:[%s766 + $0x18] sm:$0xe] %v712
      %774 = vst [vmem:[%s766 + $0x1c] sm:$0xf] %v715
      %775 = vst [vmem:[%s766 + $0x20] sm:$0x1] %v716
      %776 = vst [vmem:[%s766 + $0x24] sm:$0xe] %v717
      %777 = vst [vmem:[%s766 + $0x28] sm:$0xf] %v720
      %778 = vst [vmem:[%s766 + $0x2c] sm:$0x1] %v721
      %779 = vst [vmem:[%s766 + $0x30] sm:$0xe] %v722
      %780 = vst [vmem:[%s766 + $0x34] sm:$0xf] %v725
      %781 = vst [vmem:[%s766 + $0x38] sm:$0x1] %v726
      %782 = vst [vmem:[%s766 + $0x3c] sm:$0xe] %v727
      %783 = vst [vmem:[%s766 + $0x40] sm:$0xf] %v730
      %784 = vst [vmem:[%s766 + $0x44] sm:$0x1] %v731
      %785 = vst [vmem:[%s766 + $0x48] sm:$0xe] %v732
      %786 = vst [vmem:[%s766 + $0x4c] sm:$0xf] %v735
      %787 = vst [vmem:[%s766 + $0x50] sm:$0x1] %v736
      %788 = vst [vmem:[%s766 + $0x54] sm:$0xe] %v737
      %789 = vst [vmem:[%s766 + $0x58] sm:$0xf] %v740
      %790 = vst [vmem:[%s766 + $0x5c] sm:$0x1] %v741
      %v791 = vunpack.c.l.b16 %v670
      %v792 = vunpack.c.l.b16 %v671
      %v793 = vunpack.c.l.b16 %v672
      %v794 = vunpack.c.l.b16 %v673
      %v795 = vunpack.c.l.b16 %v674
      %v796 = vunpack.c.l.b16 %v675
      %v797 = vunpack.c.l.b16 %v676
      %v798 = vunpack.c.l.b16 %v677
      %v799 = vunpack.c.l.b16 %v678
      %v800 = vunpack.c.l.b16 %v679
      %v801 = vunpack.c.l.b16 %v680
      %v802 = vunpack.c.l.b16 %v681
      %v803 = vunpack.c.l.b16 %v682
      %v804 = vunpack.c.l.b16 %v683
      %v805 = vunpack.c.l.b16 %v684
      %v806 = vunpack.c.l.b16 %v685
      %v807 = vpack.c.b16 %v792, %v791
      %v808 = vpack.c.b16 %v794, %v793
      %v809 = vpack.c.b16 %v796, %v795
      %v810 = vpack.c.b16 %v798, %v797
      %v811 = vpack.c.b16 %v800, %v799
      %v812 = vpack.c.b16 %v802, %v801
      %v813 = vpack.c.b16 %v804, %v803
      %v814 = vpack.c.b16 %v806, %v805
      %823 = vst [vmem:[#allocation3] sm:$0xff] %v807
      %824 = vst [vmem:[#allocation3 + $0x20] sm:$0xff] %v808
      %825 = vst [vmem:[#allocation3 + $0x40] sm:$0xff] %v809
      %826 = vst [vmem:[#allocation3 + $0x60] sm:$0xff] %v810
      %827 = vst [vmem:[#allocation3 + $0x80] sm:$0xff] %v811
      %828 = vst [vmem:[#allocation3 + $0xa0] sm:$0xff] %v812
      %829 = vst [vmem:[#allocation3 + $0xc0] sm:$0xff] %v813
      %830 = vst [vmem:[#allocation3 + $0xe0] sm:$0xff] %v814
      %v831 = vld [vmem:[#allocation2] sm:$0xf]
      %v832 = vld [vmem:[#allocation2 + $0x4] sm:$0xf]
      %v833 = vld [vmem:[#allocation2 + $0x8] sm:$0x3]
      %v834 = vld [vmem:[#allocation2 + $0xc] sm:$0xf]
      %v835 = vld [vmem:[#allocation2 + $0x10] sm:$0xf]
      %v836 = vld [vmem:[#allocation2 + $0x14] sm:$0x3]
      %v837 = vld [vmem:[#allocation2 + $0x18] sm:$0xf]
      %v838 = vld [vmem:[#allocation2 + $0x1c] sm:$0xf]
      %v839 = vld [vmem:[#allocation2 + $0x20] sm:$0x3]
      %v840 = vld [vmem:[#allocation2 + $0x24] sm:$0xf]
      %v841 = vld [vmem:[#allocation2 + $0x28] sm:$0xf]
      %v842 = vld [vmem:[#allocation2 + $0x2c] sm:$0x3]
      %v843 = vld [vmem:[#allocation2 + $0x30] sm:$0xf]
      %v844 = vld [vmem:[#allocation2 + $0x34] sm:$0xf]
      %v845 = vld [vmem:[#allocation2 + $0x38] sm:$0x3]
      %v846 = vld [vmem:[#allocation2 + $0x3c] sm:$0xf]
      %v847 = vld [vmem:[#allocation2 + $0x40] sm:$0xf]
      %v848 = vld [vmem:[#allocation2 + $0x44] sm:$0x3]
      %v849 = vld [vmem:[#allocation2 + $0x48] sm:$0xf]
      %v850 = vld [vmem:[#allocation2 + $0x4c] sm:$0xf]
      %v851 = vld [vmem:[#allocation2 + $0x50] sm:$0x3]
      %v852 = vld [vmem:[#allocation2 + $0x54] sm:$0xf]
      %v853 = vld [vmem:[#allocation2 + $0x58] sm:$0xf]
      %v854 = vld [vmem:[#allocation2 + $0x5c] sm:$0x3]
      %v855 = vld [vmem:[#allocation2 + $0x60] sm:$0xf]
      %v856 = vld [vmem:[#allocation2 + $0x64] sm:$0xf]
      %v857 = vld [vmem:[#allocation2 + $0x68] sm:$0x3]
      %v858 = vld [vmem:[#allocation2 + $0x6c] sm:$0xf]
      %v859 = vld [vmem:[#allocation2 + $0x70] sm:$0xf]
      %v860 = vld [vmem:[#allocation2 + $0x74] sm:$0x3]
      %v861 = vld [vmem:[#allocation2 + $0x78] sm:$0xf]
      %v862 = vld [vmem:[#allocation2 + $0x7c] sm:$0xf]
      %v863 = vld [vmem:[#allocation2 + $0x80] sm:$0x3]
      %v864 = vld [vmem:[#allocation2 + $0x84] sm:$0xf]
      %v865 = vld [vmem:[#allocation2 + $0x88] sm:$0xf]
      %v866 = vld [vmem:[#allocation2 + $0x8c] sm:$0x3]
      %v867 = vld [vmem:[#allocation2 + $0x90] sm:$0xf]
      %v868 = vld [vmem:[#allocation2 + $0x94] sm:$0xf]
      %v869 = vld [vmem:[#allocation2 + $0x98] sm:$0x3]
      %v870 = vld [vmem:[#allocation2 + $0x9c] sm:$0xf]
      %v871 = vld [vmem:[#allocation2 + $0xa0] sm:$0xf]
      %v872 = vld [vmem:[#allocation2 + $0xa4] sm:$0x3]
      %v873 = vld [vmem:[#allocation2 + $0xa8] sm:$0xf]
      %v874 = vld [vmem:[#allocation2 + $0xac] sm:$0xf]
      %v875 = vld [vmem:[#allocation2 + $0xb0] sm:$0x3]
      %v876 = vld [vmem:[#allocation2 + $0xb4] sm:$0xf]
      %v877 = vld [vmem:[#allocation2 + $0xb8] sm:$0xf]
      %v878 = vld [vmem:[#allocation2 + $0xbc] sm:$0x3]
      %v879 = vld [vmem:[#allocation2 + $0xc0] sm:$0xf]
      %v880 = vld [vmem:[#allocation2 + $0xc4] sm:$0xf]
      %v881 = vld [vmem:[#allocation2 + $0xc8] sm:$0x3]
      %v882 = vld [vmem:[#allocation2 + $0xcc] sm:$0xf]
      %v883 = vld [vmem:[#allocation2 + $0xd0] sm:$0xf]
      %v884 = vld [vmem:[#allocation2 + $0xd4] sm:$0x3]
      %v885 = vld [vmem:[#allocation2 + $0xd8] sm:$0xf]
      %v886 = vld [vmem:[#allocation2 + $0xdc] sm:$0xf]
      %v887 = vld [vmem:[#allocation2 + $0xe0] sm:$0x3]
      %v888 = vld [vmem:[#allocation2 + $0xe4] sm:$0xf]
      %v889 = vld [vmem:[#allocation2 + $0xe8] sm:$0xf]
      %v890 = vld [vmem:[#allocation2 + $0xec] sm:$0x3]
      %s891 = scalar_lea.vmem [#allocation2], 12
      %v892 = vld [vmem:[%s891] sm:$0xf]
      %v893 = vld [vmem:[%s891 + $0x4] sm:$0xf]
      %v894 = vld [vmem:[%s891 + $0x8] sm:$0x3]
      %v895 = vld [vmem:[%s891 + $0xc] sm:$0xf]
      %v896 = vld [vmem:[%s891 + $0x10] sm:$0xf]
      %v897 = vld [vmem:[%s891 + $0x14] sm:$0x3]
      %v898 = vld [vmem:[%s891 + $0x18] sm:$0xf]
      %v899 = vld [vmem:[%s891 + $0x1c] sm:$0xf]
      %v900 = vld [vmem:[%s891 + $0x20] sm:$0x3]
      %v901 = vld [vmem:[%s891 + $0x24] sm:$0xf]
      %v902 = vld [vmem:[%s891 + $0x28] sm:$0xf]
      %v903 = vld [vmem:[%s891 + $0x2c] sm:$0x3]
      %v904 = vld [vmem:[%s891 + $0x30] sm:$0xf]
      %v905 = vld [vmem:[%s891 + $0x34] sm:$0xf]
      %v906 = vld [vmem:[%s891 + $0x38] sm:$0x3]
      %v907 = vld [vmem:[%s891 + $0x3c] sm:$0xf]
      %v908 = vld [vmem:[%s891 + $0x40] sm:$0xf]
      %v909 = vld [vmem:[%s891 + $0x44] sm:$0x3]
      %v910 = vld [vmem:[%s891 + $0x48] sm:$0xf]
      %v911 = vld [vmem:[%s891 + $0x4c] sm:$0xf]
      %v912 = vld [vmem:[%s891 + $0x50] sm:$0x3]
      %v913 = vld [vmem:[%s891 + $0x54] sm:$0xf]
      %v914 = vld [vmem:[%s891 + $0x58] sm:$0xf]
      %v915 = vld [vmem:[%s891 + $0x5c] sm:$0x3]
      %v916 = vld [vmem:[%s891 + $0x60] sm:$0xf]
      %v917 = vld [vmem:[%s891 + $0x64] sm:$0xf]
      %v918 = vld [vmem:[%s891 + $0x68] sm:$0x3]
      %v919 = vld [vmem:[%s891 + $0x6c] sm:$0xf]
      %v920 = vld [vmem:[%s891 + $0x70] sm:$0xf]
      %v921 = vld [vmem:[%s891 + $0x74] sm:$0x3]
      %v922 = vld [vmem:[%s891 + $0x78] sm:$0xf]
      %v923 = vld [vmem:[%s891 + $0x7c] sm:$0xf]
      %v924 = vld [vmem:[%s891 + $0x80] sm:$0x3]
      %v925 = vld [vmem:[%s891 + $0x84] sm:$0xf]
      %v926 = vld [vmem:[%s891 + $0x88] sm:$0xf]
      %v927 = vld [vmem:[%s891 + $0x8c] sm:$0x3]
      %v928 = vld [vmem:[%s891 + $0x90] sm:$0xf]
      %v929 = vld [vmem:[%s891 + $0x94] sm:$0xf]
      %v930 = vld [vmem:[%s891 + $0x98] sm:$0x3]
      %v931 = vld [vmem:[%s891 + $0x9c] sm:$0xf]
      %v932 = vld [vmem:[%s891 + $0xa0] sm:$0xf]
      %v933 = vld [vmem:[%s891 + $0xa4] sm:$0x3]
      %v934 = vld [vmem:[%s891 + $0xa8] sm:$0xf]
      %v935 = vld [vmem:[%s891 + $0xac] sm:$0xf]
      %v936 = vld [vmem:[%s891 + $0xb0] sm:$0x3]
      %v937 = vld [vmem:[%s891 + $0xb4] sm:$0xf]
      %v938 = vld [vmem:[%s891 + $0xb8] sm:$0xf]
      %v939 = vld [vmem:[%s891 + $0xbc] sm:$0x3]
      %v940 = vld [vmem:[%s891 + $0xc0] sm:$0xf]
      %v941 = vld [vmem:[%s891 + $0xc4] sm:$0xf]
      %v942 = vld [vmem:[%s891 + $0xc8] sm:$0x3]
      %v943 = vld [vmem:[%s891 + $0xcc] sm:$0xf]
      %v944 = vld [vmem:[%s891 + $0xd0] sm:$0xf]
      %v945 = vld [vmem:[%s891 + $0xd4] sm:$0x3]
      %v946 = vld [vmem:[%s891 + $0xd8] sm:$0xf]
      %v947 = vld [vmem:[%s891 + $0xdc] sm:$0xf]
      %v948 = vld [vmem:[%s891 + $0xe0] sm:$0x3]
      %v949 = vld [vmem:[%s891 + $0xe4] sm:$0xf]
      %v950 = vld [vmem:[%s891 + $0xe8] sm:$0xf]
      %v951 = vld [vmem:[%s891 + $0xec] sm:$0x3]
      %v952 = vmax.bf16 %v831, %v892
      %v953 = vmax.bf16 %v832, %v893
      %v954 = vmax.bf16 %v833, %v894
      %v955 = vmax.bf16 %v834, %v895
      %v956 = vmax.bf16 %v835, %v896
      %v957 = vmax.bf16 %v836, %v897
      %v958 = vmax.bf16 %v837, %v898
      %v959 = vmax.bf16 %v838, %v899
      %v960 = vmax.bf16 %v839, %v900
      %v961 = vmax.bf16 %v840, %v901
      %v962 = vmax.bf16 %v841, %v902
      %v963 = vmax.bf16 %v842, %v903
      %v964 = vmax.bf16 %v843, %v904
      %v965 = vmax.bf16 %v844, %v905
      %v966 = vmax.bf16 %v845, %v906
      %v967 = vmax.bf16 %v846, %v907
      %v968 = vmax.bf16 %v847, %v908
      %v969 = vmax.bf16 %v848, %v909
      %v970 = vmax.bf16 %v849, %v910
      %v971 = vmax.bf16 %v850, %v911
      %v972 = vmax.bf16 %v851, %v912
      %v973 = vmax.bf16 %v852, %v913
      %v974 = vmax.bf16 %v853, %v914
      %v975 = vmax.bf16 %v854, %v915
      %v976 = vmax.bf16 %v855, %v916
      %v977 = vmax.bf16 %v856, %v917
      %v978 = vmax.bf16 %v857, %v918
      %v979 = vmax.bf16 %v858, %v919
      %v980 = vmax.bf16 %v859, %v920
      %v981 = vmax.bf16 %v860, %v921
      %v982 = vmax.bf16 %v861, %v922
      %v983 = vmax.bf16 %v862, %v923
      %v984 = vmax.bf16 %v863, %v924
      %v985 = vmax.bf16 %v864, %v925
      %v986 = vmax.bf16 %v865, %v926
      %v987 = vmax.bf16 %v866, %v927
      %v988 = vmax.bf16 %v867, %v928
      %v989 = vmax.bf16 %v868, %v929
      %v990 = vmax.bf16 %v869, %v930
      %v991 = vmax.bf16 %v870, %v931
      %v992 = vmax.bf16 %v871, %v932
      %v993 = vmax.bf16 %v872, %v933
      %v994 = vmax.bf16 %v873, %v934
      %v995 = vmax.bf16 %v874, %v935
      %v996 = vmax.bf16 %v875, %v936
      %v997 = vmax.bf16 %v876, %v937
      %v998 = vmax.bf16 %v877, %v938
      %v999 = vmax.bf16 %v878, %v939
      %v1000 = vmax.bf16 %v879, %v940
      %v1001 = vmax.bf16 %v880, %v941
      %v1002 = vmax.bf16 %v881, %v942
      %v1003 = vmax.bf16 %v882, %v943
      %v1004 = vmax.bf16 %v883, %v944
      %v1005 = vmax.bf16 %v884, %v945
      %v1006 = vmax.bf16 %v885, %v946
      %v1007 = vmax.bf16 %v886, %v947
      %v1008 = vmax.bf16 %v887, %v948
      %v1009 = vmax.bf16 %v888, %v949
      %v1010 = vmax.bf16 %v889, %v950
      %v1011 = vmax.bf16 %v890, %v951
      %v1012 = vld [vmem:[%s544] sm:$0xf]
      %v1013 = vld [vmem:[%s544 + $0x4] sm:$0xf]
      %v1014 = vld [vmem:[%s544 + $0x8] sm:$0x3]
      %v1015 = vld [vmem:[%s544 + $0xc] sm:$0xf]
      %v1016 = vld [vmem:[%s544 + $0x10] sm:$0xf]
      %v1017 = vld [vmem:[%s544 + $0x14] sm:$0x3]
      %v1018 = vld [vmem:[%s544 + $0x18] sm:$0xf]
      %v1019 = vld [vmem:[%s544 + $0x1c] sm:$0xf]
      %v1020 = vld [vmem:[%s544 + $0x20] sm:$0x3]
      %v1021 = vld [vmem:[%s544 + $0x24] sm:$0xf]
      %v1022 = vld [vmem:[%s544 + $0x28] sm:$0xf]
      %v1023 = vld [vmem:[%s544 + $0x2c] sm:$0x3]
      %v1024 = vld [vmem:[%s544 + $0x30] sm:$0xf]
      %v1025 = vld [vmem:[%s544 + $0x34] sm:$0xf]
      %v1026 = vld [vmem:[%s544 + $0x38] sm:$0x3]
      %v1027 = vld [vmem:[%s544 + $0x3c] sm:$0xf]
      %v1028 = vld [vmem:[%s544 + $0x40] sm:$0xf]
      %v1029 = vld [vmem:[%s544 + $0x44] sm:$0x3]
      %v1030 = vld [vmem:[%s544 + $0x48] sm:$0xf]
      %v1031 = vld [vmem:[%s544 + $0x4c] sm:$0xf]
      %v1032 = vld [vmem:[%s544 + $0x50] sm:$0x3]
      %v1033 = vld [vmem:[%s544 + $0x54] sm:$0xf]
      %v1034 = vld [vmem:[%s544 + $0x58] sm:$0xf]
      %v1035 = vld [vmem:[%s544 + $0x5c] sm:$0x3]
      %v1036 = vld [vmem:[%s544 + $0x60] sm:$0xf]
      %v1037 = vld [vmem:[%s544 + $0x64] sm:$0xf]
      %v1038 = vld [vmem:[%s544 + $0x68] sm:$0x3]
      %v1039 = vld [vmem:[%s544 + $0x6c] sm:$0xf]
      %v1040 = vld [vmem:[%s544 + $0x70] sm:$0xf]
      %v1041 = vld [vmem:[%s544 + $0x74] sm:$0x3]
      %v1042 = vld [vmem:[%s544 + $0x78] sm:$0xf]
      %v1043 = vld [vmem:[%s544 + $0x7c] sm:$0xf]
      %v1044 = vld [vmem:[%s544 + $0x80] sm:$0x3]
      %v1045 = vld [vmem:[%s544 + $0x84] sm:$0xf]
      %v1046 = vld [vmem:[%s544 + $0x88] sm:$0xf]
      %v1047 = vld [vmem:[%s544 + $0x8c] sm:$0x3]
      %v1048 = vld [vmem:[%s544 + $0x90] sm:$0xf]
      %v1049 = vld [vmem:[%s544 + $0x94] sm:$0xf]
      %v1050 = vld [vmem:[%s544 + $0x98] sm:$0x3]
      %v1051 = vld [vmem:[%s544 + $0x9c] sm:$0xf]
      %v1052 = vld [vmem:[%s544 + $0xa0] sm:$0xf]
      %v1053 = vld [vmem:[%s544 + $0xa4] sm:$0x3]
      %v1054 = vld [vmem:[%s544 + $0xa8] sm:$0xf]
      %v1055 = vld [vmem:[%s544 + $0xac] sm:$0xf]
      %v1056 = vld [vmem:[%s544 + $0xb0] sm:$0x3]
      %v1057 = vld [vmem:[%s544 + $0xb4] sm:$0xf]
      %v1058 = vld [vmem:[%s544 + $0xb8] sm:$0xf]
      %v1059 = vld [vmem:[%s544 + $0xbc] sm:$0x3]
      %v1060 = vld [vmem:[%s544 + $0xc0] sm:$0xf]
      %v1061 = vld [vmem:[%s544 + $0xc4] sm:$0xf]
      %v1062 = vld [vmem:[%s544 + $0xc8] sm:$0x3]
      %v1063 = vld [vmem:[%s544 + $0xcc] sm:$0xf]
      %v1064 = vld [vmem:[%s544 + $0xd0] sm:$0xf]
      %v1065 = vld [vmem:[%s544 + $0xd4] sm:$0x3]
      %v1066 = vld [vmem:[%s544 + $0xd8] sm:$0xf]
      %v1067 = vld [vmem:[%s544 + $0xdc] sm:$0xf]
      %v1068 = vld [vmem:[%s544 + $0xe0] sm:$0x3]
      %v1069 = vld [vmem:[%s544 + $0xe4] sm:$0xf]
      %v1070 = vld [vmem:[%s544 + $0xe8] sm:$0xf]
      %v1071 = vld [vmem:[%s544 + $0xec] sm:$0x3]
      %v1072 = vmax.bf16 %v952, %v1012
      %v1073 = vmax.bf16 %v953, %v1013
      %v1074 = vmax.bf16 %v954, %v1014
      %v1075 = vmax.bf16 %v955, %v1015
      %v1076 = vmax.bf16 %v956, %v1016
      %v1077 = vmax.bf16 %v957, %v1017
      %v1078 = vmax.bf16 %v958, %v1018
      %v1079 = vmax.bf16 %v959, %v1019
      %v1080 = vmax.bf16 %v960, %v1020
      %v1081 = vmax.bf16 %v961, %v1021
      %v1082 = vmax.bf16 %v962, %v1022
      %v1083 = vmax.bf16 %v963, %v1023
      %v1084 = vmax.bf16 %v964, %v1024
      %v1085 = vmax.bf16 %v965, %v1025
      %v1086 = vmax.bf16 %v966, %v1026
      %v1087 = vmax.bf16 %v967, %v1027
      %v1088 = vmax.bf16 %v968, %v1028
      %v1089 = vmax.bf16 %v969, %v1029
      %v1090 = vmax.bf16 %v970, %v1030
      %v1091 = vmax.bf16 %v971, %v1031
      %v1092 = vmax.bf16 %v972, %v1032
      %v1093 = vmax.bf16 %v973, %v1033
      %v1094 = vmax.bf16 %v974, %v1034
      %v1095 = vmax.bf16 %v975, %v1035
      %v1096 = vmax.bf16 %v976, %v1036
      %v1097 = vmax.bf16 %v977, %v1037
      %v1098 = vmax.bf16 %v978, %v1038
      %v1099 = vmax.bf16 %v979, %v1039
      %v1100 = vmax.bf16 %v980, %v1040
      %v1101 = vmax.bf16 %v981, %v1041
      %v1102 = vmax.bf16 %v982, %v1042
      %v1103 = vmax.bf16 %v983, %v1043
      %v1104 = vmax.bf16 %v984, %v1044
      %v1105 = vmax.bf16 %v985, %v1045
      %v1106 = vmax.bf16 %v986, %v1046
      %v1107 = vmax.bf16 %v987, %v1047
      %v1108 = vmax.bf16 %v988, %v1048
      %v1109 = vmax.bf16 %v989, %v1049
      %v1110 = vmax.bf16 %v990, %v1050
      %v1111 = vmax.bf16 %v991, %v1051
      %v1112 = vmax.bf16 %v992, %v1052
      %v1113 = vmax.bf16 %v993, %v1053
      %v1114 = vmax.bf16 %v994, %v1054
      %v1115 = vmax.bf16 %v995, %v1055
      %v1116 = vmax.bf16 %v996, %v1056
      %v1117 = vmax.bf16 %v997, %v1057
      %v1118 = vmax.bf16 %v998, %v1058
      %v1119 = vmax.bf16 %v999, %v1059
      %v1120 = vmax.bf16 %v1000, %v1060
      %v1121 = vmax.bf16 %v1001, %v1061
      %v1122 = vmax.bf16 %v1002, %v1062
      %v1123 = vmax.bf16 %v1003, %v1063
      %v1124 = vmax.bf16 %v1004, %v1064
      %v1125 = vmax.bf16 %v1005, %v1065
      %v1126 = vmax.bf16 %v1006, %v1066
      %v1127 = vmax.bf16 %v1007, %v1067
      %v1128 = vmax.bf16 %v1008, %v1068
      %v1129 = vmax.bf16 %v1009, %v1069
      %v1130 = vmax.bf16 %v1010, %v1070
      %v1131 = vmax.bf16 %v1011, %v1071
      %s1132 = scalar_lea.vmem [#allocation2], 36
      %v1133 = vld [vmem:[%s1132] sm:$0xf]
      %v1134 = vld [vmem:[%s1132 + $0x4] sm:$0xf]
      %v1135 = vld [vmem:[%s1132 + $0x8] sm:$0x3]
      %v1136 = vld [vmem:[%s1132 + $0xc] sm:$0xf]
      %v1137 = vld [vmem:[%s1132 + $0x10] sm:$0xf]
      %v1138 = vld [vmem:[%s1132 + $0x14] sm:$0x3]
      %v1139 = vld [vmem:[%s1132 + $0x18] sm:$0xf]
      %v1140 = vld [vmem:[%s1132 + $0x1c] sm:$0xf]
      %v1141 = vld [vmem:[%s1132 + $0x20] sm:$0x3]
      %v1142 = vld [vmem:[%s1132 + $0x24] sm:$0xf]
      %v1143 = vld [vmem:[%s1132 + $0x28] sm:$0xf]
      %v1144 = vld [vmem:[%s1132 + $0x2c] sm:$0x3]
      %v1145 = vld [vmem:[%s1132 + $0x30] sm:$0xf]
      %v1146 = vld [vmem:[%s1132 + $0x34] sm:$0xf]
      %v1147 = vld [vmem:[%s1132 + $0x38] sm:$0x3]
      %v1148 = vld [vmem:[%s1132 + $0x3c] sm:$0xf]
      %v1149 = vld [vmem:[%s1132 + $0x40] sm:$0xf]
      %v1150 = vld [vmem:[%s1132 + $0x44] sm:$0x3]
      %v1151 = vld [vmem:[%s1132 + $0x48] sm:$0xf]
      %v1152 = vld [vmem:[%s1132 + $0x4c] sm:$0xf]
      %v1153 = vld [vmem:[%s1132 + $0x50] sm:$0x3]
      %v1154 = vld [vmem:[%s1132 + $0x54] sm:$0xf]
      %v1155 = vld [vmem:[%s1132 + $0x58] sm:$0xf]
      %v1156 = vld [vmem:[%s1132 + $0x5c] sm:$0x3]
      %v1157 = vld [vmem:[%s1132 + $0x60] sm:$0xf]
      %v1158 = vld [vmem:[%s1132 + $0x64] sm:$0xf]
      %v1159 = vld [vmem:[%s1132 + $0x68] sm:$0x3]
      %v1160 = vld [vmem:[%s1132 + $0x6c] sm:$0xf]
      %v1161 = vld [vmem:[%s1132 + $0x70] sm:$0xf]
      %v1162 = vld [vmem:[%s1132 + $0x74] sm:$0x3]
      %v1163 = vld [vmem:[%s1132 + $0x78] sm:$0xf]
      %v1164 = vld [vmem:[%s1132 + $0x7c] sm:$0xf]
      %v1165 = vld [vmem:[%s1132 + $0x80] sm:$0x3]
      %v1166 = vld [vmem:[%s1132 + $0x84] sm:$0xf]
      %v1167 = vld [vmem:[%s1132 + $0x88] sm:$0xf]
      %v1168 = vld [vmem:[%s1132 + $0x8c] sm:$0x3]
      %v1169 = vld [vmem:[%s1132 + $0x90] sm:$0xf]
      %v1170 = vld [vmem:[%s1132 + $0x94] sm:$0xf]
      %v1171 = vld [vmem:[%s1132 + $0x98] sm:$0x3]
      %v1172 = vld [vmem:[%s1132 + $0x9c] sm:$0xf]
      %v1173 = vld [vmem:[%s1132 + $0xa0] sm:$0xf]
      %v1174 = vld [vmem:[%s1132 + $0xa4] sm:$0x3]
      %v1175 = vld [vmem:[%s1132 + $0xa8] sm:$0xf]
      %v1176 = vld [vmem:[%s1132 + $0xac] sm:$0xf]
      %v1177 = vld [vmem:[%s1132 + $0xb0] sm:$0x3]
      %v1178 = vld [vmem:[%s1132 + $0xb4] sm:$0xf]
      %v1179 = vld [vmem:[%s1132 + $0xb8] sm:$0xf]
      %v1180 = vld [vmem:[%s1132 + $0xbc] sm:$0x3]
      %v1181 = vld [vmem:[%s1132 + $0xc0] sm:$0xf]
      %v1182 = vld [vmem:[%s1132 + $0xc4] sm:$0xf]
      %v1183 = vld [vmem:[%s1132 + $0xc8] sm:$0x3]
      %v1184 = vld [vmem:[%s1132 + $0xcc] sm:$0xf]
      %v1185 = vld [vmem:[%s1132 + $0xd0] sm:$0xf]
      %v1186 = vld [vmem:[%s1132 + $0xd4] sm:$0x3]
      %v1187 = vld [vmem:[%s1132 + $0xd8] sm:$0xf]
      %v1188 = vld [vmem:[%s1132 + $0xdc] sm:$0xf]
      %v1189 = vld [vmem:[%s1132 + $0xe0] sm:$0x3]
      %v1190 = vld [vmem:[%s1132 + $0xe4] sm:$0xf]
      %v1191 = vld [vmem:[%s1132 + $0xe8] sm:$0xf]
      %v1192 = vld [vmem:[%s1132 + $0xec] sm:$0x3]
      %v1193 = vmax.bf16 %v1072, %v1133
      %v1194 = vmax.bf16 %v1073, %v1134
      %v1195 = vmax.bf16 %v1074, %v1135
      %v1196 = vmax.bf16 %v1075, %v1136
      %v1197 = vmax.bf16 %v1076, %v1137
      %v1198 = vmax.bf16 %v1077, %v1138
      %v1199 = vmax.bf16 %v1078, %v1139
      %v1200 = vmax.bf16 %v1079, %v1140
      %v1201 = vmax.bf16 %v1080, %v1141
      %v1202 = vmax.bf16 %v1081, %v1142
      %v1203 = vmax.bf16 %v1082, %v1143
      %v1204 = vmax.bf16 %v1083, %v1144
      %v1205 = vmax.bf16 %v1084, %v1145
      %v1206 = vmax.bf16 %v1085, %v1146
      %v1207 = vmax.bf16 %v1086, %v1147
      %v1208 = vmax.bf16 %v1087, %v1148
      %v1209 = vmax.bf16 %v1088, %v1149
      %v1210 = vmax.bf16 %v1089, %v1150
      %v1211 = vmax.bf16 %v1090, %v1151
      %v1212 = vmax.bf16 %v1091, %v1152
      %v1213 = vmax.bf16 %v1092, %v1153
      %v1214 = vmax.bf16 %v1093, %v1154
      %v1215 = vmax.bf16 %v1094, %v1155
      %v1216 = vmax.bf16 %v1095, %v1156
      %v1217 = vmax.bf16 %v1096, %v1157
      %v1218 = vmax.bf16 %v1097, %v1158
      %v1219 = vmax.bf16 %v1098, %v1159
      %v1220 = vmax.bf16 %v1099, %v1160
      %v1221 = vmax.bf16 %v1100, %v1161
      %v1222 = vmax.bf16 %v1101, %v1162
      %v1223 = vmax.bf16 %v1102, %v1163
      %v1224 = vmax.bf16 %v1103, %v1164
      %v1225 = vmax.bf16 %v1104, %v1165
      %v1226 = vmax.bf16 %v1105, %v1166
      %v1227 = vmax.bf16 %v1106, %v1167
      %v1228 = vmax.bf16 %v1107, %v1168
      %v1229 = vmax.bf16 %v1108, %v1169
      %v1230 = vmax.bf16 %v1109, %v1170
      %v1231 = vmax.bf16 %v1110, %v1171
      %v1232 = vmax.bf16 %v1111, %v1172
      %v1233 = vmax.bf16 %v1112, %v1173
      %v1234 = vmax.bf16 %v1113, %v1174
      %v1235 = vmax.bf16 %v1114, %v1175
      %v1236 = vmax.bf16 %v1115, %v1176
      %v1237 = vmax.bf16 %v1116, %v1177
      %v1238 = vmax.bf16 %v1117, %v1178
      %v1239 = vmax.bf16 %v1118, %v1179
      %v1240 = vmax.bf16 %v1119, %v1180
      %v1241 = vmax.bf16 %v1120, %v1181
      %v1242 = vmax.bf16 %v1121, %v1182
      %v1243 = vmax.bf16 %v1122, %v1183
      %v1244 = vmax.bf16 %v1123, %v1184
      %v1245 = vmax.bf16 %v1124, %v1185
      %v1246 = vmax.bf16 %v1125, %v1186
      %v1247 = vmax.bf16 %v1126, %v1187
      %v1248 = vmax.bf16 %v1127, %v1188
      %v1249 = vmax.bf16 %v1128, %v1189
      %v1250 = vmax.bf16 %v1129, %v1190
      %v1251 = vmax.bf16 %v1130, %v1191
      %v1252 = vmax.bf16 %v1131, %v1192
      %s1253 = scalar_lea.vmem [#allocation2], 48
      %v1254 = vld [vmem:[%s1253] sm:$0xf]
      %v1255 = vld [vmem:[%s1253 + $0x4] sm:$0xf]
      %v1256 = vld [vmem:[%s1253 + $0x8] sm:$0x3]
      %v1257 = vld [vmem:[%s1253 + $0xc] sm:$0xf]
      %v1258 = vld [vmem:[%s1253 + $0x10] sm:$0xf]
      %v1259 = vld [vmem:[%s1253 + $0x14] sm:$0x3]
      %v1260 = vld [vmem:[%s1253 + $0x18] sm:$0xf]
      %v1261 = vld [vmem:[%s1253 + $0x1c] sm:$0xf]
      %v1262 = vld [vmem:[%s1253 + $0x20] sm:$0x3]
      %v1263 = vld [vmem:[%s1253 + $0x24] sm:$0xf]
      %v1264 = vld [vmem:[%s1253 + $0x28] sm:$0xf]
      %v1265 = vld [vmem:[%s1253 + $0x2c] sm:$0x3]
      %v1266 = vld [vmem:[%s1253 + $0x30] sm:$0xf]
      %v1267 = vld [vmem:[%s1253 + $0x34] sm:$0xf]
      %v1268 = vld [vmem:[%s1253 + $0x38] sm:$0x3]
      %v1269 = vld [vmem:[%s1253 + $0x3c] sm:$0xf]
      %v1270 = vld [vmem:[%s1253 + $0x40] sm:$0xf]
      %v1271 = vld [vmem:[%s1253 + $0x44] sm:$0x3]
      %v1272 = vld [vmem:[%s1253 + $0x48] sm:$0xf]
      %v1273 = vld [vmem:[%s1253 + $0x4c] sm:$0xf]
      %v1274 = vld [vmem:[%s1253 + $0x50] sm:$0x3]
      %v1275 = vld [vmem:[%s1253 + $0x54] sm:$0xf]
      %v1276 = vld [vmem:[%s1253 + $0x58] sm:$0xf]
      %v1277 = vld [vmem:[%s1253 + $0x5c] sm:$0x3]
      %v1278 = vld [vmem:[%s1253 + $0x60] sm:$0xf]
      %v1279 = vld [vmem:[%s1253 + $0x64] sm:$0xf]
      %v1280 = vld [vmem:[%s1253 + $0x68] sm:$0x3]
      %v1281 = vld [vmem:[%s1253 + $0x6c] sm:$0xf]
      %v1282 = vld [vmem:[%s1253 + $0x70] sm:$0xf]
      %v1283 = vld [vmem:[%s1253 + $0x74] sm:$0x3]
      %v1284 = vld [vmem:[%s1253 + $0x78] sm:$0xf]
      %v1285 = vld [vmem:[%s1253 + $0x7c] sm:$0xf]
      %v1286 = vld [vmem:[%s1253 + $0x80] sm:$0x3]
      %v1287 = vld [vmem:[%s1253 + $0x84] sm:$0xf]
      %v1288 = vld [vmem:[%s1253 + $0x88] sm:$0xf]
      %v1289 = vld [vmem:[%s1253 + $0x8c] sm:$0x3]
      %v1290 = vld [vmem:[%s1253 + $0x90] sm:$0xf]
      %v1291 = vld [vmem:[%s1253 + $0x94] sm:$0xf]
      %v1292 = vld [vmem:[%s1253 + $0x98] sm:$0x3]
      %v1293 = vld [vmem:[%s1253 + $0x9c] sm:$0xf]
      %v1294 = vld [vmem:[%s1253 + $0xa0] sm:$0xf]
      %v1295 = vld [vmem:[%s1253 + $0xa4] sm:$0x3]
      %v1296 = vld [vmem:[%s1253 + $0xa8] sm:$0xf]
      %v1297 = vld [vmem:[%s1253 + $0xac] sm:$0xf]
      %v1298 = vld [vmem:[%s1253 + $0xb0] sm:$0x3]
      %v1299 = vld [vmem:[%s1253 + $0xb4] sm:$0xf]
      %v1300 = vld [vmem:[%s1253 + $0xb8] sm:$0xf]
      %v1301 = vld [vmem:[%s1253 + $0xbc] sm:$0x3]
      %v1302 = vld [vmem:[%s1253 + $0xc0] sm:$0xf]
      %v1303 = vld [vmem:[%s1253 + $0xc4] sm:$0xf]
      %v1304 = vld [vmem:[%s1253 + $0xc8] sm:$0x3]
      %v1305 = vld [vmem:[%s1253 + $0xcc] sm:$0xf]
      %v1306 = vld [vmem:[%s1253 + $0xd0] sm:$0xf]
      %v1307 = vld [vmem:[%s1253 + $0xd4] sm:$0x3]
      %v1308 = vld [vmem:[%s1253 + $0xd8] sm:$0xf]
      %v1309 = vld [vmem:[%s1253 + $0xdc] sm:$0xf]
      %v1310 = vld [vmem:[%s1253 + $0xe0] sm:$0x3]
      %v1311 = vld [vmem:[%s1253 + $0xe4] sm:$0xf]
      %v1312 = vld [vmem:[%s1253 + $0xe8] sm:$0xf]
      %v1313 = vld [vmem:[%s1253 + $0xec] sm:$0x3]
      %v1314 = vmax.bf16 %v1193, %v1254
      %v1315 = vmax.bf16 %v1194, %v1255
      %v1316 = vmax.bf16 %v1195, %v1256
      %v1317 = vmax.bf16 %v1196, %v1257
      %v1318 = vmax.bf16 %v1197, %v1258
      %v1319 = vmax.bf16 %v1198, %v1259
      %v1320 = vmax.bf16 %v1199, %v1260
      %v1321 = vmax.bf16 %v1200, %v1261
      %v1322 = vmax.bf16 %v1201, %v1262
      %v1323 = vmax.bf16 %v1202, %v1263
      %v1324 = vmax.bf16 %v1203, %v1264
      %v1325 = vmax.bf16 %v1204, %v1265
      %v1326 = vmax.bf16 %v1205, %v1266
      %v1327 = vmax.bf16 %v1206, %v1267
      %v1328 = vmax.bf16 %v1207, %v1268
      %v1329 = vmax.bf16 %v1208, %v1269
      %v1330 = vmax.bf16 %v1209, %v1270
      %v1331 = vmax.bf16 %v1210, %v1271
      %v1332 = vmax.bf16 %v1211, %v1272
      %v1333 = vmax.bf16 %v1212, %v1273
      %v1334 = vmax.bf16 %v1213, %v1274
      %v1335 = vmax.bf16 %v1214, %v1275
      %v1336 = vmax.bf16 %v1215, %v1276
      %v1337 = vmax.bf16 %v1216, %v1277
      %v1338 = vmax.bf16 %v1217, %v1278
      %v1339 = vmax.bf16 %v1218, %v1279
      %v1340 = vmax.bf16 %v1219, %v1280
      %v1341 = vmax.bf16 %v1220, %v1281
      %v1342 = vmax.bf16 %v1221, %v1282
      %v1343 = vmax.bf16 %v1222, %v1283
      %v1344 = vmax.bf16 %v1223, %v1284
      %v1345 = vmax.bf16 %v1224, %v1285
      %v1346 = vmax.bf16 %v1225, %v1286
      %v1347 = vmax.bf16 %v1226, %v1287
      %v1348 = vmax.bf16 %v1227, %v1288
      %v1349 = vmax.bf16 %v1228, %v1289
      %v1350 = vmax.bf16 %v1229, %v1290
      %v1351 = vmax.bf16 %v1230, %v1291
      %v1352 = vmax.bf16 %v1231, %v1292
      %v1353 = vmax.bf16 %v1232, %v1293
      %v1354 = vmax.bf16 %v1233, %v1294
      %v1355 = vmax.bf16 %v1234, %v1295
      %v1356 = vmax.bf16 %v1235, %v1296
      %v1357 = vmax.bf16 %v1236, %v1297
      %v1358 = vmax.bf16 %v1237, %v1298
      %v1359 = vmax.bf16 %v1238, %v1299
      %v1360 = vmax.bf16 %v1239, %v1300
      %v1361 = vmax.bf16 %v1240, %v1301
      %v1362 = vmax.bf16 %v1241, %v1302
      %v1363 = vmax.bf16 %v1242, %v1303
      %v1364 = vmax.bf16 %v1243, %v1304
      %v1365 = vmax.bf16 %v1244, %v1305
      %v1366 = vmax.bf16 %v1245, %v1306
      %v1367 = vmax.bf16 %v1246, %v1307
      %v1368 = vmax.bf16 %v1247, %v1308
      %v1369 = vmax.bf16 %v1248, %v1309
      %v1370 = vmax.bf16 %v1249, %v1310
      %v1371 = vmax.bf16 %v1250, %v1311
      %v1372 = vmax.bf16 %v1251, %v1312
      %v1373 = vmax.bf16 %v1252, %v1313
      %vm1374 = vsmask.f32 3328
      %vm1375 = vsmask.f32 7440
      %vm1376 = vmor %vm1374, %vm1375
      %v1378 = vshrl.u32 %v1314, 16
      %v1380 = vrot.slane %v1378, 4
      %v1381 = vshll.u32 %v1314, 16
      %v1383 = vrot.slane %v1381, 5
      %v1384 = vor.u32 %v1380, %v1383
      %v1385 = vrot.slane %v1384, 4
      %v1387 = vshll.u32 %v1315, 16
      %v1389 = vrot.slane %v1387, 5
      %v1390 = vsel %vm1376, %v1385, %v1389
      %v1391 = vshrl.u32 %v1315, 16
      %v1393 = vrot.slane %v1391, 4
      %v1394 = vor.u32 %v1393, %v1389
      %v1395 = vrot.slane %v1394, 4
      %v1397 = vshll.u32 %v1316, 16
      %v1399 = vrot.slane %v1397, 5
      %v1400 = vsel %vm1376, %v1395, %v1399
      %v1402 = vshrl.u32 %v1317, 16
      %v1404 = vrot.slane %v1402, 4
      %v1405 = vshll.u32 %v1317, 16
      %v1407 = vrot.slane %v1405, 5
      %v1408 = vor.u32 %v1404, %v1407
      %v1409 = vrot.slane %v1408, 4
      %v1411 = vshll.u32 %v1318, 16
      %v1413 = vrot.slane %v1411, 5
      %v1414 = vsel %vm1376, %v1409, %v1413
      %v1415 = vshrl.u32 %v1318, 16
      %v1417 = vrot.slane %v1415, 4
      %v1418 = vor.u32 %v1417, %v1413
      %v1419 = vrot.slane %v1418, 4
      %v1421 = vshll.u32 %v1319, 16
      %v1423 = vrot.slane %v1421, 5
      %v1424 = vsel %vm1376, %v1419, %v1423
      %v1426 = vshrl.u32 %v1320, 16
      %v1428 = vrot.slane %v1426, 4
      %v1429 = vshll.u32 %v1320, 16
      %v1431 = vrot.slane %v1429, 5
      %v1432 = vor.u32 %v1428, %v1431
      %v1433 = vrot.slane %v1432, 4
      %v1435 = vshll.u32 %v1321, 16
      %v1437 = vrot.slane %v1435, 5
      %v1438 = vsel %vm1376, %v1433, %v1437
      %v1439 = vshrl.u32 %v1321, 16
      %v1441 = vrot.slane %v1439, 4
      %v1442 = vor.u32 %v1441, %v1437
      %v1443 = vrot.slane %v1442, 4
      %v1445 = vshll.u32 %v1322, 16
      %v1447 = vrot.slane %v1445, 5
      %v1448 = vsel %vm1376, %v1443, %v1447
      %v1450 = vshrl.u32 %v1323, 16
      %v1452 = vrot.slane %v1450, 4
      %v1453 = vshll.u32 %v1323, 16
      %v1455 = vrot.slane %v1453, 5
      %v1456 = vor.u32 %v1452, %v1455
      %v1457 = vrot.slane %v1456, 4
      %v1459 = vshll.u32 %v1324, 16
      %v1461 = vrot.slane %v1459, 5
      %v1462 = vsel %vm1376, %v1457, %v1461
      %v1463 = vshrl.u32 %v1324, 16
      %v1465 = vrot.slane %v1463, 4
      %v1466 = vor.u32 %v1465, %v1461
      %v1467 = vrot.slane %v1466, 4
      %v1469 = vshll.u32 %v1325, 16
      %v1471 = vrot.slane %v1469, 5
      %v1472 = vsel %vm1376, %v1467, %v1471
      %v1474 = vshrl.u32 %v1326, 16
      %v1476 = vrot.slane %v1474, 4
      %v1477 = vshll.u32 %v1326, 16
      %v1479 = vrot.slane %v1477, 5
      %v1480 = vor.u32 %v1476, %v1479
      %v1481 = vrot.slane %v1480, 4
      %v1483 = vshll.u32 %v1327, 16
      %v1485 = vrot.slane %v1483, 5
      %v1486 = vsel %vm1376, %v1481, %v1485
      %v1487 = vshrl.u32 %v1327, 16
      %v1489 = vrot.slane %v1487, 4
      %v1490 = vor.u32 %v1489, %v1485
      %v1491 = vrot.slane %v1490, 4
      %v1493 = vshll.u32 %v1328, 16
      %v1495 = vrot.slane %v1493, 5
      %v1496 = vsel %vm1376, %v1491, %v1495
      %v1498 = vshrl.u32 %v1329, 16
      %v1500 = vrot.slane %v1498, 4
      %v1501 = vshll.u32 %v1329, 16
      %v1503 = vrot.slane %v1501, 5
      %v1504 = vor.u32 %v1500, %v1503
      %v1505 = vrot.slane %v1504, 4
      %v1507 = vshll.u32 %v1330, 16
      %v1509 = vrot.slane %v1507, 5
      %v1510 = vsel %vm1376, %v1505, %v1509
      %v1511 = vshrl.u32 %v1330, 16
      %v1513 = vrot.slane %v1511, 4
      %v1514 = vor.u32 %v1513, %v1509
      %v1515 = vrot.slane %v1514, 4
      %v1517 = vshll.u32 %v1331, 16
      %v1519 = vrot.slane %v1517, 5
      %v1520 = vsel %vm1376, %v1515, %v1519
      %v1522 = vshrl.u32 %v1332, 16
      %v1524 = vrot.slane %v1522, 4
      %v1525 = vshll.u32 %v1332, 16
      %v1527 = vrot.slane %v1525, 5
      %v1528 = vor.u32 %v1524, %v1527
      %v1529 = vrot.slane %v1528, 4
      %v1531 = vshll.u32 %v1333, 16
      %v1533 = vrot.slane %v1531, 5
      %v1534 = vsel %vm1376, %v1529, %v1533
      %v1535 = vshrl.u32 %v1333, 16
      %v1537 = vrot.slane %v1535, 4
      %v1538 = vor.u32 %v1537, %v1533
      %v1539 = vrot.slane %v1538, 4
      %v1541 = vshll.u32 %v1334, 16
      %v1543 = vrot.slane %v1541, 5
      %v1544 = vsel %vm1376, %v1539, %v1543
      %v1546 = vshrl.u32 %v1335, 16
      %v1548 = vrot.slane %v1546, 4
      %v1549 = vshll.u32 %v1335, 16
      %v1551 = vrot.slane %v1549, 5
      %v1552 = vor.u32 %v1548, %v1551
      %v1553 = vrot.slane %v1552, 4
      %v1555 = vshll.u32 %v1336, 16
      %v1557 = vrot.slane %v1555, 5
      %v1558 = vsel %vm1376, %v1553, %v1557
      %v1559 = vshrl.u32 %v1336, 16
      %v1561 = vrot.slane %v1559, 4
      %v1562 = vor.u32 %v1561, %v1557
      %v1563 = vrot.slane %v1562, 4
      %v1565 = vshll.u32 %v1337, 16
      %v1567 = vrot.slane %v1565, 5
      %v1568 = vsel %vm1376, %v1563, %v1567
      %v1570 = vshrl.u32 %v1338, 16
      %v1572 = vrot.slane %v1570, 4
      %v1573 = vshll.u32 %v1338, 16
      %v1575 = vrot.slane %v1573, 5
      %v1576 = vor.u32 %v1572, %v1575
      %v1577 = vrot.slane %v1576, 4
      %v1579 = vshll.u32 %v1339, 16
      %v1581 = vrot.slane %v1579, 5
      %v1582 = vsel %vm1376, %v1577, %v1581
      %v1583 = vshrl.u32 %v1339, 16
      %v1585 = vrot.slane %v1583, 4
      %v1586 = vor.u32 %v1585, %v1581
      %v1587 = vrot.slane %v1586, 4
      %v1589 = vshll.u32 %v1340, 16
      %v1591 = vrot.slane %v1589, 5
      %v1592 = vsel %vm1376, %v1587, %v1591
      %v1594 = vshrl.u32 %v1341, 16
      %v1596 = vrot.slane %v1594, 4
      %v1597 = vshll.u32 %v1341, 16
      %v1599 = vrot.slane %v1597, 5
      %v1600 = vor.u32 %v1596, %v1599
      %v1601 = vrot.slane %v1600, 4
      %v1603 = vshll.u32 %v1342, 16
      %v1605 = vrot.slane %v1603, 5
      %v1606 = vsel %vm1376, %v1601, %v1605
      %v1607 = vshrl.u32 %v1342, 16
      %v1609 = vrot.slane %v1607, 4
      %v1610 = vor.u32 %v1609, %v1605
      %v1611 = vrot.slane %v1610, 4
      %v1613 = vshll.u32 %v1343, 16
      %v1615 = vrot.slane %v1613, 5
      %v1616 = vsel %vm1376, %v1611, %v1615
      %v1618 = vshrl.u32 %v1344, 16
      %v1620 = vrot.slane %v1618, 4
      %v1621 = vshll.u32 %v1344, 16
      %v1623 = vrot.slane %v1621, 5
      %v1624 = vor.u32 %v1620, %v1623
      %v1625 = vrot.slane %v1624, 4
      %v1627 = vshll.u32 %v1345, 16
      %v1629 = vrot.slane %v1627, 5
      %v1630 = vsel %vm1376, %v1625, %v1629
      %v1631 = vshrl.u32 %v1345, 16
      %v1633 = vrot.slane %v1631, 4
      %v1634 = vor.u32 %v1633, %v1629
      %v1635 = vrot.slane %v1634, 4
      %v1637 = vshll.u32 %v1346, 16
      %v1639 = vrot.slane %v1637, 5
      %v1640 = vsel %vm1376, %v1635, %v1639
      %v1642 = vshrl.u32 %v1347, 16
      %v1644 = vrot.slane %v1642, 4
      %v1645 = vshll.u32 %v1347, 16
      %v1647 = vrot.slane %v1645, 5
      %v1648 = vor.u32 %v1644, %v1647
      %v1649 = vrot.slane %v1648, 4
      %v1651 = vshll.u32 %v1348, 16
      %v1653 = vrot.slane %v1651, 5
      %v1654 = vsel %vm1376, %v1649, %v1653
      %v1655 = vshrl.u32 %v1348, 16
      %v1657 = vrot.slane %v1655, 4
      %v1658 = vor.u32 %v1657, %v1653
      %v1659 = vrot.slane %v1658, 4
      %v1661 = vshll.u32 %v1349, 16
      %v1663 = vrot.slane %v1661, 5
      %v1664 = vsel %vm1376, %v1659, %v1663
      %v1666 = vshrl.u32 %v1350, 16
      %v1668 = vrot.slane %v1666, 4
      %v1669 = vshll.u32 %v1350, 16
      %v1671 = vrot.slane %v1669, 5
      %v1672 = vor.u32 %v1668, %v1671
      %v1673 = vrot.slane %v1672, 4
      %v1675 = vshll.u32 %v1351, 16
      %v1677 = vrot.slane %v1675, 5
      %v1678 = vsel %vm1376, %v1673, %v1677
      %v1679 = vshrl.u32 %v1351, 16
      %v1681 = vrot.slane %v1679, 4
      %v1682 = vor.u32 %v1681, %v1677
      %v1683 = vrot.slane %v1682, 4
      %v1685 = vshll.u32 %v1352, 16
      %v1687 = vrot.slane %v1685, 5
      %v1688 = vsel %vm1376, %v1683, %v1687
      %v1690 = vshrl.u32 %v1353, 16
      %v1692 = vrot.slane %v1690, 4
      %v1693 = vshll.u32 %v1353, 16
      %v1695 = vrot.slane %v1693, 5
      %v1696 = vor.u32 %v1692, %v1695
      %v1697 = vrot.slane %v1696, 4
      %v1699 = vshll.u32 %v1354, 16
      %v1701 = vrot.slane %v1699, 5
      %v1702 = vsel %vm1376, %v1697, %v1701
      %v1703 = vshrl.u32 %v1354, 16
      %v1705 = vrot.slane %v1703, 4
      %v1706 = vor.u32 %v1705, %v1701
      %v1707 = vrot.slane %v1706, 4
      %v1709 = vshll.u32 %v1355, 16
      %v1711 = vrot.slane %v1709, 5
      %v1712 = vsel %vm1376, %v1707, %v1711
      %v1714 = vshrl.u32 %v1356, 16
      %v1716 = vrot.slane %v1714, 4
      %v1717 = vshll.u32 %v1356, 16
      %v1719 = vrot.slane %v1717, 5
      %v1720 = vor.u32 %v1716, %v1719
      %v1721 = vrot.slane %v1720, 4
      %v1723 = vshll.u32 %v1357, 16
      %v1725 = vrot.slane %v1723, 5
      %v1726 = vsel %vm1376, %v1721, %v1725
      %v1727 = vshrl.u32 %v1357, 16
      %v1729 = vrot.slane %v1727, 4
      %v1730 = vor.u32 %v1729, %v1725
      %v1731 = vrot.slane %v1730, 4
      %v1733 = vshll.u32 %v1358, 16
      %v1735 = vrot.slane %v1733, 5
      %v1736 = vsel %vm1376, %v1731, %v1735
      %v1738 = vshrl.u32 %v1359, 16
      %v1740 = vrot.slane %v1738, 4
      %v1741 = vshll.u32 %v1359, 16
      %v1743 = vrot.slane %v1741, 5
      %v1744 = vor.u32 %v1740, %v1743
      %v1745 = vrot.slane %v1744, 4
      %v1747 = vshll.u32 %v1360, 16
      %v1749 = vrot.slane %v1747, 5
      %v1750 = vsel %vm1376, %v1745, %v1749
      %v1751 = vshrl.u32 %v1360, 16
      %v1753 = vrot.slane %v1751, 4
      %v1754 = vor.u32 %v1753, %v1749
      %v1755 = vrot.slane %v1754, 4
      %v1757 = vshll.u32 %v1361, 16
      %v1759 = vrot.slane %v1757, 5
      %v1760 = vsel %vm1376, %v1755, %v1759
      %v1762 = vshrl.u32 %v1362, 16
      %v1764 = vrot.slane %v1762, 4
      %v1765 = vshll.u32 %v1362, 16
      %v1767 = vrot.slane %v1765, 5
      %v1768 = vor.u32 %v1764, %v1767
      %v1769 = vrot.slane %v1768, 4
      %v1771 = vshll.u32 %v1363, 16
      %v1773 = vrot.slane %v1771, 5
      %v1774 = vsel %vm1376, %v1769, %v1773
      %v1775 = vshrl.u32 %v1363, 16
      %v1777 = vrot.slane %v1775, 4
      %v1778 = vor.u32 %v1777, %v1773
      %v1779 = vrot.slane %v1778, 4
      %v1781 = vshll.u32 %v1364, 16
      %v1783 = vrot.slane %v1781, 5
      %v1784 = vsel %vm1376, %v1779, %v1783
      %v1786 = vshrl.u32 %v1365, 16
      %v1788 = vrot.slane %v1786, 4
      %v1789 = vshll.u32 %v1365, 16
      %v1791 = vrot.slane %v1789, 5
      %v1792 = vor.u32 %v1788, %v1791
      %v1793 = vrot.slane %v1792, 4
      %v1795 = vshll.u32 %v1366, 16
      %v1797 = vrot.slane %v1795, 5
      %v1798 = vsel %vm1376, %v1793, %v1797
      %v1799 = vshrl.u32 %v1366, 16
      %v1801 = vrot.slane %v1799, 4
      %v1802 = vor.u32 %v1801, %v1797
      %v1803 = vrot.slane %v1802, 4
      %v1805 = vshll.u32 %v1367, 16
      %v1807 = vrot.slane %v1805, 5
      %v1808 = vsel %vm1376, %v1803, %v1807
      %v1810 = vshrl.u32 %v1368, 16
      %v1812 = vrot.slane %v1810, 4
      %v1813 = vshll.u32 %v1368, 16
      %v1815 = vrot.slane %v1813, 5
      %v1816 = vor.u32 %v1812, %v1815
      %v1817 = vrot.slane %v1816, 4
      %v1819 = vshll.u32 %v1369, 16
      %v1821 = vrot.slane %v1819, 5
      %v1822 = vsel %vm1376, %v1817, %v1821
      %v1823 = vshrl.u32 %v1369, 16
      %v1825 = vrot.slane %v1823, 4
      %v1826 = vor.u32 %v1825, %v1821
      %v1827 = vrot.slane %v1826, 4
      %v1829 = vshll.u32 %v1370, 16
      %v1831 = vrot.slane %v1829, 5
      %v1832 = vsel %vm1376, %v1827, %v1831
      %v1834 = vshrl.u32 %v1371, 16
      %v1836 = vrot.slane %v1834, 4
      %v1837 = vshll.u32 %v1371, 16
      %v1839 = vrot.slane %v1837, 5
      %v1840 = vor.u32 %v1836, %v1839
      %v1841 = vrot.slane %v1840, 4
      %v1843 = vshll.u32 %v1372, 16
      %v1845 = vrot.slane %v1843, 5
      %v1846 = vsel %vm1376, %v1841, %v1845
      %v1847 = vshrl.u32 %v1372, 16
      %v1849 = vrot.slane %v1847, 4
      %v1850 = vor.u32 %v1849, %v1845
      %v1851 = vrot.slane %v1850, 4
      %v1853 = vshll.u32 %v1373, 16
      %v1855 = vrot.slane %v1853, 5
      %v1856 = vsel %vm1376, %v1851, %v1855
      %v1897 = vmax.bf16 %v1314, %v1390
      %v1898 = vmax.bf16 %v1315, %v1400
      %v1899 = vmax.bf16 %v1317, %v1414
      %v1900 = vmax.bf16 %v1318, %v1424
      %v1901 = vmax.bf16 %v1320, %v1438
      %v1902 = vmax.bf16 %v1321, %v1448
      %v1903 = vmax.bf16 %v1323, %v1462
      %v1904 = vmax.bf16 %v1324, %v1472
      %v1905 = vmax.bf16 %v1326, %v1486
      %v1906 = vmax.bf16 %v1327, %v1496
      %v1907 = vmax.bf16 %v1329, %v1510
      %v1908 = vmax.bf16 %v1330, %v1520
      %v1909 = vmax.bf16 %v1332, %v1534
      %v1910 = vmax.bf16 %v1333, %v1544
      %v1911 = vmax.bf16 %v1335, %v1558
      %v1912 = vmax.bf16 %v1336, %v1568
      %v1913 = vmax.bf16 %v1338, %v1582
      %v1914 = vmax.bf16 %v1339, %v1592
      %v1915 = vmax.bf16 %v1341, %v1606
      %v1916 = vmax.bf16 %v1342, %v1616
      %v1917 = vmax.bf16 %v1344, %v1630
      %v1918 = vmax.bf16 %v1345, %v1640
      %v1919 = vmax.bf16 %v1347, %v1654
      %v1920 = vmax.bf16 %v1348, %v1664
      %v1921 = vmax.bf16 %v1350, %v1678
      %v1922 = vmax.bf16 %v1351, %v1688
      %v1923 = vmax.bf16 %v1353, %v1702
      %v1924 = vmax.bf16 %v1354, %v1712
      %v1925 = vmax.bf16 %v1356, %v1726
      %v1926 = vmax.bf16 %v1357, %v1736
      %v1927 = vmax.bf16 %v1359, %v1750
      %v1928 = vmax.bf16 %v1360, %v1760
      %v1929 = vmax.bf16 %v1362, %v1774
      %v1930 = vmax.bf16 %v1363, %v1784
      %v1931 = vmax.bf16 %v1365, %v1798
      %v1932 = vmax.bf16 %v1366, %v1808
      %v1933 = vmax.bf16 %v1368, %v1822
      %v1934 = vmax.bf16 %v1369, %v1832
      %v1935 = vmax.bf16 %v1371, %v1846
      %v1936 = vmax.bf16 %v1372, %v1856
      %vm1997 = vcmask 1042432
      %vm1998 = vcmask 1046532
      %vm1999 = vmor %vm1997, %vm1998
      %v2000 = vrot.slane %v1314, 5
      %v2001 = vrot.slane %v2000, 4
      %v2002 = vrot.slane %v1315, 5
      %v2003 = vsel %vm1999, %v2001, %v2002
      %v2004 = vrot.slane %v2002, 4
      %v2005 = vrot.slane %v1316, 5
      %v2006 = vsel %vm1999, %v2004, %v2005
      %v2007 = vrot.slane %v1317, 5
      %v2008 = vrot.slane %v2007, 4
      %v2009 = vrot.slane %v1318, 5
      %v2010 = vsel %vm1999, %v2008, %v2009
      %v2011 = vrot.slane %v2009, 4
      %v2012 = vrot.slane %v1319, 5
      %v2013 = vsel %vm1999, %v2011, %v2012
      %v2014 = vrot.slane %v1320, 5
      %v2015 = vrot.slane %v2014, 4
      %v2016 = vrot.slane %v1321, 5
      %v2017 = vsel %vm1999, %v2015, %v2016
      %v2018 = vrot.slane %v2016, 4
      %v2019 = vrot.slane %v1322, 5
      %v2020 = vsel %vm1999, %v2018, %v2019
      %v2021 = vrot.slane %v1323, 5
      %v2022 = vrot.slane %v2021, 4
      %v2023 = vrot.slane %v1324, 5
      %v2024 = vsel %vm1999, %v2022, %v2023
      %v2025 = vrot.slane %v2023, 4
      %v2026 = vrot.slane %v1325, 5
      %v2027 = vsel %vm1999, %v2025, %v2026
      %v2028 = vrot.slane %v1326, 5
      %v2029 = vrot.slane %v2028, 4
      %v2030 = vrot.slane %v1327, 5
      %v2031 = vsel %vm1999, %v2029, %v2030
      %v2032 = vrot.slane %v2030, 4
      %v2033 = vrot.slane %v1328, 5
      %v2034 = vsel %vm1999, %v2032, %v2033
      %v2035 = vrot.slane %v1329, 5
      %v2036 = vrot.slane %v2035, 4
      %v2037 = vrot.slane %v1330, 5
      %v2038 = vsel %vm1999, %v2036, %v2037
      %v2039 = vrot.slane %v2037, 4
      %v2040 = vrot.slane %v1331, 5
      %v2041 = vsel %vm1999, %v2039, %v2040
      %v2042 = vrot.slane %v1332, 5
      %v2043 = vrot.slane %v2042, 4
      %v2044 = vrot.slane %v1333, 5
      %v2045 = vsel %vm1999, %v2043, %v2044
      %v2046 = vrot.slane %v2044, 4
      %v2047 = vrot.slane %v1334, 5
      %v2048 = vsel %vm1999, %v2046, %v2047
      %v2049 = vrot.slane %v1335, 5
      %v2050 = vrot.slane %v2049, 4
      %v2051 = vrot.slane %v1336, 5
      %v2052 = vsel %vm1999, %v2050, %v2051
      %v2053 = vrot.slane %v2051, 4
      %v2054 = vrot.slane %v1337, 5
      %v2055 = vsel %vm1999, %v2053, %v2054
      %v2056 = vrot.slane %v1338, 5
      %v2057 = vrot.slane %v2056, 4
      %v2058 = vrot.slane %v1339, 5
      %v2059 = vsel %vm1999, %v2057, %v2058
      %v2060 = vrot.slane %v2058, 4
      %v2061 = vrot.slane %v1340, 5
      %v2062 = vsel %vm1999, %v2060, %v2061
      %v2063 = vrot.slane %v1341, 5
      %v2064 = vrot.slane %v2063, 4
      %v2065 = vrot.slane %v1342, 5
      %v2066 = vsel %vm1999, %v2064, %v2065
      %v2067 = vrot.slane %v2065, 4
      %v2068 = vrot.slane %v1343, 5
      %v2069 = vsel %vm1999, %v2067, %v2068
      %v2070 = vrot.slane %v1344, 5
      %v2071 = vrot.slane %v2070, 4
      %v2072 = vrot.slane %v1345, 5
      %v2073 = vsel %vm1999, %v2071, %v2072
      %v2074 = vrot.slane %v2072, 4
      %v2075 = vrot.slane %v1346, 5
      %v2076 = vsel %vm1999, %v2074, %v2075
      %v2077 = vrot.slane %v1347, 5
      %v2078 = vrot.slane %v2077, 4
      %v2079 = vrot.slane %v1348, 5
      %v2080 = vsel %vm1999, %v2078, %v2079
      %v2081 = vrot.slane %v2079, 4
      %v2082 = vrot.slane %v1349, 5
      %v2083 = vsel %vm1999, %v2081, %v2082
      %v2084 = vrot.slane %v1350, 5
      %v2085 = vrot.slane %v2084, 4
      %v2086 = vrot.slane %v1351, 5
      %v2087 = vsel %vm1999, %v2085, %v2086
      %v2088 = vrot.slane %v2086, 4
      %v2089 = vrot.slane %v1352, 5
      %v2090 = vsel %vm1999, %v2088, %v2089
      %v2091 = vrot.slane %v1353, 5
      %v2092 = vrot.slane %v2091, 4
      %v2093 = vrot.slane %v1354, 5
      %v2094 = vsel %vm1999, %v2092, %v2093
      %v2095 = vrot.slane %v2093, 4
      %v2096 = vrot.slane %v1355, 5
      %v2097 = vsel %vm1999, %v2095, %v2096
      %v2098 = vrot.slane %v1356, 5
      %v2099 = vrot.slane %v2098, 4
      %v2100 = vrot.slane %v1357, 5
      %v2101 = vsel %vm1999, %v2099, %v2100
      %v2102 = vrot.slane %v2100, 4
      %v2103 = vrot.slane %v1358, 5
      %v2104 = vsel %vm1999, %v2102, %v2103
      %v2105 = vrot.slane %v1359, 5
      %v2106 = vrot.slane %v2105, 4
      %v2107 = vrot.slane %v1360, 5
      %v2108 = vsel %vm1999, %v2106, %v2107
      %v2109 = vrot.slane %v2107, 4
      %v2110 = vrot.slane %v1361, 5
      %v2111 = vsel %vm1999, %v2109, %v2110
      %v2112 = vrot.slane %v1362, 5
      %v2113 = vrot.slane %v2112, 4
      %v2114 = vrot.slane %v1363, 5
      %v2115 = vsel %vm1999, %v2113, %v2114
      %v2116 = vrot.slane %v2114, 4
      %v2117 = vrot.slane %v1364, 5
      %v2118 = vsel %vm1999, %v2116, %v2117
      %v2119 = vrot.slane %v1365, 5
      %v2120 = vrot.slane %v2119, 4
      %v2121 = vrot.slane %v1366, 5
      %v2122 = vsel %vm1999, %v2120, %v2121
      %v2123 = vrot.slane %v2121, 4
      %v2124 = vrot.slane %v1367, 5
      %v2125 = vsel %vm1999, %v2123, %v2124
      %v2126 = vrot.slane %v1368, 5
      %v2127 = vrot.slane %v2126, 4
      %v2128 = vrot.slane %v1369, 5
      %v2129 = vsel %vm1999, %v2127, %v2128
      %v2130 = vrot.slane %v2128, 4
      %v2131 = vrot.slane %v1370, 5
      %v2132 = vsel %vm1999, %v2130, %v2131
      %v2133 = vrot.slane %v1371, 5
      %v2134 = vrot.slane %v2133, 4
      %v2135 = vrot.slane %v1372, 5
      %v2136 = vsel %vm1999, %v2134, %v2135
      %v2137 = vrot.slane %v2135, 4
      %v2138 = vrot.slane %v1373, 5
      %v2139 = vsel %vm1999, %v2137, %v2138
      %v2180 = vmax.bf16 %v1897, %v2003
      %v2181 = vmax.bf16 %v1898, %v2006
      %v2182 = vmax.bf16 %v1899, %v2010
      %v2183 = vmax.bf16 %v1900, %v2013
      %v2184 = vmax.bf16 %v1901, %v2017
      %v2185 = vmax.bf16 %v1902, %v2020
      %v2186 = vmax.bf16 %v1903, %v2024
      %v2187 = vmax.bf16 %v1904, %v2027
      %v2188 = vmax.bf16 %v1905, %v2031
      %v2189 = vmax.bf16 %v1906, %v2034
      %v2190 = vmax.bf16 %v1907, %v2038
      %v2191 = vmax.bf16 %v1908, %v2041
      %v2192 = vmax.bf16 %v1909, %v2045
      %v2193 = vmax.bf16 %v1910, %v2048
      %v2194 = vmax.bf16 %v1911, %v2052
      %v2195 = vmax.bf16 %v1912, %v2055
      %v2196 = vmax.bf16 %v1913, %v2059
      %v2197 = vmax.bf16 %v1914, %v2062
      %v2198 = vmax.bf16 %v1915, %v2066
      %v2199 = vmax.bf16 %v1916, %v2069
      %v2200 = vmax.bf16 %v1917, %v2073
      %v2201 = vmax.bf16 %v1918, %v2076
      %v2202 = vmax.bf16 %v1919, %v2080
      %v2203 = vmax.bf16 %v1920, %v2083
      %v2204 = vmax.bf16 %v1921, %v2087
      %v2205 = vmax.bf16 %v1922, %v2090
      %v2206 = vmax.bf16 %v1923, %v2094
      %v2207 = vmax.bf16 %v1924, %v2097
      %v2208 = vmax.bf16 %v1925, %v2101
      %v2209 = vmax.bf16 %v1926, %v2104
      %v2210 = vmax.bf16 %v1927, %v2108
      %v2211 = vmax.bf16 %v1928, %v2111
      %v2212 = vmax.bf16 %v1929, %v2115
      %v2213 = vmax.bf16 %v1930, %v2118
      %v2214 = vmax.bf16 %v1931, %v2122
      %v2215 = vmax.bf16 %v1932, %v2125
      %v2216 = vmax.bf16 %v1933, %v2129
      %v2217 = vmax.bf16 %v1934, %v2132
      %v2218 = vmax.bf16 %v1935, %v2136
      %v2219 = vmax.bf16 %v1936, %v2139
      %vm2220 = vsmask.f32 2304
      %vm2221 = vsmask.f32 6416
      %vm2222 = vmor %vm2220, %vm2221
      %v2223 = vrot.slane %v1378, 5
      %v2224 = vrot.slane %v1381, 6
      %v2225 = vor.u32 %v2223, %v2224
      %v2226 = vrot.slane %v2225, 4
      %v2227 = vrot.slane %v1391, 5
      %v2228 = vrot.slane %v1387, 6
      %v2229 = vor.u32 %v2227, %v2228
      %v2230 = vsel %vm2222, %v2226, %v2229
      %v2231 = vrot.slane %v2229, 4
      %v2232 = vshrl.u32 %v1316, 16
      %v2234 = vrot.slane %v2232, 5
      %v2235 = vrot.slane %v1397, 6
      %v2236 = vor.u32 %v2234, %v2235
      %v2237 = vsel %vm2222, %v2231, %v2236
      %v2238 = vrot.slane %v1402, 5
      %v2239 = vrot.slane %v1405, 6
      %v2240 = vor.u32 %v2238, %v2239
      %v2241 = vrot.slane %v2240, 4
      %v2242 = vrot.slane %v1415, 5
      %v2243 = vrot.slane %v1411, 6
      %v2244 = vor.u32 %v2242, %v2243
      %v2245 = vsel %vm2222, %v2241, %v2244
      %v2246 = vrot.slane %v2244, 4
      %v2247 = vshrl.u32 %v1319, 16
      %v2249 = vrot.slane %v2247, 5
      %v2250 = vrot.slane %v1421, 6
      %v2251 = vor.u32 %v2249, %v2250
      %v2252 = vsel %vm2222, %v2246, %v2251
      %v2253 = vrot.slane %v1426, 5
      %v2254 = vrot.slane %v1429, 6
      %v2255 = vor.u32 %v2253, %v2254
      %v2256 = vrot.slane %v2255, 4
      %v2257 = vrot.slane %v1439, 5
      %v2258 = vrot.slane %v1435, 6
      %v2259 = vor.u32 %v2257, %v2258
      %v2260 = vsel %vm2222, %v2256, %v2259
      %v2261 = vrot.slane %v2259, 4
      %v2262 = vshrl.u32 %v1322, 16
      %v2264 = vrot.slane %v2262, 5
      %v2265 = vrot.slane %v1445, 6
      %v2266 = vor.u32 %v2264, %v2265
      %v2267 = vsel %vm2222, %v2261, %v2266
      %v2268 = vrot.slane %v1450, 5
      %v2269 = vrot.slane %v1453, 6
      %v2270 = vor.u32 %v2268, %v2269
      %v2271 = vrot.slane %v2270, 4
      %v2272 = vrot.slane %v1463, 5
      %v2273 = vrot.slane %v1459, 6
      %v2274 = vor.u32 %v2272, %v2273
      %v2275 = vsel %vm2222, %v2271, %v2274
      %v2276 = vrot.slane %v2274, 4
      %v2277 = vshrl.u32 %v1325, 16
      %v2279 = vrot.slane %v2277, 5
      %v2280 = vrot.slane %v1469, 6
      %v2281 = vor.u32 %v2279, %v2280
      %v2282 = vsel %vm2222, %v2276, %v2281
      %v2283 = vrot.slane %v1474, 5
      %v2284 = vrot.slane %v1477, 6
      %v2285 = vor.u32 %v2283, %v2284
      %v2286 = vrot.slane %v2285, 4
      %v2287 = vrot.slane %v1487, 5
      %v2288 = vrot.slane %v1483, 6
      %v2289 = vor.u32 %v2287, %v2288
      %v2290 = vsel %vm2222, %v2286, %v2289
      %v2291 = vrot.slane %v2289, 4
      %v2292 = vshrl.u32 %v1328, 16
      %v2294 = vrot.slane %v2292, 5
      %v2295 = vrot.slane %v1493, 6
      %v2296 = vor.u32 %v2294, %v2295
      %v2297 = vsel %vm2222, %v2291, %v2296
      %v2298 = vrot.slane %v1498, 5
      %v2299 = vrot.slane %v1501, 6
      %v2300 = vor.u32 %v2298, %v2299
      %v2301 = vrot.slane %v2300, 4
      %v2302 = vrot.slane %v1511, 5
      %v2303 = vrot.slane %v1507, 6
      %v2304 = vor.u32 %v2302, %v2303
      %v2305 = vsel %vm2222, %v2301, %v2304
      %v2306 = vrot.slane %v2304, 4
      %v2307 = vshrl.u32 %v1331, 16
      %v2309 = vrot.slane %v2307, 5
      %v2310 = vrot.slane %v1517, 6
      %v2311 = vor.u32 %v2309, %v2310
      %v2312 = vsel %vm2222, %v2306, %v2311
      %v2313 = vrot.slane %v1522, 5
      %v2314 = vrot.slane %v1525, 6
      %v2315 = vor.u32 %v2313, %v2314
      %v2316 = vrot.slane %v2315, 4
      %v2317 = vrot.slane %v1535, 5
      %v2318 = vrot.slane %v1531, 6
      %v2319 = vor.u32 %v2317, %v2318
      %v2320 = vsel %vm2222, %v2316, %v2319
      %v2321 = vrot.slane %v2319, 4
      %v2322 = vshrl.u32 %v1334, 16
      %v2324 = vrot.slane %v2322, 5
      %v2325 = vrot.slane %v1541, 6
      %v2326 = vor.u32 %v2324, %v2325
      %v2327 = vsel %vm2222, %v2321, %v2326
      %v2328 = vrot.slane %v1546, 5
      %v2329 = vrot.slane %v1549, 6
      %v2330 = vor.u32 %v2328, %v2329
      %v2331 = vrot.slane %v2330, 4
      %v2332 = vrot.slane %v1559, 5
      %v2333 = vrot.slane %v1555, 6
      %v2334 = vor.u32 %v2332, %v2333
      %v2335 = vsel %vm2222, %v2331, %v2334
      %v2336 = vrot.slane %v2334, 4
      %v2337 = vshrl.u32 %v1337, 16
      %v2339 = vrot.slane %v2337, 5
      %v2340 = vrot.slane %v1565, 6
      %v2341 = vor.u32 %v2339, %v2340
      %v2342 = vsel %vm2222, %v2336, %v2341
      %v2343 = vrot.slane %v1570, 5
      %v2344 = vrot.slane %v1573, 6
      %v2345 = vor.u32 %v2343, %v2344
      %v2346 = vrot.slane %v2345, 4
      %v2347 = vrot.slane %v1583, 5
      %v2348 = vrot.slane %v1579, 6
      %v2349 = vor.u32 %v2347, %v2348
      %v2350 = vsel %vm2222, %v2346, %v2349
      %v2351 = vrot.slane %v2349, 4
      %v2352 = vshrl.u32 %v1340, 16
      %v2354 = vrot.slane %v2352, 5
      %v2355 = vrot.slane %v1589, 6
      %v2356 = vor.u32 %v2354, %v2355
      %v2357 = vsel %vm2222, %v2351, %v2356
      %v2358 = vrot.slane %v1594, 5
      %v2359 = vrot.slane %v1597, 6
      %v2360 = vor.u32 %v2358, %v2359
      %v2361 = vrot.slane %v2360, 4
      %v2362 = vrot.slane %v1607, 5
      %v2363 = vrot.slane %v1603, 6
      %v2364 = vor.u32 %v2362, %v2363
      %v2365 = vsel %vm2222, %v2361, %v2364
      %v2366 = vrot.slane %v2364, 4
      %v2367 = vshrl.u32 %v1343, 16
      %v2369 = vrot.slane %v2367, 5
      %v2370 = vrot.slane %v1613, 6
      %v2371 = vor.u32 %v2369, %v2370
      %v2372 = vsel %vm2222, %v2366, %v2371
      %v2373 = vrot.slane %v1618, 5
      %v2374 = vrot.slane %v1621, 6
      %v2375 = vor.u32 %v2373, %v2374
      %v2376 = vrot.slane %v2375, 4
      %v2377 = vrot.slane %v1631, 5
      %v2378 = vrot.slane %v1627, 6
      %v2379 = vor.u32 %v2377, %v2378
      %v2380 = vsel %vm2222, %v2376, %v2379
      %v2381 = vrot.slane %v2379, 4
      %v2382 = vshrl.u32 %v1346, 16
      %v2384 = vrot.slane %v2382, 5
      %v2385 = vrot.slane %v1637, 6
      %v2386 = vor.u32 %v2384, %v2385
      %v2387 = vsel %vm2222, %v2381, %v2386
      %v2388 = vrot.slane %v1642, 5
      %v2389 = vrot.slane %v1645, 6
      %v2390 = vor.u32 %v2388, %v2389
      %v2391 = vrot.slane %v2390, 4
      %v2392 = vrot.slane %v1655, 5
      %v2393 = vrot.slane %v1651, 6
      %v2394 = vor.u32 %v2392, %v2393
      %v2395 = vsel %vm2222, %v2391, %v2394
      %v2396 = vrot.slane %v2394, 4
      %v2397 = vshrl.u32 %v1349, 16
      %v2399 = vrot.slane %v2397, 5
      %v2400 = vrot.slane %v1661, 6
      %v2401 = vor.u32 %v2399, %v2400
      %v2402 = vsel %vm2222, %v2396, %v2401
      %v2403 = vrot.slane %v1666, 5
      %v2404 = vrot.slane %v1669, 6
      %v2405 = vor.u32 %v2403, %v2404
      %v2406 = vrot.slane %v2405, 4
      %v2407 = vrot.slane %v1679, 5
      %v2408 = vrot.slane %v1675, 6
      %v2409 = vor.u32 %v2407, %v2408
      %v2410 = vsel %vm2222, %v2406, %v2409
      %v2411 = vrot.slane %v2409, 4
      %v2412 = vshrl.u32 %v1352, 16
      %v2414 = vrot.slane %v2412, 5
      %v2415 = vrot.slane %v1685, 6
      %v2416 = vor.u32 %v2414, %v2415
      %v2417 = vsel %vm2222, %v2411, %v2416
      %v2418 = vrot.slane %v1690, 5
      %v2419 = vrot.slane %v1693, 6
      %v2420 = vor.u32 %v2418, %v2419
      %v2421 = vrot.slane %v2420, 4
      %v2422 = vrot.slane %v1703, 5
      %v2423 = vrot.slane %v1699, 6
      %v2424 = vor.u32 %v2422, %v2423
      %v2425 = vsel %vm2222, %v2421, %v2424
      %v2426 = vrot.slane %v2424, 4
      %v2427 = vshrl.u32 %v1355, 16
      %v2429 = vrot.slane %v2427, 5
      %v2430 = vrot.slane %v1709, 6
      %v2431 = vor.u32 %v2429, %v2430
      %v2432 = vsel %vm2222, %v2426, %v2431
      %v2433 = vrot.slane %v1714, 5
      %v2434 = vrot.slane %v1717, 6
      %v2435 = vor.u32 %v2433, %v2434
      %v2436 = vrot.slane %v2435, 4
      %v2437 = vrot.slane %v1727, 5
      %v2438 = vrot.slane %v1723, 6
      %v2439 = vor.u32 %v2437, %v2438
      %v2440 = vsel %vm2222, %v2436, %v2439
      %v2441 = vrot.slane %v2439, 4
      %v2442 = vshrl.u32 %v1358, 16
      %v2444 = vrot.slane %v2442, 5
      %v2445 = vrot.slane %v1733, 6
      %v2446 = vor.u32 %v2444, %v2445
      %v2447 = vsel %vm2222, %v2441, %v2446
      %v2448 = vrot.slane %v1738, 5
      %v2449 = vrot.slane %v1741, 6
      %v2450 = vor.u32 %v2448, %v2449
      %v2451 = vrot.slane %v2450, 4
      %v2452 = vrot.slane %v1751, 5
      %v2453 = vrot.slane %v1747, 6
      %v2454 = vor.u32 %v2452, %v2453
      %v2455 = vsel %vm2222, %v2451, %v2454
      %v2456 = vrot.slane %v2454, 4
      %v2457 = vshrl.u32 %v1361, 16
      %v2459 = vrot.slane %v2457, 5
      %v2460 = vrot.slane %v1757, 6
      %v2461 = vor.u32 %v2459, %v2460
      %v2462 = vsel %vm2222, %v2456, %v2461
      %v2463 = vrot.slane %v1762, 5
      %v2464 = vrot.slane %v1765, 6
      %v2465 = vor.u32 %v2463, %v2464
      %v2466 = vrot.slane %v2465, 4
      %v2467 = vrot.slane %v1775, 5
      %v2468 = vrot.slane %v1771, 6
      %v2469 = vor.u32 %v2467, %v2468
      %v2470 = vsel %vm2222, %v2466, %v2469
      %v2471 = vrot.slane %v2469, 4
      %v2472 = vshrl.u32 %v1364, 16
      %v2474 = vrot.slane %v2472, 5
      %v2475 = vrot.slane %v1781, 6
      %v2476 = vor.u32 %v2474, %v2475
      %v2477 = vsel %vm2222, %v2471, %v2476
      %v2478 = vrot.slane %v1786, 5
      %v2479 = vrot.slane %v1789, 6
      %v2480 = vor.u32 %v2478, %v2479
      %v2481 = vrot.slane %v2480, 4
      %v2482 = vrot.slane %v1799, 5
      %v2483 = vrot.slane %v1795, 6
      %v2484 = vor.u32 %v2482, %v2483
      %v2485 = vsel %vm2222, %v2481, %v2484
      %v2486 = vrot.slane %v2484, 4
      %v2487 = vshrl.u32 %v1367, 16
      %v2489 = vrot.slane %v2487, 5
      %v2490 = vrot.slane %v1805, 6
      %v2491 = vor.u32 %v2489, %v2490
      %v2492 = vsel %vm2222, %v2486, %v2491
      %v2493 = vrot.slane %v1810, 5
      %v2494 = vrot.slane %v1813, 6
      %v2495 = vor.u32 %v2493, %v2494
      %v2496 = vrot.slane %v2495, 4
      %v2497 = vrot.slane %v1823, 5
      %v2498 = vrot.slane %v1819, 6
      %v2499 = vor.u32 %v2497, %v2498
      %v2500 = vsel %vm2222, %v2496, %v2499
      %v2501 = vrot.slane %v2499, 4
      %v2502 = vshrl.u32 %v1370, 16
      %v2504 = vrot.slane %v2502, 5
      %v2505 = vrot.slane %v1829, 6
      %v2506 = vor.u32 %v2504, %v2505
      %v2507 = vsel %vm2222, %v2501, %v2506
      %v2508 = vrot.slane %v1834, 5
      %v2509 = vrot.slane %v1837, 6
      %v2510 = vor.u32 %v2508, %v2509
      %v2511 = vrot.slane %v2510, 4
      %v2512 = vrot.slane %v1847, 5
      %v2513 = vrot.slane %v1843, 6
      %v2514 = vor.u32 %v2512, %v2513
      %v2515 = vsel %vm2222, %v2511, %v2514
      %v2516 = vrot.slane %v2514, 4
      %v2517 = vshrl.u32 %v1373, 16
      %v2519 = vrot.slane %v2517, 5
      %v2520 = vrot.slane %v1853, 6
      %v2521 = vor.u32 %v2519, %v2520
      %v2522 = vsel %vm2222, %v2516, %v2521
      %v2563 = vmax.bf16 %v2180, %v2230
      %v2564 = vmax.bf16 %v2181, %v2237
      %v2565 = vmax.bf16 %v2182, %v2245
      %v2566 = vmax.bf16 %v2183, %v2252
      %v2567 = vmax.bf16 %v2184, %v2260
      %v2568 = vmax.bf16 %v2185, %v2267
      %v2569 = vmax.bf16 %v2186, %v2275
      %v2570 = vmax.bf16 %v2187, %v2282
      %v2571 = vmax.bf16 %v2188, %v2290
      %v2572 = vmax.bf16 %v2189, %v2297
      %v2573 = vmax.bf16 %v2190, %v2305
      %v2574 = vmax.bf16 %v2191, %v2312
      %v2575 = vmax.bf16 %v2192, %v2320
      %v2576 = vmax.bf16 %v2193, %v2327
      %v2577 = vmax.bf16 %v2194, %v2335
      %v2578 = vmax.bf16 %v2195, %v2342
      %v2579 = vmax.bf16 %v2196, %v2350
      %v2580 = vmax.bf16 %v2197, %v2357
      %v2581 = vmax.bf16 %v2198, %v2365
      %v2582 = vmax.bf16 %v2199, %v2372
      %v2583 = vmax.bf16 %v2200, %v2380
      %v2584 = vmax.bf16 %v2201, %v2387
      %v2585 = vmax.bf16 %v2202, %v2395
      %v2586 = vmax.bf16 %v2203, %v2402
      %v2587 = vmax.bf16 %v2204, %v2410
      %v2588 = vmax.bf16 %v2205, %v2417
      %v2589 = vmax.bf16 %v2206, %v2425
      %v2590 = vmax.bf16 %v2207, %v2432
      %v2591 = vmax.bf16 %v2208, %v2440
      %v2592 = vmax.bf16 %v2209, %v2447
      %v2593 = vmax.bf16 %v2210, %v2455
      %v2594 = vmax.bf16 %v2211, %v2462
      %v2595 = vmax.bf16 %v2212, %v2470
      %v2596 = vmax.bf16 %v2213, %v2477
      %v2597 = vmax.bf16 %v2214, %v2485
      %v2598 = vmax.bf16 %v2215, %v2492
      %v2599 = vmax.bf16 %v2216, %v2500
      %v2600 = vmax.bf16 %v2217, %v2507
      %v2601 = vmax.bf16 %v2218, %v2515
      %v2602 = vmax.bf16 %v2219, %v2522
      %vm2603 = vcmask 1041408
      %vm2604 = vcmask 1045508
      %vm2605 = vmor %vm2603, %vm2604
      %v2606 = vrot.slane %v1314, 6
      %v2607 = vrot.slane %v2606, 4
      %v2608 = vrot.slane %v1315, 6
      %v2609 = vsel %vm2605, %v2607, %v2608
      %v2610 = vrot.slane %v2608, 4
      %v2611 = vrot.slane %v1316, 6
      %v2612 = vsel %vm2605, %v2610, %v2611
      %v2613 = vrot.slane %v1317, 6
      %v2614 = vrot.slane %v2613, 4
      %v2615 = vrot.slane %v1318, 6
      %v2616 = vsel %vm2605, %v2614, %v2615
      %v2617 = vrot.slane %v2615, 4
      %v2618 = vrot.slane %v1319, 6
      %v2619 = vsel %vm2605, %v2617, %v2618
      %v2620 = vrot.slane %v1320, 6
      %v2621 = vrot.slane %v2620, 4
      %v2622 = vrot.slane %v1321, 6
      %v2623 = vsel %vm2605, %v2621, %v2622
      %v2624 = vrot.slane %v2622, 4
      %v2625 = vrot.slane %v1322, 6
      %v2626 = vsel %vm2605, %v2624, %v2625
      %v2627 = vrot.slane %v1323, 6
      %v2628 = vrot.slane %v2627, 4
      %v2629 = vrot.slane %v1324, 6
      %v2630 = vsel %vm2605, %v2628, %v2629
      %v2631 = vrot.slane %v2629, 4
      %v2632 = vrot.slane %v1325, 6
      %v2633 = vsel %vm2605, %v2631, %v2632
      %v2634 = vrot.slane %v1326, 6
      %v2635 = vrot.slane %v2634, 4
      %v2636 = vrot.slane %v1327, 6
      %v2637 = vsel %vm2605, %v2635, %v2636
      %v2638 = vrot.slane %v2636, 4
      %v2639 = vrot.slane %v1328, 6
      %v2640 = vsel %vm2605, %v2638, %v2639
      %v2641 = vrot.slane %v1329, 6
      %v2642 = vrot.slane %v2641, 4
      %v2643 = vrot.slane %v1330, 6
      %v2644 = vsel %vm2605, %v2642, %v2643
      %v2645 = vrot.slane %v2643, 4
      %v2646 = vrot.slane %v1331, 6
      %v2647 = vsel %vm2605, %v2645, %v2646
      %v2648 = vrot.slane %v1332, 6
      %v2649 = vrot.slane %v2648, 4
      %v2650 = vrot.slane %v1333, 6
      %v2651 = vsel %vm2605, %v2649, %v2650
      %v2652 = vrot.slane %v2650, 4
      %v2653 = vrot.slane %v1334, 6
      %v2654 = vsel %vm2605, %v2652, %v2653
      %v2655 = vrot.slane %v1335, 6
      %v2656 = vrot.slane %v2655, 4
      %v2657 = vrot.slane %v1336, 6
      %v2658 = vsel %vm2605, %v2656, %v2657
      %v2659 = vrot.slane %v2657, 4
      %v2660 = vrot.slane %v1337, 6
      %v2661 = vsel %vm2605, %v2659, %v2660
      %v2662 = vrot.slane %v1338, 6
      %v2663 = vrot.slane %v2662, 4
      %v2664 = vrot.slane %v1339, 6
      %v2665 = vsel %vm2605, %v2663, %v2664
      %v2666 = vrot.slane %v2664, 4
      %v2667 = vrot.slane %v1340, 6
      %v2668 = vsel %vm2605, %v2666, %v2667
      %v2669 = vrot.slane %v1341, 6
      %v2670 = vrot.slane %v2669, 4
      %v2671 = vrot.slane %v1342, 6
      %v2672 = vsel %vm2605, %v2670, %v2671
      %v2673 = vrot.slane %v2671, 4
      %v2674 = vrot.slane %v1343, 6
      %v2675 = vsel %vm2605, %v2673, %v2674
      %v2676 = vrot.slane %v1344, 6
      %v2677 = vrot.slane %v2676, 4
      %v2678 = vrot.slane %v1345, 6
      %v2679 = vsel %vm2605, %v2677, %v2678
      %v2680 = vrot.slane %v2678, 4
      %v2681 = vrot.slane %v1346, 6
      %v2682 = vsel %vm2605, %v2680, %v2681
      %v2683 = vrot.slane %v1347, 6
      %v2684 = vrot.slane %v2683, 4
      %v2685 = vrot.slane %v1348, 6
      %v2686 = vsel %vm2605, %v2684, %v2685
      %v2687 = vrot.slane %v2685, 4
      %v2688 = vrot.slane %v1349, 6
      %v2689 = vsel %vm2605, %v2687, %v2688
      %v2690 = vrot.slane %v1350, 6
      %v2691 = vrot.slane %v2690, 4
      %v2692 = vrot.slane %v1351, 6
      %v2693 = vsel %vm2605, %v2691, %v2692
      %v2694 = vrot.slane %v2692, 4
      %v2695 = vrot.slane %v1352, 6
      %v2696 = vsel %vm2605, %v2694, %v2695
      %v2697 = vrot.slane %v1353, 6
      %v2698 = vrot.slane %v2697, 4
      %v2699 = vrot.slane %v1354, 6
      %v2700 = vsel %vm2605, %v2698, %v2699
      %v2701 = vrot.slane %v2699, 4
      %v2702 = vrot.slane %v1355, 6
      %v2703 = vsel %vm2605, %v2701, %v2702
      %v2704 = vrot.slane %v1356, 6
      %v2705 = vrot.slane %v2704, 4
      %v2706 = vrot.slane %v1357, 6
      %v2707 = vsel %vm2605, %v2705, %v2706
      %v2708 = vrot.slane %v2706, 4
      %v2709 = vrot.slane %v1358, 6
      %v2710 = vsel %vm2605, %v2708, %v2709
      %v2711 = vrot.slane %v1359, 6
      %v2712 = vrot.slane %v2711, 4
      %v2713 = vrot.slane %v1360, 6
      %v2714 = vsel %vm2605, %v2712, %v2713
      %v2715 = vrot.slane %v2713, 4
      %v2716 = vrot.slane %v1361, 6
      %v2717 = vsel %vm2605, %v2715, %v2716
      %v2718 = vrot.slane %v1362, 6
      %v2719 = vrot.slane %v2718, 4
      %v2720 = vrot.slane %v1363, 6
      %v2721 = vsel %vm2605, %v2719, %v2720
      %v2722 = vrot.slane %v2720, 4
      %v2723 = vrot.slane %v1364, 6
      %v2724 = vsel %vm2605, %v2722, %v2723
      %v2725 = vrot.slane %v1365, 6
      %v2726 = vrot.slane %v2725, 4
      %v2727 = vrot.slane %v1366, 6
      %v2728 = vsel %vm2605, %v2726, %v2727
      %v2729 = vrot.slane %v2727, 4
      %v2730 = vrot.slane %v1367, 6
      %v2731 = vsel %vm2605, %v2729, %v2730
      %v2732 = vrot.slane %v1368, 6
      %v2733 = vrot.slane %v2732, 4
      %v2734 = vrot.slane %v1369, 6
      %v2735 = vsel %vm2605, %v2733, %v2734
      %v2736 = vrot.slane %v2734, 4
      %v2737 = vrot.slane %v1370, 6
      %v2738 = vsel %vm2605, %v2736, %v2737
      %v2739 = vrot.slane %v1371, 6
      %v2740 = vrot.slane %v2739, 4
      %v2741 = vrot.slane %v1372, 6
      %v2742 = vsel %vm2605, %v2740, %v2741
      %v2743 = vrot.slane %v2741, 4
      %v2744 = vrot.slane %v1373, 6
      %v2745 = vsel %vm2605, %v2743, %v2744
      %v2786 = vmax.bf16 %v2563, %v2609
      %v2787 = vmax.bf16 %v2564, %v2612
      %v2788 = vmax.bf16 %v2565, %v2616
      %v2789 = vmax.bf16 %v2566, %v2619
      %v2790 = vmax.bf16 %v2567, %v2623
      %v2791 = vmax.bf16 %v2568, %v2626
      %v2792 = vmax.bf16 %v2569, %v2630
      %v2793 = vmax.bf16 %v2570, %v2633
      %v2794 = vmax.bf16 %v2571, %v2637
      %v2795 = vmax.bf16 %v2572, %v2640
      %v2796 = vmax.bf16 %v2573, %v2644
      %v2797 = vmax.bf16 %v2574, %v2647
      %v2798 = vmax.bf16 %v2575, %v2651
      %v2799 = vmax.bf16 %v2576, %v2654
      %v2800 = vmax.bf16 %v2577, %v2658
      %v2801 = vmax.bf16 %v2578, %v2661
      %v2802 = vmax.bf16 %v2579, %v2665
      %v2803 = vmax.bf16 %v2580, %v2668
      %v2804 = vmax.bf16 %v2581, %v2672
      %v2805 = vmax.bf16 %v2582, %v2675
      %v2806 = vmax.bf16 %v2583, %v2679
      %v2807 = vmax.bf16 %v2584, %v2682
      %v2808 = vmax.bf16 %v2585, %v2686
      %v2809 = vmax.bf16 %v2586, %v2689
      %v2810 = vmax.bf16 %v2587, %v2693
      %v2811 = vmax.bf16 %v2588, %v2696
      %v2812 = vmax.bf16 %v2589, %v2700
      %v2813 = vmax.bf16 %v2590, %v2703
      %v2814 = vmax.bf16 %v2591, %v2707
      %v2815 = vmax.bf16 %v2592, %v2710
      %v2816 = vmax.bf16 %v2593, %v2714
      %v2817 = vmax.bf16 %v2594, %v2717
      %v2818 = vmax.bf16 %v2595, %v2721
      %v2819 = vmax.bf16 %v2596, %v2724
      %v2820 = vmax.bf16 %v2597, %v2728
      %v2821 = vmax.bf16 %v2598, %v2731
      %v2822 = vmax.bf16 %v2599, %v2735
      %v2823 = vmax.bf16 %v2600, %v2738
      %v2824 = vmax.bf16 %v2601, %v2742
      %v2825 = vmax.bf16 %v2602, %v2745
      %v2842 = vunpack.c.l.b16 %v2798
      %v2843 = vunpack.c.l.b16 %v2799
      %v2844 = vunpack.c.l.b16 %v2800
      %v2845 = vunpack.c.l.b16 %v2801
      %v2846 = vunpack.c.l.b16 %v2802
      %v2847 = vunpack.c.l.b16 %v2803
      %v2848 = vunpack.c.l.b16 %v2804
      %v2849 = vunpack.c.l.b16 %v2805
      %v2850 = vunpack.c.l.b16 %v2806
      %v2851 = vunpack.c.l.b16 %v2807
      %v2852 = vunpack.c.l.b16 %v2808
      %v2853 = vunpack.c.l.b16 %v2809
      %v2854 = vunpack.c.l.b16 %v2810
      %v2855 = vunpack.c.l.b16 %v2811
      %v2856 = vunpack.c.l.b16 %v2812
      %v2857 = vunpack.c.l.b16 %v2813
      %v2858 = vpack.c.b16 %v2843, %v2842
      %v2859 = vpack.c.b16 %v2845, %v2844
      %v2860 = vpack.c.b16 %v2847, %v2846
      %v2861 = vpack.c.b16 %v2849, %v2848
      %v2862 = vpack.c.b16 %v2851, %v2850
      %v2863 = vpack.c.b16 %v2853, %v2852
      %v2864 = vpack.c.b16 %v2855, %v2854
      %v2865 = vpack.c.b16 %v2857, %v2856
      %2874 = vst [vmem:[#allocation3 + $0x8] sm:$0xff] %v2858
      %2875 = vst [vmem:[#allocation3 + $0x28] sm:$0xff] %v2859
      %2876 = vst [vmem:[#allocation3 + $0x48] sm:$0xff] %v2860
      %2877 = vst [vmem:[#allocation3 + $0x68] sm:$0xff] %v2861
      %2878 = vst [vmem:[#allocation3 + $0x88] sm:$0xff] %v2862
      %2879 = vst [vmem:[#allocation3 + $0xa8] sm:$0xff] %v2863
      %2880 = vst [vmem:[#allocation3 + $0xc8] sm:$0xff] %v2864
      %2881 = vst [vmem:[#allocation3 + $0xe8] sm:$0xff] %v2865
      %v2906 = vrot.slane %v2786, 7
      %v2907 = vrot.slane %v2906, 4
      %v2908 = vrot.slane %v2787, 7
      %v2909 = vsel %vm495, %v2907, %v2908
      %v2910 = vrot.slane %v2908, 4
      %v2911 = vrot.slane %v2788, 7
      %v2912 = vrot.slane %v2911, 4
      %v2913 = vrot.slane %v2789, 7
      %v2914 = vsel %vm495, %v2912, %v2913
      %v2915 = vrot.slane %v2913, 4
      %v2916 = vrot.slane %v2790, 7
      %v2917 = vrot.slane %v2916, 4
      %v2918 = vrot.slane %v2791, 7
      %v2919 = vsel %vm495, %v2917, %v2918
      %v2920 = vrot.slane %v2918, 4
      %v2921 = vrot.slane %v2792, 7
      %v2922 = vrot.slane %v2921, 4
      %v2923 = vrot.slane %v2793, 7
      %v2924 = vsel %vm495, %v2922, %v2923
      %v2925 = vrot.slane %v2923, 4
      %v2926 = vrot.slane %v2794, 7
      %v2927 = vrot.slane %v2926, 4
      %v2928 = vrot.slane %v2795, 7
      %v2929 = vsel %vm495, %v2927, %v2928
      %v2930 = vrot.slane %v2928, 4
      %v2931 = vrot.slane %v2796, 7
      %v2932 = vrot.slane %v2931, 4
      %v2933 = vrot.slane %v2797, 7
      %v2934 = vsel %vm495, %v2932, %v2933
      %v2935 = vrot.slane %v2933, 4
      %v2936 = vrot.slane %v2798, 7
      %v2937 = vrot.slane %v2936, 4
      %v2938 = vrot.slane %v2799, 7
      %v2939 = vsel %vm495, %v2937, %v2938
      %v2940 = vrot.slane %v2938, 4
      %v2941 = vrot.slane %v2800, 7
      %v2942 = vrot.slane %v2941, 4
      %v2943 = vrot.slane %v2801, 7
      %v2944 = vsel %vm495, %v2942, %v2943
      %v2945 = vrot.slane %v2943, 4
      %v2946 = vrot.slane %v2802, 7
      %v2947 = vrot.slane %v2946, 4
      %v2948 = vrot.slane %v2803, 7
      %v2949 = vsel %vm495, %v2947, %v2948
      %v2950 = vrot.slane %v2948, 4
      %v2951 = vrot.slane %v2804, 7
      %v2952 = vrot.slane %v2951, 4
      %v2953 = vrot.slane %v2805, 7
      %v2954 = vsel %vm495, %v2952, %v2953
      %v2955 = vrot.slane %v2953, 4
      %v2956 = vrot.slane %v2806, 7
      %v2957 = vrot.slane %v2956, 4
      %v2958 = vrot.slane %v2807, 7
      %v2959 = vsel %vm495, %v2957, %v2958
      %v2960 = vrot.slane %v2958, 4
      %v2961 = vrot.slane %v2808, 7
      %v2962 = vrot.slane %v2961, 4
      %v2963 = vrot.slane %v2809, 7
      %v2964 = vsel %vm495, %v2962, %v2963
      %v2965 = vrot.slane %v2963, 4
      %v2966 = vrot.slane %v2810, 7
      %v2967 = vrot.slane %v2966, 4
      %v2968 = vrot.slane %v2811, 7
      %v2969 = vsel %vm495, %v2967, %v2968
      %v2970 = vrot.slane %v2968, 4
      %v2971 = vrot.slane %v2812, 7
      %v2972 = vrot.slane %v2971, 4
      %v2973 = vrot.slane %v2813, 7
      %v2974 = vsel %vm495, %v2972, %v2973
      %v2975 = vrot.slane %v2973, 4
      %v2976 = vrot.slane %v2814, 7
      %v2977 = vrot.slane %v2976, 4
      %v2978 = vrot.slane %v2815, 7
      %v2979 = vsel %vm495, %v2977, %v2978
      %v2980 = vrot.slane %v2978, 4
      %v2981 = vrot.slane %v2816, 7
      %v2982 = vrot.slane %v2981, 4
      %v2983 = vrot.slane %v2817, 7
      %v2984 = vsel %vm495, %v2982, %v2983
      %v2985 = vrot.slane %v2983, 4
      %v2986 = vrot.slane %v2818, 7
      %v2987 = vrot.slane %v2986, 4
      %v2988 = vrot.slane %v2819, 7
      %v2989 = vsel %vm495, %v2987, %v2988
      %v2990 = vrot.slane %v2988, 4
      %v2991 = vrot.slane %v2820, 7
      %v2992 = vrot.slane %v2991, 4
      %v2993 = vrot.slane %v2821, 7
      %v2994 = vsel %vm495, %v2992, %v2993
      %v2995 = vrot.slane %v2993, 4
      %v2996 = vrot.slane %v2822, 7
      %v2997 = vrot.slane %v2996, 4
      %v2998 = vrot.slane %v2823, 7
      %v2999 = vsel %vm495, %v2997, %v2998
      %v3000 = vrot.slane %v2998, 4
      %v3001 = vrot.slane %v2824, 7
      %v3002 = vrot.slane %v3001, 4
      %v3003 = vrot.slane %v2825, 7
      %v3004 = vsel %vm495, %v3002, %v3003
      %v3005 = vrot.slane %v3003, 4
      %3066 = vst [vmem:[%s544] sm:$0xe] %v2906
      %3067 = vst [vmem:[%s544 + $0x4] sm:$0xf] %v2909
      %3068 = vst [vmem:[%s544 + $0x8] sm:$0x1] %v2910
      %3069 = vst [vmem:[%s544 + $0xc] sm:$0xe] %v2911
      %3070 = vst [vmem:[%s544 + $0x10] sm:$0xf] %v2914
      %3071 = vst [vmem:[%s544 + $0x14] sm:$0x1] %v2915
      %3072 = vst [vmem:[%s544 + $0x18] sm:$0xe] %v2916
      %3073 = vst [vmem:[%s544 + $0x1c] sm:$0xf] %v2919
      %3074 = vst [vmem:[%s544 + $0x20] sm:$0x1] %v2920
      %3075 = vst [vmem:[%s544 + $0x24] sm:$0xe] %v2921
      %3076 = vst [vmem:[%s544 + $0x28] sm:$0xf] %v2924
      %3077 = vst [vmem:[%s544 + $0x2c] sm:$0x1] %v2925
      %3078 = vst [vmem:[%s544 + $0x30] sm:$0xe] %v2926
      %3079 = vst [vmem:[%s544 + $0x34] sm:$0xf] %v2929
      %3080 = vst [vmem:[%s544 + $0x38] sm:$0x1] %v2930
      %3081 = vst [vmem:[%s544 + $0x3c] sm:$0xe] %v2931
      %3082 = vst [vmem:[%s544 + $0x40] sm:$0xf] %v2934
      %3083 = vst [vmem:[%s544 + $0x44] sm:$0x1] %v2935
      %3084 = vst [vmem:[%s544 + $0x48] sm:$0xe] %v2936
      %3085 = vst [vmem:[%s544 + $0x4c] sm:$0xf] %v2939
      %3086 = vst [vmem:[%s544 + $0x50] sm:$0x1] %v2940
      %3087 = vst [vmem:[%s544 + $0x54] sm:$0xe] %v2941
      %3088 = vst [vmem:[%s544 + $0x58] sm:$0xf] %v2944
      %3089 = vst [vmem:[%s544 + $0x5c] sm:$0x1] %v2945
      %3090 = vst [vmem:[%s544 + $0x60] sm:$0xe] %v2946
      %3091 = vst [vmem:[%s544 + $0x64] sm:$0xf] %v2949
      %3092 = vst [vmem:[%s544 + $0x68] sm:$0x1] %v2950
      %3093 = vst [vmem:[%s544 + $0x6c] sm:$0xe] %v2951
      %3094 = vst [vmem:[%s544 + $0x70] sm:$0xf] %v2954
      %3095 = vst [vmem:[%s544 + $0x74] sm:$0x1] %v2955
      %3096 = vst [vmem:[%s544 + $0x78] sm:$0xe] %v2956
      %3097 = vst [vmem:[%s544 + $0x7c] sm:$0xf] %v2959
      %3098 = vst [vmem:[%s544 + $0x80] sm:$0x1] %v2960
      %3099 = vst [vmem:[%s544 + $0x84] sm:$0xe] %v2961
      %3100 = vst [vmem:[%s544 + $0x88] sm:$0xf] %v2964
      %3101 = vst [vmem:[%s544 + $0x8c] sm:$0x1] %v2965
      %3102 = vst [vmem:[%s544 + $0x90] sm:$0xe] %v2966
      %3103 = vst [vmem:[%s544 + $0x94] sm:$0xf] %v2969
      %3104 = vst [vmem:[%s544 + $0x98] sm:$0x1] %v2970
      %3105 = vst [vmem:[%s544 + $0x9c] sm:$0xe] %v2971
      %3106 = vst [vmem:[%s544 + $0xa0] sm:$0xf] %v2974
      %3107 = vst [vmem:[%s544 + $0xa4] sm:$0x1] %v2975
      %3108 = vst [vmem:[%s544 + $0xa8] sm:$0xe] %v2976
      %3109 = vst [vmem:[%s544 + $0xac] sm:$0xf] %v2979
      %3110 = vst [vmem:[%s544 + $0xb0] sm:$0x1] %v2980
      %3111 = vst [vmem:[%s544 + $0xb4] sm:$0xe] %v2981
      %3112 = vst [vmem:[%s544 + $0xb8] sm:$0xf] %v2984
      %3113 = vst [vmem:[%s544 + $0xbc] sm:$0x1] %v2985
      %3114 = vst [vmem:[%s544 + $0xc0] sm:$0xe] %v2986
      %3115 = vst [vmem:[%s544 + $0xc4] sm:$0xf] %v2989
      %3116 = vst [vmem:[%s544 + $0xc8] sm:$0x1] %v2990
      %3117 = vst [vmem:[%s544 + $0xcc] sm:$0xe] %v2991
      %3118 = vst [vmem:[%s544 + $0xd0] sm:$0xf] %v2994
      %3119 = vst [vmem:[%s544 + $0xd4] sm:$0x1] %v2995
      %3120 = vst [vmem:[%s544 + $0xd8] sm:$0xe] %v2996
      %3121 = vst [vmem:[%s544 + $0xdc] sm:$0xf] %v2999
      %3122 = vst [vmem:[%s544 + $0xe0] sm:$0x1] %v3000
      %3123 = vst [vmem:[%s544 + $0xe4] sm:$0xe] %v3001
      %3124 = vst [vmem:[%s544 + $0xe8] sm:$0xf] %v3004
      %3125 = vst [vmem:[%s544 + $0xec] sm:$0x1] %v3005
      %v3126 = vld [vmem:[#allocation2] sm:$0xf]
      %v3127 = vld [vmem:[#allocation2 + $0x4] sm:$0xf]
      %v3128 = vld [vmem:[#allocation2 + $0x8] sm:$0x3]
      %v3129 = vld [vmem:[#allocation2 + $0xc] sm:$0xf]
      %v3130 = vld [vmem:[#allocation2 + $0x10] sm:$0xf]
      %v3131 = vld [vmem:[#allocation2 + $0x14] sm:$0x3]
      %v3132 = vld [vmem:[#allocation2 + $0x18] sm:$0xf]
      %v3133 = vld [vmem:[#allocation2 + $0x1c] sm:$0xf]
      %v3134 = vld [vmem:[#allocation2 + $0x20] sm:$0x3]
      %v3135 = vld [vmem:[#allocation2 + $0x24] sm:$0xf]
      %v3136 = vld [vmem:[#allocation2 + $0x28] sm:$0xf]
      %v3137 = vld [vmem:[#allocation2 + $0x2c] sm:$0x3]
      %v3138 = vld [vmem:[#allocation2 + $0x30] sm:$0xf]
      %v3139 = vld [vmem:[#allocation2 + $0x34] sm:$0xf]
      %v3140 = vld [vmem:[#allocation2 + $0x38] sm:$0x3]
      %v3141 = vld [vmem:[#allocation2 + $0x3c] sm:$0xf]
      %v3142 = vld [vmem:[#allocation2 + $0x40] sm:$0xf]
      %v3143 = vld [vmem:[#allocation2 + $0x44] sm:$0x3]
      %v3144 = vld [vmem:[#allocation2 + $0x48] sm:$0xf]
      %v3145 = vld [vmem:[#allocation2 + $0x4c] sm:$0xf]
      %v3146 = vld [vmem:[#allocation2 + $0x50] sm:$0x3]
      %v3147 = vld [vmem:[#allocation2 + $0x54] sm:$0xf]
      %v3148 = vld [vmem:[#allocation2 + $0x58] sm:$0xf]
      %v3149 = vld [vmem:[#allocation2 + $0x5c] sm:$0x3]
      %v3150 = vld [vmem:[#allocation2 + $0x60] sm:$0xf]
      %v3151 = vld [vmem:[#allocation2 + $0x64] sm:$0xf]
      %v3152 = vld [vmem:[#allocation2 + $0x68] sm:$0x3]
      %v3153 = vld [vmem:[#allocation2 + $0x6c] sm:$0xf]
      %v3154 = vld [vmem:[#allocation2 + $0x70] sm:$0xf]
      %v3155 = vld [vmem:[#allocation2 + $0x74] sm:$0x3]
      %v3156 = vld [vmem:[#allocation2 + $0x78] sm:$0xf]
      %v3157 = vld [vmem:[#allocation2 + $0x7c] sm:$0xf]
      %v3158 = vld [vmem:[#allocation2 + $0x80] sm:$0x3]
      %v3159 = vld [vmem:[#allocation2 + $0x84] sm:$0xf]
      %v3160 = vld [vmem:[#allocation2 + $0x88] sm:$0xf]
      %v3161 = vld [vmem:[#allocation2 + $0x8c] sm:$0x3]
      %v3162 = vld [vmem:[#allocation2 + $0x90] sm:$0xf]
      %v3163 = vld [vmem:[#allocation2 + $0x94] sm:$0xf]
      %v3164 = vld [vmem:[#allocation2 + $0x98] sm:$0x3]
      %v3165 = vld [vmem:[#allocation2 + $0x9c] sm:$0xf]
      %v3166 = vld [vmem:[#allocation2 + $0xa0] sm:$0xf]
      %v3167 = vld [vmem:[#allocation2 + $0xa4] sm:$0x3]
      %v3168 = vld [vmem:[#allocation2 + $0xa8] sm:$0xf]
      %v3169 = vld [vmem:[#allocation2 + $0xac] sm:$0xf]
      %v3170 = vld [vmem:[#allocation2 + $0xb0] sm:$0x3]
      %v3171 = vld [vmem:[#allocation2 + $0xb4] sm:$0xf]
      %v3172 = vld [vmem:[#allocation2 + $0xb8] sm:$0xf]
      %v3173 = vld [vmem:[#allocation2 + $0xbc] sm:$0x3]
      %v3174 = vld [vmem:[#allocation2 + $0xc0] sm:$0xf]
      %v3175 = vld [vmem:[#allocation2 + $0xc4] sm:$0xf]
      %v3176 = vld [vmem:[#allocation2 + $0xc8] sm:$0x3]
      %v3177 = vld [vmem:[#allocation2 + $0xcc] sm:$0xf]
      %v3178 = vld [vmem:[#allocation2 + $0xd0] sm:$0xf]
      %v3179 = vld [vmem:[#allocation2 + $0xd4] sm:$0x3]
      %v3180 = vld [vmem:[#allocation2 + $0xd8] sm:$0xf]
      %v3181 = vld [vmem:[#allocation2 + $0xdc] sm:$0xf]
      %v3182 = vld [vmem:[#allocation2 + $0xe0] sm:$0x3]
      %v3183 = vld [vmem:[#allocation2 + $0xe4] sm:$0xf]
      %v3184 = vld [vmem:[#allocation2 + $0xe8] sm:$0xf]
      %v3185 = vld [vmem:[#allocation2 + $0xec] sm:$0x3]
      %v3186 = vld [vmem:[%s891] sm:$0xf]
      %v3187 = vld [vmem:[%s891 + $0x4] sm:$0xf]
      %v3188 = vld [vmem:[%s891 + $0x8] sm:$0x3]
      %v3189 = vld [vmem:[%s891 + $0xc] sm:$0xf]
      %v3190 = vld [vmem:[%s891 + $0x10] sm:$0xf]
      %v3191 = vld [vmem:[%s891 + $0x14] sm:$0x3]
      %v3192 = vld [vmem:[%s891 + $0x18] sm:$0xf]
      %v3193 = vld [vmem:[%s891 + $0x1c] sm:$0xf]
      %v3194 = vld [vmem:[%s891 + $0x20] sm:$0x3]
      %v3195 = vld [vmem:[%s891 + $0x24] sm:$0xf]
      %v3196 = vld [vmem:[%s891 + $0x28] sm:$0xf]
      %v3197 = vld [vmem:[%s891 + $0x2c] sm:$0x3]
      %v3198 = vld [vmem:[%s891 + $0x30] sm:$0xf]
      %v3199 = vld [vmem:[%s891 + $0x34] sm:$0xf]
      %v3200 = vld [vmem:[%s891 + $0x38] sm:$0x3]
      %v3201 = vld [vmem:[%s891 + $0x3c] sm:$0xf]
      %v3202 = vld [vmem:[%s891 + $0x40] sm:$0xf]
      %v3203 = vld [vmem:[%s891 + $0x44] sm:$0x3]
      %v3204 = vld [vmem:[%s891 + $0x48] sm:$0xf]
      %v3205 = vld [vmem:[%s891 + $0x4c] sm:$0xf]
      %v3206 = vld [vmem:[%s891 + $0x50] sm:$0x3]
      %v3207 = vld [vmem:[%s891 + $0x54] sm:$0xf]
      %v3208 = vld [vmem:[%s891 + $0x58] sm:$0xf]
      %v3209 = vld [vmem:[%s891 + $0x5c] sm:$0x3]
      %v3210 = vld [vmem:[%s891 + $0x60] sm:$0xf]
      %v3211 = vld [vmem:[%s891 + $0x64] sm:$0xf]
      %v3212 = vld [vmem:[%s891 + $0x68] sm:$0x3]
      %v3213 = vld [vmem:[%s891 + $0x6c] sm:$0xf]
      %v3214 = vld [vmem:[%s891 + $0x70] sm:$0xf]
      %v3215 = vld [vmem:[%s891 + $0x74] sm:$0x3]
      %v3216 = vld [vmem:[%s891 + $0x78] sm:$0xf]
      %v3217 = vld [vmem:[%s891 + $0x7c] sm:$0xf]
      %v3218 = vld [vmem:[%s891 + $0x80] sm:$0x3]
      %v3219 = vld [vmem:[%s891 + $0x84] sm:$0xf]
      %v3220 = vld [vmem:[%s891 + $0x88] sm:$0xf]
      %v3221 = vld [vmem:[%s891 + $0x8c] sm:$0x3]
      %v3222 = vld [vmem:[%s891 + $0x90] sm:$0xf]
      %v3223 = vld [vmem:[%s891 + $0x94] sm:$0xf]
      %v3224 = vld [vmem:[%s891 + $0x98] sm:$0x3]
      %v3225 = vld [vmem:[%s891 + $0x9c] sm:$0xf]
      %v3226 = vld [vmem:[%s891 + $0xa0] sm:$0xf]
      %v3227 = vld [vmem:[%s891 + $0xa4] sm:$0x3]
      %v3228 = vld [vmem:[%s891 + $0xa8] sm:$0xf]
      %v3229 = vld [vmem:[%s891 + $0xac] sm:$0xf]
      %v3230 = vld [vmem:[%s891 + $0xb0] sm:$0x3]
      %v3231 = vld [vmem:[%s891 + $0xb4] sm:$0xf]
      %v3232 = vld [vmem:[%s891 + $0xb8] sm:$0xf]
      %v3233 = vld [vmem:[%s891 + $0xbc] sm:$0x3]
      %v3234 = vld [vmem:[%s891 + $0xc0] sm:$0xf]
      %v3235 = vld [vmem:[%s891 + $0xc4] sm:$0xf]
      %v3236 = vld [vmem:[%s891 + $0xc8] sm:$0x3]
      %v3237 = vld [vmem:[%s891 + $0xcc] sm:$0xf]
      %v3238 = vld [vmem:[%s891 + $0xd0] sm:$0xf]
      %v3239 = vld [vmem:[%s891 + $0xd4] sm:$0x3]
      %v3240 = vld [vmem:[%s891 + $0xd8] sm:$0xf]
      %v3241 = vld [vmem:[%s891 + $0xdc] sm:$0xf]
      %v3242 = vld [vmem:[%s891 + $0xe0] sm:$0x3]
      %v3243 = vld [vmem:[%s891 + $0xe4] sm:$0xf]
      %v3244 = vld [vmem:[%s891 + $0xe8] sm:$0xf]
      %v3245 = vld [vmem:[%s891 + $0xec] sm:$0x3]
      %v3246 = vmax.bf16 %v3126, %v3186
      %v3247 = vmax.bf16 %v3127, %v3187
      %v3248 = vmax.bf16 %v3128, %v3188
      %v3249 = vmax.bf16 %v3129, %v3189
      %v3250 = vmax.bf16 %v3130, %v3190
      %v3251 = vmax.bf16 %v3131, %v3191
      %v3252 = vmax.bf16 %v3132, %v3192
      %v3253 = vmax.bf16 %v3133, %v3193
      %v3254 = vmax.bf16 %v3134, %v3194
      %v3255 = vmax.bf16 %v3135, %v3195
      %v3256 = vmax.bf16 %v3136, %v3196
      %v3257 = vmax.bf16 %v3137, %v3197
      %v3258 = vmax.bf16 %v3138, %v3198
      %v3259 = vmax.bf16 %v3139, %v3199
      %v3260 = vmax.bf16 %v3140, %v3200
      %v3261 = vmax.bf16 %v3141, %v3201
      %v3262 = vmax.bf16 %v3142, %v3202
      %v3263 = vmax.bf16 %v3143, %v3203
      %v3264 = vmax.bf16 %v3144, %v3204
      %v3265 = vmax.bf16 %v3145, %v3205
      %v3266 = vmax.bf16 %v3146, %v3206
      %v3267 = vmax.bf16 %v3147, %v3207
      %v3268 = vmax.bf16 %v3148, %v3208
      %v3269 = vmax.bf16 %v3149, %v3209
      %v3270 = vmax.bf16 %v3150, %v3210
      %v3271 = vmax.bf16 %v3151, %v3211
      %v3272 = vmax.bf16 %v3152, %v3212
      %v3273 = vmax.bf16 %v3153, %v3213
      %v3274 = vmax.bf16 %v3154, %v3214
      %v3275 = vmax.bf16 %v3155, %v3215
      %v3276 = vmax.bf16 %v3156, %v3216
      %v3277 = vmax.bf16 %v3157, %v3217
      %v3278 = vmax.bf16 %v3158, %v3218
      %v3279 = vmax.bf16 %v3159, %v3219
      %v3280 = vmax.bf16 %v3160, %v3220
      %v3281 = vmax.bf16 %v3161, %v3221
      %v3282 = vmax.bf16 %v3162, %v3222
      %v3283 = vmax.bf16 %v3163, %v3223
      %v3284 = vmax.bf16 %v3164, %v3224
      %v3285 = vmax.bf16 %v3165, %v3225
      %v3286 = vmax.bf16 %v3166, %v3226
      %v3287 = vmax.bf16 %v3167, %v3227
      %v3288 = vmax.bf16 %v3168, %v3228
      %v3289 = vmax.bf16 %v3169, %v3229
      %v3290 = vmax.bf16 %v3170, %v3230
      %v3291 = vmax.bf16 %v3171, %v3231
      %v3292 = vmax.bf16 %v3172, %v3232
      %v3293 = vmax.bf16 %v3173, %v3233
      %v3294 = vmax.bf16 %v3174, %v3234
      %v3295 = vmax.bf16 %v3175, %v3235
      %v3296 = vmax.bf16 %v3176, %v3236
      %v3297 = vmax.bf16 %v3177, %v3237
      %v3298 = vmax.bf16 %v3178, %v3238
      %v3299 = vmax.bf16 %v3179, %v3239
      %v3300 = vmax.bf16 %v3180, %v3240
      %v3301 = vmax.bf16 %v3181, %v3241
      %v3302 = vmax.bf16 %v3182, %v3242
      %v3303 = vmax.bf16 %v3183, %v3243
      %v3304 = vmax.bf16 %v3184, %v3244
      %v3305 = vmax.bf16 %v3185, %v3245
      %v3306 = vld [vmem:[%s544] sm:$0xf]
      %v3307 = vld [vmem:[%s544 + $0x4] sm:$0xf]
      %v3308 = vld [vmem:[%s544 + $0x8] sm:$0x3]
      %v3309 = vld [vmem:[%s544 + $0xc] sm:$0xf]
      %v3310 = vld [vmem:[%s544 + $0x10] sm:$0xf]
      %v3311 = vld [vmem:[%s544 + $0x14] sm:$0x3]
      %v3312 = vld [vmem:[%s544 + $0x18] sm:$0xf]
      %v3313 = vld [vmem:[%s544 + $0x1c] sm:$0xf]
      %v3314 = vld [vmem:[%s544 + $0x20] sm:$0x3]
      %v3315 = vld [vmem:[%s544 + $0x24] sm:$0xf]
      %v3316 = vld [vmem:[%s544 + $0x28] sm:$0xf]
      %v3317 = vld [vmem:[%s544 + $0x2c] sm:$0x3]
      %v3318 = vld [vmem:[%s544 + $0x30] sm:$0xf]
      %v3319 = vld [vmem:[%s544 + $0x34] sm:$0xf]
      %v3320 = vld [vmem:[%s544 + $0x38] sm:$0x3]
      %v3321 = vld [vmem:[%s544 + $0x3c] sm:$0xf]
      %v3322 = vld [vmem:[%s544 + $0x40] sm:$0xf]
      %v3323 = vld [vmem:[%s544 + $0x44] sm:$0x3]
      %v3324 = vld [vmem:[%s544 + $0x48] sm:$0xf]
      %v3325 = vld [vmem:[%s544 + $0x4c] sm:$0xf]
      %v3326 = vld [vmem:[%s544 + $0x50] sm:$0x3]
      %v3327 = vld [vmem:[%s544 + $0x54] sm:$0xf]
      %v3328 = vld [vmem:[%s544 + $0x58] sm:$0xf]
      %v3329 = vld [vmem:[%s544 + $0x5c] sm:$0x3]
      %v3330 = vld [vmem:[%s544 + $0x60] sm:$0xf]
      %v3331 = vld [vmem:[%s544 + $0x64] sm:$0xf]
      %v3332 = vld [vmem:[%s544 + $0x68] sm:$0x3]
      %v3333 = vld [vmem:[%s544 + $0x6c] sm:$0xf]
      %v3334 = vld [vmem:[%s544 + $0x70] sm:$0xf]
      %v3335 = vld [vmem:[%s544 + $0x74] sm:$0x3]
      %v3336 = vld [vmem:[%s544 + $0x78] sm:$0xf]
      %v3337 = vld [vmem:[%s544 + $0x7c] sm:$0xf]
      %v3338 = vld [vmem:[%s544 + $0x80] sm:$0x3]
      %v3339 = vld [vmem:[%s544 + $0x84] sm:$0xf]
      %v3340 = vld [vmem:[%s544 + $0x88] sm:$0xf]
      %v3341 = vld [vmem:[%s544 + $0x8c] sm:$0x3]
      %v3342 = vld [vmem:[%s544 + $0x90] sm:$0xf]
      %v3343 = vld [vmem:[%s544 + $0x94] sm:$0xf]
      %v3344 = vld [vmem:[%s544 + $0x98] sm:$0x3]
      %v3345 = vld [vmem:[%s544 + $0x9c] sm:$0xf]
      %v3346 = vld [vmem:[%s544 + $0xa0] sm:$0xf]
      %v3347 = vld [vmem:[%s544 + $0xa4] sm:$0x3]
      %v3348 = vld [vmem:[%s544 + $0xa8] sm:$0xf]
      %v3349 = vld [vmem:[%s544 + $0xac] sm:$0xf]
      %v3350 = vld [vmem:[%s544 + $0xb0] sm:$0x3]
      %v3351 = vld [vmem:[%s544 + $0xb4] sm:$0xf]
      %v3352 = vld [vmem:[%s544 + $0xb8] sm:$0xf]
      %v3353 = vld [vmem:[%s544 + $0xbc] sm:$0x3]
      %v3354 = vld [vmem:[%s544 + $0xc0] sm:$0xf]
      %v3355 = vld [vmem:[%s544 + $0xc4] sm:$0xf]
      %v3356 = vld [vmem:[%s544 + $0xc8] sm:$0x3]
      %v3357 = vld [vmem:[%s544 + $0xcc] sm:$0xf]
      %v3358 = vld [vmem:[%s544 + $0xd0] sm:$0xf]
      %v3359 = vld [vmem:[%s544 + $0xd4] sm:$0x3]
      %v3360 = vld [vmem:[%s544 + $0xd8] sm:$0xf]
      %v3361 = vld [vmem:[%s544 + $0xdc] sm:$0xf]
      %v3362 = vld [vmem:[%s544 + $0xe0] sm:$0x3]
      %v3363 = vld [vmem:[%s544 + $0xe4] sm:$0xf]
      %v3364 = vld [vmem:[%s544 + $0xe8] sm:$0xf]
      %v3365 = vld [vmem:[%s544 + $0xec] sm:$0x3]
      %v3366 = vmax.bf16 %v3246, %v3306
      %v3367 = vmax.bf16 %v3247, %v3307
      %v3368 = vmax.bf16 %v3248, %v3308
      %v3369 = vmax.bf16 %v3249, %v3309
      %v3370 = vmax.bf16 %v3250, %v3310
      %v3371 = vmax.bf16 %v3251, %v3311
      %v3372 = vmax.bf16 %v3252, %v3312
      %v3373 = vmax.bf16 %v3253, %v3313
      %v3374 = vmax.bf16 %v3254, %v3314
      %v3375 = vmax.bf16 %v3255, %v3315
      %v3376 = vmax.bf16 %v3256, %v3316
      %v3377 = vmax.bf16 %v3257, %v3317
      %v3378 = vmax.bf16 %v3258, %v3318
      %v3379 = vmax.bf16 %v3259, %v3319
      %v3380 = vmax.bf16 %v3260, %v3320
      %v3381 = vmax.bf16 %v3261, %v3321
      %v3382 = vmax.bf16 %v3262, %v3322
      %v3383 = vmax.bf16 %v3263, %v3323
      %v3384 = vmax.bf16 %v3264, %v3324
      %v3385 = vmax.bf16 %v3265, %v3325
      %v3386 = vmax.bf16 %v3266, %v3326
      %v3387 = vmax.bf16 %v3267, %v3327
      %v3388 = vmax.bf16 %v3268, %v3328
      %v3389 = vmax.bf16 %v3269, %v3329
      %v3390 = vmax.bf16 %v3270, %v3330
      %v3391 = vmax.bf16 %v3271, %v3331
      %v3392 = vmax.bf16 %v3272, %v3332
      %v3393 = vmax.bf16 %v3273, %v3333
      %v3394 = vmax.bf16 %v3274, %v3334
      %v3395 = vmax.bf16 %v3275, %v3335
      %v3396 = vmax.bf16 %v3276, %v3336
      %v3397 = vmax.bf16 %v3277, %v3337
      %v3398 = vmax.bf16 %v3278, %v3338
      %v3399 = vmax.bf16 %v3279, %v3339
      %v3400 = vmax.bf16 %v3280, %v3340
      %v3401 = vmax.bf16 %v3281, %v3341
      %v3402 = vmax.bf16 %v3282, %v3342
      %v3403 = vmax.bf16 %v3283, %v3343
      %v3404 = vmax.bf16 %v3284, %v3344
      %v3405 = vmax.bf16 %v3285, %v3345
      %v3406 = vmax.bf16 %v3286, %v3346
      %v3407 = vmax.bf16 %v3287, %v3347
      %v3408 = vmax.bf16 %v3288, %v3348
      %v3409 = vmax.bf16 %v3289, %v3349
      %v3410 = vmax.bf16 %v3290, %v3350
      %v3411 = vmax.bf16 %v3291, %v3351
      %v3412 = vmax.bf16 %v3292, %v3352
      %v3413 = vmax.bf16 %v3293, %v3353
      %v3414 = vmax.bf16 %v3294, %v3354
      %v3415 = vmax.bf16 %v3295, %v3355
      %v3416 = vmax.bf16 %v3296, %v3356
      %v3417 = vmax.bf16 %v3297, %v3357
      %v3418 = vmax.bf16 %v3298, %v3358
      %v3419 = vmax.bf16 %v3299, %v3359
      %v3420 = vmax.bf16 %v3300, %v3360
      %v3421 = vmax.bf16 %v3301, %v3361
      %v3422 = vmax.bf16 %v3302, %v3362
      %v3423 = vmax.bf16 %v3303, %v3363
      %v3424 = vmax.bf16 %v3304, %v3364
      %v3425 = vmax.bf16 %v3305, %v3365
      %v3426 = vld [vmem:[%s1132] sm:$0xf]
      %v3427 = vld [vmem:[%s1132 + $0x4] sm:$0xf]
      %v3428 = vld [vmem:[%s1132 + $0x8] sm:$0x3]
      %v3429 = vld [vmem:[%s1132 + $0xc] sm:$0xf]
      %v3430 = vld [vmem:[%s1132 + $0x10] sm:$0xf]
      %v3431 = vld [vmem:[%s1132 + $0x14] sm:$0x3]
      %v3432 = vld [vmem:[%s1132 + $0x18] sm:$0xf]
      %v3433 = vld [vmem:[%s1132 + $0x1c] sm:$0xf]
      %v3434 = vld [vmem:[%s1132 + $0x20] sm:$0x3]
      %v3435 = vld [vmem:[%s1132 + $0x24] sm:$0xf]
      %v3436 = vld [vmem:[%s1132 + $0x28] sm:$0xf]
      %v3437 = vld [vmem:[%s1132 + $0x2c] sm:$0x3]
      %v3438 = vld [vmem:[%s1132 + $0x30] sm:$0xf]
      %v3439 = vld [vmem:[%s1132 + $0x34] sm:$0xf]
      %v3440 = vld [vmem:[%s1132 + $0x38] sm:$0x3]
      %v3441 = vld [vmem:[%s1132 + $0x3c] sm:$0xf]
      %v3442 = vld [vmem:[%s1132 + $0x40] sm:$0xf]
      %v3443 = vld [vmem:[%s1132 + $0x44] sm:$0x3]
      %v3444 = vld [vmem:[%s1132 + $0x48] sm:$0xf]
      %v3445 = vld [vmem:[%s1132 + $0x4c] sm:$0xf]
      %v3446 = vld [vmem:[%s1132 + $0x50] sm:$0x3]
      %v3447 = vld [vmem:[%s1132 + $0x54] sm:$0xf]
      %v3448 = vld [vmem:[%s1132 + $0x58] sm:$0xf]
      %v3449 = vld [vmem:[%s1132 + $0x5c] sm:$0x3]
      %v3450 = vld [vmem:[%s1132 + $0x60] sm:$0xf]
      %v3451 = vld [vmem:[%s1132 + $0x64] sm:$0xf]
      %v3452 = vld [vmem:[%s1132 + $0x68] sm:$0x3]
      %v3453 = vld [vmem:[%s1132 + $0x6c] sm:$0xf]
      %v3454 = vld [vmem:[%s1132 + $0x70] sm:$0xf]
      %v3455 = vld [vmem:[%s1132 + $0x74] sm:$0x3]
      %v3456 = vld [vmem:[%s1132 + $0x78] sm:$0xf]
      %v3457 = vld [vmem:[%s1132 + $0x7c] sm:$0xf]
      %v3458 = vld [vmem:[%s1132 + $0x80] sm:$0x3]
      %v3459 = vld [vmem:[%s1132 + $0x84] sm:$0xf]
      %v3460 = vld [vmem:[%s1132 + $0x88] sm:$0xf]
      %v3461 = vld [vmem:[%s1132 + $0x8c] sm:$0x3]
      %v3462 = vld [vmem:[%s1132 + $0x90] sm:$0xf]
      %v3463 = vld [vmem:[%s1132 + $0x94] sm:$0xf]
      %v3464 = vld [vmem:[%s1132 + $0x98] sm:$0x3]
      %v3465 = vld [vmem:[%s1132 + $0x9c] sm:$0xf]
      %v3466 = vld [vmem:[%s1132 + $0xa0] sm:$0xf]
      %v3467 = vld [vmem:[%s1132 + $0xa4] sm:$0x3]
      %v3468 = vld [vmem:[%s1132 + $0xa8] sm:$0xf]
      %v3469 = vld [vmem:[%s1132 + $0xac] sm:$0xf]
      %v3470 = vld [vmem:[%s1132 + $0xb0] sm:$0x3]
      %v3471 = vld [vmem:[%s1132 + $0xb4] sm:$0xf]
      %v3472 = vld [vmem:[%s1132 + $0xb8] sm:$0xf]
      %v3473 = vld [vmem:[%s1132 + $0xbc] sm:$0x3]
      %v3474 = vld [vmem:[%s1132 + $0xc0] sm:$0xf]
      %v3475 = vld [vmem:[%s1132 + $0xc4] sm:$0xf]
      %v3476 = vld [vmem:[%s1132 + $0xc8] sm:$0x3]
      %v3477 = vld [vmem:[%s1132 + $0xcc] sm:$0xf]
      %v3478 = vld [vmem:[%s1132 + $0xd0] sm:$0xf]
      %v3479 = vld [vmem:[%s1132 + $0xd4] sm:$0x3]
      %v3480 = vld [vmem:[%s1132 + $0xd8] sm:$0xf]
      %v3481 = vld [vmem:[%s1132 + $0xdc] sm:$0xf]
      %v3482 = vld [vmem:[%s1132 + $0xe0] sm:$0x3]
      %v3483 = vld [vmem:[%s1132 + $0xe4] sm:$0xf]
      %v3484 = vld [vmem:[%s1132 + $0xe8] sm:$0xf]
      %v3485 = vld [vmem:[%s1132 + $0xec] sm:$0x3]
      %v3486 = vmax.bf16 %v3366, %v3426
      %v3487 = vmax.bf16 %v3367, %v3427
      %v3488 = vmax.bf16 %v3368, %v3428
      %v3489 = vmax.bf16 %v3369, %v3429
      %v3490 = vmax.bf16 %v3370, %v3430
      %v3491 = vmax.bf16 %v3371, %v3431
      %v3492 = vmax.bf16 %v3372, %v3432
      %v3493 = vmax.bf16 %v3373, %v3433
      %v3494 = vmax.bf16 %v3374, %v3434
      %v3495 = vmax.bf16 %v3375, %v3435
      %v3496 = vmax.bf16 %v3376, %v3436
      %v3497 = vmax.bf16 %v3377, %v3437
      %v3498 = vmax.bf16 %v3378, %v3438
      %v3499 = vmax.bf16 %v3379, %v3439
      %v3500 = vmax.bf16 %v3380, %v3440
      %v3501 = vmax.bf16 %v3381, %v3441
      %v3502 = vmax.bf16 %v3382, %v3442
      %v3503 = vmax.bf16 %v3383, %v3443
      %v3504 = vmax.bf16 %v3384, %v3444
      %v3505 = vmax.bf16 %v3385, %v3445
      %v3506 = vmax.bf16 %v3386, %v3446
      %v3507 = vmax.bf16 %v3387, %v3447
      %v3508 = vmax.bf16 %v3388, %v3448
      %v3509 = vmax.bf16 %v3389, %v3449
      %v3510 = vmax.bf16 %v3390, %v3450
      %v3511 = vmax.bf16 %v3391, %v3451
      %v3512 = vmax.bf16 %v3392, %v3452
      %v3513 = vmax.bf16 %v3393, %v3453
      %v3514 = vmax.bf16 %v3394, %v3454
      %v3515 = vmax.bf16 %v3395, %v3455
      %v3516 = vmax.bf16 %v3396, %v3456
      %v3517 = vmax.bf16 %v3397, %v3457
      %v3518 = vmax.bf16 %v3398, %v3458
      %v3519 = vmax.bf16 %v3399, %v3459
      %v3520 = vmax.bf16 %v3400, %v3460
      %v3521 = vmax.bf16 %v3401, %v3461
      %v3522 = vmax.bf16 %v3402, %v3462
      %v3523 = vmax.bf16 %v3403, %v3463
      %v3524 = vmax.bf16 %v3404, %v3464
      %v3525 = vmax.bf16 %v3405, %v3465
      %v3526 = vmax.bf16 %v3406, %v3466
      %v3527 = vmax.bf16 %v3407, %v3467
      %v3528 = vmax.bf16 %v3408, %v3468
      %v3529 = vmax.bf16 %v3409, %v3469
      %v3530 = vmax.bf16 %v3410, %v3470
      %v3531 = vmax.bf16 %v3411, %v3471
      %v3532 = vmax.bf16 %v3412, %v3472
      %v3533 = vmax.bf16 %v3413, %v3473
      %v3534 = vmax.bf16 %v3414, %v3474
      %v3535 = vmax.bf16 %v3415, %v3475
      %v3536 = vmax.bf16 %v3416, %v3476
      %v3537 = vmax.bf16 %v3417, %v3477
      %v3538 = vmax.bf16 %v3418, %v3478
      %v3539 = vmax.bf16 %v3419, %v3479
      %v3540 = vmax.bf16 %v3420, %v3480
      %v3541 = vmax.bf16 %v3421, %v3481
      %v3542 = vmax.bf16 %v3422, %v3482
      %v3543 = vmax.bf16 %v3423, %v3483
      %v3544 = vmax.bf16 %v3424, %v3484
      %v3545 = vmax.bf16 %v3425, %v3485
      %v3546 = vld [vmem:[%s1253] sm:$0xf]
      %v3547 = vld [vmem:[%s1253 + $0x4] sm:$0xf]
      %v3548 = vld [vmem:[%s1253 + $0x8] sm:$0x3]
      %v3549 = vld [vmem:[%s1253 + $0xc] sm:$0xf]
      %v3550 = vld [vmem:[%s1253 + $0x10] sm:$0xf]
      %v3551 = vld [vmem:[%s1253 + $0x14] sm:$0x3]
      %v3552 = vld [vmem:[%s1253 + $0x18] sm:$0xf]
      %v3553 = vld [vmem:[%s1253 + $0x1c] sm:$0xf]
      %v3554 = vld [vmem:[%s1253 + $0x20] sm:$0x3]
      %v3555 = vld [vmem:[%s1253 + $0x24] sm:$0xf]
      %v3556 = vld [vmem:[%s1253 + $0x28] sm:$0xf]
      %v3557 = vld [vmem:[%s1253 + $0x2c] sm:$0x3]
      %v3558 = vld [vmem:[%s1253 + $0x30] sm:$0xf]
      %v3559 = vld [vmem:[%s1253 + $0x34] sm:$0xf]
      %v3560 = vld [vmem:[%s1253 + $0x38] sm:$0x3]
      %v3561 = vld [vmem:[%s1253 + $0x3c] sm:$0xf]
      %v3562 = vld [vmem:[%s1253 + $0x40] sm:$0xf]
      %v3563 = vld [vmem:[%s1253 + $0x44] sm:$0x3]
      %v3564 = vld [vmem:[%s1253 + $0x48] sm:$0xf]
      %v3565 = vld [vmem:[%s1253 + $0x4c] sm:$0xf]
      %v3566 = vld [vmem:[%s1253 + $0x50] sm:$0x3]
      %v3567 = vld [vmem:[%s1253 + $0x54] sm:$0xf]
      %v3568 = vld [vmem:[%s1253 + $0x58] sm:$0xf]
      %v3569 = vld [vmem:[%s1253 + $0x5c] sm:$0x3]
      %v3570 = vld [vmem:[%s1253 + $0x60] sm:$0xf]
      %v3571 = vld [vmem:[%s1253 + $0x64] sm:$0xf]
      %v3572 = vld [vmem:[%s1253 + $0x68] sm:$0x3]
      %v3573 = vld [vmem:[%s1253 + $0x6c] sm:$0xf]
      %v3574 = vld [vmem:[%s1253 + $0x70] sm:$0xf]
      %v3575 = vld [vmem:[%s1253 + $0x74] sm:$0x3]
      %v3576 = vld [vmem:[%s1253 + $0x78] sm:$0xf]
      %v3577 = vld [vmem:[%s1253 + $0x7c] sm:$0xf]
      %v3578 = vld [vmem:[%s1253 + $0x80] sm:$0x3]
      %v3579 = vld [vmem:[%s1253 + $0x84] sm:$0xf]
      %v3580 = vld [vmem:[%s1253 + $0x88] sm:$0xf]
      %v3581 = vld [vmem:[%s1253 + $0x8c] sm:$0x3]
      %v3582 = vld [vmem:[%s1253 + $0x90] sm:$0xf]
      %v3583 = vld [vmem:[%s1253 + $0x94] sm:$0xf]
      %v3584 = vld [vmem:[%s1253 + $0x98] sm:$0x3]
      %v3585 = vld [vmem:[%s1253 + $0x9c] sm:$0xf]
      %v3586 = vld [vmem:[%s1253 + $0xa0] sm:$0xf]
      %v3587 = vld [vmem:[%s1253 + $0xa4] sm:$0x3]
      %v3588 = vld [vmem:[%s1253 + $0xa8] sm:$0xf]
      %v3589 = vld [vmem:[%s1253 + $0xac] sm:$0xf]
      %v3590 = vld [vmem:[%s1253 + $0xb0] sm:$0x3]
      %v3591 = vld [vmem:[%s1253 + $0xb4] sm:$0xf]
      %v3592 = vld [vmem:[%s1253 + $0xb8] sm:$0xf]
      %v3593 = vld [vmem:[%s1253 + $0xbc] sm:$0x3]
      %v3594 = vld [vmem:[%s1253 + $0xc0] sm:$0xf]
      %v3595 = vld [vmem:[%s1253 + $0xc4] sm:$0xf]
      %v3596 = vld [vmem:[%s1253 + $0xc8] sm:$0x3]
      %v3597 = vld [vmem:[%s1253 + $0xcc] sm:$0xf]
      %v3598 = vld [vmem:[%s1253 + $0xd0] sm:$0xf]
      %v3599 = vld [vmem:[%s1253 + $0xd4] sm:$0x3]
      %v3600 = vld [vmem:[%s1253 + $0xd8] sm:$0xf]
      %v3601 = vld [vmem:[%s1253 + $0xdc] sm:$0xf]
      %v3602 = vld [vmem:[%s1253 + $0xe0] sm:$0x3]
      %v3603 = vld [vmem:[%s1253 + $0xe4] sm:$0xf]
      %v3604 = vld [vmem:[%s1253 + $0xe8] sm:$0xf]
      %v3605 = vld [vmem:[%s1253 + $0xec] sm:$0x3]
      %v3606 = vmax.bf16 %v3486, %v3546
      %v3607 = vmax.bf16 %v3487, %v3547
      %v3608 = vmax.bf16 %v3488, %v3548
      %v3609 = vmax.bf16 %v3489, %v3549
      %v3610 = vmax.bf16 %v3490, %v3550
      %v3611 = vmax.bf16 %v3491, %v3551
      %v3612 = vmax.bf16 %v3492, %v3552
      %v3613 = vmax.bf16 %v3493, %v3553
      %v3614 = vmax.bf16 %v3494, %v3554
      %v3615 = vmax.bf16 %v3495, %v3555
      %v3616 = vmax.bf16 %v3496, %v3556
      %v3617 = vmax.bf16 %v3497, %v3557
      %v3618 = vmax.bf16 %v3498, %v3558
      %v3619 = vmax.bf16 %v3499, %v3559
      %v3620 = vmax.bf16 %v3500, %v3560
      %v3621 = vmax.bf16 %v3501, %v3561
      %v3622 = vmax.bf16 %v3502, %v3562
      %v3623 = vmax.bf16 %v3503, %v3563
      %v3624 = vmax.bf16 %v3504, %v3564
      %v3625 = vmax.bf16 %v3505, %v3565
      %v3626 = vmax.bf16 %v3506, %v3566
      %v3627 = vmax.bf16 %v3507, %v3567
      %v3628 = vmax.bf16 %v3508, %v3568
      %v3629 = vmax.bf16 %v3509, %v3569
      %v3630 = vmax.bf16 %v3510, %v3570
      %v3631 = vmax.bf16 %v3511, %v3571
      %v3632 = vmax.bf16 %v3512, %v3572
      %v3633 = vmax.bf16 %v3513, %v3573
      %v3634 = vmax.bf16 %v3514, %v3574
      %v3635 = vmax.bf16 %v3515, %v3575
      %v3636 = vmax.bf16 %v3516, %v3576
      %v3637 = vmax.bf16 %v3517, %v3577
      %v3638 = vmax.bf16 %v3518, %v3578
      %v3639 = vmax.bf16 %v3519, %v3579
      %v3640 = vmax.bf16 %v3520, %v3580
      %v3641 = vmax.bf16 %v3521, %v3581
      %v3642 = vmax.bf16 %v3522, %v3582
      %v3643 = vmax.bf16 %v3523, %v3583
      %v3644 = vmax.bf16 %v3524, %v3584
      %v3645 = vmax.bf16 %v3525, %v3585
      %v3646 = vmax.bf16 %v3526, %v3586
      %v3647 = vmax.bf16 %v3527, %v3587
      %v3648 = vmax.bf16 %v3528, %v3588
      %v3649 = vmax.bf16 %v3529, %v3589
      %v3650 = vmax.bf16 %v3530, %v3590
      %v3651 = vmax.bf16 %v3531, %v3591
      %v3652 = vmax.bf16 %v3532, %v3592
      %v3653 = vmax.bf16 %v3533, %v3593
      %v3654 = vmax.bf16 %v3534, %v3594
      %v3655 = vmax.bf16 %v3535, %v3595
      %v3656 = vmax.bf16 %v3536, %v3596
      %v3657 = vmax.bf16 %v3537, %v3597
      %v3658 = vmax.bf16 %v3538, %v3598
      %v3659 = vmax.bf16 %v3539, %v3599
      %v3660 = vmax.bf16 %v3540, %v3600
      %v3661 = vmax.bf16 %v3541, %v3601
      %v3662 = vmax.bf16 %v3542, %v3602
      %v3663 = vmax.bf16 %v3543, %v3603
      %v3664 = vmax.bf16 %v3544, %v3604
      %v3665 = vmax.bf16 %v3545, %v3605
      %v3667 = vshrl.u32 %v3606, 16
      %v3669 = vrot.slane %v3667, 4
      %v3670 = vshll.u32 %v3606, 16
      %v3672 = vrot.slane %v3670, 5
      %v3673 = vor.u32 %v3669, %v3672
      %v3674 = vrot.slane %v3673, 4
      %v3676 = vshll.u32 %v3607, 16
      %v3678 = vrot.slane %v3676, 5
      %v3679 = vsel %vm1376, %v3674, %v3678
      %v3680 = vshrl.u32 %v3607, 16
      %v3682 = vrot.slane %v3680, 4
      %v3683 = vor.u32 %v3682, %v3678
      %v3684 = vrot.slane %v3683, 4
      %v3686 = vshll.u32 %v3608, 16
      %v3688 = vrot.slane %v3686, 5
      %v3689 = vsel %vm1376, %v3684, %v3688
      %v3691 = vshrl.u32 %v3609, 16
      %v3693 = vrot.slane %v3691, 4
      %v3694 = vshll.u32 %v3609, 16
      %v3696 = vrot.slane %v3694, 5
      %v3697 = vor.u32 %v3693, %v3696
      %v3698 = vrot.slane %v3697, 4
      %v3700 = vshll.u32 %v3610, 16
      %v3702 = vrot.slane %v3700, 5
      %v3703 = vsel %vm1376, %v3698, %v3702
      %v3704 = vshrl.u32 %v3610, 16
      %v3706 = vrot.slane %v3704, 4
      %v3707 = vor.u32 %v3706, %v3702
      %v3708 = vrot.slane %v3707, 4
      %v3710 = vshll.u32 %v3611, 16
      %v3712 = vrot.slane %v3710, 5
      %v3713 = vsel %vm1376, %v3708, %v3712
      %v3715 = vshrl.u32 %v3612, 16
      %v3717 = vrot.slane %v3715, 4
      %v3718 = vshll.u32 %v3612, 16
      %v3720 = vrot.slane %v3718, 5
      %v3721 = vor.u32 %v3717, %v3720
      %v3722 = vrot.slane %v3721, 4
      %v3724 = vshll.u32 %v3613, 16
      %v3726 = vrot.slane %v3724, 5
      %v3727 = vsel %vm1376, %v3722, %v3726
      %v3728 = vshrl.u32 %v3613, 16
      %v3730 = vrot.slane %v3728, 4
      %v3731 = vor.u32 %v3730, %v3726
      %v3732 = vrot.slane %v3731, 4
      %v3734 = vshll.u32 %v3614, 16
      %v3736 = vrot.slane %v3734, 5
      %v3737 = vsel %vm1376, %v3732, %v3736
      %v3739 = vshrl.u32 %v3615, 16
      %v3741 = vrot.slane %v3739, 4
      %v3742 = vshll.u32 %v3615, 16
      %v3744 = vrot.slane %v3742, 5
      %v3745 = vor.u32 %v3741, %v3744
      %v3746 = vrot.slane %v3745, 4
      %v3748 = vshll.u32 %v3616, 16
      %v3750 = vrot.slane %v3748, 5
      %v3751 = vsel %vm1376, %v3746, %v3750
      %v3752 = vshrl.u32 %v3616, 16
      %v3754 = vrot.slane %v3752, 4
      %v3755 = vor.u32 %v3754, %v3750
      %v3756 = vrot.slane %v3755, 4
      %v3758 = vshll.u32 %v3617, 16
      %v3760 = vrot.slane %v3758, 5
      %v3761 = vsel %vm1376, %v3756, %v3760
      %v3763 = vshrl.u32 %v3618, 16
      %v3765 = vrot.slane %v3763, 4
      %v3766 = vshll.u32 %v3618, 16
      %v3768 = vrot.slane %v3766, 5
      %v3769 = vor.u32 %v3765, %v3768
      %v3770 = vrot.slane %v3769, 4
      %v3772 = vshll.u32 %v3619, 16
      %v3774 = vrot.slane %v3772, 5
      %v3775 = vsel %vm1376, %v3770, %v3774
      %v3776 = vshrl.u32 %v3619, 16
      %v3778 = vrot.slane %v3776, 4
      %v3779 = vor.u32 %v3778, %v3774
      %v3780 = vrot.slane %v3779, 4
      %v3782 = vshll.u32 %v3620, 16
      %v3784 = vrot.slane %v3782, 5
      %v3785 = vsel %vm1376, %v3780, %v3784
      %v3787 = vshrl.u32 %v3621, 16
      %v3789 = vrot.slane %v3787, 4
      %v3790 = vshll.u32 %v3621, 16
      %v3792 = vrot.slane %v3790, 5
      %v3793 = vor.u32 %v3789, %v3792
      %v3794 = vrot.slane %v3793, 4
      %v3796 = vshll.u32 %v3622, 16
      %v3798 = vrot.slane %v3796, 5
      %v3799 = vsel %vm1376, %v3794, %v3798
      %v3800 = vshrl.u32 %v3622, 16
      %v3802 = vrot.slane %v3800, 4
      %v3803 = vor.u32 %v3802, %v3798
      %v3804 = vrot.slane %v3803, 4
      %v3806 = vshll.u32 %v3623, 16
      %v3808 = vrot.slane %v3806, 5
      %v3809 = vsel %vm1376, %v3804, %v3808
      %v3811 = vshrl.u32 %v3624, 16
      %v3813 = vrot.slane %v3811, 4
      %v3814 = vshll.u32 %v3624, 16
      %v3816 = vrot.slane %v3814, 5
      %v3817 = vor.u32 %v3813, %v3816
      %v3818 = vrot.slane %v3817, 4
      %v3820 = vshll.u32 %v3625, 16
      %v3822 = vrot.slane %v3820, 5
      %v3823 = vsel %vm1376, %v3818, %v3822
      %v3824 = vshrl.u32 %v3625, 16
      %v3826 = vrot.slane %v3824, 4
      %v3827 = vor.u32 %v3826, %v3822
      %v3828 = vrot.slane %v3827, 4
      %v3830 = vshll.u32 %v3626, 16
      %v3832 = vrot.slane %v3830, 5
      %v3833 = vsel %vm1376, %v3828, %v3832
      %v3835 = vshrl.u32 %v3627, 16
      %v3837 = vrot.slane %v3835, 4
      %v3838 = vshll.u32 %v3627, 16
      %v3840 = vrot.slane %v3838, 5
      %v3841 = vor.u32 %v3837, %v3840
      %v3842 = vrot.slane %v3841, 4
      %v3844 = vshll.u32 %v3628, 16
      %v3846 = vrot.slane %v3844, 5
      %v3847 = vsel %vm1376, %v3842, %v3846
      %v3848 = vshrl.u32 %v3628, 16
      %v3850 = vrot.slane %v3848, 4
      %v3851 = vor.u32 %v3850, %v3846
      %v3852 = vrot.slane %v3851, 4
      %v3854 = vshll.u32 %v3629, 16
      %v3856 = vrot.slane %v3854, 5
      %v3857 = vsel %vm1376, %v3852, %v3856
      %v3859 = vshrl.u32 %v3630, 16
      %v3861 = vrot.slane %v3859, 4
      %v3862 = vshll.u32 %v3630, 16
      %v3864 = vrot.slane %v3862, 5
      %v3865 = vor.u32 %v3861, %v3864
      %v3866 = vrot.slane %v3865, 4
      %v3868 = vshll.u32 %v3631, 16
      %v3870 = vrot.slane %v3868, 5
      %v3871 = vsel %vm1376, %v3866, %v3870
      %v3872 = vshrl.u32 %v3631, 16
      %v3874 = vrot.slane %v3872, 4
      %v3875 = vor.u32 %v3874, %v3870
      %v3876 = vrot.slane %v3875, 4
      %v3878 = vshll.u32 %v3632, 16
      %v3880 = vrot.slane %v3878, 5
      %v3881 = vsel %vm1376, %v3876, %v3880
      %v3883 = vshrl.u32 %v3633, 16
      %v3885 = vrot.slane %v3883, 4
      %v3886 = vshll.u32 %v3633, 16
      %v3888 = vrot.slane %v3886, 5
      %v3889 = vor.u32 %v3885, %v3888
      %v3890 = vrot.slane %v3889, 4
      %v3892 = vshll.u32 %v3634, 16
      %v3894 = vrot.slane %v3892, 5
      %v3895 = vsel %vm1376, %v3890, %v3894
      %v3896 = vshrl.u32 %v3634, 16
      %v3898 = vrot.slane %v3896, 4
      %v3899 = vor.u32 %v3898, %v3894
      %v3900 = vrot.slane %v3899, 4
      %v3902 = vshll.u32 %v3635, 16
      %v3904 = vrot.slane %v3902, 5
      %v3905 = vsel %vm1376, %v3900, %v3904
      %v3907 = vshrl.u32 %v3636, 16
      %v3909 = vrot.slane %v3907, 4
      %v3910 = vshll.u32 %v3636, 16
      %v3912 = vrot.slane %v3910, 5
      %v3913 = vor.u32 %v3909, %v3912
      %v3914 = vrot.slane %v3913, 4
      %v3916 = vshll.u32 %v3637, 16
      %v3918 = vrot.slane %v3916, 5
      %v3919 = vsel %vm1376, %v3914, %v3918
      %v3920 = vshrl.u32 %v3637, 16
      %v3922 = vrot.slane %v3920, 4
      %v3923 = vor.u32 %v3922, %v3918
      %v3924 = vrot.slane %v3923, 4
      %v3926 = vshll.u32 %v3638, 16
      %v3928 = vrot.slane %v3926, 5
      %v3929 = vsel %vm1376, %v3924, %v3928
      %v3931 = vshrl.u32 %v3639, 16
      %v3933 = vrot.slane %v3931, 4
      %v3934 = vshll.u32 %v3639, 16
      %v3936 = vrot.slane %v3934, 5
      %v3937 = vor.u32 %v3933, %v3936
      %v3938 = vrot.slane %v3937, 4
      %v3940 = vshll.u32 %v3640, 16
      %v3942 = vrot.slane %v3940, 5
      %v3943 = vsel %vm1376, %v3938, %v3942
      %v3944 = vshrl.u32 %v3640, 16
      %v3946 = vrot.slane %v3944, 4
      %v3947 = vor.u32 %v3946, %v3942
      %v3948 = vrot.slane %v3947, 4
      %v3950 = vshll.u32 %v3641, 16
      %v3952 = vrot.slane %v3950, 5
      %v3953 = vsel %vm1376, %v3948, %v3952
      %v3955 = vshrl.u32 %v3642, 16
      %v3957 = vrot.slane %v3955, 4
      %v3958 = vshll.u32 %v3642, 16
      %v3960 = vrot.slane %v3958, 5
      %v3961 = vor.u32 %v3957, %v3960
      %v3962 = vrot.slane %v3961, 4
      %v3964 = vshll.u32 %v3643, 16
      %v3966 = vrot.slane %v3964, 5
      %v3967 = vsel %vm1376, %v3962, %v3966
      %v3968 = vshrl.u32 %v3643, 16
      %v3970 = vrot.slane %v3968, 4
      %v3971 = vor.u32 %v3970, %v3966
      %v3972 = vrot.slane %v3971, 4
      %v3974 = vshll.u32 %v3644, 16
      %v3976 = vrot.slane %v3974, 5
      %v3977 = vsel %vm1376, %v3972, %v3976
      %v3979 = vshrl.u32 %v3645, 16
      %v3981 = vrot.slane %v3979, 4
      %v3982 = vshll.u32 %v3645, 16
      %v3984 = vrot.slane %v3982, 5
      %v3985 = vor.u32 %v3981, %v3984
      %v3986 = vrot.slane %v3985, 4
      %v3988 = vshll.u32 %v3646, 16
      %v3990 = vrot.slane %v3988, 5
      %v3991 = vsel %vm1376, %v3986, %v3990
      %v3992 = vshrl.u32 %v3646, 16
      %v3994 = vrot.slane %v3992, 4
      %v3995 = vor.u32 %v3994, %v3990
      %v3996 = vrot.slane %v3995, 4
      %v3998 = vshll.u32 %v3647, 16
      %v4000 = vrot.slane %v3998, 5
      %v4001 = vsel %vm1376, %v3996, %v4000
      %v4003 = vshrl.u32 %v3648, 16
      %v4005 = vrot.slane %v4003, 4
      %v4006 = vshll.u32 %v3648, 16
      %v4008 = vrot.slane %v4006, 5
      %v4009 = vor.u32 %v4005, %v4008
      %v4010 = vrot.slane %v4009, 4
      %v4012 = vshll.u32 %v3649, 16
      %v4014 = vrot.slane %v4012, 5
      %v4015 = vsel %vm1376, %v4010, %v4014
      %v4016 = vshrl.u32 %v3649, 16
      %v4018 = vrot.slane %v4016, 4
      %v4019 = vor.u32 %v4018, %v4014
      %v4020 = vrot.slane %v4019, 4
      %v4022 = vshll.u32 %v3650, 16
      %v4024 = vrot.slane %v4022, 5
      %v4025 = vsel %vm1376, %v4020, %v4024
      %v4027 = vshrl.u32 %v3651, 16
      %v4029 = vrot.slane %v4027, 4
      %v4030 = vshll.u32 %v3651, 16
      %v4032 = vrot.slane %v4030, 5
      %v4033 = vor.u32 %v4029, %v4032
      %v4034 = vrot.slane %v4033, 4
      %v4036 = vshll.u32 %v3652, 16
      %v4038 = vrot.slane %v4036, 5
      %v4039 = vsel %vm1376, %v4034, %v4038
      %v4040 = vshrl.u32 %v3652, 16
      %v4042 = vrot.slane %v4040, 4
      %v4043 = vor.u32 %v4042, %v4038
      %v4044 = vrot.slane %v4043, 4
      %v4046 = vshll.u32 %v3653, 16
      %v4048 = vrot.slane %v4046, 5
      %v4049 = vsel %vm1376, %v4044, %v4048
      %v4051 = vshrl.u32 %v3654, 16
      %v4053 = vrot.slane %v4051, 4
      %v4054 = vshll.u32 %v3654, 16
      %v4056 = vrot.slane %v4054, 5
      %v4057 = vor.u32 %v4053, %v4056
      %v4058 = vrot.slane %v4057, 4
      %v4060 = vshll.u32 %v3655, 16
      %v4062 = vrot.slane %v4060, 5
      %v4063 = vsel %vm1376, %v4058, %v4062
      %v4064 = vshrl.u32 %v3655, 16
      %v4066 = vrot.slane %v4064, 4
      %v4067 = vor.u32 %v4066, %v4062
      %v4068 = vrot.slane %v4067, 4
      %v4070 = vshll.u32 %v3656, 16
      %v4072 = vrot.slane %v4070, 5
      %v4073 = vsel %vm1376, %v4068, %v4072
      %v4075 = vshrl.u32 %v3657, 16
      %v4077 = vrot.slane %v4075, 4
      %v4078 = vshll.u32 %v3657, 16
      %v4080 = vrot.slane %v4078, 5
      %v4081 = vor.u32 %v4077, %v4080
      %v4082 = vrot.slane %v4081, 4
      %v4084 = vshll.u32 %v3658, 16
      %v4086 = vrot.slane %v4084, 5
      %v4087 = vsel %vm1376, %v4082, %v4086
      %v4088 = vshrl.u32 %v3658, 16
      %v4090 = vrot.slane %v4088, 4
      %v4091 = vor.u32 %v4090, %v4086
      %v4092 = vrot.slane %v4091, 4
      %v4094 = vshll.u32 %v3659, 16
      %v4096 = vrot.slane %v4094, 5
      %v4097 = vsel %vm1376, %v4092, %v4096
      %v4099 = vshrl.u32 %v3660, 16
      %v4101 = vrot.slane %v4099, 4
      %v4102 = vshll.u32 %v3660, 16
      %v4104 = vrot.slane %v4102, 5
      %v4105 = vor.u32 %v4101, %v4104
      %v4106 = vrot.slane %v4105, 4
      %v4108 = vshll.u32 %v3661, 16
      %v4110 = vrot.slane %v4108, 5
      %v4111 = vsel %vm1376, %v4106, %v4110
      %v4112 = vshrl.u32 %v3661, 16
      %v4114 = vrot.slane %v4112, 4
      %v4115 = vor.u32 %v4114, %v4110
      %v4116 = vrot.slane %v4115, 4
      %v4118 = vshll.u32 %v3662, 16
      %v4120 = vrot.slane %v4118, 5
      %v4121 = vsel %vm1376, %v4116, %v4120
      %v4123 = vshrl.u32 %v3663, 16
      %v4125 = vrot.slane %v4123, 4
      %v4126 = vshll.u32 %v3663, 16
      %v4128 = vrot.slane %v4126, 5
      %v4129 = vor.u32 %v4125, %v4128
      %v4130 = vrot.slane %v4129, 4
      %v4132 = vshll.u32 %v3664, 16
      %v4134 = vrot.slane %v4132, 5
      %v4135 = vsel %vm1376, %v4130, %v4134
      %v4136 = vshrl.u32 %v3664, 16
      %v4138 = vrot.slane %v4136, 4
      %v4139 = vor.u32 %v4138, %v4134
      %v4140 = vrot.slane %v4139, 4
      %v4142 = vshll.u32 %v3665, 16
      %v4144 = vrot.slane %v4142, 5
      %v4145 = vsel %vm1376, %v4140, %v4144
      %v4186 = vmax.bf16 %v3606, %v3679
      %v4187 = vmax.bf16 %v3607, %v3689
      %v4188 = vmax.bf16 %v3609, %v3703
      %v4189 = vmax.bf16 %v3610, %v3713
      %v4190 = vmax.bf16 %v3612, %v3727
      %v4191 = vmax.bf16 %v3613, %v3737
      %v4192 = vmax.bf16 %v3615, %v3751
      %v4193 = vmax.bf16 %v3616, %v3761
      %v4194 = vmax.bf16 %v3618, %v3775
      %v4195 = vmax.bf16 %v3619, %v3785
      %v4196 = vmax.bf16 %v3621, %v3799
      %v4197 = vmax.bf16 %v3622, %v3809
      %v4198 = vmax.bf16 %v3624, %v3823
      %v4199 = vmax.bf16 %v3625, %v3833
      %v4200 = vmax.bf16 %v3627, %v3847
      %v4201 = vmax.bf16 %v3628, %v3857
      %v4202 = vmax.bf16 %v3630, %v3871
      %v4203 = vmax.bf16 %v3631, %v3881
      %v4204 = vmax.bf16 %v3633, %v3895
      %v4205 = vmax.bf16 %v3634, %v3905
      %v4206 = vmax.bf16 %v3636, %v3919
      %v4207 = vmax.bf16 %v3637, %v3929
      %v4208 = vmax.bf16 %v3639, %v3943
      %v4209 = vmax.bf16 %v3640, %v3953
      %v4210 = vmax.bf16 %v3642, %v3967
      %v4211 = vmax.bf16 %v3643, %v3977
      %v4212 = vmax.bf16 %v3645, %v3991
      %v4213 = vmax.bf16 %v3646, %v4001
      %v4214 = vmax.bf16 %v3648, %v4015
      %v4215 = vmax.bf16 %v3649, %v4025
      %v4216 = vmax.bf16 %v3651, %v4039
      %v4217 = vmax.bf16 %v3652, %v4049
      %v4218 = vmax.bf16 %v3654, %v4063
      %v4219 = vmax.bf16 %v3655, %v4073
      %v4220 = vmax.bf16 %v3657, %v4087
      %v4221 = vmax.bf16 %v3658, %v4097
      %v4222 = vmax.bf16 %v3660, %v4111
      %v4223 = vmax.bf16 %v3661, %v4121
      %v4224 = vmax.bf16 %v3663, %v4135
      %v4225 = vmax.bf16 %v3664, %v4145
      %v4286 = vrot.slane %v3606, 5
      %v4287 = vrot.slane %v4286, 4
      %v4288 = vrot.slane %v3607, 5
      %v4289 = vsel %vm1999, %v4287, %v4288
      %v4290 = vrot.slane %v4288, 4
      %v4291 = vrot.slane %v3608, 5
      %v4292 = vsel %vm1999, %v4290, %v4291
      %v4293 = vrot.slane %v3609, 5
      %v4294 = vrot.slane %v4293, 4
      %v4295 = vrot.slane %v3610, 5
      %v4296 = vsel %vm1999, %v4294, %v4295
      %v4297 = vrot.slane %v4295, 4
      %v4298 = vrot.slane %v3611, 5
      %v4299 = vsel %vm1999, %v4297, %v4298
      %v4300 = vrot.slane %v3612, 5
      %v4301 = vrot.slane %v4300, 4
      %v4302 = vrot.slane %v3613, 5
      %v4303 = vsel %vm1999, %v4301, %v4302
      %v4304 = vrot.slane %v4302, 4
      %v4305 = vrot.slane %v3614, 5
      %v4306 = vsel %vm1999, %v4304, %v4305
      %v4307 = vrot.slane %v3615, 5
      %v4308 = vrot.slane %v4307, 4
      %v4309 = vrot.slane %v3616, 5
      %v4310 = vsel %vm1999, %v4308, %v4309
      %v4311 = vrot.slane %v4309, 4
      %v4312 = vrot.slane %v3617, 5
      %v4313 = vsel %vm1999, %v4311, %v4312
      %v4314 = vrot.slane %v3618, 5
      %v4315 = vrot.slane %v4314, 4
      %v4316 = vrot.slane %v3619, 5
      %v4317 = vsel %vm1999, %v4315, %v4316
      %v4318 = vrot.slane %v4316, 4
      %v4319 = vrot.slane %v3620, 5
      %v4320 = vsel %vm1999, %v4318, %v4319
      %v4321 = vrot.slane %v3621, 5
      %v4322 = vrot.slane %v4321, 4
      %v4323 = vrot.slane %v3622, 5
      %v4324 = vsel %vm1999, %v4322, %v4323
      %v4325 = vrot.slane %v4323, 4
      %v4326 = vrot.slane %v3623, 5
      %v4327 = vsel %vm1999, %v4325, %v4326
      %v4328 = vrot.slane %v3624, 5
      %v4329 = vrot.slane %v4328, 4
      %v4330 = vrot.slane %v3625, 5
      %v4331 = vsel %vm1999, %v4329, %v4330
      %v4332 = vrot.slane %v4330, 4
      %v4333 = vrot.slane %v3626, 5
      %v4334 = vsel %vm1999, %v4332, %v4333
      %v4335 = vrot.slane %v3627, 5
      %v4336 = vrot.slane %v4335, 4
      %v4337 = vrot.slane %v3628, 5
      %v4338 = vsel %vm1999, %v4336, %v4337
      %v4339 = vrot.slane %v4337, 4
      %v4340 = vrot.slane %v3629, 5
      %v4341 = vsel %vm1999, %v4339, %v4340
      %v4342 = vrot.slane %v3630, 5
      %v4343 = vrot.slane %v4342, 4
      %v4344 = vrot.slane %v3631, 5
      %v4345 = vsel %vm1999, %v4343, %v4344
      %v4346 = vrot.slane %v4344, 4
      %v4347 = vrot.slane %v3632, 5
      %v4348 = vsel %vm1999, %v4346, %v4347
      %v4349 = vrot.slane %v3633, 5
      %v4350 = vrot.slane %v4349, 4
      %v4351 = vrot.slane %v3634, 5
      %v4352 = vsel %vm1999, %v4350, %v4351
      %v4353 = vrot.slane %v4351, 4
      %v4354 = vrot.slane %v3635, 5
      %v4355 = vsel %vm1999, %v4353, %v4354
      %v4356 = vrot.slane %v3636, 5
      %v4357 = vrot.slane %v4356, 4
      %v4358 = vrot.slane %v3637, 5
      %v4359 = vsel %vm1999, %v4357, %v4358
      %v4360 = vrot.slane %v4358, 4
      %v4361 = vrot.slane %v3638, 5
      %v4362 = vsel %vm1999, %v4360, %v4361
      %v4363 = vrot.slane %v3639, 5
      %v4364 = vrot.slane %v4363, 4
      %v4365 = vrot.slane %v3640, 5
      %v4366 = vsel %vm1999, %v4364, %v4365
      %v4367 = vrot.slane %v4365, 4
      %v4368 = vrot.slane %v3641, 5
      %v4369 = vsel %vm1999, %v4367, %v4368
      %v4370 = vrot.slane %v3642, 5
      %v4371 = vrot.slane %v4370, 4
      %v4372 = vrot.slane %v3643, 5
      %v4373 = vsel %vm1999, %v4371, %v4372
      %v4374 = vrot.slane %v4372, 4
      %v4375 = vrot.slane %v3644, 5
      %v4376 = vsel %vm1999, %v4374, %v4375
      %v4377 = vrot.slane %v3645, 5
      %v4378 = vrot.slane %v4377, 4
      %v4379 = vrot.slane %v3646, 5
      %v4380 = vsel %vm1999, %v4378, %v4379
      %v4381 = vrot.slane %v4379, 4
      %v4382 = vrot.slane %v3647, 5
      %v4383 = vsel %vm1999, %v4381, %v4382
      %v4384 = vrot.slane %v3648, 5
      %v4385 = vrot.slane %v4384, 4
      %v4386 = vrot.slane %v3649, 5
      %v4387 = vsel %vm1999, %v4385, %v4386
      %v4388 = vrot.slane %v4386, 4
      %v4389 = vrot.slane %v3650, 5
      %v4390 = vsel %vm1999, %v4388, %v4389
      %v4391 = vrot.slane %v3651, 5
      %v4392 = vrot.slane %v4391, 4
      %v4393 = vrot.slane %v3652, 5
      %v4394 = vsel %vm1999, %v4392, %v4393
      %v4395 = vrot.slane %v4393, 4
      %v4396 = vrot.slane %v3653, 5
      %v4397 = vsel %vm1999, %v4395, %v4396
      %v4398 = vrot.slane %v3654, 5
      %v4399 = vrot.slane %v4398, 4
      %v4400 = vrot.slane %v3655, 5
      %v4401 = vsel %vm1999, %v4399, %v4400
      %v4402 = vrot.slane %v4400, 4
      %v4403 = vrot.slane %v3656, 5
      %v4404 = vsel %vm1999, %v4402, %v4403
      %v4405 = vrot.slane %v3657, 5
      %v4406 = vrot.slane %v4405, 4
      %v4407 = vrot.slane %v3658, 5
      %v4408 = vsel %vm1999, %v4406, %v4407
      %v4409 = vrot.slane %v4407, 4
      %v4410 = vrot.slane %v3659, 5
      %v4411 = vsel %vm1999, %v4409, %v4410
      %v4412 = vrot.slane %v3660, 5
      %v4413 = vrot.slane %v4412, 4
      %v4414 = vrot.slane %v3661, 5
      %v4415 = vsel %vm1999, %v4413, %v4414
      %v4416 = vrot.slane %v4414, 4
      %v4417 = vrot.slane %v3662, 5
      %v4418 = vsel %vm1999, %v4416, %v4417
      %v4419 = vrot.slane %v3663, 5
      %v4420 = vrot.slane %v4419, 4
      %v4421 = vrot.slane %v3664, 5
      %v4422 = vsel %vm1999, %v4420, %v4421
      %v4423 = vrot.slane %v4421, 4
      %v4424 = vrot.slane %v3665, 5
      %v4425 = vsel %vm1999, %v4423, %v4424
      %v4466 = vmax.bf16 %v4186, %v4289
      %v4467 = vmax.bf16 %v4187, %v4292
      %v4468 = vmax.bf16 %v4188, %v4296
      %v4469 = vmax.bf16 %v4189, %v4299
      %v4470 = vmax.bf16 %v4190, %v4303
      %v4471 = vmax.bf16 %v4191, %v4306
      %v4472 = vmax.bf16 %v4192, %v4310
      %v4473 = vmax.bf16 %v4193, %v4313
      %v4474 = vmax.bf16 %v4194, %v4317
      %v4475 = vmax.bf16 %v4195, %v4320
      %v4476 = vmax.bf16 %v4196, %v4324
      %v4477 = vmax.bf16 %v4197, %v4327
      %v4478 = vmax.bf16 %v4198, %v4331
      %v4479 = vmax.bf16 %v4199, %v4334
      %v4480 = vmax.bf16 %v4200, %v4338
      %v4481 = vmax.bf16 %v4201, %v4341
      %v4482 = vmax.bf16 %v4202, %v4345
      %v4483 = vmax.bf16 %v4203, %v4348
      %v4484 = vmax.bf16 %v4204, %v4352
      %v4485 = vmax.bf16 %v4205, %v4355
      %v4486 = vmax.bf16 %v4206, %v4359
      %v4487 = vmax.bf16 %v4207, %v4362
      %v4488 = vmax.bf16 %v4208, %v4366
      %v4489 = vmax.bf16 %v4209, %v4369
      %v4490 = vmax.bf16 %v4210, %v4373
      %v4491 = vmax.bf16 %v4211, %v4376
      %v4492 = vmax.bf16 %v4212, %v4380
      %v4493 = vmax.bf16 %v4213, %v4383
      %v4494 = vmax.bf16 %v4214, %v4387
      %v4495 = vmax.bf16 %v4215, %v4390
      %v4496 = vmax.bf16 %v4216, %v4394
      %v4497 = vmax.bf16 %v4217, %v4397
      %v4498 = vmax.bf16 %v4218, %v4401
      %v4499 = vmax.bf16 %v4219, %v4404
      %v4500 = vmax.bf16 %v4220, %v4408
      %v4501 = vmax.bf16 %v4221, %v4411
      %v4502 = vmax.bf16 %v4222, %v4415
      %v4503 = vmax.bf16 %v4223, %v4418
      %v4504 = vmax.bf16 %v4224, %v4422
      %v4505 = vmax.bf16 %v4225, %v4425
      %v4506 = vrot.slane %v3667, 5
      %v4507 = vrot.slane %v3670, 6
      %v4508 = vor.u32 %v4506, %v4507
      %v4509 = vrot.slane %v4508, 4
      %v4510 = vrot.slane %v3680, 5
      %v4511 = vrot.slane %v3676, 6
      %v4512 = vor.u32 %v4510, %v4511
      %v4513 = vsel %vm2222, %v4509, %v4512
      %v4514 = vrot.slane %v4512, 4
      %v4515 = vshrl.u32 %v3608, 16
      %v4517 = vrot.slane %v4515, 5
      %v4518 = vrot.slane %v3686, 6
      %v4519 = vor.u32 %v4517, %v4518
      %v4520 = vsel %vm2222, %v4514, %v4519
      %v4521 = vrot.slane %v3691, 5
      %v4522 = vrot.slane %v3694, 6
      %v4523 = vor.u32 %v4521, %v4522
      %v4524 = vrot.slane %v4523, 4
      %v4525 = vrot.slane %v3704, 5
      %v4526 = vrot.slane %v3700, 6
      %v4527 = vor.u32 %v4525, %v4526
      %v4528 = vsel %vm2222, %v4524, %v4527
      %v4529 = vrot.slane %v4527, 4
      %v4530 = vshrl.u32 %v3611, 16
      %v4532 = vrot.slane %v4530, 5
      %v4533 = vrot.slane %v3710, 6
      %v4534 = vor.u32 %v4532, %v4533
      %v4535 = vsel %vm2222, %v4529, %v4534
      %v4536 = vrot.slane %v3715, 5
      %v4537 = vrot.slane %v3718, 6
      %v4538 = vor.u32 %v4536, %v4537
      %v4539 = vrot.slane %v4538, 4
      %v4540 = vrot.slane %v3728, 5
      %v4541 = vrot.slane %v3724, 6
      %v4542 = vor.u32 %v4540, %v4541
      %v4543 = vsel %vm2222, %v4539, %v4542
      %v4544 = vrot.slane %v4542, 4
      %v4545 = vshrl.u32 %v3614, 16
      %v4547 = vrot.slane %v4545, 5
      %v4548 = vrot.slane %v3734, 6
      %v4549 = vor.u32 %v4547, %v4548
      %v4550 = vsel %vm2222, %v4544, %v4549
      %v4551 = vrot.slane %v3739, 5
      %v4552 = vrot.slane %v3742, 6
      %v4553 = vor.u32 %v4551, %v4552
      %v4554 = vrot.slane %v4553, 4
      %v4555 = vrot.slane %v3752, 5
      %v4556 = vrot.slane %v3748, 6
      %v4557 = vor.u32 %v4555, %v4556
      %v4558 = vsel %vm2222, %v4554, %v4557
      %v4559 = vrot.slane %v4557, 4
      %v4560 = vshrl.u32 %v3617, 16
      %v4562 = vrot.slane %v4560, 5
      %v4563 = vrot.slane %v3758, 6
      %v4564 = vor.u32 %v4562, %v4563
      %v4565 = vsel %vm2222, %v4559, %v4564
      %v4566 = vrot.slane %v3763, 5
      %v4567 = vrot.slane %v3766, 6
      %v4568 = vor.u32 %v4566, %v4567
      %v4569 = vrot.slane %v4568, 4
      %v4570 = vrot.slane %v3776, 5
      %v4571 = vrot.slane %v3772, 6
      %v4572 = vor.u32 %v4570, %v4571
      %v4573 = vsel %vm2222, %v4569, %v4572
      %v4574 = vrot.slane %v4572, 4
      %v4575 = vshrl.u32 %v3620, 16
      %v4577 = vrot.slane %v4575, 5
      %v4578 = vrot.slane %v3782, 6
      %v4579 = vor.u32 %v4577, %v4578
      %v4580 = vsel %vm2222, %v4574, %v4579
      %v4581 = vrot.slane %v3787, 5
      %v4582 = vrot.slane %v3790, 6
      %v4583 = vor.u32 %v4581, %v4582
      %v4584 = vrot.slane %v4583, 4
      %v4585 = vrot.slane %v3800, 5
      %v4586 = vrot.slane %v3796, 6
      %v4587 = vor.u32 %v4585, %v4586
      %v4588 = vsel %vm2222, %v4584, %v4587
      %v4589 = vrot.slane %v4587, 4
      %v4590 = vshrl.u32 %v3623, 16
      %v4592 = vrot.slane %v4590, 5
      %v4593 = vrot.slane %v3806, 6
      %v4594 = vor.u32 %v4592, %v4593
      %v4595 = vsel %vm2222, %v4589, %v4594
      %v4596 = vrot.slane %v3811, 5
      %v4597 = vrot.slane %v3814, 6
      %v4598 = vor.u32 %v4596, %v4597
      %v4599 = vrot.slane %v4598, 4
      %v4600 = vrot.slane %v3824, 5
      %v4601 = vrot.slane %v3820, 6
      %v4602 = vor.u32 %v4600, %v4601
      %v4603 = vsel %vm2222, %v4599, %v4602
      %v4604 = vrot.slane %v4602, 4
      %v4605 = vshrl.u32 %v3626, 16
      %v4607 = vrot.slane %v4605, 5
      %v4608 = vrot.slane %v3830, 6
      %v4609 = vor.u32 %v4607, %v4608
      %v4610 = vsel %vm2222, %v4604, %v4609
      %v4611 = vrot.slane %v3835, 5
      %v4612 = vrot.slane %v3838, 6
      %v4613 = vor.u32 %v4611, %v4612
      %v4614 = vrot.slane %v4613, 4
      %v4615 = vrot.slane %v3848, 5
      %v4616 = vrot.slane %v3844, 6
      %v4617 = vor.u32 %v4615, %v4616
      %v4618 = vsel %vm2222, %v4614, %v4617
      %v4619 = vrot.slane %v4617, 4
      %v4620 = vshrl.u32 %v3629, 16
      %v4622 = vrot.slane %v4620, 5
      %v4623 = vrot.slane %v3854, 6
      %v4624 = vor.u32 %v4622, %v4623
      %v4625 = vsel %vm2222, %v4619, %v4624
      %v4626 = vrot.slane %v3859, 5
      %v4627 = vrot.slane %v3862, 6
      %v4628 = vor.u32 %v4626, %v4627
      %v4629 = vrot.slane %v4628, 4
      %v4630 = vrot.slane %v3872, 5
      %v4631 = vrot.slane %v3868, 6
      %v4632 = vor.u32 %v4630, %v4631
      %v4633 = vsel %vm2222, %v4629, %v4632
      %v4634 = vrot.slane %v4632, 4
      %v4635 = vshrl.u32 %v3632, 16
      %v4637 = vrot.slane %v4635, 5
      %v4638 = vrot.slane %v3878, 6
      %v4639 = vor.u32 %v4637, %v4638
      %v4640 = vsel %vm2222, %v4634, %v4639
      %v4641 = vrot.slane %v3883, 5
      %v4642 = vrot.slane %v3886, 6
      %v4643 = vor.u32 %v4641, %v4642
      %v4644 = vrot.slane %v4643, 4
      %v4645 = vrot.slane %v3896, 5
      %v4646 = vrot.slane %v3892, 6
      %v4647 = vor.u32 %v4645, %v4646
      %v4648 = vsel %vm2222, %v4644, %v4647
      %v4649 = vrot.slane %v4647, 4
      %v4650 = vshrl.u32 %v3635, 16
      %v4652 = vrot.slane %v4650, 5
      %v4653 = vrot.slane %v3902, 6
      %v4654 = vor.u32 %v4652, %v4653
      %v4655 = vsel %vm2222, %v4649, %v4654
      %v4656 = vrot.slane %v3907, 5
      %v4657 = vrot.slane %v3910, 6
      %v4658 = vor.u32 %v4656, %v4657
      %v4659 = vrot.slane %v4658, 4
      %v4660 = vrot.slane %v3920, 5
      %v4661 = vrot.slane %v3916, 6
      %v4662 = vor.u32 %v4660, %v4661
      %v4663 = vsel %vm2222, %v4659, %v4662
      %v4664 = vrot.slane %v4662, 4
      %v4665 = vshrl.u32 %v3638, 16
      %v4667 = vrot.slane %v4665, 5
      %v4668 = vrot.slane %v3926, 6
      %v4669 = vor.u32 %v4667, %v4668
      %v4670 = vsel %vm2222, %v4664, %v4669
      %v4671 = vrot.slane %v3931, 5
      %v4672 = vrot.slane %v3934, 6
      %v4673 = vor.u32 %v4671, %v4672
      %v4674 = vrot.slane %v4673, 4
      %v4675 = vrot.slane %v3944, 5
      %v4676 = vrot.slane %v3940, 6
      %v4677 = vor.u32 %v4675, %v4676
      %v4678 = vsel %vm2222, %v4674, %v4677
      %v4679 = vrot.slane %v4677, 4
      %v4680 = vshrl.u32 %v3641, 16
      %v4682 = vrot.slane %v4680, 5
      %v4683 = vrot.slane %v3950, 6
      %v4684 = vor.u32 %v4682, %v4683
      %v4685 = vsel %vm2222, %v4679, %v4684
      %v4686 = vrot.slane %v3955, 5
      %v4687 = vrot.slane %v3958, 6
      %v4688 = vor.u32 %v4686, %v4687
      %v4689 = vrot.slane %v4688, 4
      %v4690 = vrot.slane %v3968, 5
      %v4691 = vrot.slane %v3964, 6
      %v4692 = vor.u32 %v4690, %v4691
      %v4693 = vsel %vm2222, %v4689, %v4692
      %v4694 = vrot.slane %v4692, 4
      %v4695 = vshrl.u32 %v3644, 16
      %v4697 = vrot.slane %v4695, 5
      %v4698 = vrot.slane %v3974, 6
      %v4699 = vor.u32 %v4697, %v4698
      %v4700 = vsel %vm2222, %v4694, %v4699
      %v4701 = vrot.slane %v3979, 5
      %v4702 = vrot.slane %v3982, 6
      %v4703 = vor.u32 %v4701, %v4702
      %v4704 = vrot.slane %v4703, 4
      %v4705 = vrot.slane %v3992, 5
      %v4706 = vrot.slane %v3988, 6
      %v4707 = vor.u32 %v4705, %v4706
      %v4708 = vsel %vm2222, %v4704, %v4707
      %v4709 = vrot.slane %v4707, 4
      %v4710 = vshrl.u32 %v3647, 16
      %v4712 = vrot.slane %v4710, 5
      %v4713 = vrot.slane %v3998, 6
      %v4714 = vor.u32 %v4712, %v4713
      %v4715 = vsel %vm2222, %v4709, %v4714
      %v4716 = vrot.slane %v4003, 5
      %v4717 = vrot.slane %v4006, 6
      %v4718 = vor.u32 %v4716, %v4717
      %v4719 = vrot.slane %v4718, 4
      %v4720 = vrot.slane %v4016, 5
      %v4721 = vrot.slane %v4012, 6
      %v4722 = vor.u32 %v4720, %v4721
      %v4723 = vsel %vm2222, %v4719, %v4722
      %v4724 = vrot.slane %v4722, 4
      %v4725 = vshrl.u32 %v3650, 16
      %v4727 = vrot.slane %v4725, 5
      %v4728 = vrot.slane %v4022, 6
      %v4729 = vor.u32 %v4727, %v4728
      %v4730 = vsel %vm2222, %v4724, %v4729
      %v4731 = vrot.slane %v4027, 5
      %v4732 = vrot.slane %v4030, 6
      %v4733 = vor.u32 %v4731, %v4732
      %v4734 = vrot.slane %v4733, 4
      %v4735 = vrot.slane %v4040, 5
      %v4736 = vrot.slane %v4036, 6
      %v4737 = vor.u32 %v4735, %v4736
      %v4738 = vsel %vm2222, %v4734, %v4737
      %v4739 = vrot.slane %v4737, 4
      %v4740 = vshrl.u32 %v3653, 16
      %v4742 = vrot.slane %v4740, 5
      %v4743 = vrot.slane %v4046, 6
      %v4744 = vor.u32 %v4742, %v4743
      %v4745 = vsel %vm2222, %v4739, %v4744
      %v4746 = vrot.slane %v4051, 5
      %v4747 = vrot.slane %v4054, 6
      %v4748 = vor.u32 %v4746, %v4747
      %v4749 = vrot.slane %v4748, 4
      %v4750 = vrot.slane %v4064, 5
      %v4751 = vrot.slane %v4060, 6
      %v4752 = vor.u32 %v4750, %v4751
      %v4753 = vsel %vm2222, %v4749, %v4752
      %v4754 = vrot.slane %v4752, 4
      %v4755 = vshrl.u32 %v3656, 16
      %v4757 = vrot.slane %v4755, 5
      %v4758 = vrot.slane %v4070, 6
      %v4759 = vor.u32 %v4757, %v4758
      %v4760 = vsel %vm2222, %v4754, %v4759
      %v4761 = vrot.slane %v4075, 5
      %v4762 = vrot.slane %v4078, 6
      %v4763 = vor.u32 %v4761, %v4762
      %v4764 = vrot.slane %v4763, 4
      %v4765 = vrot.slane %v4088, 5
      %v4766 = vrot.slane %v4084, 6
      %v4767 = vor.u32 %v4765, %v4766
      %v4768 = vsel %vm2222, %v4764, %v4767
      %v4769 = vrot.slane %v4767, 4
      %v4770 = vshrl.u32 %v3659, 16
      %v4772 = vrot.slane %v4770, 5
      %v4773 = vrot.slane %v4094, 6
      %v4774 = vor.u32 %v4772, %v4773
      %v4775 = vsel %vm2222, %v4769, %v4774
      %v4776 = vrot.slane %v4099, 5
      %v4777 = vrot.slane %v4102, 6
      %v4778 = vor.u32 %v4776, %v4777
      %v4779 = vrot.slane %v4778, 4
      %v4780 = vrot.slane %v4112, 5
      %v4781 = vrot.slane %v4108, 6
      %v4782 = vor.u32 %v4780, %v4781
      %v4783 = vsel %vm2222, %v4779, %v4782
      %v4784 = vrot.slane %v4782, 4
      %v4785 = vshrl.u32 %v3662, 16
      %v4787 = vrot.slane %v4785, 5
      %v4788 = vrot.slane %v4118, 6
      %v4789 = vor.u32 %v4787, %v4788
      %v4790 = vsel %vm2222, %v4784, %v4789
      %v4791 = vrot.slane %v4123, 5
      %v4792 = vrot.slane %v4126, 6
      %v4793 = vor.u32 %v4791, %v4792
      %v4794 = vrot.slane %v4793, 4
      %v4795 = vrot.slane %v4136, 5
      %v4796 = vrot.slane %v4132, 6
      %v4797 = vor.u32 %v4795, %v4796
      %v4798 = vsel %vm2222, %v4794, %v4797
      %v4799 = vrot.slane %v4797, 4
      %v4800 = vshrl.u32 %v3665, 16
      %v4802 = vrot.slane %v4800, 5
      %v4803 = vrot.slane %v4142, 6
      %v4804 = vor.u32 %v4802, %v4803
      %v4805 = vsel %vm2222, %v4799, %v4804
      %v4846 = vmax.bf16 %v4466, %v4513
      %v4847 = vmax.bf16 %v4467, %v4520
      %v4848 = vmax.bf16 %v4468, %v4528
      %v4849 = vmax.bf16 %v4469, %v4535
      %v4850 = vmax.bf16 %v4470, %v4543
      %v4851 = vmax.bf16 %v4471, %v4550
      %v4852 = vmax.bf16 %v4472, %v4558
      %v4853 = vmax.bf16 %v4473, %v4565
      %v4854 = vmax.bf16 %v4474, %v4573
      %v4855 = vmax.bf16 %v4475, %v4580
      %v4856 = vmax.bf16 %v4476, %v4588
      %v4857 = vmax.bf16 %v4477, %v4595
      %v4858 = vmax.bf16 %v4478, %v4603
      %v4859 = vmax.bf16 %v4479, %v4610
      %v4860 = vmax.bf16 %v4480, %v4618
      %v4861 = vmax.bf16 %v4481, %v4625
      %v4862 = vmax.bf16 %v4482, %v4633
      %v4863 = vmax.bf16 %v4483, %v4640
      %v4864 = vmax.bf16 %v4484, %v4648
      %v4865 = vmax.bf16 %v4485, %v4655
      %v4866 = vmax.bf16 %v4486, %v4663
      %v4867 = vmax.bf16 %v4487, %v4670
      %v4868 = vmax.bf16 %v4488, %v4678
      %v4869 = vmax.bf16 %v4489, %v4685
      %v4870 = vmax.bf16 %v4490, %v4693
      %v4871 = vmax.bf16 %v4491, %v4700
      %v4872 = vmax.bf16 %v4492, %v4708
      %v4873 = vmax.bf16 %v4493, %v4715
      %v4874 = vmax.bf16 %v4494, %v4723
      %v4875 = vmax.bf16 %v4495, %v4730
      %v4876 = vmax.bf16 %v4496, %v4738
      %v4877 = vmax.bf16 %v4497, %v4745
      %v4878 = vmax.bf16 %v4498, %v4753
      %v4879 = vmax.bf16 %v4499, %v4760
      %v4880 = vmax.bf16 %v4500, %v4768
      %v4881 = vmax.bf16 %v4501, %v4775
      %v4882 = vmax.bf16 %v4502, %v4783
      %v4883 = vmax.bf16 %v4503, %v4790
      %v4884 = vmax.bf16 %v4504, %v4798
      %v4885 = vmax.bf16 %v4505, %v4805
      %v4886 = vrot.slane %v3606, 6
      %v4887 = vrot.slane %v4886, 4
      %v4888 = vrot.slane %v3607, 6
      %v4889 = vsel %vm2605, %v4887, %v4888
      %v4890 = vrot.slane %v4888, 4
      %v4891 = vrot.slane %v3608, 6
      %v4892 = vsel %vm2605, %v4890, %v4891
      %v4893 = vrot.slane %v3609, 6
      %v4894 = vrot.slane %v4893, 4
      %v4895 = vrot.slane %v3610, 6
      %v4896 = vsel %vm2605, %v4894, %v4895
      %v4897 = vrot.slane %v4895, 4
      %v4898 = vrot.slane %v3611, 6
      %v4899 = vsel %vm2605, %v4897, %v4898
      %v4900 = vrot.slane %v3612, 6
      %v4901 = vrot.slane %v4900, 4
      %v4902 = vrot.slane %v3613, 6
      %v4903 = vsel %vm2605, %v4901, %v4902
      %v4904 = vrot.slane %v4902, 4
      %v4905 = vrot.slane %v3614, 6
      %v4906 = vsel %vm2605, %v4904, %v4905
      %v4907 = vrot.slane %v3615, 6
      %v4908 = vrot.slane %v4907, 4
      %v4909 = vrot.slane %v3616, 6
      %v4910 = vsel %vm2605, %v4908, %v4909
      %v4911 = vrot.slane %v4909, 4
      %v4912 = vrot.slane %v3617, 6
      %v4913 = vsel %vm2605, %v4911, %v4912
      %v4914 = vrot.slane %v3618, 6
      %v4915 = vrot.slane %v4914, 4
      %v4916 = vrot.slane %v3619, 6
      %v4917 = vsel %vm2605, %v4915, %v4916
      %v4918 = vrot.slane %v4916, 4
      %v4919 = vrot.slane %v3620, 6
      %v4920 = vsel %vm2605, %v4918, %v4919
      %v4921 = vrot.slane %v3621, 6
      %v4922 = vrot.slane %v4921, 4
      %v4923 = vrot.slane %v3622, 6
      %v4924 = vsel %vm2605, %v4922, %v4923
      %v4925 = vrot.slane %v4923, 4
      %v4926 = vrot.slane %v3623, 6
      %v4927 = vsel %vm2605, %v4925, %v4926
      %v4928 = vrot.slane %v3624, 6
      %v4929 = vrot.slane %v4928, 4
      %v4930 = vrot.slane %v3625, 6
      %v4931 = vsel %vm2605, %v4929, %v4930
      %v4932 = vrot.slane %v4930, 4
      %v4933 = vrot.slane %v3626, 6
      %v4934 = vsel %vm2605, %v4932, %v4933
      %v4935 = vrot.slane %v3627, 6
      %v4936 = vrot.slane %v4935, 4
      %v4937 = vrot.slane %v3628, 6
      %v4938 = vsel %vm2605, %v4936, %v4937
      %v4939 = vrot.slane %v4937, 4
      %v4940 = vrot.slane %v3629, 6
      %v4941 = vsel %vm2605, %v4939, %v4940
      %v4942 = vrot.slane %v3630, 6
      %v4943 = vrot.slane %v4942, 4
      %v4944 = vrot.slane %v3631, 6
      %v4945 = vsel %vm2605, %v4943, %v4944
      %v4946 = vrot.slane %v4944, 4
      %v4947 = vrot.slane %v3632, 6
      %v4948 = vsel %vm2605, %v4946, %v4947
      %v4949 = vrot.slane %v3633, 6
      %v4950 = vrot.slane %v4949, 4
      %v4951 = vrot.slane %v3634, 6
      %v4952 = vsel %vm2605, %v4950, %v4951
      %v4953 = vrot.slane %v4951, 4
      %v4954 = vrot.slane %v3635, 6
      %v4955 = vsel %vm2605, %v4953, %v4954
      %v4956 = vrot.slane %v3636, 6
      %v4957 = vrot.slane %v4956, 4
      %v4958 = vrot.slane %v3637, 6
      %v4959 = vsel %vm2605, %v4957, %v4958
      %v4960 = vrot.slane %v4958, 4
      %v4961 = vrot.slane %v3638, 6
      %v4962 = vsel %vm2605, %v4960, %v4961
      %v4963 = vrot.slane %v3639, 6
      %v4964 = vrot.slane %v4963, 4
      %v4965 = vrot.slane %v3640, 6
      %v4966 = vsel %vm2605, %v4964, %v4965
      %v4967 = vrot.slane %v4965, 4
      %v4968 = vrot.slane %v3641, 6
      %v4969 = vsel %vm2605, %v4967, %v4968
      %v4970 = vrot.slane %v3642, 6
      %v4971 = vrot.slane %v4970, 4
      %v4972 = vrot.slane %v3643, 6
      %v4973 = vsel %vm2605, %v4971, %v4972
      %v4974 = vrot.slane %v4972, 4
      %v4975 = vrot.slane %v3644, 6
      %v4976 = vsel %vm2605, %v4974, %v4975
      %v4977 = vrot.slane %v3645, 6
      %v4978 = vrot.slane %v4977, 4
      %v4979 = vrot.slane %v3646, 6
      %v4980 = vsel %vm2605, %v4978, %v4979
      %v4981 = vrot.slane %v4979, 4
      %v4982 = vrot.slane %v3647, 6
      %v4983 = vsel %vm2605, %v4981, %v4982
      %v4984 = vrot.slane %v3648, 6
      %v4985 = vrot.slane %v4984, 4
      %v4986 = vrot.slane %v3649, 6
      %v4987 = vsel %vm2605, %v4985, %v4986
      %v4988 = vrot.slane %v4986, 4
      %v4989 = vrot.slane %v3650, 6
      %v4990 = vsel %vm2605, %v4988, %v4989
      %v4991 = vrot.slane %v3651, 6
      %v4992 = vrot.slane %v4991, 4
      %v4993 = vrot.slane %v3652, 6
      %v4994 = vsel %vm2605, %v4992, %v4993
      %v4995 = vrot.slane %v4993, 4
      %v4996 = vrot.slane %v3653, 6
      %v4997 = vsel %vm2605, %v4995, %v4996
      %v4998 = vrot.slane %v3654, 6
      %v4999 = vrot.slane %v4998, 4
      %v5000 = vrot.slane %v3655, 6
      %v5001 = vsel %vm2605, %v4999, %v5000
      %v5002 = vrot.slane %v5000, 4
      %v5003 = vrot.slane %v3656, 6
      %v5004 = vsel %vm2605, %v5002, %v5003
      %v5005 = vrot.slane %v3657, 6
      %v5006 = vrot.slane %v5005, 4
      %v5007 = vrot.slane %v3658, 6
      %v5008 = vsel %vm2605, %v5006, %v5007
      %v5009 = vrot.slane %v5007, 4
      %v5010 = vrot.slane %v3659, 6
      %v5011 = vsel %vm2605, %v5009, %v5010
      %v5012 = vrot.slane %v3660, 6
      %v5013 = vrot.slane %v5012, 4
      %v5014 = vrot.slane %v3661, 6
      %v5015 = vsel %vm2605, %v5013, %v5014
      %v5016 = vrot.slane %v5014, 4
      %v5017 = vrot.slane %v3662, 6
      %v5018 = vsel %vm2605, %v5016, %v5017
      %v5019 = vrot.slane %v3663, 6
      %v5020 = vrot.slane %v5019, 4
      %v5021 = vrot.slane %v3664, 6
      %v5022 = vsel %vm2605, %v5020, %v5021
      %v5023 = vrot.slane %v5021, 4
      %v5024 = vrot.slane %v3665, 6
      %v5025 = vsel %vm2605, %v5023, %v5024
      %v5066 = vmax.bf16 %v4846, %v4889
      %v5067 = vmax.bf16 %v4847, %v4892
      %v5068 = vmax.bf16 %v4848, %v4896
      %v5069 = vmax.bf16 %v4849, %v4899
      %v5070 = vmax.bf16 %v4850, %v4903
      %v5071 = vmax.bf16 %v4851, %v4906
      %v5072 = vmax.bf16 %v4852, %v4910
      %v5073 = vmax.bf16 %v4853, %v4913
      %v5074 = vmax.bf16 %v4854, %v4917
      %v5075 = vmax.bf16 %v4855, %v4920
      %v5076 = vmax.bf16 %v4856, %v4924
      %v5077 = vmax.bf16 %v4857, %v4927
      %v5078 = vmax.bf16 %v4858, %v4931
      %v5079 = vmax.bf16 %v4859, %v4934
      %v5080 = vmax.bf16 %v4860, %v4938
      %v5081 = vmax.bf16 %v4861, %v4941
      %v5082 = vmax.bf16 %v4862, %v4945
      %v5083 = vmax.bf16 %v4863, %v4948
      %v5084 = vmax.bf16 %v4864, %v4952
      %v5085 = vmax.bf16 %v4865, %v4955
      %v5086 = vmax.bf16 %v4866, %v4959
      %v5087 = vmax.bf16 %v4867, %v4962
      %v5088 = vmax.bf16 %v4868, %v4966
      %v5089 = vmax.bf16 %v4869, %v4969
      %v5090 = vmax.bf16 %v4870, %v4973
      %v5091 = vmax.bf16 %v4871, %v4976
      %v5092 = vmax.bf16 %v4872, %v4980
      %v5093 = vmax.bf16 %v4873, %v4983
      %v5094 = vmax.bf16 %v4874, %v4987
      %v5095 = vmax.bf16 %v4875, %v4990
      %v5096 = vmax.bf16 %v4876, %v4994
      %v5097 = vmax.bf16 %v4877, %v4997
      %v5098 = vmax.bf16 %v4878, %v5001
      %v5099 = vmax.bf16 %v4879, %v5004
      %v5100 = vmax.bf16 %v4880, %v5008
      %v5101 = vmax.bf16 %v4881, %v5011
      %v5102 = vmax.bf16 %v4882, %v5015
      %v5103 = vmax.bf16 %v4883, %v5018
      %v5104 = vmax.bf16 %v4884, %v5022
      %v5105 = vmax.bf16 %v4885, %v5025
      %v5122 = vunpack.c.l.b16 %v5078
      %v5123 = vunpack.c.l.b16 %v5079
      %v5124 = vunpack.c.l.b16 %v5080
      %v5125 = vunpack.c.l.b16 %v5081
      %v5126 = vunpack.c.l.b16 %v5082
      %v5127 = vunpack.c.l.b16 %v5083
      %v5128 = vunpack.c.l.b16 %v5084
      %v5129 = vunpack.c.l.b16 %v5085
      %v5130 = vunpack.c.l.b16 %v5086
      %v5131 = vunpack.c.l.b16 %v5087
      %v5132 = vunpack.c.l.b16 %v5088
      %v5133 = vunpack.c.l.b16 %v5089
      %v5134 = vunpack.c.l.b16 %v5090
      %v5135 = vunpack.c.l.b16 %v5091
      %v5136 = vunpack.c.l.b16 %v5092
      %v5137 = vunpack.c.l.b16 %v5093
      %v5138 = vpack.c.b16 %v5123, %v5122
      %v5139 = vpack.c.b16 %v5125, %v5124
      %v5140 = vpack.c.b16 %v5127, %v5126
      %v5141 = vpack.c.b16 %v5129, %v5128
      %v5142 = vpack.c.b16 %v5131, %v5130
      %v5143 = vpack.c.b16 %v5133, %v5132
      %v5144 = vpack.c.b16 %v5135, %v5134
      %v5145 = vpack.c.b16 %v5137, %v5136
      %5154 = vst [vmem:[#allocation3 + $0x10] sm:$0xff] %v5138
      %5155 = vst [vmem:[#allocation3 + $0x30] sm:$0xff] %v5139
      %5156 = vst [vmem:[#allocation3 + $0x50] sm:$0xff] %v5140
      %5157 = vst [vmem:[#allocation3 + $0x70] sm:$0xff] %v5141
      %5158 = vst [vmem:[#allocation3 + $0x90] sm:$0xff] %v5142
      %5159 = vst [vmem:[#allocation3 + $0xb0] sm:$0xff] %v5143
      %5160 = vst [vmem:[#allocation3 + $0xd0] sm:$0xff] %v5144
      %5161 = vst [vmem:[#allocation3 + $0xf0] sm:$0xff] %v5145
      %v5186 = vrot.slane %v5066, 7
      %v5187 = vrot.slane %v5186, 4
      %v5188 = vrot.slane %v5067, 7
      %v5189 = vsel %vm495, %v5187, %v5188
      %v5190 = vrot.slane %v5188, 4
      %v5191 = vrot.slane %v5068, 7
      %v5192 = vrot.slane %v5191, 4
      %v5193 = vrot.slane %v5069, 7
      %v5194 = vsel %vm495, %v5192, %v5193
      %v5195 = vrot.slane %v5193, 4
      %v5196 = vrot.slane %v5070, 7
      %v5197 = vrot.slane %v5196, 4
      %v5198 = vrot.slane %v5071, 7
      %v5199 = vsel %vm495, %v5197, %v5198
      %v5200 = vrot.slane %v5198, 4
      %v5201 = vrot.slane %v5072, 7
      %v5202 = vrot.slane %v5201, 4
      %v5203 = vrot.slane %v5073, 7
      %v5204 = vsel %vm495, %v5202, %v5203
      %v5205 = vrot.slane %v5203, 4
      %v5206 = vrot.slane %v5074, 7
      %v5207 = vrot.slane %v5206, 4
      %v5208 = vrot.slane %v5075, 7
      %v5209 = vsel %vm495, %v5207, %v5208
      %v5210 = vrot.slane %v5208, 4
      %v5211 = vrot.slane %v5076, 7
      %v5212 = vrot.slane %v5211, 4
      %v5213 = vrot.slane %v5077, 7
      %v5214 = vsel %vm495, %v5212, %v5213
      %v5215 = vrot.slane %v5213, 4
      %v5216 = vrot.slane %v5078, 7
      %v5217 = vrot.slane %v5216, 4
      %v5218 = vrot.slane %v5079, 7
      %v5219 = vsel %vm495, %v5217, %v5218
      %v5220 = vrot.slane %v5218, 4
      %v5221 = vrot.slane %v5080, 7
      %v5222 = vrot.slane %v5221, 4
      %v5223 = vrot.slane %v5081, 7
      %v5224 = vsel %vm495, %v5222, %v5223
      %v5225 = vrot.slane %v5223, 4
      %v5226 = vrot.slane %v5082, 7
      %v5227 = vrot.slane %v5226, 4
      %v5228 = vrot.slane %v5083, 7
      %v5229 = vsel %vm495, %v5227, %v5228
      %v5230 = vrot.slane %v5228, 4
      %v5231 = vrot.slane %v5084, 7
      %v5232 = vrot.slane %v5231, 4
      %v5233 = vrot.slane %v5085, 7
      %v5234 = vsel %vm495, %v5232, %v5233
      %v5235 = vrot.slane %v5233, 4
      %v5236 = vrot.slane %v5086, 7
      %v5237 = vrot.slane %v5236, 4
      %v5238 = vrot.slane %v5087, 7
      %v5239 = vsel %vm495, %v5237, %v5238
      %v5240 = vrot.slane %v5238, 4
      %v5241 = vrot.slane %v5088, 7
      %v5242 = vrot.slane %v5241, 4
      %v5243 = vrot.slane %v5089, 7
      %v5244 = vsel %vm495, %v5242, %v5243
      %v5245 = vrot.slane %v5243, 4
      %v5246 = vrot.slane %v5090, 7
      %v5247 = vrot.slane %v5246, 4
      %v5248 = vrot.slane %v5091, 7
      %v5249 = vsel %vm495, %v5247, %v5248
      %v5250 = vrot.slane %v5248, 4
      %v5251 = vrot.slane %v5092, 7
      %v5252 = vrot.slane %v5251, 4
      %v5253 = vrot.slane %v5093, 7
      %v5254 = vsel %vm495, %v5252, %v5253
      %v5255 = vrot.slane %v5253, 4
      %v5256 = vrot.slane %v5094, 7
      %v5257 = vrot.slane %v5256, 4
      %v5258 = vrot.slane %v5095, 7
      %v5259 = vsel %vm495, %v5257, %v5258
      %v5260 = vrot.slane %v5258, 4
      %v5261 = vrot.slane %v5096, 7
      %v5262 = vrot.slane %v5261, 4
      %v5263 = vrot.slane %v5097, 7
      %v5264 = vsel %vm495, %v5262, %v5263
      %v5265 = vrot.slane %v5263, 4
      %v5266 = vrot.slane %v5098, 7
      %v5267 = vrot.slane %v5266, 4
      %v5268 = vrot.slane %v5099, 7
      %v5269 = vsel %vm495, %v5267, %v5268
      %v5270 = vrot.slane %v5268, 4
      %v5271 = vrot.slane %v5100, 7
      %v5272 = vrot.slane %v5271, 4
      %v5273 = vrot.slane %v5101, 7
      %v5274 = vsel %vm495, %v5272, %v5273
      %v5275 = vrot.slane %v5273, 4
      %v5276 = vrot.slane %v5102, 7
      %v5277 = vrot.slane %v5276, 4
      %v5278 = vrot.slane %v5103, 7
      %v5279 = vsel %vm495, %v5277, %v5278
      %v5280 = vrot.slane %v5278, 4
      %v5281 = vrot.slane %v5104, 7
      %v5282 = vrot.slane %v5281, 4
      %v5283 = vrot.slane %v5105, 7
      %v5284 = vsel %vm495, %v5282, %v5283
      %v5285 = vrot.slane %v5283, 4
      %5346 = vst [vmem:[%s544] sm:$0xe] %v5186
      %5347 = vst [vmem:[%s544 + $0x4] sm:$0xf] %v5189
      %5348 = vst [vmem:[%s544 + $0x8] sm:$0x1] %v5190
      %5349 = vst [vmem:[%s544 + $0xc] sm:$0xe] %v5191
      %5350 = vst [vmem:[%s544 + $0x10] sm:$0xf] %v5194
      %5351 = vst [vmem:[%s544 + $0x14] sm:$0x1] %v5195
      %5352 = vst [vmem:[%s544 + $0x18] sm:$0xe] %v5196
      %5353 = vst [vmem:[%s544 + $0x1c] sm:$0xf] %v5199
      %5354 = vst [vmem:[%s544 + $0x20] sm:$0x1] %v5200
      %5355 = vst [vmem:[%s544 + $0x24] sm:$0xe] %v5201
      %5356 = vst [vmem:[%s544 + $0x28] sm:$0xf] %v5204
      %5357 = vst [vmem:[%s544 + $0x2c] sm:$0x1] %v5205
      %5358 = vst [vmem:[%s544 + $0x30] sm:$0xe] %v5206
      %5359 = vst [vmem:[%s544 + $0x34] sm:$0xf] %v5209
      %5360 = vst [vmem:[%s544 + $0x38] sm:$0x1] %v5210
      %5361 = vst [vmem:[%s544 + $0x3c] sm:$0xe] %v5211
      %5362 = vst [vmem:[%s544 + $0x40] sm:$0xf] %v5214
      %5363 = vst [vmem:[%s544 + $0x44] sm:$0x1] %v5215
      %5364 = vst [vmem:[%s544 + $0x48] sm:$0xe] %v5216
      %5365 = vst [vmem:[%s544 + $0x4c] sm:$0xf] %v5219
      %5366 = vst [vmem:[%s544 + $0x50] sm:$0x1] %v5220
      %5367 = vst [vmem:[%s544 + $0x54] sm:$0xe] %v5221
      %5368 = vst [vmem:[%s544 + $0x58] sm:$0xf] %v5224
      %5369 = vst [vmem:[%s544 + $0x5c] sm:$0x1] %v5225
      %5370 = vst [vmem:[%s544 + $0x60] sm:$0xe] %v5226
      %5371 = vst [vmem:[%s544 + $0x64] sm:$0xf] %v5229
      %5372 = vst [vmem:[%s544 + $0x68] sm:$0x1] %v5230
      %5373 = vst [vmem:[%s544 + $0x6c] sm:$0xe] %v5231
      %5374 = vst [vmem:[%s544 + $0x70] sm:$0xf] %v5234
      %5375 = vst [vmem:[%s544 + $0x74] sm:$0x1] %v5235
      %5376 = vst [vmem:[%s544 + $0x78] sm:$0xe] %v5236
      %5377 = vst [vmem:[%s544 + $0x7c] sm:$0xf] %v5239
      %5378 = vst [vmem:[%s544 + $0x80] sm:$0x1] %v5240
      %5379 = vst [vmem:[%s544 + $0x84] sm:$0xe] %v5241
      %5380 = vst [vmem:[%s544 + $0x88] sm:$0xf] %v5244
      %5381 = vst [vmem:[%s544 + $0x8c] sm:$0x1] %v5245
      %5382 = vst [vmem:[%s544 + $0x90] sm:$0xe] %v5246
      %5383 = vst [vmem:[%s544 + $0x94] sm:$0xf] %v5249
      %5384 = vst [vmem:[%s544 + $0x98] sm:$0x1] %v5250
      %5385 = vst [vmem:[%s544 + $0x9c] sm:$0xe] %v5251
      %5386 = vst [vmem:[%s544 + $0xa0] sm:$0xf] %v5254
      %5387 = vst [vmem:[%s544 + $0xa4] sm:$0x1] %v5255
      %5388 = vst [vmem:[%s544 + $0xa8] sm:$0xe] %v5256
      %5389 = vst [vmem:[%s544 + $0xac] sm:$0xf] %v5259
      %5390 = vst [vmem:[%s544 + $0xb0] sm:$0x1] %v5260
      %5391 = vst [vmem:[%s544 + $0xb4] sm:$0xe] %v5261
      %5392 = vst [vmem:[%s544 + $0xb8] sm:$0xf] %v5264
      %5393 = vst [vmem:[%s544 + $0xbc] sm:$0x1] %v5265
      %5394 = vst [vmem:[%s544 + $0xc0] sm:$0xe] %v5266
      %5395 = vst [vmem:[%s544 + $0xc4] sm:$0xf] %v5269
      %5396 = vst [vmem:[%s544 + $0xc8] sm:$0x1] %v5270
      %5397 = vst [vmem:[%s544 + $0xcc] sm:$0xe] %v5271
      %5398 = vst [vmem:[%s544 + $0xd0] sm:$0xf] %v5274
      %5399 = vst [vmem:[%s544 + $0xd4] sm:$0x1] %v5275
      %5400 = vst [vmem:[%s544 + $0xd8] sm:$0xe] %v5276
      %5401 = vst [vmem:[%s544 + $0xdc] sm:$0xf] %v5279
      %5402 = vst [vmem:[%s544 + $0xe0] sm:$0x1] %v5280
      %5403 = vst [vmem:[%s544 + $0xe4] sm:$0xe] %v5281
      %5404 = vst [vmem:[%s544 + $0xe8] sm:$0xf] %v5284
      %5405 = vst [vmem:[%s544 + $0xec] sm:$0x1] %v5285
      %v5406 = vld [vmem:[#allocation2 + $0x48] sm:$0xf]
      %v5407 = vld [vmem:[#allocation2 + $0x4c] sm:$0xf]
      %v5408 = vld [vmem:[#allocation2 + $0x50] sm:$0x3]
      %v5409 = vld [vmem:[#allocation2 + $0x54] sm:$0xf]
      %v5410 = vld [vmem:[#allocation2 + $0x58] sm:$0xf]
      %v5411 = vld [vmem:[#allocation2 + $0x5c] sm:$0x3]
      %v5412 = vld [vmem:[#allocation2 + $0x60] sm:$0xf]
      %v5413 = vld [vmem:[#allocation2 + $0x64] sm:$0xf]
      %v5414 = vld [vmem:[#allocation2 + $0x68] sm:$0x3]
      %v5415 = vld [vmem:[#allocation2 + $0x6c] sm:$0xf]
      %v5416 = vld [vmem:[#allocation2 + $0x70] sm:$0xf]
      %v5417 = vld [vmem:[#allocation2 + $0x74] sm:$0x3]
      %v5418 = vld [vmem:[#allocation2 + $0x78] sm:$0xf]
      %v5419 = vld [vmem:[#allocation2 + $0x7c] sm:$0xf]
      %v5420 = vld [vmem:[#allocation2 + $0x80] sm:$0x3]
      %v5421 = vld [vmem:[#allocation2 + $0x84] sm:$0xf]
      %v5422 = vld [vmem:[#allocation2 + $0x88] sm:$0xf]
      %v5423 = vld [vmem:[#allocation2 + $0x8c] sm:$0x3]
      %v5424 = vld [vmem:[#allocation2 + $0x90] sm:$0xf]
      %v5425 = vld [vmem:[#allocation2 + $0x94] sm:$0xf]
      %v5426 = vld [vmem:[#allocation2 + $0x98] sm:$0x3]
      %v5427 = vld [vmem:[#allocation2 + $0x9c] sm:$0xf]
      %v5428 = vld [vmem:[#allocation2 + $0xa0] sm:$0xf]
      %v5429 = vld [vmem:[#allocation2 + $0xa4] sm:$0x3]
      %v5430 = vld [vmem:[%s891 + $0x48] sm:$0xf]
      %v5431 = vld [vmem:[%s891 + $0x4c] sm:$0xf]
      %v5432 = vld [vmem:[%s891 + $0x50] sm:$0x3]
      %v5433 = vld [vmem:[%s891 + $0x54] sm:$0xf]
      %v5434 = vld [vmem:[%s891 + $0x58] sm:$0xf]
      %v5435 = vld [vmem:[%s891 + $0x5c] sm:$0x3]
      %v5436 = vld [vmem:[%s891 + $0x60] sm:$0xf]
      %v5437 = vld [vmem:[%s891 + $0x64] sm:$0xf]
      %v5438 = vld [vmem:[%s891 + $0x68] sm:$0x3]
      %v5439 = vld [vmem:[%s891 + $0x6c] sm:$0xf]
      %v5440 = vld [vmem:[%s891 + $0x70] sm:$0xf]
      %v5441 = vld [vmem:[%s891 + $0x74] sm:$0x3]
      %v5442 = vld [vmem:[%s891 + $0x78] sm:$0xf]
      %v5443 = vld [vmem:[%s891 + $0x7c] sm:$0xf]
      %v5444 = vld [vmem:[%s891 + $0x80] sm:$0x3]
      %v5445 = vld [vmem:[%s891 + $0x84] sm:$0xf]
      %v5446 = vld [vmem:[%s891 + $0x88] sm:$0xf]
      %v5447 = vld [vmem:[%s891 + $0x8c] sm:$0x3]
      %v5448 = vld [vmem:[%s891 + $0x90] sm:$0xf]
      %v5449 = vld [vmem:[%s891 + $0x94] sm:$0xf]
      %v5450 = vld [vmem:[%s891 + $0x98] sm:$0x3]
      %v5451 = vld [vmem:[%s891 + $0x9c] sm:$0xf]
      %v5452 = vld [vmem:[%s891 + $0xa0] sm:$0xf]
      %v5453 = vld [vmem:[%s891 + $0xa4] sm:$0x3]
      %v5454 = vmax.bf16 %v5406, %v5430
      %v5455 = vmax.bf16 %v5407, %v5431
      %v5456 = vmax.bf16 %v5408, %v5432
      %v5457 = vmax.bf16 %v5409, %v5433
      %v5458 = vmax.bf16 %v5410, %v5434
      %v5459 = vmax.bf16 %v5411, %v5435
      %v5460 = vmax.bf16 %v5412, %v5436
      %v5461 = vmax.bf16 %v5413, %v5437
      %v5462 = vmax.bf16 %v5414, %v5438
      %v5463 = vmax.bf16 %v5415, %v5439
      %v5464 = vmax.bf16 %v5416, %v5440
      %v5465 = vmax.bf16 %v5417, %v5441
      %v5466 = vmax.bf16 %v5418, %v5442
      %v5467 = vmax.bf16 %v5419, %v5443
      %v5468 = vmax.bf16 %v5420, %v5444
      %v5469 = vmax.bf16 %v5421, %v5445
      %v5470 = vmax.bf16 %v5422, %v5446
      %v5471 = vmax.bf16 %v5423, %v5447
      %v5472 = vmax.bf16 %v5424, %v5448
      %v5473 = vmax.bf16 %v5425, %v5449
      %v5474 = vmax.bf16 %v5426, %v5450
      %v5475 = vmax.bf16 %v5427, %v5451
      %v5476 = vmax.bf16 %v5428, %v5452
      %v5477 = vmax.bf16 %v5429, %v5453
      %v5478 = vld [vmem:[%s544 + $0x48] sm:$0xf]
      %v5479 = vld [vmem:[%s544 + $0x4c] sm:$0xf]
      %v5480 = vld [vmem:[%s544 + $0x50] sm:$0x3]
      %v5481 = vld [vmem:[%s544 + $0x54] sm:$0xf]
      %v5482 = vld [vmem:[%s544 + $0x58] sm:$0xf]
      %v5483 = vld [vmem:[%s544 + $0x5c] sm:$0x3]
      %v5484 = vld [vmem:[%s544 + $0x60] sm:$0xf]
      %v5485 = vld [vmem:[%s544 + $0x64] sm:$0xf]
      %v5486 = vld [vmem:[%s544 + $0x68] sm:$0x3]
      %v5487 = vld [vmem:[%s544 + $0x6c] sm:$0xf]
      %v5488 = vld [vmem:[%s544 + $0x70] sm:$0xf]
      %v5489 = vld [vmem:[%s544 + $0x74] sm:$0x3]
      %v5490 = vld [vmem:[%s544 + $0x78] sm:$0xf]
      %v5491 = vld [vmem:[%s544 + $0x7c] sm:$0xf]
      %v5492 = vld [vmem:[%s544 + $0x80] sm:$0x3]
      %v5493 = vld [vmem:[%s544 + $0x84] sm:$0xf]
      %v5494 = vld [vmem:[%s544 + $0x88] sm:$0xf]
      %v5495 = vld [vmem:[%s544 + $0x8c] sm:$0x3]
      %v5496 = vld [vmem:[%s544 + $0x90] sm:$0xf]
      %v5497 = vld [vmem:[%s544 + $0x94] sm:$0xf]
      %v5498 = vld [vmem:[%s544 + $0x98] sm:$0x3]
      %v5499 = vld [vmem:[%s544 + $0x9c] sm:$0xf]
      %v5500 = vld [vmem:[%s544 + $0xa0] sm:$0xf]
      %v5501 = vld [vmem:[%s544 + $0xa4] sm:$0x3]
      %v5502 = vmax.bf16 %v5454, %v5478
      %v5503 = vmax.bf16 %v5455, %v5479
      %v5504 = vmax.bf16 %v5456, %v5480
      %v5505 = vmax.bf16 %v5457, %v5481
      %v5506 = vmax.bf16 %v5458, %v5482
      %v5507 = vmax.bf16 %v5459, %v5483
      %v5508 = vmax.bf16 %v5460, %v5484
      %v5509 = vmax.bf16 %v5461, %v5485
      %v5510 = vmax.bf16 %v5462, %v5486
      %v5511 = vmax.bf16 %v5463, %v5487
      %v5512 = vmax.bf16 %v5464, %v5488
      %v5513 = vmax.bf16 %v5465, %v5489
      %v5514 = vmax.bf16 %v5466, %v5490
      %v5515 = vmax.bf16 %v5467, %v5491
      %v5516 = vmax.bf16 %v5468, %v5492
      %v5517 = vmax.bf16 %v5469, %v5493
      %v5518 = vmax.bf16 %v5470, %v5494
      %v5519 = vmax.bf16 %v5471, %v5495
      %v5520 = vmax.bf16 %v5472, %v5496
      %v5521 = vmax.bf16 %v5473, %v5497
      %v5522 = vmax.bf16 %v5474, %v5498
      %v5523 = vmax.bf16 %v5475, %v5499
      %v5524 = vmax.bf16 %v5476, %v5500
      %v5525 = vmax.bf16 %v5477, %v5501
      %v5526 = vld [vmem:[%s1132 + $0x48] sm:$0xf]
      %v5527 = vld [vmem:[%s1132 + $0x4c] sm:$0xf]
      %v5528 = vld [vmem:[%s1132 + $0x50] sm:$0x3]
      %v5529 = vld [vmem:[%s1132 + $0x54] sm:$0xf]
      %v5530 = vld [vmem:[%s1132 + $0x58] sm:$0xf]
      %v5531 = vld [vmem:[%s1132 + $0x5c] sm:$0x3]
      %v5532 = vld [vmem:[%s1132 + $0x60] sm:$0xf]
      %v5533 = vld [vmem:[%s1132 + $0x64] sm:$0xf]
      %v5534 = vld [vmem:[%s1132 + $0x68] sm:$0x3]
      %v5535 = vld [vmem:[%s1132 + $0x6c] sm:$0xf]
      %v5536 = vld [vmem:[%s1132 + $0x70] sm:$0xf]
      %v5537 = vld [vmem:[%s1132 + $0x74] sm:$0x3]
      %v5538 = vld [vmem:[%s1132 + $0x78] sm:$0xf]
      %v5539 = vld [vmem:[%s1132 + $0x7c] sm:$0xf]
      %v5540 = vld [vmem:[%s1132 + $0x80] sm:$0x3]
      %v5541 = vld [vmem:[%s1132 + $0x84] sm:$0xf]
      %v5542 = vld [vmem:[%s1132 + $0x88] sm:$0xf]
      %v5543 = vld [vmem:[%s1132 + $0x8c] sm:$0x3]
      %v5544 = vld [vmem:[%s1132 + $0x90] sm:$0xf]
      %v5545 = vld [vmem:[%s1132 + $0x94] sm:$0xf]
      %v5546 = vld [vmem:[%s1132 + $0x98] sm:$0x3]
      %v5547 = vld [vmem:[%s1132 + $0x9c] sm:$0xf]
      %v5548 = vld [vmem:[%s1132 + $0xa0] sm:$0xf]
      %v5549 = vld [vmem:[%s1132 + $0xa4] sm:$0x3]
      %v5550 = vmax.bf16 %v5502, %v5526
      %v5551 = vmax.bf16 %v5503, %v5527
      %v5552 = vmax.bf16 %v5504, %v5528
      %v5553 = vmax.bf16 %v5505, %v5529
      %v5554 = vmax.bf16 %v5506, %v5530
      %v5555 = vmax.bf16 %v5507, %v5531
      %v5556 = vmax.bf16 %v5508, %v5532
      %v5557 = vmax.bf16 %v5509, %v5533
      %v5558 = vmax.bf16 %v5510, %v5534
      %v5559 = vmax.bf16 %v5511, %v5535
      %v5560 = vmax.bf16 %v5512, %v5536
      %v5561 = vmax.bf16 %v5513, %v5537
      %v5562 = vmax.bf16 %v5514, %v5538
      %v5563 = vmax.bf16 %v5515, %v5539
      %v5564 = vmax.bf16 %v5516, %v5540
      %v5565 = vmax.bf16 %v5517, %v5541
      %v5566 = vmax.bf16 %v5518, %v5542
      %v5567 = vmax.bf16 %v5519, %v5543
      %v5568 = vmax.bf16 %v5520, %v5544
      %v5569 = vmax.bf16 %v5521, %v5545
      %v5570 = vmax.bf16 %v5522, %v5546
      %v5571 = vmax.bf16 %v5523, %v5547
      %v5572 = vmax.bf16 %v5524, %v5548
      %v5573 = vmax.bf16 %v5525, %v5549
      %v5574 = vld [vmem:[%s1253 + $0x48] sm:$0xf]
      %v5575 = vld [vmem:[%s1253 + $0x4c] sm:$0xf]
      %v5576 = vld [vmem:[%s1253 + $0x50] sm:$0x3]
      %v5577 = vld [vmem:[%s1253 + $0x54] sm:$0xf]
      %v5578 = vld [vmem:[%s1253 + $0x58] sm:$0xf]
      %v5579 = vld [vmem:[%s1253 + $0x5c] sm:$0x3]
      %v5580 = vld [vmem:[%s1253 + $0x60] sm:$0xf]
      %v5581 = vld [vmem:[%s1253 + $0x64] sm:$0xf]
      %v5582 = vld [vmem:[%s1253 + $0x68] sm:$0x3]
      %v5583 = vld [vmem:[%s1253 + $0x6c] sm:$0xf]
      %v5584 = vld [vmem:[%s1253 + $0x70] sm:$0xf]
      %v5585 = vld [vmem:[%s1253 + $0x74] sm:$0x3]
      %v5586 = vld [vmem:[%s1253 + $0x78] sm:$0xf]
      %v5587 = vld [vmem:[%s1253 + $0x7c] sm:$0xf]
      %v5588 = vld [vmem:[%s1253 + $0x80] sm:$0x3]
      %v5589 = vld [vmem:[%s1253 + $0x84] sm:$0xf]
      %v5590 = vld [vmem:[%s1253 + $0x88] sm:$0xf]
      %v5591 = vld [vmem:[%s1253 + $0x8c] sm:$0x3]
      %v5592 = vld [vmem:[%s1253 + $0x90] sm:$0xf]
      %v5593 = vld [vmem:[%s1253 + $0x94] sm:$0xf]
      %v5594 = vld [vmem:[%s1253 + $0x98] sm:$0x3]
      %v5595 = vld [vmem:[%s1253 + $0x9c] sm:$0xf]
      %v5596 = vld [vmem:[%s1253 + $0xa0] sm:$0xf]
      %v5597 = vld [vmem:[%s1253 + $0xa4] sm:$0x3]
      %v5598 = vmax.bf16 %v5550, %v5574
      %v5599 = vmax.bf16 %v5551, %v5575
      %v5600 = vmax.bf16 %v5552, %v5576
      %v5601 = vmax.bf16 %v5553, %v5577
      %v5602 = vmax.bf16 %v5554, %v5578
      %v5603 = vmax.bf16 %v5555, %v5579
      %v5604 = vmax.bf16 %v5556, %v5580
      %v5605 = vmax.bf16 %v5557, %v5581
      %v5606 = vmax.bf16 %v5558, %v5582
      %v5607 = vmax.bf16 %v5559, %v5583
      %v5608 = vmax.bf16 %v5560, %v5584
      %v5609 = vmax.bf16 %v5561, %v5585
      %v5610 = vmax.bf16 %v5562, %v5586
      %v5611 = vmax.bf16 %v5563, %v5587
      %v5612 = vmax.bf16 %v5564, %v5588
      %v5613 = vmax.bf16 %v5565, %v5589
      %v5614 = vmax.bf16 %v5566, %v5590
      %v5615 = vmax.bf16 %v5567, %v5591
      %v5616 = vmax.bf16 %v5568, %v5592
      %v5617 = vmax.bf16 %v5569, %v5593
      %v5618 = vmax.bf16 %v5570, %v5594
      %v5619 = vmax.bf16 %v5571, %v5595
      %v5620 = vmax.bf16 %v5572, %v5596
      %v5621 = vmax.bf16 %v5573, %v5597
      %v5623 = vshrl.u32 %v5598, 16
      %v5625 = vrot.slane %v5623, 4
      %v5626 = vshll.u32 %v5598, 16
      %v5628 = vrot.slane %v5626, 5
      %v5629 = vor.u32 %v5625, %v5628
      %v5630 = vrot.slane %v5629, 4
      %v5632 = vshll.u32 %v5599, 16
      %v5634 = vrot.slane %v5632, 5
      %v5635 = vsel %vm1376, %v5630, %v5634
      %v5636 = vshrl.u32 %v5599, 16
      %v5638 = vrot.slane %v5636, 4
      %v5639 = vor.u32 %v5638, %v5634
      %v5640 = vrot.slane %v5639, 4
      %v5642 = vshll.u32 %v5600, 16
      %v5644 = vrot.slane %v5642, 5
      %v5645 = vsel %vm1376, %v5640, %v5644
      %v5647 = vshrl.u32 %v5601, 16
      %v5649 = vrot.slane %v5647, 4
      %v5650 = vshll.u32 %v5601, 16
      %v5652 = vrot.slane %v5650, 5
      %v5653 = vor.u32 %v5649, %v5652
      %v5654 = vrot.slane %v5653, 4
      %v5656 = vshll.u32 %v5602, 16
      %v5658 = vrot.slane %v5656, 5
      %v5659 = vsel %vm1376, %v5654, %v5658
      %v5660 = vshrl.u32 %v5602, 16
      %v5662 = vrot.slane %v5660, 4
      %v5663 = vor.u32 %v5662, %v5658
      %v5664 = vrot.slane %v5663, 4
      %v5666 = vshll.u32 %v5603, 16
      %v5668 = vrot.slane %v5666, 5
      %v5669 = vsel %vm1376, %v5664, %v5668
      %v5671 = vshrl.u32 %v5604, 16
      %v5673 = vrot.slane %v5671, 4
      %v5674 = vshll.u32 %v5604, 16
      %v5676 = vrot.slane %v5674, 5
      %v5677 = vor.u32 %v5673, %v5676
      %v5678 = vrot.slane %v5677, 4
      %v5680 = vshll.u32 %v5605, 16
      %v5682 = vrot.slane %v5680, 5
      %v5683 = vsel %vm1376, %v5678, %v5682
      %v5684 = vshrl.u32 %v5605, 16
      %v5686 = vrot.slane %v5684, 4
      %v5687 = vor.u32 %v5686, %v5682
      %v5688 = vrot.slane %v5687, 4
      %v5690 = vshll.u32 %v5606, 16
      %v5692 = vrot.slane %v5690, 5
      %v5693 = vsel %vm1376, %v5688, %v5692
      %v5695 = vshrl.u32 %v5607, 16
      %v5697 = vrot.slane %v5695, 4
      %v5698 = vshll.u32 %v5607, 16
      %v5700 = vrot.slane %v5698, 5
      %v5701 = vor.u32 %v5697, %v5700
      %v5702 = vrot.slane %v5701, 4
      %v5704 = vshll.u32 %v5608, 16
      %v5706 = vrot.slane %v5704, 5
      %v5707 = vsel %vm1376, %v5702, %v5706
      %v5708 = vshrl.u32 %v5608, 16
      %v5710 = vrot.slane %v5708, 4
      %v5711 = vor.u32 %v5710, %v5706
      %v5712 = vrot.slane %v5711, 4
      %v5714 = vshll.u32 %v5609, 16
      %v5716 = vrot.slane %v5714, 5
      %v5717 = vsel %vm1376, %v5712, %v5716
      %v5719 = vshrl.u32 %v5610, 16
      %v5721 = vrot.slane %v5719, 4
      %v5722 = vshll.u32 %v5610, 16
      %v5724 = vrot.slane %v5722, 5
      %v5725 = vor.u32 %v5721, %v5724
      %v5726 = vrot.slane %v5725, 4
      %v5728 = vshll.u32 %v5611, 16
      %v5730 = vrot.slane %v5728, 5
      %v5731 = vsel %vm1376, %v5726, %v5730
      %v5732 = vshrl.u32 %v5611, 16
      %v5734 = vrot.slane %v5732, 4
      %v5735 = vor.u32 %v5734, %v5730
      %v5736 = vrot.slane %v5735, 4
      %v5738 = vshll.u32 %v5612, 16
      %v5740 = vrot.slane %v5738, 5
      %v5741 = vsel %vm1376, %v5736, %v5740
      %v5743 = vshrl.u32 %v5613, 16
      %v5745 = vrot.slane %v5743, 4
      %v5746 = vshll.u32 %v5613, 16
      %v5748 = vrot.slane %v5746, 5
      %v5749 = vor.u32 %v5745, %v5748
      %v5750 = vrot.slane %v5749, 4
      %v5752 = vshll.u32 %v5614, 16
      %v5754 = vrot.slane %v5752, 5
      %v5755 = vsel %vm1376, %v5750, %v5754
      %v5756 = vshrl.u32 %v5614, 16
      %v5758 = vrot.slane %v5756, 4
      %v5759 = vor.u32 %v5758, %v5754
      %v5760 = vrot.slane %v5759, 4
      %v5762 = vshll.u32 %v5615, 16
      %v5764 = vrot.slane %v5762, 5
      %v5765 = vsel %vm1376, %v5760, %v5764
      %v5767 = vshrl.u32 %v5616, 16
      %v5769 = vrot.slane %v5767, 4
      %v5770 = vshll.u32 %v5616, 16
      %v5772 = vrot.slane %v5770, 5
      %v5773 = vor.u32 %v5769, %v5772
      %v5774 = vrot.slane %v5773, 4
      %v5776 = vshll.u32 %v5617, 16
      %v5778 = vrot.slane %v5776, 5
      %v5779 = vsel %vm1376, %v5774, %v5778
      %v5780 = vshrl.u32 %v5617, 16
      %v5782 = vrot.slane %v5780, 4
      %v5783 = vor.u32 %v5782, %v5778
      %v5784 = vrot.slane %v5783, 4
      %v5786 = vshll.u32 %v5618, 16
      %v5788 = vrot.slane %v5786, 5
      %v5789 = vsel %vm1376, %v5784, %v5788
      %v5791 = vshrl.u32 %v5619, 16
      %v5793 = vrot.slane %v5791, 4
      %v5794 = vshll.u32 %v5619, 16
      %v5796 = vrot.slane %v5794, 5
      %v5797 = vor.u32 %v5793, %v5796
      %v5798 = vrot.slane %v5797, 4
      %v5800 = vshll.u32 %v5620, 16
      %v5802 = vrot.slane %v5800, 5
      %v5803 = vsel %vm1376, %v5798, %v5802
      %v5804 = vshrl.u32 %v5620, 16
      %v5806 = vrot.slane %v5804, 4
      %v5807 = vor.u32 %v5806, %v5802
      %v5808 = vrot.slane %v5807, 4
      %v5810 = vshll.u32 %v5621, 16
      %v5812 = vrot.slane %v5810, 5
      %v5813 = vsel %vm1376, %v5808, %v5812
      %v5830 = vmax.bf16 %v5598, %v5635
      %v5831 = vmax.bf16 %v5599, %v5645
      %v5832 = vmax.bf16 %v5601, %v5659
      %v5833 = vmax.bf16 %v5602, %v5669
      %v5834 = vmax.bf16 %v5604, %v5683
      %v5835 = vmax.bf16 %v5605, %v5693
      %v5836 = vmax.bf16 %v5607, %v5707
      %v5837 = vmax.bf16 %v5608, %v5717
      %v5838 = vmax.bf16 %v5610, %v5731
      %v5839 = vmax.bf16 %v5611, %v5741
      %v5840 = vmax.bf16 %v5613, %v5755
      %v5841 = vmax.bf16 %v5614, %v5765
      %v5842 = vmax.bf16 %v5616, %v5779
      %v5843 = vmax.bf16 %v5617, %v5789
      %v5844 = vmax.bf16 %v5619, %v5803
      %v5845 = vmax.bf16 %v5620, %v5813
      %v5870 = vrot.slane %v5598, 5
      %v5871 = vrot.slane %v5870, 4
      %v5872 = vrot.slane %v5599, 5
      %v5873 = vsel %vm1999, %v5871, %v5872
      %v5874 = vrot.slane %v5872, 4
      %v5875 = vrot.slane %v5600, 5
      %v5876 = vsel %vm1999, %v5874, %v5875
      %v5877 = vrot.slane %v5601, 5
      %v5878 = vrot.slane %v5877, 4
      %v5879 = vrot.slane %v5602, 5
      %v5880 = vsel %vm1999, %v5878, %v5879
      %v5881 = vrot.slane %v5879, 4
      %v5882 = vrot.slane %v5603, 5
      %v5883 = vsel %vm1999, %v5881, %v5882
      %v5884 = vrot.slane %v5604, 5
      %v5885 = vrot.slane %v5884, 4
      %v5886 = vrot.slane %v5605, 5
      %v5887 = vsel %vm1999, %v5885, %v5886
      %v5888 = vrot.slane %v5886, 4
      %v5889 = vrot.slane %v5606, 5
      %v5890 = vsel %vm1999, %v5888, %v5889
      %v5891 = vrot.slane %v5607, 5
      %v5892 = vrot.slane %v5891, 4
      %v5893 = vrot.slane %v5608, 5
      %v5894 = vsel %vm1999, %v5892, %v5893
      %v5895 = vrot.slane %v5893, 4
      %v5896 = vrot.slane %v5609, 5
      %v5897 = vsel %vm1999, %v5895, %v5896
      %v5898 = vrot.slane %v5610, 5
      %v5899 = vrot.slane %v5898, 4
      %v5900 = vrot.slane %v5611, 5
      %v5901 = vsel %vm1999, %v5899, %v5900
      %v5902 = vrot.slane %v5900, 4
      %v5903 = vrot.slane %v5612, 5
      %v5904 = vsel %vm1999, %v5902, %v5903
      %v5905 = vrot.slane %v5613, 5
      %v5906 = vrot.slane %v5905, 4
      %v5907 = vrot.slane %v5614, 5
      %v5908 = vsel %vm1999, %v5906, %v5907
      %v5909 = vrot.slane %v5907, 4
      %v5910 = vrot.slane %v5615, 5
      %v5911 = vsel %vm1999, %v5909, %v5910
      %v5912 = vrot.slane %v5616, 5
      %v5913 = vrot.slane %v5912, 4
      %v5914 = vrot.slane %v5617, 5
      %v5915 = vsel %vm1999, %v5913, %v5914
      %v5916 = vrot.slane %v5914, 4
      %v5917 = vrot.slane %v5618, 5
      %v5918 = vsel %vm1999, %v5916, %v5917
      %v5919 = vrot.slane %v5619, 5
      %v5920 = vrot.slane %v5919, 4
      %v5921 = vrot.slane %v5620, 5
      %v5922 = vsel %vm1999, %v5920, %v5921
      %v5923 = vrot.slane %v5921, 4
      %v5924 = vrot.slane %v5621, 5
      %v5925 = vsel %vm1999, %v5923, %v5924
      %v5942 = vmax.bf16 %v5830, %v5873
      %v5943 = vmax.bf16 %v5831, %v5876
      %v5944 = vmax.bf16 %v5832, %v5880
      %v5945 = vmax.bf16 %v5833, %v5883
      %v5946 = vmax.bf16 %v5834, %v5887
      %v5947 = vmax.bf16 %v5835, %v5890
      %v5948 = vmax.bf16 %v5836, %v5894
      %v5949 = vmax.bf16 %v5837, %v5897
      %v5950 = vmax.bf16 %v5838, %v5901
      %v5951 = vmax.bf16 %v5839, %v5904
      %v5952 = vmax.bf16 %v5840, %v5908
      %v5953 = vmax.bf16 %v5841, %v5911
      %v5954 = vmax.bf16 %v5842, %v5915
      %v5955 = vmax.bf16 %v5843, %v5918
      %v5956 = vmax.bf16 %v5844, %v5922
      %v5957 = vmax.bf16 %v5845, %v5925
      %v5958 = vrot.slane %v5623, 5
      %v5959 = vrot.slane %v5626, 6
      %v5960 = vor.u32 %v5958, %v5959
      %v5961 = vrot.slane %v5960, 4
      %v5962 = vrot.slane %v5636, 5
      %v5963 = vrot.slane %v5632, 6
      %v5964 = vor.u32 %v5962, %v5963
      %v5965 = vsel %vm2222, %v5961, %v5964
      %v5966 = vrot.slane %v5964, 4
      %v5967 = vshrl.u32 %v5600, 16
      %v5969 = vrot.slane %v5967, 5
      %v5970 = vrot.slane %v5642, 6
      %v5971 = vor.u32 %v5969, %v5970
      %v5972 = vsel %vm2222, %v5966, %v5971
      %v5973 = vrot.slane %v5647, 5
      %v5974 = vrot.slane %v5650, 6
      %v5975 = vor.u32 %v5973, %v5974
      %v5976 = vrot.slane %v5975, 4
      %v5977 = vrot.slane %v5660, 5
      %v5978 = vrot.slane %v5656, 6
      %v5979 = vor.u32 %v5977, %v5978
      %v5980 = vsel %vm2222, %v5976, %v5979
      %v5981 = vrot.slane %v5979, 4
      %v5982 = vshrl.u32 %v5603, 16
      %v5984 = vrot.slane %v5982, 5
      %v5985 = vrot.slane %v5666, 6
      %v5986 = vor.u32 %v5984, %v5985
      %v5987 = vsel %vm2222, %v5981, %v5986
      %v5988 = vrot.slane %v5671, 5
      %v5989 = vrot.slane %v5674, 6
      %v5990 = vor.u32 %v5988, %v5989
      %v5991 = vrot.slane %v5990, 4
      %v5992 = vrot.slane %v5684, 5
      %v5993 = vrot.slane %v5680, 6
      %v5994 = vor.u32 %v5992, %v5993
      %v5995 = vsel %vm2222, %v5991, %v5994
      %v5996 = vrot.slane %v5994, 4
      %v5997 = vshrl.u32 %v5606, 16
      %v5999 = vrot.slane %v5997, 5
      %v6000 = vrot.slane %v5690, 6
      %v6001 = vor.u32 %v5999, %v6000
      %v6002 = vsel %vm2222, %v5996, %v6001
      %v6003 = vrot.slane %v5695, 5
      %v6004 = vrot.slane %v5698, 6
      %v6005 = vor.u32 %v6003, %v6004
      %v6006 = vrot.slane %v6005, 4
      %v6007 = vrot.slane %v5708, 5
      %v6008 = vrot.slane %v5704, 6
      %v6009 = vor.u32 %v6007, %v6008
      %v6010 = vsel %vm2222, %v6006, %v6009
      %v6011 = vrot.slane %v6009, 4
      %v6012 = vshrl.u32 %v5609, 16
      %v6014 = vrot.slane %v6012, 5
      %v6015 = vrot.slane %v5714, 6
      %v6016 = vor.u32 %v6014, %v6015
      %v6017 = vsel %vm2222, %v6011, %v6016
      %v6018 = vrot.slane %v5719, 5
      %v6019 = vrot.slane %v5722, 6
      %v6020 = vor.u32 %v6018, %v6019
      %v6021 = vrot.slane %v6020, 4
      %v6022 = vrot.slane %v5732, 5
      %v6023 = vrot.slane %v5728, 6
      %v6024 = vor.u32 %v6022, %v6023
      %v6025 = vsel %vm2222, %v6021, %v6024
      %v6026 = vrot.slane %v6024, 4
      %v6027 = vshrl.u32 %v5612, 16
      %v6029 = vrot.slane %v6027, 5
      %v6030 = vrot.slane %v5738, 6
      %v6031 = vor.u32 %v6029, %v6030
      %v6032 = vsel %vm2222, %v6026, %v6031
      %v6033 = vrot.slane %v5743, 5
      %v6034 = vrot.slane %v5746, 6
      %v6035 = vor.u32 %v6033, %v6034
      %v6036 = vrot.slane %v6035, 4
      %v6037 = vrot.slane %v5756, 5
      %v6038 = vrot.slane %v5752, 6
      %v6039 = vor.u32 %v6037, %v6038
      %v6040 = vsel %vm2222, %v6036, %v6039
      %v6041 = vrot.slane %v6039, 4
      %v6042 = vshrl.u32 %v5615, 16
      %v6044 = vrot.slane %v6042, 5
      %v6045 = vrot.slane %v5762, 6
      %v6046 = vor.u32 %v6044, %v6045
      %v6047 = vsel %vm2222, %v6041, %v6046
      %v6048 = vrot.slane %v5767, 5
      %v6049 = vrot.slane %v5770, 6
      %v6050 = vor.u32 %v6048, %v6049
      %v6051 = vrot.slane %v6050, 4
      %v6052 = vrot.slane %v5780, 5
      %v6053 = vrot.slane %v5776, 6
      %v6054 = vor.u32 %v6052, %v6053
      %v6055 = vsel %vm2222, %v6051, %v6054
      %v6056 = vrot.slane %v6054, 4
      %v6057 = vshrl.u32 %v5618, 16
      %v6059 = vrot.slane %v6057, 5
      %v6060 = vrot.slane %v5786, 6
      %v6061 = vor.u32 %v6059, %v6060
      %v6062 = vsel %vm2222, %v6056, %v6061
      %v6063 = vrot.slane %v5791, 5
      %v6064 = vrot.slane %v5794, 6
      %v6065 = vor.u32 %v6063, %v6064
      %v6066 = vrot.slane %v6065, 4
      %v6067 = vrot.slane %v5804, 5
      %v6068 = vrot.slane %v5800, 6
      %v6069 = vor.u32 %v6067, %v6068
      %v6070 = vsel %vm2222, %v6066, %v6069
      %v6071 = vrot.slane %v6069, 4
      %v6072 = vshrl.u32 %v5621, 16
      %v6074 = vrot.slane %v6072, 5
      %v6075 = vrot.slane %v5810, 6
      %v6076 = vor.u32 %v6074, %v6075
      %v6077 = vsel %vm2222, %v6071, %v6076
      %v6094 = vmax.bf16 %v5942, %v5965
      %v6095 = vmax.bf16 %v5943, %v5972
      %v6096 = vmax.bf16 %v5944, %v5980
      %v6097 = vmax.bf16 %v5945, %v5987
      %v6098 = vmax.bf16 %v5946, %v5995
      %v6099 = vmax.bf16 %v5947, %v6002
      %v6100 = vmax.bf16 %v5948, %v6010
      %v6101 = vmax.bf16 %v5949, %v6017
      %v6102 = vmax.bf16 %v5950, %v6025
      %v6103 = vmax.bf16 %v5951, %v6032
      %v6104 = vmax.bf16 %v5952, %v6040
      %v6105 = vmax.bf16 %v5953, %v6047
      %v6106 = vmax.bf16 %v5954, %v6055
      %v6107 = vmax.bf16 %v5955, %v6062
      %v6108 = vmax.bf16 %v5956, %v6070
      %v6109 = vmax.bf16 %v5957, %v6077
      %v6110 = vrot.slane %v5598, 6
      %v6111 = vrot.slane %v6110, 4
      %v6112 = vrot.slane %v5599, 6
      %v6113 = vsel %vm2605, %v6111, %v6112
      %v6114 = vrot.slane %v6112, 4
      %v6115 = vrot.slane %v5600, 6
      %v6116 = vsel %vm2605, %v6114, %v6115
      %v6117 = vrot.slane %v5601, 6
      %v6118 = vrot.slane %v6117, 4
      %v6119 = vrot.slane %v5602, 6
      %v6120 = vsel %vm2605, %v6118, %v6119
      %v6121 = vrot.slane %v6119, 4
      %v6122 = vrot.slane %v5603, 6
      %v6123 = vsel %vm2605, %v6121, %v6122
      %v6124 = vrot.slane %v5604, 6
      %v6125 = vrot.slane %v6124, 4
      %v6126 = vrot.slane %v5605, 6
      %v6127 = vsel %vm2605, %v6125, %v6126
      %v6128 = vrot.slane %v6126, 4
      %v6129 = vrot.slane %v5606, 6
      %v6130 = vsel %vm2605, %v6128, %v6129
      %v6131 = vrot.slane %v5607, 6
      %v6132 = vrot.slane %v6131, 4
      %v6133 = vrot.slane %v5608, 6
      %v6134 = vsel %vm2605, %v6132, %v6133
      %v6135 = vrot.slane %v6133, 4
      %v6136 = vrot.slane %v5609, 6
      %v6137 = vsel %vm2605, %v6135, %v6136
      %v6138 = vrot.slane %v5610, 6
      %v6139 = vrot.slane %v6138, 4
      %v6140 = vrot.slane %v5611, 6
      %v6141 = vsel %vm2605, %v6139, %v6140
      %v6142 = vrot.slane %v6140, 4
      %v6143 = vrot.slane %v5612, 6
      %v6144 = vsel %vm2605, %v6142, %v6143
      %v6145 = vrot.slane %v5613, 6
      %v6146 = vrot.slane %v6145, 4
      %v6147 = vrot.slane %v5614, 6
      %v6148 = vsel %vm2605, %v6146, %v6147
      %v6149 = vrot.slane %v6147, 4
      %v6150 = vrot.slane %v5615, 6
      %v6151 = vsel %vm2605, %v6149, %v6150
      %v6152 = vrot.slane %v5616, 6
      %v6153 = vrot.slane %v6152, 4
      %v6154 = vrot.slane %v5617, 6
      %v6155 = vsel %vm2605, %v6153, %v6154
      %v6156 = vrot.slane %v6154, 4
      %v6157 = vrot.slane %v5618, 6
      %v6158 = vsel %vm2605, %v6156, %v6157
      %v6159 = vrot.slane %v5619, 6
      %v6160 = vrot.slane %v6159, 4
      %v6161 = vrot.slane %v5620, 6
      %v6162 = vsel %vm2605, %v6160, %v6161
      %v6163 = vrot.slane %v6161, 4
      %v6164 = vrot.slane %v5621, 6
      %v6165 = vsel %vm2605, %v6163, %v6164
      %v6182 = vmax.bf16 %v6094, %v6113
      %v6183 = vmax.bf16 %v6095, %v6116
      %v6184 = vmax.bf16 %v6096, %v6120
      %v6185 = vmax.bf16 %v6097, %v6123
      %v6186 = vmax.bf16 %v6098, %v6127
      %v6187 = vmax.bf16 %v6099, %v6130
      %v6188 = vmax.bf16 %v6100, %v6134
      %v6189 = vmax.bf16 %v6101, %v6137
      %v6190 = vmax.bf16 %v6102, %v6141
      %v6191 = vmax.bf16 %v6103, %v6144
      %v6192 = vmax.bf16 %v6104, %v6148
      %v6193 = vmax.bf16 %v6105, %v6151
      %v6194 = vmax.bf16 %v6106, %v6155
      %v6195 = vmax.bf16 %v6107, %v6158
      %v6196 = vmax.bf16 %v6108, %v6162
      %v6197 = vmax.bf16 %v6109, %v6165
      %v6214 = vunpack.c.l.b16 %v6182
      %v6215 = vunpack.c.l.b16 %v6183
      %v6216 = vunpack.c.l.b16 %v6184
      %v6217 = vunpack.c.l.b16 %v6185
      %v6218 = vunpack.c.l.b16 %v6186
      %v6219 = vunpack.c.l.b16 %v6187
      %v6220 = vunpack.c.l.b16 %v6188
      %v6221 = vunpack.c.l.b16 %v6189
      %v6222 = vunpack.c.l.b16 %v6190
      %v6223 = vunpack.c.l.b16 %v6191
      %v6224 = vunpack.c.l.b16 %v6192
      %v6225 = vunpack.c.l.b16 %v6193
      %v6226 = vunpack.c.l.b16 %v6194
      %v6227 = vunpack.c.l.b16 %v6195
      %v6228 = vunpack.c.l.b16 %v6196
      %v6229 = vunpack.c.l.b16 %v6197
      %v6230 = vpack.c.b16 %v6215, %v6214
      %v6231 = vpack.c.b16 %v6217, %v6216
      %v6232 = vpack.c.b16 %v6219, %v6218
      %v6233 = vpack.c.b16 %v6221, %v6220
      %v6234 = vpack.c.b16 %v6223, %v6222
      %v6235 = vpack.c.b16 %v6225, %v6224
      %v6236 = vpack.c.b16 %v6227, %v6226
      %v6237 = vpack.c.b16 %v6229, %v6228
      %6246 = vst [vmem:[#allocation3 + $0x18] sm:$0xff] %v6230
      %6247 = vst [vmem:[#allocation3 + $0x38] sm:$0xff] %v6231
      %6248 = vst [vmem:[#allocation3 + $0x58] sm:$0xff] %v6232
      %6249 = vst [vmem:[#allocation3 + $0x78] sm:$0xff] %v6233
      %6250 = vst [vmem:[#allocation3 + $0x98] sm:$0xff] %v6234
      %6251 = vst [vmem:[#allocation3 + $0xb8] sm:$0xff] %v6235
      %6252 = vst [vmem:[#allocation3 + $0xd8] sm:$0xff] %v6236
      %6253 = vst [vmem:[#allocation3 + $0xf8] sm:$0xff] %v6237
      %v6254 = vld [vmem:[#allocation3] sm:$0xff]
      %v6255 = vld [vmem:[#allocation3 + $0x8] sm:$0xff]
      %v6256 = vld [vmem:[#allocation3 + $0x10] sm:$0xff]
      %v6257 = vld [vmem:[#allocation3 + $0x18] sm:$0xff]
      %v6258 = vld [vmem:[#allocation3 + $0x20] sm:$0xff]
      %v6259 = vld [vmem:[#allocation3 + $0x28] sm:$0xff]
      %v6260 = vld [vmem:[#allocation3 + $0x30] sm:$0xff]
      %v6261 = vld [vmem:[#allocation3 + $0x38] sm:$0xff]
      %v6262 = vld [vmem:[#allocation3 + $0x40] sm:$0xff]
      %v6263 = vld [vmem:[#allocation3 + $0x48] sm:$0xff]
      %v6264 = vld [vmem:[#allocation3 + $0x50] sm:$0xff]
      %v6265 = vld [vmem:[#allocation3 + $0x58] sm:$0xff]
      %v6266 = vld [vmem:[#allocation3 + $0x60] sm:$0xff]
      %v6267 = vld [vmem:[#allocation3 + $0x68] sm:$0xff]
      %v6268 = vld [vmem:[#allocation3 + $0x70] sm:$0xff]
      %v6269 = vld [vmem:[#allocation3 + $0x78] sm:$0xff]
      %v6270 = vld [vmem:[#allocation3 + $0x80] sm:$0xff]
      %v6271 = vld [vmem:[#allocation3 + $0x88] sm:$0xff]
      %v6272 = vld [vmem:[#allocation3 + $0x90] sm:$0xff]
      %v6273 = vld [vmem:[#allocation3 + $0x98] sm:$0xff]
      %v6274 = vld [vmem:[#allocation3 + $0xa0] sm:$0xff]
      %v6275 = vld [vmem:[#allocation3 + $0xa8] sm:$0xff]
      %v6276 = vld [vmem:[#allocation3 + $0xb0] sm:$0xff]
      %v6277 = vld [vmem:[#allocation3 + $0xb8] sm:$0xff]
      %v6278 = vld [vmem:[#allocation3 + $0xc0] sm:$0xff]
      %v6279 = vld [vmem:[#allocation3 + $0xc8] sm:$0xff]
      %v6280 = vld [vmem:[#allocation3 + $0xd0] sm:$0xff]
      %v6281 = vld [vmem:[#allocation3 + $0xd8] sm:$0xff]
      %v6282 = vld [vmem:[#allocation3 + $0xe0] sm:$0xff]
      %v6283 = vld [vmem:[#allocation3 + $0xe8] sm:$0xff]
      %v6284 = vld [vmem:[#allocation3 + $0xf0] sm:$0xff]
      %v6285 = vld [vmem:[#allocation3 + $0xf8] sm:$0xff]
      %v6286 = vld [vmem:[%s3] sm:$0xf]
      %v6287 = vld [vmem:[%s3 + $0x4] sm:$0xf]
      %v6288 = vld [vmem:[%s3 + $0x8] sm:$0xf]
      %v6289 = vld [vmem:[%s3 + $0xc] sm:$0xf]
      %v6290 = vld [vmem:[%s3 + $0x10] sm:$0xf]
      %v6291 = vld [vmem:[%s3 + $0x14] sm:$0xf]
      %v6292 = vld [vmem:[%s3 + $0x18] sm:$0xf]
      %v6293 = vld [vmem:[%s3 + $0x1c] sm:$0xf]
      %v6294 = vld [vmem:[%s3 + $0x20] sm:$0xf]
      %v6295 = vld [vmem:[%s3 + $0x24] sm:$0xf]
      %v6296 = vld [vmem:[%s3 + $0x28] sm:$0xf]
      %v6297 = vld [vmem:[%s3 + $0x2c] sm:$0xf]
      %v6298 = vld [vmem:[%s3 + $0x30] sm:$0xf]
      %v6299 = vld [vmem:[%s3 + $0x34] sm:$0xf]
      %v6300 = vld [vmem:[%s3 + $0x38] sm:$0xf]
      %v6301 = vld [vmem:[%s3 + $0x3c] sm:$0xf]
      %v6302 = vld [vmem:[%s3 + $0x40] sm:$0xf]
      %v6303 = vld [vmem:[%s3 + $0x44] sm:$0xf]
      %v6304 = vld [vmem:[%s3 + $0x48] sm:$0xf]
      %v6305 = vld [vmem:[%s3 + $0x4c] sm:$0xf]
      %v6306 = vld [vmem:[%s3 + $0x50] sm:$0xf]
      %v6307 = vld [vmem:[%s3 + $0x54] sm:$0xf]
      %v6308 = vld [vmem:[%s3 + $0x58] sm:$0xf]
      %v6309 = vld [vmem:[%s3 + $0x5c] sm:$0xf]
      %v6310 = vld [vmem:[%s3 + $0x60] sm:$0xf]
      %v6311 = vld [vmem:[%s3 + $0x64] sm:$0xf]
      %v6312 = vld [vmem:[%s3 + $0x68] sm:$0xf]
      %v6313 = vld [vmem:[%s3 + $0x6c] sm:$0xf]
      %v6314 = vld [vmem:[%s3 + $0x70] sm:$0xf]
      %v6315 = vld [vmem:[%s3 + $0x74] sm:$0xf]
      %v6316 = vld [vmem:[%s3 + $0x78] sm:$0xf]
      %v6317 = vld [vmem:[%s3 + $0x7c] sm:$0xf]
      %v6318 = vld [vmem:[%s3 + $0x80] sm:$0xf]
      %v6319 = vld [vmem:[%s3 + $0x84] sm:$0xf]
      %v6320 = vld [vmem:[%s3 + $0x88] sm:$0xf]
      %v6321 = vld [vmem:[%s3 + $0x8c] sm:$0xf]
      %v6322 = vld [vmem:[%s3 + $0x90] sm:$0xf]
      %v6323 = vld [vmem:[%s3 + $0x94] sm:$0xf]
      %v6324 = vld [vmem:[%s3 + $0x98] sm:$0xf]
      %v6325 = vld [vmem:[%s3 + $0x9c] sm:$0xf]
      %v6326 = vld [vmem:[%s3 + $0xa0] sm:$0xf]
      %v6327 = vld [vmem:[%s3 + $0xa4] sm:$0xf]
      %v6328 = vld [vmem:[%s3 + $0xa8] sm:$0xf]
      %v6329 = vld [vmem:[%s3 + $0xac] sm:$0xf]
      %v6330 = vld [vmem:[%s3 + $0xb0] sm:$0xf]
      %v6331 = vld [vmem:[%s3 + $0xb4] sm:$0xf]
      %v6332 = vld [vmem:[%s3 + $0xb8] sm:$0xf]
      %v6333 = vld [vmem:[%s3 + $0xbc] sm:$0xf]
      %v6334 = vld [vmem:[%s3 + $0xc0] sm:$0xf]
      %v6335 = vld [vmem:[%s3 + $0xc4] sm:$0xf]
      %v6336 = vld [vmem:[%s3 + $0xc8] sm:$0xf]
      %v6337 = vld [vmem:[%s3 + $0xcc] sm:$0xf]
      %v6338 = vld [vmem:[%s3 + $0xd0] sm:$0xf]
      %v6339 = vld [vmem:[%s3 + $0xd4] sm:$0xf]
      %v6340 = vld [vmem:[%s3 + $0xd8] sm:$0xf]
      %v6341 = vld [vmem:[%s3 + $0xdc] sm:$0xf]
      %v6342 = vld [vmem:[%s3 + $0xe0] sm:$0xf]
      %v6343 = vld [vmem:[%s3 + $0xe4] sm:$0xf]
      %v6344 = vld [vmem:[%s3 + $0xe8] sm:$0xf]
      %v6345 = vld [vmem:[%s3 + $0xec] sm:$0xf]
      %v6346 = vld [vmem:[%s3 + $0xf0] sm:$0xf]
      %v6347 = vld [vmem:[%s3 + $0xf4] sm:$0xf]
      %v6348 = vld [vmem:[%s3 + $0xf8] sm:$0xf]
      %v6349 = vld [vmem:[%s3 + $0xfc] sm:$0xf]
      %v6350 = vld [vmem:[%s4] sm:$0x1]
      %v6352 = vlaneseq
      %v6353 = vshrl.u32 %v6352, 7
      %v6354 = vsub.s32 0, %v6353
      %v6355 = vrot.slane %v6350, %v6354
      %v6421 = vunpack.c.l.b16 %v6286
      %v6422 = vunpack.c.l.b16 %v6287
      %v6423 = vunpack.c.l.b16 %v6288
      %v6424 = vunpack.c.l.b16 %v6289
      %v6425 = vunpack.c.l.b16 %v6290
      %v6426 = vunpack.c.l.b16 %v6291
      %v6427 = vunpack.c.l.b16 %v6292
      %v6428 = vunpack.c.l.b16 %v6293
      %v6429 = vunpack.c.l.b16 %v6294
      %v6430 = vunpack.c.l.b16 %v6295
      %v6431 = vunpack.c.l.b16 %v6296
      %v6432 = vunpack.c.l.b16 %v6297
      %v6433 = vunpack.c.l.b16 %v6298
      %v6434 = vunpack.c.l.b16 %v6299
      %v6435 = vunpack.c.l.b16 %v6300
      %v6436 = vunpack.c.l.b16 %v6301
      %v6437 = vunpack.c.l.b16 %v6302
      %v6438 = vunpack.c.l.b16 %v6303
      %v6439 = vunpack.c.l.b16 %v6304
      %v6440 = vunpack.c.l.b16 %v6305
      %v6441 = vunpack.c.l.b16 %v6306
      %v6442 = vunpack.c.l.b16 %v6307
      %v6443 = vunpack.c.l.b16 %v6308
      %v6444 = vunpack.c.l.b16 %v6309
      %v6445 = vunpack.c.l.b16 %v6310
      %v6446 = vunpack.c.l.b16 %v6311
      %v6447 = vunpack.c.l.b16 %v6312
      %v6448 = vunpack.c.l.b16 %v6313
      %v6449 = vunpack.c.l.b16 %v6314
      %v6450 = vunpack.c.l.b16 %v6315
      %v6451 = vunpack.c.l.b16 %v6316
      %v6452 = vunpack.c.l.b16 %v6317
      %v6453 = vunpack.c.l.b16 %v6318
      %v6454 = vunpack.c.l.b16 %v6319
      %v6455 = vunpack.c.l.b16 %v6320
      %v6456 = vunpack.c.l.b16 %v6321
      %v6457 = vunpack.c.l.b16 %v6322
      %v6458 = vunpack.c.l.b16 %v6323
      %v6459 = vunpack.c.l.b16 %v6324
      %v6460 = vunpack.c.l.b16 %v6325
      %v6461 = vunpack.c.l.b16 %v6326
      %v6462 = vunpack.c.l.b16 %v6327
      %v6463 = vunpack.c.l.b16 %v6328
      %v6464 = vunpack.c.l.b16 %v6329
      %v6465 = vunpack.c.l.b16 %v6330
      %v6466 = vunpack.c.l.b16 %v6331
      %v6467 = vunpack.c.l.b16 %v6332
      %v6468 = vunpack.c.l.b16 %v6333
      %v6469 = vunpack.c.l.b16 %v6334
      %v6470 = vunpack.c.l.b16 %v6335
      %v6471 = vunpack.c.l.b16 %v6336
      %v6472 = vunpack.c.l.b16 %v6337
      %v6473 = vunpack.c.l.b16 %v6338
      %v6474 = vunpack.c.l.b16 %v6339
      %v6475 = vunpack.c.l.b16 %v6340
      %v6476 = vunpack.c.l.b16 %v6341
      %v6477 = vunpack.c.l.b16 %v6342
      %v6478 = vunpack.c.l.b16 %v6343
      %v6479 = vunpack.c.l.b16 %v6344
      %v6480 = vunpack.c.l.b16 %v6345
      %v6481 = vunpack.c.l.b16 %v6346
      %v6482 = vunpack.c.l.b16 %v6347
      %v6483 = vunpack.c.l.b16 %v6348
      %v6484 = vunpack.c.l.b16 %v6349
      %v6485 = vpack.c.b16 %v6422, %v6421
      %v6486 = vpack.c.b16 %v6424, %v6423
      %v6487 = vpack.c.b16 %v6426, %v6425
      %v6488 = vpack.c.b16 %v6428, %v6427
      %v6489 = vpack.c.b16 %v6430, %v6429
      %v6490 = vpack.c.b16 %v6432, %v6431
      %v6491 = vpack.c.b16 %v6434, %v6433
      %v6492 = vpack.c.b16 %v6436, %v6435
      %v6493 = vpack.c.b16 %v6438, %v6437
      %v6494 = vpack.c.b16 %v6440, %v6439
      %v6495 = vpack.c.b16 %v6442, %v6441
      %v6496 = vpack.c.b16 %v6444, %v6443
      %v6497 = vpack.c.b16 %v6446, %v6445
      %v6498 = vpack.c.b16 %v6448, %v6447
      %v6499 = vpack.c.b16 %v6450, %v6449
      %v6500 = vpack.c.b16 %v6452, %v6451
      %v6501 = vpack.c.b16 %v6454, %v6453
      %v6502 = vpack.c.b16 %v6456, %v6455
      %v6503 = vpack.c.b16 %v6458, %v6457
      %v6504 = vpack.c.b16 %v6460, %v6459
      %v6505 = vpack.c.b16 %v6462, %v6461
      %v6506 = vpack.c.b16 %v6464, %v6463
      %v6507 = vpack.c.b16 %v6466, %v6465
      %v6508 = vpack.c.b16 %v6468, %v6467
      %v6509 = vpack.c.b16 %v6470, %v6469
      %v6510 = vpack.c.b16 %v6472, %v6471
      %v6511 = vpack.c.b16 %v6474, %v6473
      %v6512 = vpack.c.b16 %v6476, %v6475
      %v6513 = vpack.c.b16 %v6478, %v6477
      %v6514 = vpack.c.b16 %v6480, %v6479
      %v6515 = vpack.c.b16 %v6482, %v6481
      %v6516 = vpack.c.b16 %v6484, %v6483
      %6549 = vmatprep.subr.bf16.mxu0 0
      %6550 = vmatpush1.bf16.msra.mxu0 %v6485
      %6551 = vmatprep.subr.bf16.mxu0 0
      %6552 = vmatpush1.bf16.msra.mxu0 %v6486
      %6553 = vmatprep.subr.bf16.mxu0 0
      %6554 = vmatpush1.bf16.msra.mxu0 %v6487
      %6555 = vmatprep.subr.bf16.mxu0 0
      %6556 = vmatpush1.bf16.msra.mxu0 %v6488
      %6557 = vmatprep.subr.bf16.mxu0 0
      %6558 = vmatpush1.bf16.msra.mxu0 %v6489
      %6559 = vmatprep.subr.bf16.mxu0 0
      %6560 = vmatpush1.bf16.msra.mxu0 %v6490
      %6561 = vmatprep.subr.bf16.mxu0 0
      %6562 = vmatpush1.bf16.msra.mxu0 %v6491
      %6563 = vmatprep.subr.bf16.mxu0 0
      %6564 = vmatpush1.bf16.msra.mxu0 %v6492
      %6565 = vmatprep.subr.bf16.mxu0 0
      %6566 = vmatpush1.bf16.msra.mxu0 %v6493
      %6567 = vmatprep.subr.bf16.mxu0 0
      %6568 = vmatpush1.bf16.msra.mxu0 %v6494
      %6569 = vmatprep.subr.bf16.mxu0 0
      %6570 = vmatpush1.bf16.msra.mxu0 %v6495
      %6571 = vmatprep.subr.bf16.mxu0 0
      %6572 = vmatpush1.bf16.msra.mxu0 %v6496
      %6573 = vmatprep.subr.bf16.mxu0 0
      %6574 = vmatpush1.bf16.msra.mxu0 %v6497
      %6575 = vmatprep.subr.bf16.mxu0 0
      %6576 = vmatpush1.bf16.msra.mxu0 %v6498
      %6577 = vmatprep.subr.bf16.mxu0 0
      %6578 = vmatpush1.bf16.msra.mxu0 %v6499
      %6579 = vmatprep.subr.bf16.mxu0 0
      %6580 = vmatpush1.bf16.msra.mxu0 %v6500
      %6581 = vmatprep.mubr.bf16.mxu0 %v6255
      %6582 = vmatmul.mubr.bf16.gmra.mrb[0].mxu0 %v6254
      %v6583 = vpop.f32.mrb[0].mxu0
      %v6584 = vadd.f32 %v6355, %v6583
      %v6585 = vpop.f32.mrb[0].mxu0
      %v6586 = vpop.f32.mrb[0].mxu0
      %v6587 = vadd.f32 %v6355, %v6586
      %v6588 = vpop.f32.mrb[0].mxu0
      %6589 = vmatprep.mubr.bf16.mxu0 %v6259
      %6590 = vmatmul.mubr.bf16.gmra.mrb[0].mxu0 %v6258
      %v6591 = vpop.f32.mrb[0].mxu0
      %v6592 = vadd.f32 %v6355, %v6591
      %v6593 = vpop.f32.mrb[0].mxu0
      %v6594 = vpop.f32.mrb[0].mxu0
      %v6595 = vadd.f32 %v6355, %v6594
      %v6596 = vpop.f32.mrb[0].mxu0
      %6597 = vmatprep.mubr.bf16.mxu0 %v6263
      %6598 = vmatmul.mubr.bf16.gmra.mrb[0].mxu0 %v6262
      %v6599 = vpop.f32.mrb[0].mxu0
      %v6600 = vadd.f32 %v6355, %v6599
      %v6601 = vpop.f32.mrb[0].mxu0
      %v6602 = vpop.f32.mrb[0].mxu0
      %v6603 = vadd.f32 %v6355, %v6602
      %v6604 = vpop.f32.mrb[0].mxu0
      %6605 = vmatprep.mubr.bf16.mxu0 %v6267
      %6606 = vmatmul.mubr.bf16.gmra.mrb[0].mxu0 %v6266
      %v6607 = vpop.f32.mrb[0].mxu0
      %v6608 = vadd.f32 %v6355, %v6607
      %v6609 = vpop.f32.mrb[0].mxu0
      %v6610 = vpop.f32.mrb[0].mxu0
      %v6611 = vadd.f32 %v6355, %v6610
      %v6612 = vpop.f32.mrb[0].mxu0
      %6613 = vmatprep.mubr.bf16.mxu0 %v6271
      %6614 = vmatmul.mubr.bf16.gmra.mrb[0].mxu0 %v6270
      %v6615 = vpop.f32.mrb[0].mxu0
      %v6616 = vadd.f32 %v6355, %v6615
      %v6617 = vpop.f32.mrb[0].mxu0
      %v6618 = vpop.f32.mrb[0].mxu0
      %v6619 = vadd.f32 %v6355, %v6618
      %v6620 = vpop.f32.mrb[0].mxu0
      %6621 = vmatprep.mubr.bf16.mxu0 %v6275
      %6622 = vmatmul.mubr.bf16.gmra.mrb[0].mxu0 %v6274
      %v6623 = vpop.f32.mrb[0].mxu0
      %v6624 = vadd.f32 %v6355, %v6623
      %v6625 = vpop.f32.mrb[0].mxu0
      %v6626 = vpop.f32.mrb[0].mxu0
      %v6627 = vadd.f32 %v6355, %v6626
      %v6628 = vpop.f32.mrb[0].mxu0
      %6629 = vmatprep.mubr.bf16.mxu0 %v6279
      %6630 = vmatmul.mubr.bf16.gmra.mrb[0].mxu0 %v6278
      %v6631 = vpop.f32.mrb[0].mxu0
      %v6632 = vadd.f32 %v6355, %v6631
      %v6633 = vpop.f32.mrb[0].mxu0
      %v6634 = vpop.f32.mrb[0].mxu0
      %v6635 = vadd.f32 %v6355, %v6634
      %v6636 = vpop.f32.mrb[0].mxu0
      %6637 = vmatprep.mubr.bf16.mxu0 %v6283
      %6638 = vmatmul.mubr.bf16.gmra.mrb[0].mxu0 %v6282
      %v6639 = vpop.f32.mrb[0].mxu0
      %v6640 = vadd.f32 %v6355, %v6639
      %v6641 = vpop.f32.mrb[0].mxu0
      %v6642 = vpop.f32.mrb[0].mxu0
      %v6643 = vadd.f32 %v6355, %v6642
      %v6644 = vpop.f32.mrb[0].mxu0
      %6645 = vdwg.mxu0
      %6646 = vmatprep.subr.bf16.mxu0 0
      %6647 = vmatpush1.bf16.msra.mxu0 %v6501
      %6648 = vmatprep.subr.bf16.mxu0 0
      %6649 = vmatpush1.bf16.msra.mxu0 %v6502
      %6650 = vmatprep.subr.bf16.mxu0 0
      %6651 = vmatpush1.bf16.msra.mxu0 %v6503
      %6652 = vmatprep.subr.bf16.mxu0 0
      %6653 = vmatpush1.bf16.msra.mxu0 %v6504
      %6654 = vmatprep.subr.bf16.mxu0 0
      %6655 = vmatpush1.bf16.msra.mxu0 %v6505
      %6656 = vmatprep.subr.bf16.mxu0 0
      %6657 = vmatpush1.bf16.msra.mxu0 %v6506
      %6658 = vmatprep.subr.bf16.mxu0 0
      %6659 = vmatpush1.bf16.msra.mxu0 %v6507
      %6660 = vmatprep.subr.bf16.mxu0 0
      %6661 = vmatpush1.bf16.msra.mxu0 %v6508
      %6662 = vmatprep.subr.bf16.mxu0 0
      %6663 = vmatpush1.bf16.msra.mxu0 %v6509
      %6664 = vmatprep.subr.bf16.mxu0 0
      %6665 = vmatpush1.bf16.msra.mxu0 %v6510
      %6666 = vmatprep.subr.bf16.mxu0 0
      %6667 = vmatpush1.bf16.msra.mxu0 %v6511
      %6668 = vmatprep.subr.bf16.mxu0 0
      %6669 = vmatpush1.bf16.msra.mxu0 %v6512
      %6670 = vmatprep.subr.bf16.mxu0 0
      %6671 = vmatpush1.bf16.msra.mxu0 %v6513
      %6672 = vmatprep.subr.bf16.mxu0 0
      %6673 = vmatpush1.bf16.msra.mxu0 %v6514
      %6674 = vmatprep.subr.bf16.mxu0 0
      %6675 = vmatpush1.bf16.msra.mxu0 %v6515
      %6676 = vmatprep.subr.bf16.mxu0 0
      %6677 = vmatpush1.bf16.msra.mxu0 %v6516
      %6678 = vmatprep.mubr.bf16.mxu0 %v6257
      %6679 = vmatmul.mubr.bf16.gmra.mrb[0].mxu0 %v6256
      %v6680 = vpop.f32.mrb[0].mxu0
      %v6681 = vadd.f32 %v6584, %v6680
      %v6682 = vpop.f32.mrb[0].mxu0
      %v6683 = vpop.f32.mrb[0].mxu0
      %v6684 = vadd.f32 %v6587, %v6683
      %v6685 = vpop.f32.mrb[0].mxu0
      %6686 = vmatprep.mubr.bf16.mxu0 %v6261
      %6687 = vmatmul.mubr.bf16.gmra.mrb[0].mxu0 %v6260
      %v6688 = vpop.f32.mrb[0].mxu0
      %v6689 = vadd.f32 %v6592, %v6688
      %v6690 = vpop.f32.mrb[0].mxu0
      %v6691 = vpop.f32.mrb[0].mxu0
      %v6692 = vadd.f32 %v6595, %v6691
      %v6693 = vpop.f32.mrb[0].mxu0
      %6694 = vmatprep.mubr.bf16.mxu0 %v6265
      %6695 = vmatmul.mubr.bf16.gmra.mrb[0].mxu0 %v6264
      %v6696 = vpop.f32.mrb[0].mxu0
      %v6697 = vadd.f32 %v6600, %v6696
      %v6698 = vpop.f32.mrb[0].mxu0
      %v6699 = vpop.f32.mrb[0].mxu0
      %v6700 = vadd.f32 %v6603, %v6699
      %v6701 = vpop.f32.mrb[0].mxu0
      %6702 = vmatprep.mubr.bf16.mxu0 %v6269
      %6703 = vmatmul.mubr.bf16.gmra.mrb[0].mxu0 %v6268
      %v6704 = vpop.f32.mrb[0].mxu0
      %v6705 = vadd.f32 %v6608, %v6704
      %v6706 = vpop.f32.mrb[0].mxu0
      %v6707 = vpop.f32.mrb[0].mxu0
      %v6708 = vadd.f32 %v6611, %v6707
      %v6709 = vpop.f32.mrb[0].mxu0
      %6710 = vmatprep.mubr.bf16.mxu0 %v6273
      %6711 = vmatmul.mubr.bf16.gmra.mrb[0].mxu0 %v6272
      %v6712 = vpop.f32.mrb[0].mxu0
      %v6713 = vadd.f32 %v6616, %v6712
      %v6714 = vpop.f32.mrb[0].mxu0
      %v6715 = vpop.f32.mrb[0].mxu0
      %v6716 = vadd.f32 %v6619, %v6715
      %v6717 = vpop.f32.mrb[0].mxu0
      %6718 = vmatprep.mubr.bf16.mxu0 %v6277
      %6719 = vmatmul.mubr.bf16.gmra.mrb[0].mxu0 %v6276
      %v6720 = vpop.f32.mrb[0].mxu0
      %v6721 = vadd.f32 %v6624, %v6720
      %v6722 = vpop.f32.mrb[0].mxu0
      %v6723 = vpop.f32.mrb[0].mxu0
      %v6724 = vadd.f32 %v6627, %v6723
      %v6725 = vpop.f32.mrb[0].mxu0
      %6726 = vmatprep.mubr.bf16.mxu0 %v6281
      %6727 = vmatmul.mubr.bf16.gmra.mrb[0].mxu0 %v6280
      %v6728 = vpop.f32.mrb[0].mxu0
      %v6729 = vadd.f32 %v6632, %v6728
      %v6730 = vpop.f32.mrb[0].mxu0
      %v6731 = vpop.f32.mrb[0].mxu0
      %v6732 = vadd.f32 %v6635, %v6731
      %v6733 = vpop.f32.mrb[0].mxu0
      %6734 = vmatprep.mubr.bf16.mxu0 %v6285
      %6735 = vmatmul.mubr.bf16.gmra.mrb[0].mxu0 %v6284
      %v6736 = vpop.f32.mrb[0].mxu0
      %v6737 = vadd.f32 %v6640, %v6736
      %v6738 = vpop.f32.mrb[0].mxu0
      %v6739 = vpop.f32.mrb[0].mxu0
      %v6740 = vadd.f32 %v6643, %v6739
      %v6741 = vpop.f32.mrb[0].mxu0
      %6742 = vdwg.mxu0
      %v6743 = vsub.f32 0.0, %v6681
      %v6744 = vsub.f32 0.0, %v6684
      %v6745 = vsub.f32 0.0, %v6689
      %v6746 = vsub.f32 0.0, %v6692
      %v6747 = vsub.f32 0.0, %v6697
      %v6748 = vsub.f32 0.0, %v6700
      %v6749 = vsub.f32 0.0, %v6705
      %v6750 = vsub.f32 0.0, %v6708
      %v6751 = vsub.f32 0.0, %v6713
      %v6752 = vsub.f32 0.0, %v6716
      %v6753 = vsub.f32 0.0, %v6721
      %v6754 = vsub.f32 0.0, %v6724
      %v6755 = vsub.f32 0.0, %v6729
      %v6756 = vsub.f32 0.0, %v6732
      %v6757 = vsub.f32 0.0, %v6737
      %v6758 = vsub.f32 0.0, %v6740
      %v6759 = vmul.f32 %v6743, 1.442695
      %v6760 = vpow.pop %v6759
      %v6761 = vmul.f32 %v6744, 1.442695
      %v6762 = vpow.pop %v6761
      %v6763 = vmul.f32 %v6745, 1.442695
      %v6764 = vpow.pop %v6763
      %v6765 = vmul.f32 %v6746, 1.442695
      %v6766 = vpow.pop %v6765
      %v6767 = vmul.f32 %v6747, 1.442695
      %v6768 = vpow.pop %v6767
      %v6769 = vmul.f32 %v6748, 1.442695
      %v6770 = vpow.pop %v6769
      %v6771 = vmul.f32 %v6749, 1.442695
      %v6772 = vpow.pop %v6771
      %v6773 = vmul.f32 %v6750, 1.442695
      %v6774 = vpow.pop %v6773
      %v6775 = vmul.f32 %v6751, 1.442695
      %v6776 = vpow.pop %v6775
      %v6777 = vmul.f32 %v6752, 1.442695
      %v6778 = vpow.pop %v6777
      %v6779 = vmul.f32 %v6753, 1.442695
      %v6780 = vpow.pop %v6779
      %v6781 = vmul.f32 %v6754, 1.442695
      %v6782 = vpow.pop %v6781
      %v6783 = vmul.f32 %v6755, 1.442695
      %v6784 = vpow.pop %v6783
      %v6785 = vmul.f32 %v6756, 1.442695
      %v6786 = vpow.pop %v6785
      %v6787 = vmul.f32 %v6757, 1.442695
      %v6788 = vpow.pop %v6787
      %v6789 = vmul.f32 %v6758, 1.442695
      %v6790 = vpow.pop %v6789
      %v6791 = vadd.f32 %v6760, 1.0
      %v6792 = vadd.f32 %v6762, 1.0
      %v6793 = vadd.f32 %v6764, 1.0
      %v6794 = vadd.f32 %v6766, 1.0
      %v6795 = vadd.f32 %v6768, 1.0
      %v6796 = vadd.f32 %v6770, 1.0
      %v6797 = vadd.f32 %v6772, 1.0
      %v6798 = vadd.f32 %v6774, 1.0
      %v6799 = vadd.f32 %v6776, 1.0
      %v6800 = vadd.f32 %v6778, 1.0
      %v6801 = vadd.f32 %v6780, 1.0
      %v6802 = vadd.f32 %v6782, 1.0
      %v6803 = vadd.f32 %v6784, 1.0
      %v6804 = vadd.f32 %v6786, 1.0
      %v6805 = vadd.f32 %v6788, 1.0
      %v6806 = vadd.f32 %v6790, 1.0
      %v6807 = vrcp.pop %v6791
      %v6808 = vrcp.pop %v6792
      %v6809 = vrcp.pop %v6793
      %v6810 = vrcp.pop %v6794
      %v6811 = vrcp.pop %v6795
      %v6812 = vrcp.pop %v6796
      %v6813 = vrcp.pop %v6797
      %v6814 = vrcp.pop %v6798
      %v6815 = vrcp.pop %v6799
      %v6816 = vrcp.pop %v6800
      %v6817 = vrcp.pop %v6801
      %v6818 = vrcp.pop %v6802
      %v6819 = vrcp.pop %v6803
      %v6820 = vrcp.pop %v6804
      %v6821 = vrcp.pop %v6805
      %v6822 = vrcp.pop %v6806
      %v6823 = vmul.f32 %v6681, %v6807
      %v6824 = vmul.f32 %v6684, %v6808
      %v6825 = vmul.f32 %v6689, %v6809
      %v6826 = vmul.f32 %v6692, %v6810
      %v6827 = vmul.f32 %v6697, %v6811
      %v6828 = vmul.f32 %v6700, %v6812
      %v6829 = vmul.f32 %v6705, %v6813
      %v6830 = vmul.f32 %v6708, %v6814
      %v6831 = vmul.f32 %v6713, %v6815
      %v6832 = vmul.f32 %v6716, %v6816
      %v6833 = vmul.f32 %v6721, %v6817
      %v6834 = vmul.f32 %v6724, %v6818
      %v6835 = vmul.f32 %v6729, %v6819
      %v6836 = vmul.f32 %v6732, %v6820
      %v6837 = vmul.f32 %v6737, %v6821
      %v6838 = vmul.f32 %v6740, %v6822
      %v6839 = vpack.c.bf16 %v6824, %v6823
      %v6840 = vpack.c.bf16 %v6826, %v6825
      %v6841 = vpack.c.bf16 %v6828, %v6827
      %v6842 = vpack.c.bf16 %v6830, %v6829
      %v6843 = vpack.c.bf16 %v6832, %v6831
      %v6844 = vpack.c.bf16 %v6834, %v6833
      %v6845 = vpack.c.bf16 %v6836, %v6835
      %v6846 = vpack.c.bf16 %v6838, %v6837
      %v6855 = vunpack.c.l.b16 %v6839
      %v6856 = vunpack.c.h.b16 %v6839
      %v6857 = vunpack.c.l.b16 %v6840
      %v6858 = vunpack.c.h.b16 %v6840
      %v6859 = vunpack.c.l.b16 %v6841
      %v6860 = vunpack.c.h.b16 %v6841
      %v6861 = vunpack.c.l.b16 %v6842
      %v6862 = vunpack.c.h.b16 %v6842
      %v6863 = vunpack.c.l.b16 %v6843
      %v6864 = vunpack.c.h.b16 %v6843
      %v6865 = vunpack.c.l.b16 %v6844
      %v6866 = vunpack.c.h.b16 %v6844
      %v6867 = vunpack.c.l.b16 %v6845
      %v6868 = vunpack.c.h.b16 %v6845
      %v6869 = vunpack.c.l.b16 %v6846
      %v6870 = vunpack.c.h.b16 %v6846
      %v6871 = vpack.c.b16 %v6855, %v6855
      %v6872 = vpack.c.b16 %v6856, %v6856
      %v6873 = vpack.c.b16 %v6857, %v6857
      %v6874 = vpack.c.b16 %v6858, %v6858
      %v6875 = vpack.c.b16 %v6859, %v6859
      %v6876 = vpack.c.b16 %v6860, %v6860
      %v6877 = vpack.c.b16 %v6861, %v6861
      %v6878 = vpack.c.b16 %v6862, %v6862
      %v6879 = vpack.c.b16 %v6863, %v6863
      %v6880 = vpack.c.b16 %v6864, %v6864
      %v6881 = vpack.c.b16 %v6865, %v6865
      %v6882 = vpack.c.b16 %v6866, %v6866
      %v6883 = vpack.c.b16 %v6867, %v6867
      %v6884 = vpack.c.b16 %v6868, %v6868
      %v6885 = vpack.c.b16 %v6869, %v6869
      %v6886 = vpack.c.b16 %v6870, %v6870
      %6903 = vst [vmem:[%s387] sm:$0xf] %v6871
      %6904 = vst [vmem:[%s387 + $0x4] sm:$0xf] %v6872
      %6905 = vst [vmem:[%s387 + $0x8] sm:$0xf] %v6873
      %6906 = vst [vmem:[%s387 + $0xc] sm:$0xf] %v6874
      %6907 = vst [vmem:[%s387 + $0x10] sm:$0xf] %v6875
      %6908 = vst [vmem:[%s387 + $0x14] sm:$0xf] %v6876
      %6909 = vst [vmem:[%s387 + $0x18] sm:$0xf] %v6877
      %6910 = vst [vmem:[%s387 + $0x1c] sm:$0xf] %v6878
      %6911 = vst [vmem:[%s387 + $0x20] sm:$0xf] %v6879
      %6912 = vst [vmem:[%s387 + $0x24] sm:$0xf] %v6880
      %6913 = vst [vmem:[%s387 + $0x28] sm:$0xf] %v6881
      %6914 = vst [vmem:[%s387 + $0x2c] sm:$0xf] %v6882
      %6915 = vst [vmem:[%s387 + $0x30] sm:$0xf] %v6883
      %6916 = vst [vmem:[%s387 + $0x34] sm:$0xf] %v6884
      %6917 = vst [vmem:[%s387 + $0x38] sm:$0xf] %v6885
      %6918 = vst [vmem:[%s387 + $0x3c] sm:$0xf] %v6886
      %s6919 = smul.u32 8, %s21
      %p6920 = scmp.lt.s32.totalorder %s20, 1
      %s6921 = scalar_select %p6920, %s20, 1
      %p6922 = scmp.lt.s32.totalorder %s6919, 15
      %s6923 = scalar_select %p6922, %s6919, 15
      %s6924 = smul.addr %s6923, 2
      %s6925 = smul.addr %s6921, 32
      %s6926 = sadd.s32 %s6924, %s6925
      %s6927 = smul.addr %s6926, 4
      %s6928 = scalar_lea.vmem %s5, %s6927
      // Predicated region
      $region41: #{tispp_forward.3} parent=39 // pred_check
        %p6929 = pneg %p186
      $region42: #{tispp_forward.3} parent=39 // pred_check_branch
        %6931 = sbr.rel (%p6929) target = $region44
      $region43: #{tispp_forward.3} parent=39 // pred_region
        %s6932 = smul.u32 8, %s21
      $region44: #{tispp_forward.3} parent=39 // pred_fallthru
        _
    $region40: #{tispp_forward.3} parent=5 // pred_fallthru
      _
    %p6933 = scmp.le.s32.totalorder 2, %s11
    // Predicated region
    $region45: #{tispp_forward.3} parent=5 // pred_check
      %p6934 = pneg %p6933
    $region46: #{tispp_forward.3} parent=5 // pred_check_branch
      %6936 = sbr.rel (%p6934) target = $region48
    $region47: #{tispp_forward.3} parent=5 // pred_region
      %s6937 = ssub.s32 %s11, 2
      // Predicated region
      $region49: #{tispp_forward.3} parent=47 // pred_check
        %p6938 = pneg %p192
      $region50: #{tispp_forward.3} parent=47 // pred_check_branch
        %6940 = sbr.rel (%p6938) target = $region52
      $region51: #{tispp_forward.3} parent=47 // pred_region
        %s6941 = smul.u32 8, %s23
        %p6942 = scmp.lt.s32.totalorder %s22, 1
        %s6943 = scalar_select %p6942, %s22, 1
        %p6944 = scmp.lt.s32.totalorder %s6941, 15
        %s6945 = scalar_select %p6944, %s6941, 15
        %s6946 = smul.addr %s6945, 2
        %s6947 = smul.addr %s6943, 32
        %s6948 = sadd.s32 %s6946, %s6947
        %s6949 = smul.addr %s6948, 4
        %s6950 = scalar_lea.vmem %s5, %s6949
      $region52: #{tispp_forward.3} parent=47 // pred_fallthru
        _
    $region48: #{tispp_forward.3} parent=5 // pred_fallthru
      _
  $region6: #{tispp_forward.3} parent=0 // loop_footer
    %s15 = sadd.s32 1, %s11
  $region7: #{tispp_forward.3} parent=0 // loop_footer_branch
    %10 = sbr.rel target = $region3
  $region8: #{tispp_forward.3} parent=0 // loop_exit
    _

</llo_original>
